<compile_context>
chip_gen: v5e
topology: v5e:2x2
jax: 0.10.0
libtpu: 0.0.40
codegen_flags: <defaults>
</compile_context>

<pallas_src>
import functools

import numpy as np
import jax
import jax.numpy as jnp
from jax.experimental import pallas as pl
from jax.experimental.pallas import tpu as pltpu


# Sign pattern of the PyTorch ConvTranspose2d Haar weights; |w| == 0.5 exactly (after .float()).
#   LL = [[+.5,+.5],[+.5,+.5]]  LH = [[-.5,+.5],[-.5,+.5]]
#   HL = [[-.5,-.5],[+.5,+.5]]  HH = [[+.5,-.5],[-.5,+.5]]
_HAAR_SIGNS = (
    ((+1, +1), (+1, +1)),   # LL
    ((-1, +1), (-1, +1)),   # LH
    ((-1, -1), (+1, +1)),   # HL
    ((+1, -1), (-1, +1)),   # HH
)
_HAAR_W = np.asarray(_HAAR_SIGNS, dtype=np.float32) * np.float32(0.5)   # (4, 2, 2)

_MIN_GRID_STEPS = 8          # keep both v7x TensorCores fed even when N == 1


@functools.lru_cache(maxsize=1)
def _vmem_capacity_bytes():
    """Physical VMEM bytes for the current TPU generation (safe 64 MiB fallback)."""
    default = 64 * 1024 * 1024
    try:
        info = pltpu.get_tpu_info()
    except Exception:
        return default
    for attr in ("vmem_capacity_bytes", "vmem_bytes", "vmem_size_bytes"):
        v = getattr(info, attr, None)
        if isinstance(v, int) and v > 0:
            return v
    return default


def _pick_tile(M, row_bytes, step_budget_bytes, min_m_tiles=1):
    """Row-tile TM: multiple of 8 (or == M), per-step block under the VMEM budget, and —
    when possible — at least `min_m_tiles` tiles along M (megacore)."""
    if M <= 8:
        return M
    cap = max(8, step_budget_bytes // max(row_bytes, 1))
    if min_m_tiles > 1:
        cap = min(cap, max(8, -(-M // min_m_tiles)))
    cap = min(cap, M)
    cap -= cap % 8
    cap = max(cap, 8)
    t = cap
    while t >= 8 and 2 * t >= cap:          # prefer an exact divisor near the cap
        if M % t == 0:
            return t
        t -= 8
    return cap                              # ragged last tile; Pallas masks the edge


def _interleave_lanes(a, b):
    """c[:, 2j] = a[:, j]; c[:, 2j+1] = b[:, j].  XLU relayout; VPU/MXU stay free."""
    tm, w = a.shape
    return jnp.stack([a, b], axis=-1).reshape(tm, 2 * w)


def _expand_band(x, signs):
    """(TM, W) coefficients -> (TM, 4W) rows laid out as [dh*2W + 2j + dw] (exact +-0.5)."""
    xh = x * 0.5
    xn = -xh

    def term(s):
        return xh if s > 0 else xn

    halves = [_interleave_lanes(term(signs[dh][0]), term(signs[dh][1])) for dh in range(2)]
    return jnp.concatenate(halves, axis=-1)


def _cat5_kernel(ll_ref, lh_ref, hl_ref, hh_ref, orig_ref, out_ref):
    # band refs: (1, TM, W); orig_ref: (1, TM, 4W); out_ref: (1, 5, TM, 4W) lane-dense.
    bands = (ll_ref, lh_ref, hl_ref, hh_ref)
    for b in range(4):
        out_ref[0, b] = _expand_band(bands[b][0], _HAAR_SIGNS[b]).astype(out_ref.dtype)
    out_ref[0, 4] = orig_ref[0].astype(out_ref.dtype)


def _sum_kernel(ll_ref, lh_ref, hl_ref, hh_ref, out_ref):
    # Accumulate the four bands at width W in f32 (same left-to-right order as PyTorch),
    # then interleave once per dh half and store a single lane-dense (TM, 4W) row block.
    xs = [r[0].astype(jnp.float32) * 0.5 for r in (ll_ref, lh_ref, hl_ref, hh_ref)]
    halves = []
    for dh in range(2):
        cols = []
        for dw in range(2):
            acc = xs[0] if _HAAR_SIGNS[0][dh][dw] > 0 else -xs[0]
            for b in range(1, 4):
                if _HAAR_SIGNS[b][dh][dw] > 0:
                    acc = acc + xs[b]
                else:
                    acc = acc - xs[b]
            cols.append(acc)
        halves.append(_interleave_lanes(cols[0], cols[1]))
    out_ref[0] = jnp.concatenate(halves, axis=-1).astype(out_ref.dtype)


@functools.partial(jax.jit, static_argnames=("option_unpool",))
def wave_unpool(LL, LH, HL, HH, original=None, option_unpool="cat5"):
    if option_unpool == "sumall":
        return LL + LH + HL + HH                  # trivial elementwise add; no kernel needed
    if option_unpool not in ("cat5", "sum"):
        raise NotImplementedError(option_unpool)
    if option_unpool == "cat5" and original is None:
        raise NotImplementedError("option_unpool='cat5' requires `original`")

    N, C, H, W = LL.shape
    M = C * H
    dtypes = [LL.dtype, LH.dtype, HL.dtype, HH.dtype]
    if option_unpool == "cat5":
        dtypes.append(original.dtype)
    out_dtype = jnp.result_type(*dtypes)          # bf16 stays bf16; f32 stays f32
    itemsize = jnp.dtype(out_dtype).itemsize

    # Free row-major reshapes into the kernel's flattened (c, i) row layout.
    bands = [x.astype(out_dtype).reshape(N, M, W) for x in (LL, LH, HL, HH)]

    # Generation-aware VMEM budgets (v7x: 64 MiB physical -> ~48 MiB limit, ~8 MiB/step;
    # v5e/v6e: 128 MiB -> ~96 MiB limit, ~16 MiB/step).
    phys = _vmem_capacity_bytes()
    vmem_limit = int(phys * 3 // 4)
    step_budget = phys // 8                       # x2 double-buffering => <= phys // 4 resident

    groups = 5 if option_unpool == "cat5" else 1
    in_row_w = 4 * W + (4 * W if option_unpool == "cat5" else 0)
    row_bytes = (in_row_w + groups * 4 * W) * itemsize
    min_m_tiles = max(1, -(-_MIN_GRID_STEPS // N))
    TM = _pick_tile(M, row_bytes, step_budget, min_m_tiles)
    grid = (N, pl.cdiv(M, TM))

    band_spec = pl.BlockSpec((1, TM, W), lambda n, m: (n, m, 0))
    row_spec = pl.BlockSpec((1, TM, 4 * W), lambda n, m: (n, m, 0))
    cparams = pltpu.CompilerParams(
        dimension_semantics=("parallel", "parallel"),
        vmem_limit_bytes=vmem_limit,
    )

    if option_unpool == "cat5":
        orig_rows = original.astype(out_dtype).reshape(N, M, 4 * W)       # free reshape
        out = pl.pallas_call(
            _cat5_kernel,
            out_shape=jax.ShapeDtypeStruct((N, 5, M, 4 * W), out_dtype),
            grid_spec=pltpu.PrefetchScalarGridSpec(
                num_scalar_prefetch=0,
                grid=grid,
                in_specs=[band_spec, band_spec, band_spec, band_spec, row_spec],
                out_specs=pl.BlockSpec((1, 5, TM, 4 * W), lambda n, m: (n, 0, m, 0)),
            ),
            compiler_params=cparams,
        )(*bands, orig_rows)
        return out.reshape(N, 5 * C, 2 * H, 2 * W)                        # free reshape

    out = pl.pallas_call(
        _sum_kernel,
        out_shape=jax.ShapeDtypeStruct((N, M, 4 * W), out_dtype),
        grid_spec=pltpu.PrefetchScalarGridSpec(
            num_scalar_prefetch=0,
            grid=grid,
            in_specs=[band_spec, band_spec, band_spec, band_spec],
            out_specs=row_spec,
        ),
        compiler_params=cparams,
    )(*bands)
    return out.reshape(N, C, 2 * H, 2 * W)                                # free reshape


def _reference(LL, LH, HL, HH, original, option_unpool):
    """Pure-JAX reference of the PyTorch forward (weights are exactly +-0.5 in f32)."""
    ups = [jnp.kron(b.astype(jnp.float32), jnp.asarray(_HAAR_W[i]))
           for i, b in enumerate((LL, LH, HL, HH))]
    if option_unpool == "sum":
        return ((ups[0] + ups[1]) + ups[2]) + ups[3]
    return jnp.concatenate(ups + [original.astype(jnp.float32)], axis=1)


if __name__ == "__main__":
    key = jax.random.PRNGKey(0)
    kLL, kLH, kHL, kHH, kO = jax.random.split(key, 5)
    N, C, H, W = 2, 8, 16, 16                     # wavelet coefficients (half resolution)

    LL = jax.random.normal(kLL, (N, C, H, W), jnp.float32)
    LH = jax.random.normal(kLH, (N, C, H, W), jnp.float32)
    HL = jax.random.normal(kHL, (N, C, H, W), jnp.float32)
    HH = jax.random.normal(kHH, (N, C, H, W), jnp.float32)
    original = jax.random.normal(kO, (N, C, 2 * H, 2 * W), jnp.float32)

    # cat5 path (the module default) — exact: multiplies by +-0.5 and pass-through copy.
    out = jax.block_until_ready(wave_unpool(LL, LH, HL, HH, original, option_unpool="cat5"))
    ref = _reference(LL, LH, HL, HH, original, "cat5")
    assert out.shape == (N, 5 * C, 2 * H, 2 * W), out.shape
    err = float(jnp.max(jnp.abs(out - ref)))
    assert err <= 1e-6, err

    # 'sum' path (in-kernel f32 band accumulation, PyTorch addition order).
    out_sum = jax.block_until_ready(wave_unpool(LL, LH, HL, HH, option_unpool="sum"))
    ref_sum = _reference(LL, LH, HL, HH, None, "sum")
    assert out_sum.shape == (N, C, 2 * H, 2 * W), out_sum.shape
    err_sum = float(jnp.max(jnp.abs(out_sum - ref_sum)))
    assert err_sum <= 1e-5, err_sum

    # 'sumall' path (plain elementwise add).
    out_all = jax.block_until_ready(wave_unpool(LL, LH, HL, HH, option_unpool="sumall"))
    assert jnp.allclose(out_all, LL + LH + HL + HH)

    print("KERNEL_OK")
</pallas_src>

<mosaic_0001>
module attributes {stable_mosaic.version = 11 : i64} {
  func.func @_cat5_kernel(%arg0: i32, %arg1: i32, %arg2: memref<1x32x16xf32, #tpu.memory_space<vmem>>, %arg3: memref<1x32x16xf32, #tpu.memory_space<vmem>>, %arg4: memref<1x32x16xf32, #tpu.memory_space<vmem>>, %arg5: memref<1x32x16xf32, #tpu.memory_space<vmem>>, %arg6: memref<1x32x64xf32, #tpu.memory_space<vmem>>, %arg7: memref<1x5x32x64xf32, #tpu.memory_space<vmem>>) attributes {dimension_semantics = [#tpu.dimension_semantics<parallel>, #tpu.dimension_semantics<parallel>], iteration_bounds = array<i64: 2, 4>, scalar_prefetch = 0 : i64, scratch_operands = 0 : i64, tpu.core_type = #tpu.core_type<tc>, window_params = [{transform_indices = @transform_0, window_bounds = array<i64: 1, 32, 16>}, {transform_indices = @transform_1, window_bounds = array<i64: 1, 32, 16>}, {transform_indices = @transform_2, window_bounds = array<i64: 1, 32, 16>}, {transform_indices = @transform_3, window_bounds = array<i64: 1, 32, 16>}, {transform_indices = @transform_4, window_bounds = array<i64: 1, 32, 64>}, {transform_indices = @transform_5, window_bounds = array<i64: 1, 5, 32, 64>}]} {
    %c0 = arith.constant 0 : index
    %c0_0 = arith.constant 0 : index
    %c0_1 = arith.constant 0 : index
    %0 = vector.load %arg2[%c0, %c0_0, %c0_1] : memref<1x32x16xf32, #tpu.memory_space<vmem>>, vector<1x32x16xf32>
    %1 = vector.shape_cast %0 : vector<1x32x16xf32> to vector<32x16xf32>
    %cst = arith.constant 5.000000e-01 : f32
    %2 = vector.broadcast %cst : f32 to vector<32x16xf32>
    %3 = arith.mulf %1, %2 : vector<32x16xf32>
    %4 = vector.shape_cast %3 : vector<32x16xf32> to vector<32x16x1xf32>
    %5 = vector.shape_cast %3 : vector<32x16xf32> to vector<32x16x1xf32>
    %6 = tpu.concatenate %4, %5 in 2 : vector<32x16x1xf32>, vector<32x16x1xf32> -> vector<32x16x2xf32>
    %7 = vector.shape_cast %6 : vector<32x16x2xf32> to vector<32x32xf32>
    %8 = vector.shape_cast %3 : vector<32x16xf32> to vector<32x16x1xf32>
    %9 = vector.shape_cast %3 : vector<32x16xf32> to vector<32x16x1xf32>
    %10 = tpu.concatenate %8, %9 in 2 : vector<32x16x1xf32>, vector<32x16x1xf32> -> vector<32x16x2xf32>
    %11 = vector.shape_cast %10 : vector<32x16x2xf32> to vector<32x32xf32>
    %12 = tpu.concatenate %7, %11 in 1 : vector<32x32xf32>, vector<32x32xf32> -> vector<32x64xf32>
    %c0_2 = arith.constant 0 : index
    %c0_3 = arith.constant 0 : index
    %c0_4 = arith.constant 0 : index
    %c0_5 = arith.constant 0 : index
    %13 = vector.load %arg7[%c0_2, %c0_3, %c0_4, %c0_5] : memref<1x5x32x64xf32, #tpu.memory_space<vmem>>, vector<1x1x32x64xf32>
    %14 = vector.shape_cast %13 : vector<1x1x32x64xf32> to vector<32x64xf32>
    %15 = vector.shape_cast %12 : vector<32x64xf32> to vector<1x1x32x64xf32>
    tpu.vector_store %arg7[%c0_2, %c0_3, %c0_4, %c0_5], %15 {strides = array<i32>} : memref<1x5x32x64xf32, #tpu.memory_space<vmem>>, vector<1x1x32x64xf32>,
    %c0_6 = arith.constant 0 : index
    %c0_7 = arith.constant 0 : index
    %c0_8 = arith.constant 0 : index
    %16 = vector.load %arg3[%c0_6, %c0_7, %c0_8] : memref<1x32x16xf32, #tpu.memory_space<vmem>>, vector<1x32x16xf32>
    %17 = vector.shape_cast %16 : vector<1x32x16xf32> to vector<32x16xf32>
    %cst_9 = arith.constant 5.000000e-01 : f32
    %18 = vector.broadcast %cst_9 : f32 to vector<32x16xf32>
    %19 = arith.mulf %17, %18 : vector<32x16xf32>
    %cst_10 = arith.constant 0.000000e+00 : f32
    %20 = vector.broadcast %cst_10 : f32 to vector<32x16xf32>
    %21 = arith.subf %20, %19 : vector<32x16xf32>
    %22 = vector.shape_cast %21 : vector<32x16xf32> to vector<32x16x1xf32>
    %23 = vector.shape_cast %19 : vector<32x16xf32> to vector<32x16x1xf32>
    %24 = tpu.concatenate %22, %23 in 2 : vector<32x16x1xf32>, vector<32x16x1xf32> -> vector<32x16x2xf32>
    %25 = vector.shape_cast %24 : vector<32x16x2xf32> to vector<32x32xf32>
    %26 = vector.shape_cast %21 : vector<32x16xf32> to vector<32x16x1xf32>
    %27 = vector.shape_cast %19 : vector<32x16xf32> to vector<32x16x1xf32>
    %28 = tpu.concatenate %26, %27 in 2 : vector<32x16x1xf32>, vector<32x16x1xf32> -> vector<32x16x2xf32>
    %29 = vector.shape_cast %28 : vector<32x16x2xf32> to vector<32x32xf32>
    %30 = tpu.concatenate %25, %29 in 1 : vector<32x32xf32>, vector<32x32xf32> -> vector<32x64xf32>
    %c0_11 = arith.constant 0 : index
    %c1 = arith.constant 1 : index
    %c0_12 = arith.constant 0 : index
    %c0_13 = arith.constant 0 : index
    %31 = vector.load %arg7[%c0_11, %c1, %c0_12, %c0_13] : memref<1x5x32x64xf32, #tpu.memory_space<vmem>>, vector<1x1x32x64xf32>
    %32 = vector.shape_cast %31 : vector<1x1x32x64xf32> to vector<32x64xf32>
    %33 = vector.shape_cast %30 : vector<32x64xf32> to vector<1x1x32x64xf32>
    tpu.vector_store %arg7[%c0_11, %c1, %c0_12, %c0_13], %33 {strides = array<i32>} : memref<1x5x32x64xf32, #tpu.memory_space<vmem>>, vector<1x1x32x64xf32>,
    %c0_14 = arith.constant 0 : index
    %c0_15 = arith.constant 0 : index
    %c0_16 = arith.constant 0 : index
    %34 = vector.load %arg4[%c0_14, %c0_15, %c0_16] : memref<1x32x16xf32, #tpu.memory_space<vmem>>, vector<1x32x16xf32>
    %35 = vector.shape_cast %34 : vector<1x32x16xf32> to vector<32x16xf32>
    %cst_17 = arith.constant 5.000000e-01 : f32
    %36 = vector.broadcast %cst_17 : f32 to vector<32x16xf32>
    %37 = arith.mulf %35, %36 : vector<32x16xf32>
    %cst_18 = arith.constant 0.000000e+00 : f32
    %38 = vector.broadcast %cst_18 : f32 to vector<32x16xf32>
    %39 = arith.subf %38, %37 : vector<32x16xf32>
    %40 = vector.shape_cast %39 : vector<32x16xf32> to vector<32x16x1xf32>
    %41 = vector.shape_cast %39 : vector<32x16xf32> to vector<32x16x1xf32>
    %42 = tpu.concatenate %40, %41 in 2 : vector<32x16x1xf32>, vector<32x16x1xf32> -> vector<32x16x2xf32>
    %43 = vector.shape_cast %42 : vector<32x16x2xf32> to vector<32x32xf32>
    %44 = vector.shape_cast %37 : vector<32x16xf32> to vector<32x16x1xf32>
    %45 = vector.shape_cast %37 : vector<32x16xf32> to vector<32x16x1xf32>
    %46 = tpu.concatenate %44, %45 in 2 : vector<32x16x1xf32>, vector<32x16x1xf32> -> vector<32x16x2xf32>
    %47 = vector.shape_cast %46 : vector<32x16x2xf32> to vector<32x32xf32>
    %48 = tpu.concatenate %43, %47 in 1 : vector<32x32xf32>, vector<32x32xf32> -> vector<32x64xf32>
    %c0_19 = arith.constant 0 : index
    %c2 = arith.constant 2 : index
    %c0_20 = arith.constant 0 : index
    %c0_21 = arith.constant 0 : index
    %49 = vector.load %arg7[%c0_19, %c2, %c0_20, %c0_21] : memref<1x5x32x64xf32, #tpu.memory_space<vmem>>, vector<1x1x32x64xf32>
    %50 = vector.shape_cast %49 : vector<1x1x32x64xf32> to vector<32x64xf32>
    %51 = vector.shape_cast %48 : vector<32x64xf32> to vector<1x1x32x64xf32>
    tpu.vector_store %arg7[%c0_19, %c2, %c0_20, %c0_21], %51 {strides = array<i32>} : memref<1x5x32x64xf32, #tpu.memory_space<vmem>>, vector<1x1x32x64xf32>,
    %c0_22 = arith.constant 0 : index
    %c0_23 = arith.constant 0 : index
    %c0_24 = arith.constant 0 : index
    %52 = vector.load %arg5[%c0_22, %c0_23, %c0_24] : memref<1x32x16xf32, #tpu.memory_space<vmem>>, vector<1x32x16xf32>
    %53 = vector.shape_cast %52 : vector<1x32x16xf32> to vector<32x16xf32>
    %cst_25 = arith.constant 5.000000e-01 : f32
    %54 = vector.broadcast %cst_25 : f32 to vector<32x16xf32>
    %55 = arith.mulf %53, %54 : vector<32x16xf32>
    %cst_26 = arith.constant 0.000000e+00 : f32
    %56 = vector.broadcast %cst_26 : f32 to vector<32x16xf32>
    %57 = arith.subf %56, %55 : vector<32x16xf32>
    %58 = vector.shape_cast %55 : vector<32x16xf32> to vector<32x16x1xf32>
    %59 = vector.shape_cast %57 : vector<32x16xf32> to vector<32x16x1xf32>
    %60 = tpu.concatenate %58, %59 in 2 : vector<32x16x1xf32>, vector<32x16x1xf32> -> vector<32x16x2xf32>
    %61 = vector.shape_cast %60 : vector<32x16x2xf32> to vector<32x32xf32>
    %62 = vector.shape_cast %57 : vector<32x16xf32> to vector<32x16x1xf32>
    %63 = vector.shape_cast %55 : vector<32x16xf32> to vector<32x16x1xf32>
    %64 = tpu.concatenate %62, %63 in 2 : vector<32x16x1xf32>, vector<32x16x1xf32> -> vector<32x16x2xf32>
    %65 = vector.shape_cast %64 : vector<32x16x2xf32> to vector<32x32xf32>
    %66 = tpu.concatenate %61, %65 in 1 : vector<32x32xf32>, vector<32x32xf32> -> vector<32x64xf32>
    %c0_27 = arith.constant 0 : index
    %c3 = arith.constant 3 : index
    %c0_28 = arith.constant 0 : index
    %c0_29 = arith.constant 0 : index
    %67 = vector.load %arg7[%c0_27, %c3, %c0_28, %c0_29] : memref<1x5x32x64xf32, #tpu.memory_space<vmem>>, vector<1x1x32x64xf32>
    %68 = vector.shape_cast %67 : vector<1x1x32x64xf32> to vector<32x64xf32>
    %69 = vector.shape_cast %66 : vector<32x64xf32> to vector<1x1x32x64xf32>
    tpu.vector_store %arg7[%c0_27, %c3, %c0_28, %c0_29], %69 {strides = array<i32>} : memref<1x5x32x64xf32, #tpu.memory_space<vmem>>, vector<1x1x32x64xf32>,
    %c0_30 = arith.constant 0 : index
    %c0_31 = arith.constant 0 : index
    %c0_32 = arith.constant 0 : index
    %70 = vector.load %arg6[%c0_30, %c0_31, %c0_32] : memref<1x32x64xf32, #tpu.memory_space<vmem>>, vector<1x32x64xf32>
    %71 = vector.shape_cast %70 : vector<1x32x64xf32> to vector<32x64xf32>
    %c0_33 = arith.constant 0 : index
    %c4 = arith.constant 4 : index
    %c0_34 = arith.constant 0 : index
    %c0_35 = arith.constant 0 : index
    %72 = vector.load %arg7[%c0_33, %c4, %c0_34, %c0_35] : memref<1x5x32x64xf32, #tpu.memory_space<vmem>>, vector<1x1x32x64xf32>
    %73 = vector.shape_cast %72 : vector<1x1x32x64xf32> to vector<32x64xf32>
    %74 = vector.shape_cast %71 : vector<32x64xf32> to vector<1x1x32x64xf32>
    tpu.vector_store %arg7[%c0_33, %c4, %c0_34, %c0_35], %74 {strides = array<i32>} : memref<1x5x32x64xf32, #tpu.memory_space<vmem>>, vector<1x1x32x64xf32>,
    return
  }
  func.func @transform_0(%arg0: i32, %arg1: i32) -> (i32, i32, i32) {
    %c0_i32 = arith.constant 0 : i32
    %c0_i32_0 = arith.constant 0 : i32
    return %arg0, %arg1, %c0_i32 : i32, i32, i32
  }
  func.func @transform_1(%arg0: i32, %arg1: i32) -> (i32, i32, i32) {
    %c0_i32 = arith.constant 0 : i32
    %c0_i32_0 = arith.constant 0 : i32
    return %arg0, %arg1, %c0_i32 : i32, i32, i32
  }
  func.func @transform_2(%arg0: i32, %arg1: i32) -> (i32, i32, i32) {
    %c0_i32 = arith.constant 0 : i32
    %c0_i32_0 = arith.constant 0 : i32
    return %arg0, %arg1, %c0_i32 : i32, i32, i32
  }
  func.func @transform_3(%arg0: i32, %arg1: i32) -> (i32, i32, i32) {
    %c0_i32 = arith.constant 0 : i32
    %c0_i32_0 = arith.constant 0 : i32
    return %arg0, %arg1, %c0_i32 : i32, i32, i32
  }
  func.func @transform_4(%arg0: i32, %arg1: i32) -> (i32, i32, i32) {
    %c0_i32 = arith.constant 0 : i32
    %c0_i32_0 = arith.constant 0 : i32
    return %arg0, %arg1, %c0_i32 : i32, i32, i32
  }
  func.func @transform_5(%arg0: i32, %arg1: i32) -> (i32, i32, i32, i32) {
    %c0_i32 = arith.constant 0 : i32
    %c0_i32_0 = arith.constant 0 : i32
    %c0_i32_1 = arith.constant 0 : i32
    return %arg0, %c0_i32, %arg1, %c0_i32_0 : i32, i32, i32, i32
  }
}

</mosaic_0001>

<llo_original>
// kernel: wave_unpool.1
$region0: #{wave_unpool.1}
  #allocation0 [shape = 'u32[]', space=smem, size = 0x4, offset = 0x4, fixed_abs, tag = 'smem constant byte address 0x4 - core index']
  #allocation1 [shape = 'u32[72,128]{1,0:T(1,128)}', space=vmem, size = 0x9000, scoped, tag = 'internal scratch']
  %s0 = inlined_call_operand.hbm [shape: f32[2,128,16], index: 0, kind: input, shape index: {}]
  %s1 = inlined_call_operand.hbm [shape: f32[2,128,16], index: 1, kind: input, shape index: {}]
  %s2 = inlined_call_operand.hbm [shape: f32[2,128,16], index: 2, kind: input, shape index: {}]
  %s3 = inlined_call_operand.hbm [shape: f32[2,128,16], index: 3, kind: input, shape index: {}]
  %s4 = inlined_call_operand.vmem [shape: f32[2,128,64], index: 4, kind: input, shape index: {}]
  %s5 = inlined_call_operand.vmem [shape: f32[2,5,128,64], index: 5, kind: output, shape index: {}]
  %s6 = sld [smem:[#allocation0]]
  $region103: #{wave_unpool.1} parent=0
    _
  %s8 = ssub.s32 1, %s6
  %s9 = scalar_select 0, %s8, %s6
  $region1: #{wave_unpool.1} parent=0
    #allocation2 [shape = 'u8[32768]{0}', space=vmem, size = 0x8000, scoped, tag = 'input window, operand 0']
    #allocation3 [shape = 's32[2]{0}', space=sflag, size = 0x8, scoped, tag = 'scoped memory for wave_unpool.1']
    #allocation4 [shape = 'u8[32768]{0}', space=vmem, size = 0x8000, scoped, tag = 'input window, operand 1']
    #allocation5 [shape = 's32[2]{0}', space=sflag, size = 0x8, scoped, tag = 'scoped memory for wave_unpool.1']
    #allocation6 [shape = 'u8[32768]{0}', space=vmem, size = 0x8000, scoped, tag = 'input window, operand 2']
    #allocation7 [shape = 'u8[32768]{0}', space=vmem, size = 0x8000, scoped, tag = 'input window, operand 3']
    #allocation8 [shape = 's32[2]{0}', space=sflag, size = 0x8, scoped, tag = 'scoped memory for wave_unpool.1']
    #allocation9 [shape = 'u8[163840]{0}', space=vmem, size = 0x28000, scoped, tag = 'output window, operand 0']
    %10 = vsyncpa [#allocation3], 0
    %s11 = scalar_lea.sflag [#allocation3], 1
    %12 = vsyncpa %s11, 0
    %13 = vsyncpa [#allocation5], 0
    %s14 = scalar_lea.sflag [#allocation5], 1
    %15 = vsyncpa %s14, 0
    %16 = vsyncpa [#allocation8], 0
    %s17 = scalar_lea.sflag [#allocation8], 1
    %18 = vsyncpa %s17, 0
    loop: start=0, step=1, limit=10
    $region2: #{wave_unpool.1} parent=1 // loop_pre_header
      _
    $region3: #{wave_unpool.1} parent=1 // loop_header
      %s20 = sphi 0, %s24
      %p21 = scmp.ge.s32.totalorder %s20, 10
      %s27 = sphi 0, %s39
      %s28 = sphi 0, %s35
      %s29 = sphi 0, %s27
      %s30 = sphi 0, %s28
      %s31 = sphi 0, %s29
      %s32 = sphi 0, %s30
      %s44 = sphi 0, %s46
      %s47 = sphi 0, %s44
      %s48 = sphi 0, %s47
      %s64 = sphi 0, %s48
      %s72 = sphi 0, %s74
      %s75 = sphi 0, %s72
      %s76 = sphi 0, %s75
      %s92 = sphi 0, %s76
      %s100 = sphi 0, %s102
      %s103 = sphi 0, %s100
      %s104 = sphi 0, %s103
      %s120 = sphi 0, %s104
      %s128 = sphi 0, %s130
      %s131 = sphi 0, %s128
      %s132 = sphi 0, %s131
      %s148 = sphi 0, %s132
      %s156 = sphi 0, %s158
      %s159 = sphi 0, %s156
      %s160 = sphi 0, %s159
      %s176 = sphi 0, %s160
      %s184 = sphi 0, %s186
      %s187 = sphi 0, %s184
      %s188 = sphi 0, %s187
      %s204 = sphi 0, %s188
    $region4: #{wave_unpool.1} parent=1 // loop_header_branch
      %23 = sbr.rel (%p21) target = $region8
    $region5: #{wave_unpool.1} parent=1 // loop_body
      %s25 = ssub.s32 %s20, 1
      %s26 = ssub.s32 %s20, 2
      %s33 = sadd.s32 1, %s28
      %p34 = scmp.ge.s32.totalorder %s33, 4
      %s35 = scalar_select %p34, 0, %s33
      %s36 = sadd.s32 1, %s27
      %s37 = scalar_select %p34, %s36, %s27
      %p38 = scmp.ge.s32.totalorder %s37, 2
      %s39 = scalar_select %p38, 0, %s37
      %s40 = ssub.s32 %s27, %s39
      %s41 = ssub.s32 %s28, %s35
      %s42 = sor.u32 %s40, %s41
      %p43 = scmp.eq.s32.totalorder %s42, 0
      %s45 = sadd.s32 %s44, 1
      %s46 = scalar_select %p43, %s44, %s45
      %p49 = pneg %p43
      %p50 = scmp.eq.s32.totalorder %s20, 7
      %p51 = por %p49, %p50
      %p52 = scmp.ne.s32.totalorder %s44, %s47
      %p53 = scmp.eq.s32.totalorder %s20, 0
      %p54 = por %p52, %p53
      %p55 = scmp.ne.s32.totalorder %s44, %s47
      %p56 = scmp.eq.s32.totalorder %s25, 7
      %p57 = por %p55, %p56
      %p58 = scmp.ne.s32.totalorder %s47, %s48
      %p59 = scmp.eq.s32.totalorder %s25, 0
      %p60 = por %p58, %p59
      %p61 = scmp.ne.s32.totalorder %s47, %s48
      %p62 = scmp.eq.s32.totalorder %s26, 7
      %p63 = por %p61, %p62
      %p65 = scmp.ne.s32.totalorder %s48, %s64
      %p66 = scmp.eq.s32.totalorder %s26, 0
      %p67 = por %p65, %p66
      %s68 = ssub.s32 %s27, %s39
      %s69 = ssub.s32 %s28, %s35
      %s70 = sor.u32 %s68, %s69
      %p71 = scmp.eq.s32.totalorder %s70, 0
      %s73 = sadd.s32 %s72, 1
      %s74 = scalar_select %p71, %s72, %s73
      %p77 = pneg %p71
      %p78 = scmp.eq.s32.totalorder %s20, 7
      %p79 = por %p77, %p78
      %p80 = scmp.ne.s32.totalorder %s72, %s75
      %p81 = scmp.eq.s32.totalorder %s20, 0
      %p82 = por %p80, %p81
      %p83 = scmp.ne.s32.totalorder %s72, %s75
      %p84 = scmp.eq.s32.totalorder %s25, 7
      %p85 = por %p83, %p84
      %p86 = scmp.ne.s32.totalorder %s75, %s76
      %p87 = scmp.eq.s32.totalorder %s25, 0
      %p88 = por %p86, %p87
      %p89 = scmp.ne.s32.totalorder %s75, %s76
      %p90 = scmp.eq.s32.totalorder %s26, 7
      %p91 = por %p89, %p90
      %p93 = scmp.ne.s32.totalorder %s76, %s92
      %p94 = scmp.eq.s32.totalorder %s26, 0
      %p95 = por %p93, %p94
      %s96 = ssub.s32 %s27, %s39
      %s97 = ssub.s32 %s28, %s35
      %s98 = sor.u32 %s96, %s97
      %p99 = scmp.eq.s32.totalorder %s98, 0
      %s101 = sadd.s32 %s100, 1
      %s102 = scalar_select %p99, %s100, %s101
      %p105 = pneg %p99
      %p106 = scmp.eq.s32.totalorder %s20, 7
      %p107 = por %p105, %p106
      %p108 = scmp.ne.s32.totalorder %s100, %s103
      %p109 = scmp.eq.s32.totalorder %s20, 0
      %p110 = por %p108, %p109
      %p111 = scmp.ne.s32.totalorder %s100, %s103
      %p112 = scmp.eq.s32.totalorder %s25, 7
      %p113 = por %p111, %p112
      %p114 = scmp.ne.s32.totalorder %s103, %s104
      %p115 = scmp.eq.s32.totalorder %s25, 0
      %p116 = por %p114, %p115
      %p117 = scmp.ne.s32.totalorder %s103, %s104
      %p118 = scmp.eq.s32.totalorder %s26, 7
      %p119 = por %p117, %p118
      %p121 = scmp.ne.s32.totalorder %s104, %s120
      %p122 = scmp.eq.s32.totalorder %s26, 0
      %p123 = por %p121, %p122
      %s124 = ssub.s32 %s27, %s39
      %s125 = ssub.s32 %s28, %s35
      %s126 = sor.u32 %s124, %s125
      %p127 = scmp.eq.s32.totalorder %s126, 0
      %s129 = sadd.s32 %s128, 1
      %s130 = scalar_select %p127, %s128, %s129
      %p133 = pneg %p127
      %p134 = scmp.eq.s32.totalorder %s20, 7
      %p135 = por %p133, %p134
      %p136 = scmp.ne.s32.totalorder %s128, %s131
      %p137 = scmp.eq.s32.totalorder %s20, 0
      %p138 = por %p136, %p137
      %p139 = scmp.ne.s32.totalorder %s128, %s131
      %p140 = scmp.eq.s32.totalorder %s25, 7
      %p141 = por %p139, %p140
      %p142 = scmp.ne.s32.totalorder %s131, %s132
      %p143 = scmp.eq.s32.totalorder %s25, 0
      %p144 = por %p142, %p143
      %p145 = scmp.ne.s32.totalorder %s131, %s132
      %p146 = scmp.eq.s32.totalorder %s26, 7
      %p147 = por %p145, %p146
      %p149 = scmp.ne.s32.totalorder %s132, %s148
      %p150 = scmp.eq.s32.totalorder %s26, 0
      %p151 = por %p149, %p150
      %s152 = ssub.s32 %s27, %s39
      %s153 = ssub.s32 %s28, %s35
      %s154 = sor.u32 %s152, %s153
      %p155 = scmp.eq.s32.totalorder %s154, 0
      %s157 = sadd.s32 %s156, 1
      %s158 = scalar_select %p155, %s156, %s157
      %p161 = pneg %p155
      %p162 = scmp.eq.s32.totalorder %s20, 7
      %p163 = por %p161, %p162
      %p164 = scmp.ne.s32.totalorder %s156, %s159
      %p165 = scmp.eq.s32.totalorder %s20, 0
      %p166 = por %p164, %p165
      %p167 = scmp.ne.s32.totalorder %s156, %s159
      %p168 = scmp.eq.s32.totalorder %s25, 7
      %p169 = por %p167, %p168
      %p170 = scmp.ne.s32.totalorder %s159, %s160
      %p171 = scmp.eq.s32.totalorder %s25, 0
      %p172 = por %p170, %p171
      %p173 = scmp.ne.s32.totalorder %s159, %s160
      %p174 = scmp.eq.s32.totalorder %s26, 7
      %p175 = por %p173, %p174
      %p177 = scmp.ne.s32.totalorder %s160, %s176
      %p178 = scmp.eq.s32.totalorder %s26, 0
      %p179 = por %p177, %p178
      %s180 = ssub.s32 %s27, %s39
      %s181 = ssub.s32 %s28, %s35
      %s182 = sor.u32 %s180, %s181
      %p183 = scmp.eq.s32.totalorder %s182, 0
      %s185 = sadd.s32 %s184, 1
      %s186 = scalar_select %p183, %s184, %s185
      %p189 = pneg %p183
      %p190 = scmp.eq.s32.totalorder %s20, 7
      %p191 = por %p189, %p190
      %p192 = scmp.ne.s32.totalorder %s184, %s187
      %p193 = scmp.eq.s32.totalorder %s20, 0
      %p194 = por %p192, %p193
      %p195 = scmp.ne.s32.totalorder %s184, %s187
      %p196 = scmp.eq.s32.totalorder %s25, 7
      %p197 = por %p195, %p196
      %p198 = scmp.ne.s32.totalorder %s187, %s188
      %p199 = scmp.eq.s32.totalorder %s25, 0
      %p200 = por %p198, %p199
      %p201 = scmp.ne.s32.totalorder %s187, %s188
      %p202 = scmp.eq.s32.totalorder %s26, 7
      %p203 = por %p201, %p202
      %p205 = scmp.ne.s32.totalorder %s188, %s204
      %p206 = scmp.eq.s32.totalorder %s26, 0
      %p207 = por %p205, %p206
      %p208 = scmp.le.s32.totalorder 1, %s20
      %p209 = scmp.lt.s32.totalorder %s20, 9
      %p210 = pnand %p208, %p209
      %p211 = pneg %p210
      // Predicated region
      $region9: #{wave_unpool.1} parent=5 // pred_check
        _
      $region10: #{wave_unpool.1} parent=5 // pred_check_branch
        %213 = sbr.rel (%p210) target = $region12
      $region11: #{wave_unpool.1} parent=5 // pred_region
        %s214 = ssub.s32 %s20, 1
      $region12: #{wave_unpool.1} parent=5 // pred_fallthru
        _
      %p215 = scmp.lt.s32.totalorder %s20, 8
      // Predicated region
      $region13: #{wave_unpool.1} parent=5 // pred_check
        %p216 = pneg %p215
      $region14: #{wave_unpool.1} parent=5 // pred_check_branch
        %218 = sbr.rel (%p216) target = $region16
      $region15: #{wave_unpool.1} parent=5 // pred_region
        // Predicated region
        $region17: #{wave_unpool.1} parent=15 // pred_check
          %p219 = pneg %p54
        $region18: #{wave_unpool.1} parent=15 // pred_check_branch
          %221 = sbr.rel (%p219) target = $region20
        $region19: #{wave_unpool.1} parent=15 // pred_region
          %s222 = sand.u32 %s44, 1
          %s223 = scalar_lea.sflag [#allocation3], %s222
          %s224 = sand.u32 %s44, 1
          %s225 = smul.addr %s224, 32
          %s226 = scalar_lea.vmem [#allocation2], %s225
          %s227 = smul.u32 4, %s28
          %229 = vsyncadd %s223, 0
          %s230 = smul.addr %s27, 16
          %s231 = sadd.s32 %s227, %s230
          %s232 = smul.addr %s231, 8
          %s233 = scalar_lea.hbm %s0, %s232
          %s234 = sshll.u32 %s233, 4
          %s235 = int_to_ptr.hbm [resolvable:$true] %s234
          %s236 = sshll.u32 %s226, 4
          %s237 = int_to_ptr.vmem [resolvable:$true] %s236
          %242 = dma.hbm_to_vmem [thread:$0]  %s235, 512, %s237, %s223, 128, 128, 8
        $region20: #{wave_unpool.1} parent=15 // pred_fallthru
          _
        // Predicated region
        $region21: #{wave_unpool.1} parent=15 // pred_check
          %p243 = pneg %p82
        $region22: #{wave_unpool.1} parent=15 // pred_check_branch
          %245 = sbr.rel (%p243) target = $region24
        $region23: #{wave_unpool.1} parent=15 // pred_region
          %s246 = sand.u32 %s20, 1
          %s247 = scalar_lea.sflag [#allocation5], %s246
          %s248 = sand.u32 %s72, 1
          %s249 = smul.addr %s248, 32
          %s250 = scalar_lea.vmem [#allocation4], %s249
          %s251 = smul.u32 4, %s28
          %253 = vsyncadd %s247, 0
          %s254 = smul.addr %s27, 16
          %s255 = sadd.s32 %s251, %s254
          %s256 = smul.addr %s255, 8
          %s257 = scalar_lea.hbm %s1, %s256
          %s258 = sshll.u32 %s257, 4
          %s259 = int_to_ptr.hbm [resolvable:$true] %s258
          %s260 = sshll.u32 %s250, 4
          %s261 = int_to_ptr.vmem [resolvable:$true] %s260
          %266 = dma.hbm_to_vmem [thread:$0]  %s259, 512, %s261, %s247, 128, 128, 8
        $region24: #{wave_unpool.1} parent=15 // pred_fallthru
          _
        // Predicated region
        $region25: #{wave_unpool.1} parent=15 // pred_check
          %p267 = pneg %p110
        $region26: #{wave_unpool.1} parent=15 // pred_check_branch
          %269 = sbr.rel (%p267) target = $region28
        $region27: #{wave_unpool.1} parent=15 // pred_region
          %s270 = sand.u32 %s20, 1
          %s271 = scalar_lea.sflag [#allocation5], %s270
          %s272 = sand.u32 %s100, 1
          %s273 = smul.addr %s272, 32
          %s274 = scalar_lea.vmem [#allocation6], %s273
          %s275 = smul.u32 4, %s28
          %277 = vsyncadd %s271, 0
          %s278 = smul.addr %s27, 16
          %s279 = sadd.s32 %s275, %s278
          %s280 = smul.addr %s279, 8
          %s281 = scalar_lea.hbm %s2, %s280
          %s282 = sshll.u32 %s281, 4
          %s283 = int_to_ptr.hbm [resolvable:$true] %s282
          %s284 = sshll.u32 %s274, 4
          %s285 = int_to_ptr.vmem [resolvable:$true] %s284
          %290 = dma.hbm_to_vmem [thread:$0]  %s283, 512, %s285, %s271, 128, 128, 8
        $region28: #{wave_unpool.1} parent=15 // pred_fallthru
          _
        // Predicated region
        $region29: #{wave_unpool.1} parent=15 // pred_check
          %p291 = pneg %p138
        $region30: #{wave_unpool.1} parent=15 // pred_check_branch
          %293 = sbr.rel (%p291) target = $region32
        $region31: #{wave_unpool.1} parent=15 // pred_region
          %s294 = sand.u32 %s128, 1
          %s295 = scalar_lea.sflag [#allocation8], %s294
          %s296 = sand.u32 %s128, 1
          %s297 = smul.addr %s296, 32
          %s298 = scalar_lea.vmem [#allocation7], %s297
          %s299 = smul.u32 4, %s28
          %301 = vsyncadd %s295, 0
          %s302 = smul.addr %s27, 16
          %s303 = sadd.s32 %s299, %s302
          %s304 = smul.addr %s303, 8
          %s305 = scalar_lea.hbm %s3, %s304
          %s306 = sshll.u32 %s305, 4
          %s307 = int_to_ptr.hbm [resolvable:$true] %s306
          %s308 = sshll.u32 %s298, 4
          %s309 = int_to_ptr.vmem [resolvable:$true] %s308
          %314 = dma.hbm_to_vmem [thread:$0]  %s307, 512, %s309, %s295, 128, 128, 8
        $region32: #{wave_unpool.1} parent=15 // pred_fallthru
          _
        // Predicated region
        $region33: #{wave_unpool.1} parent=15 // pred_check
          %p315 = pneg %p166
        $region34: #{wave_unpool.1} parent=15 // pred_check_branch
          %317 = sbr.rel (%p315) target = $region36
        $region35: #{wave_unpool.1} parent=15 // pred_region
          %s318 = smul.u32 4, %s28
          %p319 = scmp.lt.s32.totalorder %s27, 1
          %s320 = scalar_select %p319, %s27, 1
          %p321 = scmp.lt.s32.totalorder %s318, 15
          %s322 = scalar_select %p321, %s318, 15
          %s323 = smul.addr %s320, 16
          %s324 = sadd.s32 %s322, %s323
          %s325 = smul.addr %s324, 8
          %s326 = scalar_lea.vmem %s4, %s325
          %s327 = smul.u32 4, %s28
        $region36: #{wave_unpool.1} parent=15 // pred_fallthru
          _
      $region16: #{wave_unpool.1} parent=5 // pred_fallthru
        _
      %p328 = scmp.le.s32.totalorder 1, %s20
      %p329 = scmp.lt.s32.totalorder %s20, 9
      %p330 = pnand %p328, %p329
      %p331 = pneg %p330
      // Predicated region
      $region37: #{wave_unpool.1} parent=5 // pred_check
        _
      $region38: #{wave_unpool.1} parent=5 // pred_check_branch
        %333 = sbr.rel (%p330) target = $region40
      $region39: #{wave_unpool.1} parent=5 // pred_region
        %s334 = ssub.s32 %s20, 1
        %s335 = sand.u32 %s47, 1
        %s336 = scalar_lea.sflag [#allocation3], %s335
        %s337 = sand.u32 %s47, 1
        %s338 = smul.addr %s337, 32
        %s339 = scalar_lea.vmem [#allocation2], %s338
        // Predicated region
        $region41: #{wave_unpool.1} parent=39 // pred_check
          %p340 = pneg %p60
        $region42: #{wave_unpool.1} parent=39 // pred_check_branch
          %342 = sbr.rel (%p340) target = $region44
        $region43: #{wave_unpool.1} parent=39 // pred_region
          %344 = dma.done %s336, 512
        $region44: #{wave_unpool.1} parent=39 // pred_fallthru
          _
        %s345 = sand.u32 %s25, 1
        %s346 = scalar_lea.sflag [#allocation5], %s345
        %s347 = sand.u32 %s75, 1
        %s348 = smul.addr %s347, 32
        %s349 = scalar_lea.vmem [#allocation4], %s348
        // Predicated region
        $region45: #{wave_unpool.1} parent=39 // pred_check
          %p350 = pneg %p88
        $region46: #{wave_unpool.1} parent=39 // pred_check_branch
          %352 = sbr.rel (%p350) target = $region48
        $region47: #{wave_unpool.1} parent=39 // pred_region
          %354 = dma.done %s346, 512
        $region48: #{wave_unpool.1} parent=39 // pred_fallthru
          _
        %s355 = sand.u32 %s25, 1
        %s356 = scalar_lea.sflag [#allocation5], %s355
        %s357 = sand.u32 %s103, 1
        %s358 = smul.addr %s357, 32
        %s359 = scalar_lea.vmem [#allocation6], %s358
        // Predicated region
        $region49: #{wave_unpool.1} parent=39 // pred_check
          %p360 = pneg %p116
        $region50: #{wave_unpool.1} parent=39 // pred_check_branch
          %362 = sbr.rel (%p360) target = $region52
        $region51: #{wave_unpool.1} parent=39 // pred_region
          %364 = dma.done %s356, 512
        $region52: #{wave_unpool.1} parent=39 // pred_fallthru
          _
        %s365 = sand.u32 %s131, 1
        %s366 = scalar_lea.sflag [#allocation8], %s365
        %s367 = sand.u32 %s131, 1
        %s368 = smul.addr %s367, 32
        %s369 = scalar_lea.vmem [#allocation7], %s368
        // Predicated region
        $region53: #{wave_unpool.1} parent=39 // pred_check
          %p370 = pneg %p144
        $region54: #{wave_unpool.1} parent=39 // pred_check_branch
          %372 = sbr.rel (%p370) target = $region56
        $region55: #{wave_unpool.1} parent=39 // pred_region
          %374 = dma.done %s366, 512
        $region56: #{wave_unpool.1} parent=39 // pred_fallthru
          _
        %s375 = sand.u32 %s47, 1
        %s376 = scalar_lea.sflag [#allocation3], %s375
        %s377 = sand.u32 %s47, 1
        %s378 = smul.addr %s377, 32
        %s379 = scalar_lea.vmem [#allocation2], %s378
        %p380 = pneg %p60
        %p381 = pneg %p57
        %s382 = sand.u32 %s25, 1
        %s383 = scalar_lea.sflag [#allocation5], %s382
        %s384 = sand.u32 %s75, 1
        %s385 = smul.addr %s384, 32
        %s386 = scalar_lea.vmem [#allocation4], %s385
        %p387 = pneg %p88
        %p388 = pneg %p85
        %s389 = sand.u32 %s25, 1
        %s390 = scalar_lea.sflag [#allocation5], %s389
        %s391 = sand.u32 %s103, 1
        %s392 = smul.addr %s391, 32
        %s393 = scalar_lea.vmem [#allocation6], %s392
        %p394 = pneg %p116
        %p395 = pneg %p113
        %s396 = sand.u32 %s131, 1
        %s397 = scalar_lea.sflag [#allocation8], %s396
        %s398 = sand.u32 %s131, 1
        %s399 = smul.addr %s398, 32
        %s400 = scalar_lea.vmem [#allocation7], %s399
        %p401 = pneg %p144
        %p402 = pneg %p141
        %s403 = smul.u32 4, %s30
        %p404 = scmp.lt.s32.totalorder %s29, 1
        %s405 = scalar_select %p404, %s29, 1
        %p406 = scmp.lt.s32.totalorder %s403, 15
        %s407 = scalar_select %p406, %s403, 15
        %s408 = smul.addr %s405, 16
        %s409 = sadd.s32 %s407, %s408
        %s410 = smul.addr %s409, 8
        %s411 = scalar_lea.vmem %s4, %s410
        %p412 = pneg %p172
        %p413 = pneg %p169
        %p414 = pneg %p200
        %p415 = pneg %p197
        %s416 = sand.u32 %s187, 1
        %s417 = sand.u32 %s187, 1
        %s418 = smul.addr %s417, 160
        %s419 = scalar_lea.vmem [#allocation9], %s418
        %s420 = smul.u32 4, %s30
        %s421 = smul.u32 4, %s30
        %s422 = smul.u32 4, %s30
        %s423 = smul.u32 4, %s30
        %s424 = smul.u32 4, %s30
        %p425 = scmp.lt.s32.totalorder %s29, 1
        %s426 = scalar_select %p425, %s29, 1
        %p427 = scmp.lt.s32.totalorder %s424, 15
        %s428 = scalar_select %p427, %s424, 15
        %s429 = smul.addr %s426, 16
        %s430 = sadd.s32 %s428, %s429
        %s431 = smul.addr %s430, 8
        %s432 = scalar_lea.vmem %s4, %s431
        %s433 = smul.u32 4, %s30
        %s434 = smul.u32 4, %s30
        %v435 = vld [vmem:[%s339] sm:$0xff]
        %v436 = vld [vmem:[%s339 + $0x8] sm:$0xff]
        %v437 = vld [vmem:[%s339 + $0x10] sm:$0xff]
        %v438 = vld [vmem:[%s339 + $0x18] sm:$0xff]
        %v439 = vmul.f32 %v435, 0.5
        %v440 = vmul.f32 %v436, 0.5
        %v441 = vmul.f32 %v437, 0.5
        %v442 = vmul.f32 %v438, 0.5
        %v443 = vperm.slane %v439, 0
        %v444 = vlaneseq
        %v445 = vshrl.u32 %v444, 7
        %447 = vset.pattern.permute.xlu0 %v445
        %448 = vperm.xlu0 %447, %v443
        %v449 = vpop.permute.xlu0 %448
        %v450 = vlaneseq
        %v451 = vshrl.u32 %v450, 7
        %v452 = vadd.s32 %v451, 8
        %453 = vset.pattern.permute.xlu0 %v452
        %454 = vperm.xlu0 %453, %v443
        %v455 = vpop.permute.xlu0 %454
        %v456 = vperm.slane %v439, 1
        %v457 = vlaneseq
        %v458 = vshrl.u32 %v457, 7
        %460 = vset.pattern.permute.xlu0 %v458
        %461 = vperm.xlu0 %460, %v456
        %v462 = vpop.permute.xlu0 %461
        %v463 = vlaneseq
        %v464 = vshrl.u32 %v463, 7
        %v465 = vadd.s32 %v464, 8
        %466 = vset.pattern.permute.xlu0 %v465
        %467 = vperm.xlu0 %466, %v456
        %v468 = vpop.permute.xlu0 %467
        %v469 = vperm.slane %v439, 2
        %v470 = vlaneseq
        %v471 = vshrl.u32 %v470, 7
        %473 = vset.pattern.permute.xlu0 %v471
        %474 = vperm.xlu0 %473, %v469
        %v475 = vpop.permute.xlu0 %474
        %v476 = vlaneseq
        %v477 = vshrl.u32 %v476, 7
        %v478 = vadd.s32 %v477, 8
        %479 = vset.pattern.permute.xlu0 %v478
        %480 = vperm.xlu0 %479, %v469
        %v481 = vpop.permute.xlu0 %480
        %v482 = vperm.slane %v439, 3
        %v483 = vlaneseq
        %v484 = vshrl.u32 %v483, 7
        %486 = vset.pattern.permute.xlu0 %v484
        %487 = vperm.xlu0 %486, %v482
        %v488 = vpop.permute.xlu0 %487
        %v489 = vlaneseq
        %v490 = vshrl.u32 %v489, 7
        %v491 = vadd.s32 %v490, 8
        %492 = vset.pattern.permute.xlu0 %v491
        %493 = vperm.xlu0 %492, %v482
        %v494 = vpop.permute.xlu0 %493
        %v495 = vperm.slane %v439, 4
        %v496 = vlaneseq
        %v497 = vshrl.u32 %v496, 7
        %499 = vset.pattern.permute.xlu0 %v497
        %500 = vperm.xlu0 %499, %v495
        %v501 = vpop.permute.xlu0 %500
        %v502 = vlaneseq
        %v503 = vshrl.u32 %v502, 7
        %v504 = vadd.s32 %v503, 8
        %505 = vset.pattern.permute.xlu0 %v504
        %506 = vperm.xlu0 %505, %v495
        %v507 = vpop.permute.xlu0 %506
        %v508 = vperm.slane %v439, 5
        %v509 = vlaneseq
        %v510 = vshrl.u32 %v509, 7
        %512 = vset.pattern.permute.xlu0 %v510
        %513 = vperm.xlu0 %512, %v508
        %v514 = vpop.permute.xlu0 %513
        %v515 = vlaneseq
        %v516 = vshrl.u32 %v515, 7
        %v517 = vadd.s32 %v516, 8
        %518 = vset.pattern.permute.xlu0 %v517
        %519 = vperm.xlu0 %518, %v508
        %v520 = vpop.permute.xlu0 %519
        %v521 = vperm.slane %v439, 6
        %v522 = vlaneseq
        %v523 = vshrl.u32 %v522, 7
        %525 = vset.pattern.permute.xlu0 %v523
        %526 = vperm.xlu0 %525, %v521
        %v527 = vpop.permute.xlu0 %526
        %v528 = vlaneseq
        %v529 = vshrl.u32 %v528, 7
        %v530 = vadd.s32 %v529, 8
        %531 = vset.pattern.permute.xlu0 %v530
        %532 = vperm.xlu0 %531, %v521
        %v533 = vpop.permute.xlu0 %532
        %v534 = vperm.slane %v439, 7
        %v535 = vlaneseq
        %v536 = vshrl.u32 %v535, 7
        %538 = vset.pattern.permute.xlu0 %v536
        %539 = vperm.xlu0 %538, %v534
        %v540 = vpop.permute.xlu0 %539
        %v541 = vlaneseq
        %v542 = vshrl.u32 %v541, 7
        %v543 = vadd.s32 %v542, 8
        %544 = vset.pattern.permute.xlu0 %v543
        %545 = vperm.xlu0 %544, %v534
        %v546 = vpop.permute.xlu0 %545
        %v547 = vperm.slane %v440, 0
        %v548 = vlaneseq
        %v549 = vshrl.u32 %v548, 7
        %551 = vset.pattern.permute.xlu0 %v549
        %552 = vperm.xlu0 %551, %v547
        %v553 = vpop.permute.xlu0 %552
        %v554 = vlaneseq
        %v555 = vshrl.u32 %v554, 7
        %v556 = vadd.s32 %v555, 8
        %557 = vset.pattern.permute.xlu0 %v556
        %558 = vperm.xlu0 %557, %v547
        %v559 = vpop.permute.xlu0 %558
        %v560 = vperm.slane %v440, 1
        %v561 = vlaneseq
        %v562 = vshrl.u32 %v561, 7
        %564 = vset.pattern.permute.xlu0 %v562
        %565 = vperm.xlu0 %564, %v560
        %v566 = vpop.permute.xlu0 %565
        %v567 = vlaneseq
        %v568 = vshrl.u32 %v567, 7
        %v569 = vadd.s32 %v568, 8
        %570 = vset.pattern.permute.xlu0 %v569
        %571 = vperm.xlu0 %570, %v560
        %v572 = vpop.permute.xlu0 %571
        %v573 = vperm.slane %v440, 2
        %v574 = vlaneseq
        %v575 = vshrl.u32 %v574, 7
        %577 = vset.pattern.permute.xlu0 %v575
        %578 = vperm.xlu0 %577, %v573
        %v579 = vpop.permute.xlu0 %578
        %v580 = vlaneseq
        %v581 = vshrl.u32 %v580, 7
        %v582 = vadd.s32 %v581, 8
        %583 = vset.pattern.permute.xlu0 %v582
        %584 = vperm.xlu0 %583, %v573
        %v585 = vpop.permute.xlu0 %584
        %v586 = vperm.slane %v440, 3
        %v587 = vlaneseq
        %v588 = vshrl.u32 %v587, 7
        %590 = vset.pattern.permute.xlu0 %v588
        %591 = vperm.xlu0 %590, %v586
        %v592 = vpop.permute.xlu0 %591
        %v593 = vlaneseq
        %v594 = vshrl.u32 %v593, 7
        %v595 = vadd.s32 %v594, 8
        %596 = vset.pattern.permute.xlu0 %v595
        %597 = vperm.xlu0 %596, %v586
        %v598 = vpop.permute.xlu0 %597
        %v599 = vperm.slane %v440, 4
        %v600 = vlaneseq
        %v601 = vshrl.u32 %v600, 7
        %603 = vset.pattern.permute.xlu0 %v601
        %604 = vperm.xlu0 %603, %v599
        %v605 = vpop.permute.xlu0 %604
        %v606 = vlaneseq
        %v607 = vshrl.u32 %v606, 7
        %v608 = vadd.s32 %v607, 8
        %609 = vset.pattern.permute.xlu0 %v608
        %610 = vperm.xlu0 %609, %v599
        %v611 = vpop.permute.xlu0 %610
        %v612 = vperm.slane %v440, 5
        %v613 = vlaneseq
        %v614 = vshrl.u32 %v613, 7
        %616 = vset.pattern.permute.xlu0 %v614
        %617 = vperm.xlu0 %616, %v612
        %v618 = vpop.permute.xlu0 %617
        %v619 = vlaneseq
        %v620 = vshrl.u32 %v619, 7
        %v621 = vadd.s32 %v620, 8
        %622 = vset.pattern.permute.xlu0 %v621
        %623 = vperm.xlu0 %622, %v612
        %v624 = vpop.permute.xlu0 %623
        %v625 = vperm.slane %v440, 6
        %v626 = vlaneseq
        %v627 = vshrl.u32 %v626, 7
        %629 = vset.pattern.permute.xlu0 %v627
        %630 = vperm.xlu0 %629, %v625
        %v631 = vpop.permute.xlu0 %630
        %v632 = vlaneseq
        %v633 = vshrl.u32 %v632, 7
        %v634 = vadd.s32 %v633, 8
        %635 = vset.pattern.permute.xlu0 %v634
        %636 = vperm.xlu0 %635, %v625
        %v637 = vpop.permute.xlu0 %636
        %v638 = vperm.slane %v440, 7
        %v639 = vlaneseq
        %v640 = vshrl.u32 %v639, 7
        %642 = vset.pattern.permute.xlu0 %v640
        %643 = vperm.xlu0 %642, %v638
        %v644 = vpop.permute.xlu0 %643
        %v645 = vlaneseq
        %v646 = vshrl.u32 %v645, 7
        %v647 = vadd.s32 %v646, 8
        %648 = vset.pattern.permute.xlu0 %v647
        %649 = vperm.xlu0 %648, %v638
        %v650 = vpop.permute.xlu0 %649
        %v651 = vperm.slane %v441, 0
        %v652 = vlaneseq
        %v653 = vshrl.u32 %v652, 7
        %655 = vset.pattern.permute.xlu0 %v653
        %656 = vperm.xlu0 %655, %v651
        %v657 = vpop.permute.xlu0 %656
        %v658 = vlaneseq
        %v659 = vshrl.u32 %v658, 7
        %v660 = vadd.s32 %v659, 8
        %661 = vset.pattern.permute.xlu0 %v660
        %662 = vperm.xlu0 %661, %v651
        %v663 = vpop.permute.xlu0 %662
        %v664 = vperm.slane %v441, 1
        %v665 = vlaneseq
        %v666 = vshrl.u32 %v665, 7
        %668 = vset.pattern.permute.xlu0 %v666
        %669 = vperm.xlu0 %668, %v664
        %v670 = vpop.permute.xlu0 %669
        %v671 = vlaneseq
        %v672 = vshrl.u32 %v671, 7
        %v673 = vadd.s32 %v672, 8
        %674 = vset.pattern.permute.xlu0 %v673
        %675 = vperm.xlu0 %674, %v664
        %v676 = vpop.permute.xlu0 %675
        %v677 = vperm.slane %v441, 2
        %v678 = vlaneseq
        %v679 = vshrl.u32 %v678, 7
        %681 = vset.pattern.permute.xlu0 %v679
        %682 = vperm.xlu0 %681, %v677
        %v683 = vpop.permute.xlu0 %682
        %v684 = vlaneseq
        %v685 = vshrl.u32 %v684, 7
        %v686 = vadd.s32 %v685, 8
        %687 = vset.pattern.permute.xlu0 %v686
        %688 = vperm.xlu0 %687, %v677
        %v689 = vpop.permute.xlu0 %688
        %v690 = vperm.slane %v441, 3
        %v691 = vlaneseq
        %v692 = vshrl.u32 %v691, 7
        %694 = vset.pattern.permute.xlu0 %v692
        %695 = vperm.xlu0 %694, %v690
        %v696 = vpop.permute.xlu0 %695
        %v697 = vlaneseq
        %v698 = vshrl.u32 %v697, 7
        %v699 = vadd.s32 %v698, 8
        %700 = vset.pattern.permute.xlu0 %v699
        %701 = vperm.xlu0 %700, %v690
        %v702 = vpop.permute.xlu0 %701
        %v703 = vperm.slane %v441, 4
        %v704 = vlaneseq
        %v705 = vshrl.u32 %v704, 7
        %707 = vset.pattern.permute.xlu0 %v705
        %708 = vperm.xlu0 %707, %v703
        %v709 = vpop.permute.xlu0 %708
        %v710 = vlaneseq
        %v711 = vshrl.u32 %v710, 7
        %v712 = vadd.s32 %v711, 8
        %713 = vset.pattern.permute.xlu0 %v712
        %714 = vperm.xlu0 %713, %v703
        %v715 = vpop.permute.xlu0 %714
        %v716 = vperm.slane %v441, 5
        %v717 = vlaneseq
        %v718 = vshrl.u32 %v717, 7
        %720 = vset.pattern.permute.xlu0 %v718
        %721 = vperm.xlu0 %720, %v716
        %v722 = vpop.permute.xlu0 %721
        %v723 = vlaneseq
        %v724 = vshrl.u32 %v723, 7
        %v725 = vadd.s32 %v724, 8
        %726 = vset.pattern.permute.xlu0 %v725
        %727 = vperm.xlu0 %726, %v716
        %v728 = vpop.permute.xlu0 %727
        %v729 = vperm.slane %v441, 6
        %v730 = vlaneseq
        %v731 = vshrl.u32 %v730, 7
        %733 = vset.pattern.permute.xlu0 %v731
        %734 = vperm.xlu0 %733, %v729
        %v735 = vpop.permute.xlu0 %734
        %v736 = vlaneseq
        %v737 = vshrl.u32 %v736, 7
        %v738 = vadd.s32 %v737, 8
        %739 = vset.pattern.permute.xlu0 %v738
        %740 = vperm.xlu0 %739, %v729
        %v741 = vpop.permute.xlu0 %740
        %v742 = vperm.slane %v441, 7
        %v743 = vlaneseq
        %v744 = vshrl.u32 %v743, 7
        %746 = vset.pattern.permute.xlu0 %v744
        %747 = vperm.xlu0 %746, %v742
        %v748 = vpop.permute.xlu0 %747
        %v749 = vlaneseq
        %v750 = vshrl.u32 %v749, 7
        %v751 = vadd.s32 %v750, 8
        %752 = vset.pattern.permute.xlu0 %v751
        %753 = vperm.xlu0 %752, %v742
        %v754 = vpop.permute.xlu0 %753
        %v755 = vperm.slane %v442, 0
        %v756 = vlaneseq
        %v757 = vshrl.u32 %v756, 7
        %759 = vset.pattern.permute.xlu0 %v757
        %760 = vperm.xlu0 %759, %v755
        %v761 = vpop.permute.xlu0 %760
        %v762 = vlaneseq
        %v763 = vshrl.u32 %v762, 7
        %v764 = vadd.s32 %v763, 8
        %765 = vset.pattern.permute.xlu0 %v764
        %766 = vperm.xlu0 %765, %v755
        %v767 = vpop.permute.xlu0 %766
        %v768 = vperm.slane %v442, 1
        %v769 = vlaneseq
        %v770 = vshrl.u32 %v769, 7
        %772 = vset.pattern.permute.xlu0 %v770
        %773 = vperm.xlu0 %772, %v768
        %v774 = vpop.permute.xlu0 %773
        %v775 = vlaneseq
        %v776 = vshrl.u32 %v775, 7
        %v777 = vadd.s32 %v776, 8
        %778 = vset.pattern.permute.xlu0 %v777
        %779 = vperm.xlu0 %778, %v768
        %v780 = vpop.permute.xlu0 %779
        %v781 = vperm.slane %v442, 2
        %v782 = vlaneseq
        %v783 = vshrl.u32 %v782, 7
        %785 = vset.pattern.permute.xlu0 %v783
        %786 = vperm.xlu0 %785, %v781
        %v787 = vpop.permute.xlu0 %786
        %v788 = vlaneseq
        %v789 = vshrl.u32 %v788, 7
        %v790 = vadd.s32 %v789, 8
        %791 = vset.pattern.permute.xlu0 %v790
        %792 = vperm.xlu0 %791, %v781
        %v793 = vpop.permute.xlu0 %792
        %v794 = vperm.slane %v442, 3
        %v795 = vlaneseq
        %v796 = vshrl.u32 %v795, 7
        %798 = vset.pattern.permute.xlu0 %v796
        %799 = vperm.xlu0 %798, %v794
        %v800 = vpop.permute.xlu0 %799
        %v801 = vlaneseq
        %v802 = vshrl.u32 %v801, 7
        %v803 = vadd.s32 %v802, 8
        %804 = vset.pattern.permute.xlu0 %v803
        %805 = vperm.xlu0 %804, %v794
        %v806 = vpop.permute.xlu0 %805
        %v807 = vperm.slane %v442, 4
        %v808 = vlaneseq
        %v809 = vshrl.u32 %v808, 7
        %811 = vset.pattern.permute.xlu0 %v809
        %812 = vperm.xlu0 %811, %v807
        %v813 = vpop.permute.xlu0 %812
        %v814 = vlaneseq
        %v815 = vshrl.u32 %v814, 7
        %v816 = vadd.s32 %v815, 8
        %817 = vset.pattern.permute.xlu0 %v816
        %818 = vperm.xlu0 %817, %v807
        %v819 = vpop.permute.xlu0 %818
        %v820 = vperm.slane %v442, 5
        %v821 = vlaneseq
        %v822 = vshrl.u32 %v821, 7
        %824 = vset.pattern.permute.xlu0 %v822
        %825 = vperm.xlu0 %824, %v820
        %v826 = vpop.permute.xlu0 %825
        %v827 = vlaneseq
        %v828 = vshrl.u32 %v827, 7
        %v829 = vadd.s32 %v828, 8
        %830 = vset.pattern.permute.xlu0 %v829
        %831 = vperm.xlu0 %830, %v820
        %v832 = vpop.permute.xlu0 %831
        %v833 = vperm.slane %v442, 6
        %v834 = vlaneseq
        %v835 = vshrl.u32 %v834, 7
        %837 = vset.pattern.permute.xlu0 %v835
        %838 = vperm.xlu0 %837, %v833
        %v839 = vpop.permute.xlu0 %838
        %v840 = vlaneseq
        %v841 = vshrl.u32 %v840, 7
        %v842 = vadd.s32 %v841, 8
        %843 = vset.pattern.permute.xlu0 %v842
        %844 = vperm.xlu0 %843, %v833
        %v845 = vpop.permute.xlu0 %844
        %v846 = vperm.slane %v442, 7
        %v847 = vlaneseq
        %v848 = vshrl.u32 %v847, 7
        %850 = vset.pattern.permute.xlu0 %v848
        %851 = vperm.xlu0 %850, %v846
        %v852 = vpop.permute.xlu0 %851
        %v853 = vlaneseq
        %v854 = vshrl.u32 %v853, 7
        %v855 = vadd.s32 %v854, 8
        %856 = vset.pattern.permute.xlu0 %v855
        %857 = vperm.xlu0 %856, %v846
        %v858 = vpop.permute.xlu0 %857
        %v859 = vrot.slane %v475, 4
        %vm860 = vcmask 1047556
        %v861 = vsel %vm860, %v859, %v449
        %v862 = vrot.slane %v449, 4
        %v863 = vsel %vm860, %v475, %v862
        %v865 = vunpack.c.l.s4 1983009808
        %v866 = vunpack.c.0.s8 %v865
        %v867 = vperm.slane %v861, %v866
        %v869 = vunpack.c.l.s4 1983009808
        %v870 = vunpack.c.0.s8 %v869
        %v871 = vperm.slane %v863, %v870
        %v872 = vrot.slane %v488, 4
        %v873 = vsel %vm860, %v872, %v462
        %v874 = vrot.slane %v462, 4
        %v875 = vsel %vm860, %v488, %v874
        %v877 = vunpack.c.l.s4 1983009808
        %v878 = vunpack.c.0.s8 %v877
        %v879 = vperm.slane %v873, %v878
        %v881 = vunpack.c.l.s4 1983009808
        %v882 = vunpack.c.0.s8 %v881
        %v883 = vperm.slane %v875, %v882
        %v884 = vrot.slane %v527, 4
        %v885 = vsel %vm860, %v884, %v501
        %v886 = vrot.slane %v501, 4
        %v887 = vsel %vm860, %v527, %v886
        %v889 = vunpack.c.l.s4 1983009808
        %v890 = vunpack.c.0.s8 %v889
        %v891 = vperm.slane %v885, %v890
        %v893 = vunpack.c.l.s4 1983009808
        %v894 = vunpack.c.0.s8 %v893
        %v895 = vperm.slane %v887, %v894
        %v896 = vrot.slane %v540, 4
        %v897 = vsel %vm860, %v896, %v514
        %v898 = vrot.slane %v514, 4
        %v899 = vsel %vm860, %v540, %v898
        %v901 = vunpack.c.l.s4 1983009808
        %v902 = vunpack.c.0.s8 %v901
        %v903 = vperm.slane %v897, %v902
        %v905 = vunpack.c.l.s4 1983009808
        %v906 = vunpack.c.0.s8 %v905
        %v907 = vperm.slane %v899, %v906
        %v908 = vrot.slane %v879, 4
        %v909 = vsel %vm860, %v908, %v867
        %v910 = vrot.slane %v867, 4
        %v911 = vsel %vm860, %v879, %v910
        %v913 = vunpack.c.l.s4 1934713408
        %v914 = vunpack.c.0.s8 %v913
        %v915 = vperm.slane %v909, %v914
        %v917 = vunpack.c.l.s4 1934713408
        %v918 = vunpack.c.0.s8 %v917
        %v919 = vperm.slane %v911, %v918
        %v920 = vrot.slane %v883, 4
        %v921 = vsel %vm860, %v920, %v871
        %v922 = vrot.slane %v871, 4
        %v923 = vsel %vm860, %v883, %v922
        %v925 = vunpack.c.l.s4 1934713408
        %v926 = vunpack.c.0.s8 %v925
        %v927 = vperm.slane %v921, %v926
        %v929 = vunpack.c.l.s4 1934713408
        %v930 = vunpack.c.0.s8 %v929
        %v931 = vperm.slane %v923, %v930
        %v932 = vrot.slane %v903, 4
        %v933 = vsel %vm860, %v932, %v891
        %v934 = vrot.slane %v891, 4
        %v935 = vsel %vm860, %v903, %v934
        %v937 = vunpack.c.l.s4 1934713408
        %v938 = vunpack.c.0.s8 %v937
        %v939 = vperm.slane %v933, %v938
        %v941 = vunpack.c.l.s4 1934713408
        %v942 = vunpack.c.0.s8 %v941
        %v943 = vperm.slane %v935, %v942
        %v944 = vrot.slane %v907, 4
        %v945 = vsel %vm860, %v944, %v895
        %v946 = vrot.slane %v895, 4
        %v947 = vsel %vm860, %v907, %v946
        %v949 = vunpack.c.l.s4 1934713408
        %v950 = vunpack.c.0.s8 %v949
        %v951 = vperm.slane %v945, %v950
        %v953 = vunpack.c.l.s4 1934713408
        %v954 = vunpack.c.0.s8 %v953
        %v955 = vperm.slane %v947, %v954
        %v956 = vrot.slane %v939, 4
        %v957 = vsel %vm860, %v956, %v915
        %v958 = vrot.slane %v915, 4
        %v959 = vsel %vm860, %v939, %v958
        %v960 = vrot.slane %v943, 4
        %v961 = vsel %vm860, %v960, %v919
        %v962 = vrot.slane %v919, 4
        %v963 = vsel %vm860, %v943, %v962
        %v964 = vrot.slane %v951, 4
        %v965 = vsel %vm860, %v964, %v927
        %v966 = vrot.slane %v927, 4
        %v967 = vsel %vm860, %v951, %v966
        %v968 = vrot.slane %v955, 4
        %v969 = vsel %vm860, %v968, %v931
        %v970 = vrot.slane %v931, 4
        %v971 = vsel %vm860, %v955, %v970
        %v972 = vrot.slane %v579, 4
        %v973 = vsel %vm860, %v972, %v553
        %v974 = vrot.slane %v553, 4
        %v975 = vsel %vm860, %v579, %v974
        %v977 = vunpack.c.l.s4 1983009808
        %v978 = vunpack.c.0.s8 %v977
        %v979 = vperm.slane %v973, %v978
        %v981 = vunpack.c.l.s4 1983009808
        %v982 = vunpack.c.0.s8 %v981
        %v983 = vperm.slane %v975, %v982
        %v984 = vrot.slane %v592, 4
        %v985 = vsel %vm860, %v984, %v566
        %v986 = vrot.slane %v566, 4
        %v987 = vsel %vm860, %v592, %v986
        %v989 = vunpack.c.l.s4 1983009808
        %v990 = vunpack.c.0.s8 %v989
        %v991 = vperm.slane %v985, %v990
        %v993 = vunpack.c.l.s4 1983009808
        %v994 = vunpack.c.0.s8 %v993
        %v995 = vperm.slane %v987, %v994
        %v996 = vrot.slane %v631, 4
        %v997 = vsel %vm860, %v996, %v605
        %v998 = vrot.slane %v605, 4
        %v999 = vsel %vm860, %v631, %v998
        %v1001 = vunpack.c.l.s4 1983009808
        %v1002 = vunpack.c.0.s8 %v1001
        %v1003 = vperm.slane %v997, %v1002
        %v1005 = vunpack.c.l.s4 1983009808
        %v1006 = vunpack.c.0.s8 %v1005
        %v1007 = vperm.slane %v999, %v1006
        %v1008 = vrot.slane %v644, 4
        %v1009 = vsel %vm860, %v1008, %v618
        %v1010 = vrot.slane %v618, 4
        %v1011 = vsel %vm860, %v644, %v1010
        %v1013 = vunpack.c.l.s4 1983009808
        %v1014 = vunpack.c.0.s8 %v1013
        %v1015 = vperm.slane %v1009, %v1014
        %v1017 = vunpack.c.l.s4 1983009808
        %v1018 = vunpack.c.0.s8 %v1017
        %v1019 = vperm.slane %v1011, %v1018
        %v1020 = vrot.slane %v991, 4
        %v1021 = vsel %vm860, %v1020, %v979
        %v1022 = vrot.slane %v979, 4
        %v1023 = vsel %vm860, %v991, %v1022
        %v1025 = vunpack.c.l.s4 1934713408
        %v1026 = vunpack.c.0.s8 %v1025
        %v1027 = vperm.slane %v1021, %v1026
        %v1029 = vunpack.c.l.s4 1934713408
        %v1030 = vunpack.c.0.s8 %v1029
        %v1031 = vperm.slane %v1023, %v1030
        %v1032 = vrot.slane %v995, 4
        %v1033 = vsel %vm860, %v1032, %v983
        %v1034 = vrot.slane %v983, 4
        %v1035 = vsel %vm860, %v995, %v1034
        %v1037 = vunpack.c.l.s4 1934713408
        %v1038 = vunpack.c.0.s8 %v1037
        %v1039 = vperm.slane %v1033, %v1038
        %v1041 = vunpack.c.l.s4 1934713408
        %v1042 = vunpack.c.0.s8 %v1041
        %v1043 = vperm.slane %v1035, %v1042
        %v1044 = vrot.slane %v1015, 4
        %v1045 = vsel %vm860, %v1044, %v1003
        %v1046 = vrot.slane %v1003, 4
        %v1047 = vsel %vm860, %v1015, %v1046
        %v1049 = vunpack.c.l.s4 1934713408
        %v1050 = vunpack.c.0.s8 %v1049
        %v1051 = vperm.slane %v1045, %v1050
        %v1053 = vunpack.c.l.s4 1934713408
        %v1054 = vunpack.c.0.s8 %v1053
        %v1055 = vperm.slane %v1047, %v1054
        %v1056 = vrot.slane %v1019, 4
        %v1057 = vsel %vm860, %v1056, %v1007
        %v1058 = vrot.slane %v1007, 4
        %v1059 = vsel %vm860, %v1019, %v1058
        %v1061 = vunpack.c.l.s4 1934713408
        %v1062 = vunpack.c.0.s8 %v1061
        %v1063 = vperm.slane %v1057, %v1062
        %v1065 = vunpack.c.l.s4 1934713408
        %v1066 = vunpack.c.0.s8 %v1065
        %v1067 = vperm.slane %v1059, %v1066
        %v1068 = vrot.slane %v1051, 4
        %v1069 = vsel %vm860, %v1068, %v1027
        %v1070 = vrot.slane %v1027, 4
        %v1071 = vsel %vm860, %v1051, %v1070
        %v1072 = vrot.slane %v1055, 4
        %v1073 = vsel %vm860, %v1072, %v1031
        %v1074 = vrot.slane %v1031, 4
        %v1075 = vsel %vm860, %v1055, %v1074
        %v1076 = vrot.slane %v1063, 4
        %v1077 = vsel %vm860, %v1076, %v1039
        %v1078 = vrot.slane %v1039, 4
        %v1079 = vsel %vm860, %v1063, %v1078
        %v1080 = vrot.slane %v1067, 4
        %v1081 = vsel %vm860, %v1080, %v1043
        %v1082 = vrot.slane %v1043, 4
        %v1083 = vsel %vm860, %v1067, %v1082
        %v1084 = vrot.slane %v683, 4
        %v1085 = vsel %vm860, %v1084, %v657
        %v1086 = vrot.slane %v657, 4
        %v1087 = vsel %vm860, %v683, %v1086
        %v1089 = vunpack.c.l.s4 1983009808
        %v1090 = vunpack.c.0.s8 %v1089
        %v1091 = vperm.slane %v1085, %v1090
        %v1093 = vunpack.c.l.s4 1983009808
        %v1094 = vunpack.c.0.s8 %v1093
        %v1095 = vperm.slane %v1087, %v1094
        %v1096 = vrot.slane %v696, 4
        %v1097 = vsel %vm860, %v1096, %v670
        %v1098 = vrot.slane %v670, 4
        %v1099 = vsel %vm860, %v696, %v1098
        %v1101 = vunpack.c.l.s4 1983009808
        %v1102 = vunpack.c.0.s8 %v1101
        %v1103 = vperm.slane %v1097, %v1102
        %v1105 = vunpack.c.l.s4 1983009808
        %v1106 = vunpack.c.0.s8 %v1105
        %v1107 = vperm.slane %v1099, %v1106
        %v1108 = vrot.slane %v735, 4
        %v1109 = vsel %vm860, %v1108, %v709
        %v1110 = vrot.slane %v709, 4
        %v1111 = vsel %vm860, %v735, %v1110
        %v1113 = vunpack.c.l.s4 1983009808
        %v1114 = vunpack.c.0.s8 %v1113
        %v1115 = vperm.slane %v1109, %v1114
        %v1117 = vunpack.c.l.s4 1983009808
        %v1118 = vunpack.c.0.s8 %v1117
        %v1119 = vperm.slane %v1111, %v1118
        %v1120 = vrot.slane %v748, 4
        %v1121 = vsel %vm860, %v1120, %v722
        %v1122 = vrot.slane %v722, 4
        %v1123 = vsel %vm860, %v748, %v1122
        %v1125 = vunpack.c.l.s4 1983009808
        %v1126 = vunpack.c.0.s8 %v1125
        %v1127 = vperm.slane %v1121, %v1126
        %v1129 = vunpack.c.l.s4 1983009808
        %v1130 = vunpack.c.0.s8 %v1129
        %v1131 = vperm.slane %v1123, %v1130
        %v1132 = vrot.slane %v1103, 4
        %v1133 = vsel %vm860, %v1132, %v1091
        %v1134 = vrot.slane %v1091, 4
        %v1135 = vsel %vm860, %v1103, %v1134
        %v1137 = vunpack.c.l.s4 1934713408
        %v1138 = vunpack.c.0.s8 %v1137
        %v1139 = vperm.slane %v1133, %v1138
        %v1141 = vunpack.c.l.s4 1934713408
        %v1142 = vunpack.c.0.s8 %v1141
        %v1143 = vperm.slane %v1135, %v1142
        %v1144 = vrot.slane %v1107, 4
        %v1145 = vsel %vm860, %v1144, %v1095
        %v1146 = vrot.slane %v1095, 4
        %v1147 = vsel %vm860, %v1107, %v1146
        %v1149 = vunpack.c.l.s4 1934713408
        %v1150 = vunpack.c.0.s8 %v1149
        %v1151 = vperm.slane %v1145, %v1150
        %v1153 = vunpack.c.l.s4 1934713408
        %v1154 = vunpack.c.0.s8 %v1153
        %v1155 = vperm.slane %v1147, %v1154
        %v1156 = vrot.slane %v1127, 4
        %v1157 = vsel %vm860, %v1156, %v1115
        %v1158 = vrot.slane %v1115, 4
        %v1159 = vsel %vm860, %v1127, %v1158
        %v1161 = vunpack.c.l.s4 1934713408
        %v1162 = vunpack.c.0.s8 %v1161
        %v1163 = vperm.slane %v1157, %v1162
        %v1165 = vunpack.c.l.s4 1934713408
        %v1166 = vunpack.c.0.s8 %v1165
        %v1167 = vperm.slane %v1159, %v1166
        %v1168 = vrot.slane %v1131, 4
        %v1169 = vsel %vm860, %v1168, %v1119
        %v1170 = vrot.slane %v1119, 4
        %v1171 = vsel %vm860, %v1131, %v1170
        %v1173 = vunpack.c.l.s4 1934713408
        %v1174 = vunpack.c.0.s8 %v1173
        %v1175 = vperm.slane %v1169, %v1174
        %v1177 = vunpack.c.l.s4 1934713408
        %v1178 = vunpack.c.0.s8 %v1177
        %v1179 = vperm.slane %v1171, %v1178
        %v1180 = vrot.slane %v1163, 4
        %v1181 = vsel %vm860, %v1180, %v1139
        %v1182 = vrot.slane %v1139, 4
        %v1183 = vsel %vm860, %v1163, %v1182
        %v1184 = vrot.slane %v1167, 4
        %v1185 = vsel %vm860, %v1184, %v1143
        %v1186 = vrot.slane %v1143, 4
        %v1187 = vsel %vm860, %v1167, %v1186
        %v1188 = vrot.slane %v1175, 4
        %v1189 = vsel %vm860, %v1188, %v1151
        %v1190 = vrot.slane %v1151, 4
        %v1191 = vsel %vm860, %v1175, %v1190
        %v1192 = vrot.slane %v1179, 4
        %v1193 = vsel %vm860, %v1192, %v1155
        %v1194 = vrot.slane %v1155, 4
        %v1195 = vsel %vm860, %v1179, %v1194
        %v1196 = vrot.slane %v787, 4
        %v1197 = vsel %vm860, %v1196, %v761
        %v1198 = vrot.slane %v761, 4
        %v1199 = vsel %vm860, %v787, %v1198
        %v1201 = vunpack.c.l.s4 1983009808
        %v1202 = vunpack.c.0.s8 %v1201
        %v1203 = vperm.slane %v1197, %v1202
        %v1205 = vunpack.c.l.s4 1983009808
        %v1206 = vunpack.c.0.s8 %v1205
        %v1207 = vperm.slane %v1199, %v1206
        %v1208 = vrot.slane %v800, 4
        %v1209 = vsel %vm860, %v1208, %v774
        %v1210 = vrot.slane %v774, 4
        %v1211 = vsel %vm860, %v800, %v1210
        %v1213 = vunpack.c.l.s4 1983009808
        %v1214 = vunpack.c.0.s8 %v1213
        %v1215 = vperm.slane %v1209, %v1214
        %v1217 = vunpack.c.l.s4 1983009808
        %v1218 = vunpack.c.0.s8 %v1217
        %v1219 = vperm.slane %v1211, %v1218
        %v1220 = vrot.slane %v839, 4
        %v1221 = vsel %vm860, %v1220, %v813
        %v1222 = vrot.slane %v813, 4
        %v1223 = vsel %vm860, %v839, %v1222
        %v1225 = vunpack.c.l.s4 1983009808
        %v1226 = vunpack.c.0.s8 %v1225
        %v1227 = vperm.slane %v1221, %v1226
        %v1229 = vunpack.c.l.s4 1983009808
        %v1230 = vunpack.c.0.s8 %v1229
        %v1231 = vperm.slane %v1223, %v1230
        %v1232 = vrot.slane %v852, 4
        %v1233 = vsel %vm860, %v1232, %v826
        %v1234 = vrot.slane %v826, 4
        %v1235 = vsel %vm860, %v852, %v1234
        %v1237 = vunpack.c.l.s4 1983009808
        %v1238 = vunpack.c.0.s8 %v1237
        %v1239 = vperm.slane %v1233, %v1238
        %v1241 = vunpack.c.l.s4 1983009808
        %v1242 = vunpack.c.0.s8 %v1241
        %v1243 = vperm.slane %v1235, %v1242
        %v1244 = vrot.slane %v1215, 4
        %v1245 = vsel %vm860, %v1244, %v1203
        %v1246 = vrot.slane %v1203, 4
        %v1247 = vsel %vm860, %v1215, %v1246
        %v1249 = vunpack.c.l.s4 1934713408
        %v1250 = vunpack.c.0.s8 %v1249
        %v1251 = vperm.slane %v1245, %v1250
        %v1253 = vunpack.c.l.s4 1934713408
        %v1254 = vunpack.c.0.s8 %v1253
        %v1255 = vperm.slane %v1247, %v1254
        %v1256 = vrot.slane %v1219, 4
        %v1257 = vsel %vm860, %v1256, %v1207
        %v1258 = vrot.slane %v1207, 4
        %v1259 = vsel %vm860, %v1219, %v1258
        %v1261 = vunpack.c.l.s4 1934713408
        %v1262 = vunpack.c.0.s8 %v1261
        %v1263 = vperm.slane %v1257, %v1262
        %v1265 = vunpack.c.l.s4 1934713408
        %v1266 = vunpack.c.0.s8 %v1265
        %v1267 = vperm.slane %v1259, %v1266
        %v1268 = vrot.slane %v1239, 4
        %v1269 = vsel %vm860, %v1268, %v1227
        %v1270 = vrot.slane %v1227, 4
        %v1271 = vsel %vm860, %v1239, %v1270
        %v1273 = vunpack.c.l.s4 1934713408
        %v1274 = vunpack.c.0.s8 %v1273
        %v1275 = vperm.slane %v1269, %v1274
        %v1277 = vunpack.c.l.s4 1934713408
        %v1278 = vunpack.c.0.s8 %v1277
        %v1279 = vperm.slane %v1271, %v1278
        %v1280 = vrot.slane %v1243, 4
        %v1281 = vsel %vm860, %v1280, %v1231
        %v1282 = vrot.slane %v1231, 4
        %v1283 = vsel %vm860, %v1243, %v1282
        %v1285 = vunpack.c.l.s4 1934713408
        %v1286 = vunpack.c.0.s8 %v1285
        %v1287 = vperm.slane %v1281, %v1286
        %v1289 = vunpack.c.l.s4 1934713408
        %v1290 = vunpack.c.0.s8 %v1289
        %v1291 = vperm.slane %v1283, %v1290
        %v1292 = vrot.slane %v1275, 4
        %v1293 = vsel %vm860, %v1292, %v1251
        %v1294 = vrot.slane %v1251, 4
        %v1295 = vsel %vm860, %v1275, %v1294
        %v1296 = vrot.slane %v1279, 4
        %v1297 = vsel %vm860, %v1296, %v1255
        %v1298 = vrot.slane %v1255, 4
        %v1299 = vsel %vm860, %v1279, %v1298
        %v1300 = vrot.slane %v1287, 4
        %v1301 = vsel %vm860, %v1300, %v1263
        %v1302 = vrot.slane %v1263, 4
        %v1303 = vsel %vm860, %v1287, %v1302
        %v1304 = vrot.slane %v1291, 4
        %v1305 = vsel %vm860, %v1304, %v1267
        %v1306 = vrot.slane %v1267, 4
        %v1307 = vsel %vm860, %v1291, %v1306
        %v1308 = vrot.slane %v481, 4
        %v1309 = vsel %vm860, %v1308, %v455
        %v1310 = vrot.slane %v455, 4
        %v1311 = vsel %vm860, %v481, %v1310
        %v1313 = vunpack.c.l.s4 1983009808
        %v1314 = vunpack.c.0.s8 %v1313
        %v1315 = vperm.slane %v1309, %v1314
        %v1317 = vunpack.c.l.s4 1983009808
        %v1318 = vunpack.c.0.s8 %v1317
        %v1319 = vperm.slane %v1311, %v1318
        %v1320 = vrot.slane %v494, 4
        %v1321 = vsel %vm860, %v1320, %v468
        %v1322 = vrot.slane %v468, 4
        %v1323 = vsel %vm860, %v494, %v1322
        %v1325 = vunpack.c.l.s4 1983009808
        %v1326 = vunpack.c.0.s8 %v1325
        %v1327 = vperm.slane %v1321, %v1326
        %v1329 = vunpack.c.l.s4 1983009808
        %v1330 = vunpack.c.0.s8 %v1329
        %v1331 = vperm.slane %v1323, %v1330
        %v1332 = vrot.slane %v533, 4
        %v1333 = vsel %vm860, %v1332, %v507
        %v1334 = vrot.slane %v507, 4
        %v1335 = vsel %vm860, %v533, %v1334
        %v1337 = vunpack.c.l.s4 1983009808
        %v1338 = vunpack.c.0.s8 %v1337
        %v1339 = vperm.slane %v1333, %v1338
        %v1341 = vunpack.c.l.s4 1983009808
        %v1342 = vunpack.c.0.s8 %v1341
        %v1343 = vperm.slane %v1335, %v1342
        %v1344 = vrot.slane %v546, 4
        %v1345 = vsel %vm860, %v1344, %v520
        %v1346 = vrot.slane %v520, 4
        %v1347 = vsel %vm860, %v546, %v1346
        %v1349 = vunpack.c.l.s4 1983009808
        %v1350 = vunpack.c.0.s8 %v1349
        %v1351 = vperm.slane %v1345, %v1350
        %v1353 = vunpack.c.l.s4 1983009808
        %v1354 = vunpack.c.0.s8 %v1353
        %v1355 = vperm.slane %v1347, %v1354
        %v1356 = vrot.slane %v1327, 4
        %v1357 = vsel %vm860, %v1356, %v1315
        %v1358 = vrot.slane %v1315, 4
        %v1359 = vsel %vm860, %v1327, %v1358
        %v1361 = vunpack.c.l.s4 1934713408
        %v1362 = vunpack.c.0.s8 %v1361
        %v1363 = vperm.slane %v1357, %v1362
        %v1365 = vunpack.c.l.s4 1934713408
        %v1366 = vunpack.c.0.s8 %v1365
        %v1367 = vperm.slane %v1359, %v1366
        %v1368 = vrot.slane %v1331, 4
        %v1369 = vsel %vm860, %v1368, %v1319
        %v1370 = vrot.slane %v1319, 4
        %v1371 = vsel %vm860, %v1331, %v1370
        %v1373 = vunpack.c.l.s4 1934713408
        %v1374 = vunpack.c.0.s8 %v1373
        %v1375 = vperm.slane %v1369, %v1374
        %v1377 = vunpack.c.l.s4 1934713408
        %v1378 = vunpack.c.0.s8 %v1377
        %v1379 = vperm.slane %v1371, %v1378
        %v1380 = vrot.slane %v1351, 4
        %v1381 = vsel %vm860, %v1380, %v1339
        %v1382 = vrot.slane %v1339, 4
        %v1383 = vsel %vm860, %v1351, %v1382
        %v1385 = vunpack.c.l.s4 1934713408
        %v1386 = vunpack.c.0.s8 %v1385
        %v1387 = vperm.slane %v1381, %v1386
        %v1389 = vunpack.c.l.s4 1934713408
        %v1390 = vunpack.c.0.s8 %v1389
        %v1391 = vperm.slane %v1383, %v1390
        %v1392 = vrot.slane %v1355, 4
        %v1393 = vsel %vm860, %v1392, %v1343
        %v1394 = vrot.slane %v1343, 4
        %v1395 = vsel %vm860, %v1355, %v1394
        %v1397 = vunpack.c.l.s4 1934713408
        %v1398 = vunpack.c.0.s8 %v1397
        %v1399 = vperm.slane %v1393, %v1398
        %v1401 = vunpack.c.l.s4 1934713408
        %v1402 = vunpack.c.0.s8 %v1401
        %v1403 = vperm.slane %v1395, %v1402
        %v1404 = vrot.slane %v1387, 4
        %v1405 = vsel %vm860, %v1404, %v1363
        %v1406 = vrot.slane %v1363, 4
        %v1407 = vsel %vm860, %v1387, %v1406
        %v1408 = vrot.slane %v1391, 4
        %v1409 = vsel %vm860, %v1408, %v1367
        %v1410 = vrot.slane %v1367, 4
        %v1411 = vsel %vm860, %v1391, %v1410
        %v1412 = vrot.slane %v1399, 4
        %v1413 = vsel %vm860, %v1412, %v1375
        %v1414 = vrot.slane %v1375, 4
        %v1415 = vsel %vm860, %v1399, %v1414
        %v1416 = vrot.slane %v1403, 4
        %v1417 = vsel %vm860, %v1416, %v1379
        %v1418 = vrot.slane %v1379, 4
        %v1419 = vsel %vm860, %v1403, %v1418
        %v1420 = vrot.slane %v585, 4
        %v1421 = vsel %vm860, %v1420, %v559
        %v1422 = vrot.slane %v559, 4
        %v1423 = vsel %vm860, %v585, %v1422
        %v1425 = vunpack.c.l.s4 1983009808
        %v1426 = vunpack.c.0.s8 %v1425
        %v1427 = vperm.slane %v1421, %v1426
        %v1429 = vunpack.c.l.s4 1983009808
        %v1430 = vunpack.c.0.s8 %v1429
        %v1431 = vperm.slane %v1423, %v1430
        %v1432 = vrot.slane %v598, 4
        %v1433 = vsel %vm860, %v1432, %v572
        %v1434 = vrot.slane %v572, 4
        %v1435 = vsel %vm860, %v598, %v1434
        %v1437 = vunpack.c.l.s4 1983009808
        %v1438 = vunpack.c.0.s8 %v1437
        %v1439 = vperm.slane %v1433, %v1438
        %v1441 = vunpack.c.l.s4 1983009808
        %v1442 = vunpack.c.0.s8 %v1441
        %v1443 = vperm.slane %v1435, %v1442
        %v1444 = vrot.slane %v637, 4
        %v1445 = vsel %vm860, %v1444, %v611
        %v1446 = vrot.slane %v611, 4
        %v1447 = vsel %vm860, %v637, %v1446
        %v1449 = vunpack.c.l.s4 1983009808
        %v1450 = vunpack.c.0.s8 %v1449
        %v1451 = vperm.slane %v1445, %v1450
        %v1453 = vunpack.c.l.s4 1983009808
        %v1454 = vunpack.c.0.s8 %v1453
        %v1455 = vperm.slane %v1447, %v1454
        %v1456 = vrot.slane %v650, 4
        %v1457 = vsel %vm860, %v1456, %v624
        %v1458 = vrot.slane %v624, 4
        %v1459 = vsel %vm860, %v650, %v1458
        %v1461 = vunpack.c.l.s4 1983009808
        %v1462 = vunpack.c.0.s8 %v1461
        %v1463 = vperm.slane %v1457, %v1462
        %v1465 = vunpack.c.l.s4 1983009808
        %v1466 = vunpack.c.0.s8 %v1465
        %v1467 = vperm.slane %v1459, %v1466
        %v1468 = vrot.slane %v1439, 4
        %v1469 = vsel %vm860, %v1468, %v1427
        %v1470 = vrot.slane %v1427, 4
        %v1471 = vsel %vm860, %v1439, %v1470
        %v1473 = vunpack.c.l.s4 1934713408
        %v1474 = vunpack.c.0.s8 %v1473
        %v1475 = vperm.slane %v1469, %v1474
        %v1477 = vunpack.c.l.s4 1934713408
        %v1478 = vunpack.c.0.s8 %v1477
        %v1479 = vperm.slane %v1471, %v1478
        %v1480 = vrot.slane %v1443, 4
        %v1481 = vsel %vm860, %v1480, %v1431
        %v1482 = vrot.slane %v1431, 4
        %v1483 = vsel %vm860, %v1443, %v1482
        %v1485 = vunpack.c.l.s4 1934713408
        %v1486 = vunpack.c.0.s8 %v1485
        %v1487 = vperm.slane %v1481, %v1486
        %v1489 = vunpack.c.l.s4 1934713408
        %v1490 = vunpack.c.0.s8 %v1489
        %v1491 = vperm.slane %v1483, %v1490
        %v1492 = vrot.slane %v1463, 4
        %v1493 = vsel %vm860, %v1492, %v1451
        %v1494 = vrot.slane %v1451, 4
        %v1495 = vsel %vm860, %v1463, %v1494
        %v1497 = vunpack.c.l.s4 1934713408
        %v1498 = vunpack.c.0.s8 %v1497
        %v1499 = vperm.slane %v1493, %v1498
        %v1501 = vunpack.c.l.s4 1934713408
        %v1502 = vunpack.c.0.s8 %v1501
        %v1503 = vperm.slane %v1495, %v1502
        %v1504 = vrot.slane %v1467, 4
        %v1505 = vsel %vm860, %v1504, %v1455
        %v1506 = vrot.slane %v1455, 4
        %v1507 = vsel %vm860, %v1467, %v1506
        %v1509 = vunpack.c.l.s4 1934713408
        %v1510 = vunpack.c.0.s8 %v1509
        %v1511 = vperm.slane %v1505, %v1510
        %v1513 = vunpack.c.l.s4 1934713408
        %v1514 = vunpack.c.0.s8 %v1513
        %v1515 = vperm.slane %v1507, %v1514
        %v1516 = vrot.slane %v1499, 4
        %v1517 = vsel %vm860, %v1516, %v1475
        %v1518 = vrot.slane %v1475, 4
        %v1519 = vsel %vm860, %v1499, %v1518
        %v1520 = vrot.slane %v1503, 4
        %v1521 = vsel %vm860, %v1520, %v1479
        %v1522 = vrot.slane %v1479, 4
        %v1523 = vsel %vm860, %v1503, %v1522
        %v1524 = vrot.slane %v1511, 4
        %v1525 = vsel %vm860, %v1524, %v1487
        %v1526 = vrot.slane %v1487, 4
        %v1527 = vsel %vm860, %v1511, %v1526
        %v1528 = vrot.slane %v1515, 4
        %v1529 = vsel %vm860, %v1528, %v1491
        %v1530 = vrot.slane %v1491, 4
        %v1531 = vsel %vm860, %v1515, %v1530
        %v1532 = vrot.slane %v689, 4
        %v1533 = vsel %vm860, %v1532, %v663
        %v1534 = vrot.slane %v663, 4
        %v1535 = vsel %vm860, %v689, %v1534
        %v1537 = vunpack.c.l.s4 1983009808
        %v1538 = vunpack.c.0.s8 %v1537
        %v1539 = vperm.slane %v1533, %v1538
        %v1541 = vunpack.c.l.s4 1983009808
        %v1542 = vunpack.c.0.s8 %v1541
        %v1543 = vperm.slane %v1535, %v1542
        %v1544 = vrot.slane %v702, 4
        %v1545 = vsel %vm860, %v1544, %v676
        %v1546 = vrot.slane %v676, 4
        %v1547 = vsel %vm860, %v702, %v1546
        %v1549 = vunpack.c.l.s4 1983009808
        %v1550 = vunpack.c.0.s8 %v1549
        %v1551 = vperm.slane %v1545, %v1550
        %v1553 = vunpack.c.l.s4 1983009808
        %v1554 = vunpack.c.0.s8 %v1553
        %v1555 = vperm.slane %v1547, %v1554
        %v1556 = vrot.slane %v741, 4
        %v1557 = vsel %vm860, %v1556, %v715
        %v1558 = vrot.slane %v715, 4
        %v1559 = vsel %vm860, %v741, %v1558
        %v1561 = vunpack.c.l.s4 1983009808
        %v1562 = vunpack.c.0.s8 %v1561
        %v1563 = vperm.slane %v1557, %v1562
        %v1565 = vunpack.c.l.s4 1983009808
        %v1566 = vunpack.c.0.s8 %v1565
        %v1567 = vperm.slane %v1559, %v1566
        %v1568 = vrot.slane %v754, 4
        %v1569 = vsel %vm860, %v1568, %v728
        %v1570 = vrot.slane %v728, 4
        %v1571 = vsel %vm860, %v754, %v1570
        %v1573 = vunpack.c.l.s4 1983009808
        %v1574 = vunpack.c.0.s8 %v1573
        %v1575 = vperm.slane %v1569, %v1574
        %v1577 = vunpack.c.l.s4 1983009808
        %v1578 = vunpack.c.0.s8 %v1577
        %v1579 = vperm.slane %v1571, %v1578
        %v1580 = vrot.slane %v1551, 4
        %v1581 = vsel %vm860, %v1580, %v1539
        %v1582 = vrot.slane %v1539, 4
        %v1583 = vsel %vm860, %v1551, %v1582
        %v1585 = vunpack.c.l.s4 1934713408
        %v1586 = vunpack.c.0.s8 %v1585
        %v1587 = vperm.slane %v1581, %v1586
        %v1589 = vunpack.c.l.s4 1934713408
        %v1590 = vunpack.c.0.s8 %v1589
        %v1591 = vperm.slane %v1583, %v1590
        %v1592 = vrot.slane %v1555, 4
        %v1593 = vsel %vm860, %v1592, %v1543
        %v1594 = vrot.slane %v1543, 4
        %v1595 = vsel %vm860, %v1555, %v1594
        %v1597 = vunpack.c.l.s4 1934713408
        %v1598 = vunpack.c.0.s8 %v1597
        %v1599 = vperm.slane %v1593, %v1598
        %v1601 = vunpack.c.l.s4 1934713408
        %v1602 = vunpack.c.0.s8 %v1601
        %v1603 = vperm.slane %v1595, %v1602
        %v1604 = vrot.slane %v1575, 4
        %v1605 = vsel %vm860, %v1604, %v1563
        %v1606 = vrot.slane %v1563, 4
        %v1607 = vsel %vm860, %v1575, %v1606
        %v1609 = vunpack.c.l.s4 1934713408
        %v1610 = vunpack.c.0.s8 %v1609
        %v1611 = vperm.slane %v1605, %v1610
        %v1613 = vunpack.c.l.s4 1934713408
        %v1614 = vunpack.c.0.s8 %v1613
        %v1615 = vperm.slane %v1607, %v1614
        %v1616 = vrot.slane %v1579, 4
        %v1617 = vsel %vm860, %v1616, %v1567
        %v1618 = vrot.slane %v1567, 4
        %v1619 = vsel %vm860, %v1579, %v1618
        %v1621 = vunpack.c.l.s4 1934713408
        %v1622 = vunpack.c.0.s8 %v1621
        %v1623 = vperm.slane %v1617, %v1622
        %v1625 = vunpack.c.l.s4 1934713408
        %v1626 = vunpack.c.0.s8 %v1625
        %v1627 = vperm.slane %v1619, %v1626
        %v1628 = vrot.slane %v1611, 4
        %v1629 = vsel %vm860, %v1628, %v1587
        %v1630 = vrot.slane %v1587, 4
        %v1631 = vsel %vm860, %v1611, %v1630
        %v1632 = vrot.slane %v1615, 4
        %v1633 = vsel %vm860, %v1632, %v1591
        %v1634 = vrot.slane %v1591, 4
        %v1635 = vsel %vm860, %v1615, %v1634
        %v1636 = vrot.slane %v1623, 4
        %v1637 = vsel %vm860, %v1636, %v1599
        %v1638 = vrot.slane %v1599, 4
        %v1639 = vsel %vm860, %v1623, %v1638
        %v1640 = vrot.slane %v1627, 4
        %v1641 = vsel %vm860, %v1640, %v1603
        %v1642 = vrot.slane %v1603, 4
        %v1643 = vsel %vm860, %v1627, %v1642
        %v1644 = vrot.slane %v793, 4
        %v1645 = vsel %vm860, %v1644, %v767
        %v1646 = vrot.slane %v767, 4
        %v1647 = vsel %vm860, %v793, %v1646
        %v1649 = vunpack.c.l.s4 1983009808
        %v1650 = vunpack.c.0.s8 %v1649
        %v1651 = vperm.slane %v1645, %v1650
        %v1653 = vunpack.c.l.s4 1983009808
        %v1654 = vunpack.c.0.s8 %v1653
        %v1655 = vperm.slane %v1647, %v1654
        %v1656 = vrot.slane %v806, 4
        %v1657 = vsel %vm860, %v1656, %v780
        %v1658 = vrot.slane %v780, 4
        %v1659 = vsel %vm860, %v806, %v1658
        %v1661 = vunpack.c.l.s4 1983009808
        %v1662 = vunpack.c.0.s8 %v1661
        %v1663 = vperm.slane %v1657, %v1662
        %v1665 = vunpack.c.l.s4 1983009808
        %v1666 = vunpack.c.0.s8 %v1665
        %v1667 = vperm.slane %v1659, %v1666
        %v1668 = vrot.slane %v845, 4
        %v1669 = vsel %vm860, %v1668, %v819
        %v1670 = vrot.slane %v819, 4
        %v1671 = vsel %vm860, %v845, %v1670
        %v1673 = vunpack.c.l.s4 1983009808
        %v1674 = vunpack.c.0.s8 %v1673
        %v1675 = vperm.slane %v1669, %v1674
        %v1677 = vunpack.c.l.s4 1983009808
        %v1678 = vunpack.c.0.s8 %v1677
        %v1679 = vperm.slane %v1671, %v1678
        %v1680 = vrot.slane %v858, 4
        %v1681 = vsel %vm860, %v1680, %v832
        %v1682 = vrot.slane %v832, 4
        %v1683 = vsel %vm860, %v858, %v1682
        %v1685 = vunpack.c.l.s4 1983009808
        %v1686 = vunpack.c.0.s8 %v1685
        %v1687 = vperm.slane %v1681, %v1686
        %v1689 = vunpack.c.l.s4 1983009808
        %v1690 = vunpack.c.0.s8 %v1689
        %v1691 = vperm.slane %v1683, %v1690
        %v1692 = vrot.slane %v1663, 4
        %v1693 = vsel %vm860, %v1692, %v1651
        %v1694 = vrot.slane %v1651, 4
        %v1695 = vsel %vm860, %v1663, %v1694
        %v1697 = vunpack.c.l.s4 1934713408
        %v1698 = vunpack.c.0.s8 %v1697
        %v1699 = vperm.slane %v1693, %v1698
        %v1701 = vunpack.c.l.s4 1934713408
        %v1702 = vunpack.c.0.s8 %v1701
        %v1703 = vperm.slane %v1695, %v1702
        %v1704 = vrot.slane %v1667, 4
        %v1705 = vsel %vm860, %v1704, %v1655
        %v1706 = vrot.slane %v1655, 4
        %v1707 = vsel %vm860, %v1667, %v1706
        %v1709 = vunpack.c.l.s4 1934713408
        %v1710 = vunpack.c.0.s8 %v1709
        %v1711 = vperm.slane %v1705, %v1710
        %v1713 = vunpack.c.l.s4 1934713408
        %v1714 = vunpack.c.0.s8 %v1713
        %v1715 = vperm.slane %v1707, %v1714
        %v1716 = vrot.slane %v1687, 4
        %v1717 = vsel %vm860, %v1716, %v1675
        %v1718 = vrot.slane %v1675, 4
        %v1719 = vsel %vm860, %v1687, %v1718
        %v1721 = vunpack.c.l.s4 1934713408
        %v1722 = vunpack.c.0.s8 %v1721
        %v1723 = vperm.slane %v1717, %v1722
        %v1725 = vunpack.c.l.s4 1934713408
        %v1726 = vunpack.c.0.s8 %v1725
        %v1727 = vperm.slane %v1719, %v1726
        %v1728 = vrot.slane %v1691, 4
        %v1729 = vsel %vm860, %v1728, %v1679
        %v1730 = vrot.slane %v1679, 4
        %v1731 = vsel %vm860, %v1691, %v1730
        %v1733 = vunpack.c.l.s4 1934713408
        %v1734 = vunpack.c.0.s8 %v1733
        %v1735 = vperm.slane %v1729, %v1734
        %v1737 = vunpack.c.l.s4 1934713408
        %v1738 = vunpack.c.0.s8 %v1737
        %v1739 = vperm.slane %v1731, %v1738
        %v1740 = vrot.slane %v1723, 4
        %v1741 = vsel %vm860, %v1740, %v1699
        %v1742 = vrot.slane %v1699, 4
        %v1743 = vsel %vm860, %v1723, %v1742
        %v1744 = vrot.slane %v1727, 4
        %v1745 = vsel %vm860, %v1744, %v1703
        %v1746 = vrot.slane %v1703, 4
        %v1747 = vsel %vm860, %v1727, %v1746
        %v1748 = vrot.slane %v1735, 4
        %v1749 = vsel %vm860, %v1748, %v1711
        %v1750 = vrot.slane %v1711, 4
        %v1751 = vsel %vm860, %v1735, %v1750
        %v1752 = vrot.slane %v1739, 4
        %v1753 = vsel %vm860, %v1752, %v1715
        %v1754 = vrot.slane %v1715, 4
        %v1755 = vsel %vm860, %v1739, %v1754
        %1760 = vrot.lane.b32.xlu0 %v959, 2
        %v1761 = vpop.permute.xlu0 %1760
        %1762 = vrot.lane.b32.xlu0 %v1071, 2
        %v1763 = vpop.permute.xlu0 %1762
        %1764 = vrot.lane.b32.xlu0 %v1183, 2
        %v1765 = vpop.permute.xlu0 %1764
        %1766 = vrot.lane.b32.xlu0 %v1295, 2
        %v1767 = vpop.permute.xlu0 %1766
        %1776 = vrot.lane.b32.xlu0 %v961, 4
        %v1777 = vpop.permute.xlu0 %1776
        %1778 = vrot.lane.b32.xlu0 %v1073, 4
        %v1779 = vpop.permute.xlu0 %1778
        %1780 = vrot.lane.b32.xlu0 %v1185, 4
        %v1781 = vpop.permute.xlu0 %1780
        %1782 = vrot.lane.b32.xlu0 %v1297, 4
        %v1783 = vpop.permute.xlu0 %1782
        %1792 = vrot.lane.b32.xlu0 %v963, 6
        %v1793 = vpop.permute.xlu0 %1792
        %1794 = vrot.lane.b32.xlu0 %v1075, 6
        %v1795 = vpop.permute.xlu0 %1794
        %1796 = vrot.lane.b32.xlu0 %v1187, 6
        %v1797 = vpop.permute.xlu0 %1796
        %1798 = vrot.lane.b32.xlu0 %v1299, 6
        %v1799 = vpop.permute.xlu0 %1798
        %1808 = vrot.lane.b32.xlu0 %v965, 8
        %v1809 = vpop.permute.xlu0 %1808
        %1810 = vrot.lane.b32.xlu0 %v1077, 8
        %v1811 = vpop.permute.xlu0 %1810
        %1812 = vrot.lane.b32.xlu0 %v1189, 8
        %v1813 = vpop.permute.xlu0 %1812
        %1814 = vrot.lane.b32.xlu0 %v1301, 8
        %v1815 = vpop.permute.xlu0 %1814
        %1824 = vrot.lane.b32.xlu0 %v967, 10
        %v1825 = vpop.permute.xlu0 %1824
        %1826 = vrot.lane.b32.xlu0 %v1079, 10
        %v1827 = vpop.permute.xlu0 %1826
        %1828 = vrot.lane.b32.xlu0 %v1191, 10
        %v1829 = vpop.permute.xlu0 %1828
        %1830 = vrot.lane.b32.xlu0 %v1303, 10
        %v1831 = vpop.permute.xlu0 %1830
        %1840 = vrot.lane.b32.xlu0 %v969, 12
        %v1841 = vpop.permute.xlu0 %1840
        %1842 = vrot.lane.b32.xlu0 %v1081, 12
        %v1843 = vpop.permute.xlu0 %1842
        %1844 = vrot.lane.b32.xlu0 %v1193, 12
        %v1845 = vpop.permute.xlu0 %1844
        %1846 = vrot.lane.b32.xlu0 %v1305, 12
        %v1847 = vpop.permute.xlu0 %1846
        %1856 = vrot.lane.b32.xlu0 %v971, 14
        %v1857 = vpop.permute.xlu0 %1856
        %1858 = vrot.lane.b32.xlu0 %v1083, 14
        %v1859 = vpop.permute.xlu0 %1858
        %1860 = vrot.lane.b32.xlu0 %v1195, 14
        %v1861 = vpop.permute.xlu0 %1860
        %1862 = vrot.lane.b32.xlu0 %v1307, 14
        %v1863 = vpop.permute.xlu0 %1862
        %1872 = vrot.lane.b32.xlu0 %v1405, 16
        %v1873 = vpop.permute.xlu0 %1872
        %1874 = vrot.lane.b32.xlu0 %v1517, 16
        %v1875 = vpop.permute.xlu0 %1874
        %1876 = vrot.lane.b32.xlu0 %v1629, 16
        %v1877 = vpop.permute.xlu0 %1876
        %1878 = vrot.lane.b32.xlu0 %v1741, 16
        %v1879 = vpop.permute.xlu0 %1878
        %1888 = vrot.lane.b32.xlu0 %v1407, 18
        %v1889 = vpop.permute.xlu0 %1888
        %1890 = vrot.lane.b32.xlu0 %v1519, 18
        %v1891 = vpop.permute.xlu0 %1890
        %1892 = vrot.lane.b32.xlu0 %v1631, 18
        %v1893 = vpop.permute.xlu0 %1892
        %1894 = vrot.lane.b32.xlu0 %v1743, 18
        %v1895 = vpop.permute.xlu0 %1894
        %1904 = vrot.lane.b32.xlu0 %v1409, 20
        %v1905 = vpop.permute.xlu0 %1904
        %1906 = vrot.lane.b32.xlu0 %v1521, 20
        %v1907 = vpop.permute.xlu0 %1906
        %1908 = vrot.lane.b32.xlu0 %v1633, 20
        %v1909 = vpop.permute.xlu0 %1908
        %1910 = vrot.lane.b32.xlu0 %v1745, 20
        %v1911 = vpop.permute.xlu0 %1910
        %1920 = vrot.lane.b32.xlu0 %v1411, 22
        %v1921 = vpop.permute.xlu0 %1920
        %1922 = vrot.lane.b32.xlu0 %v1523, 22
        %v1923 = vpop.permute.xlu0 %1922
        %1924 = vrot.lane.b32.xlu0 %v1635, 22
        %v1925 = vpop.permute.xlu0 %1924
        %1926 = vrot.lane.b32.xlu0 %v1747, 22
        %v1927 = vpop.permute.xlu0 %1926
        %1936 = vrot.lane.b32.xlu0 %v1413, 24
        %v1937 = vpop.permute.xlu0 %1936
        %1938 = vrot.lane.b32.xlu0 %v1525, 24
        %v1939 = vpop.permute.xlu0 %1938
        %1940 = vrot.lane.b32.xlu0 %v1637, 24
        %v1941 = vpop.permute.xlu0 %1940
        %1942 = vrot.lane.b32.xlu0 %v1749, 24
        %v1943 = vpop.permute.xlu0 %1942
        %1952 = vrot.lane.b32.xlu0 %v1415, 26
        %v1953 = vpop.permute.xlu0 %1952
        %1954 = vrot.lane.b32.xlu0 %v1527, 26
        %v1955 = vpop.permute.xlu0 %1954
        %1956 = vrot.lane.b32.xlu0 %v1639, 26
        %v1957 = vpop.permute.xlu0 %1956
        %1958 = vrot.lane.b32.xlu0 %v1751, 26
        %v1959 = vpop.permute.xlu0 %1958
        %1968 = vrot.lane.b32.xlu0 %v1417, 28
        %v1969 = vpop.permute.xlu0 %1968
        %1970 = vrot.lane.b32.xlu0 %v1529, 28
        %v1971 = vpop.permute.xlu0 %1970
        %1972 = vrot.lane.b32.xlu0 %v1641, 28
        %v1973 = vpop.permute.xlu0 %1972
        %1974 = vrot.lane.b32.xlu0 %v1753, 28
        %v1975 = vpop.permute.xlu0 %1974
        %1984 = vrot.lane.b32.xlu0 %v1419, 30
        %v1985 = vpop.permute.xlu0 %1984
        %1986 = vrot.lane.b32.xlu0 %v1531, 30
        %v1987 = vpop.permute.xlu0 %1986
        %1988 = vrot.lane.b32.xlu0 %v1643, 30
        %v1989 = vpop.permute.xlu0 %1988
        %1990 = vrot.lane.b32.xlu0 %v1755, 30
        %v1991 = vpop.permute.xlu0 %1990
        %vm1996 = vcmask 15360
        %v1997 = vsel %vm1996, %v957, %v1761
        %v1998 = vsel %vm1996, %v1069, %v1763
        %v1999 = vsel %vm1996, %v1181, %v1765
        %v2000 = vsel %vm1996, %v1293, %v1767
        %vm2001 = vcmask 31744
        %v2002 = vsel %vm2001, %v1997, %v1777
        %v2003 = vsel %vm2001, %v1998, %v1779
        %v2004 = vsel %vm2001, %v1999, %v1781
        %v2005 = vsel %vm2001, %v2000, %v1783
        %vm2006 = vcmask 48128
        %v2007 = vsel %vm2006, %v2002, %v1793
        %v2008 = vsel %vm2006, %v2003, %v1795
        %v2009 = vsel %vm2006, %v2004, %v1797
        %v2010 = vsel %vm2006, %v2005, %v1799
        %vm2011 = vcmask 64512
        %v2012 = vsel %vm2011, %v2007, %v1809
        %v2013 = vsel %vm2011, %v2008, %v1811
        %v2014 = vsel %vm2011, %v2009, %v1813
        %v2015 = vsel %vm2011, %v2010, %v1815
        %vm2016 = vcmask 80896
        %v2017 = vsel %vm2016, %v2012, %v1825
        %v2018 = vsel %vm2016, %v2013, %v1827
        %v2019 = vsel %vm2016, %v2014, %v1829
        %v2020 = vsel %vm2016, %v2015, %v1831
        %vm2021 = vcmask 97280
        %v2022 = vsel %vm2021, %v2017, %v1841
        %v2023 = vsel %vm2021, %v2018, %v1843
        %v2024 = vsel %vm2021, %v2019, %v1845
        %v2025 = vsel %vm2021, %v2020, %v1847
        %vm2026 = vcmask 113664
        %v2027 = vsel %vm2026, %v2022, %v1857
        %v2028 = vsel %vm2026, %v2023, %v1859
        %v2029 = vsel %vm2026, %v2024, %v1861
        %v2030 = vsel %vm2026, %v2025, %v1863
        %vm2031 = vcmask 130048
        %v2032 = vsel %vm2031, %v2027, %v1873
        %v2033 = vsel %vm2031, %v2028, %v1875
        %v2034 = vsel %vm2031, %v2029, %v1877
        %v2035 = vsel %vm2031, %v2030, %v1879
        %vm2036 = vcmask 146432
        %v2037 = vsel %vm2036, %v2032, %v1889
        %v2038 = vsel %vm2036, %v2033, %v1891
        %v2039 = vsel %vm2036, %v2034, %v1893
        %v2040 = vsel %vm2036, %v2035, %v1895
        %vm2041 = vcmask 162816
        %v2042 = vsel %vm2041, %v2037, %v1905
        %v2043 = vsel %vm2041, %v2038, %v1907
        %v2044 = vsel %vm2041, %v2039, %v1909
        %v2045 = vsel %vm2041, %v2040, %v1911
        %vm2046 = vcmask 179200
        %v2047 = vsel %vm2046, %v2042, %v1921
        %v2048 = vsel %vm2046, %v2043, %v1923
        %v2049 = vsel %vm2046, %v2044, %v1925
        %v2050 = vsel %vm2046, %v2045, %v1927
        %vm2051 = vcmask 195584
        %v2052 = vsel %vm2051, %v2047, %v1937
        %v2053 = vsel %vm2051, %v2048, %v1939
        %v2054 = vsel %vm2051, %v2049, %v1941
        %v2055 = vsel %vm2051, %v2050, %v1943
        %vm2056 = vcmask 211968
        %v2057 = vsel %vm2056, %v2052, %v1953
        %v2058 = vsel %vm2056, %v2053, %v1955
        %v2059 = vsel %vm2056, %v2054, %v1957
        %v2060 = vsel %vm2056, %v2055, %v1959
        %vm2061 = vcmask 228352
        %v2062 = vsel %vm2061, %v2057, %v1969
        %v2063 = vsel %vm2061, %v2058, %v1971
        %v2064 = vsel %vm2061, %v2059, %v1973
        %v2065 = vsel %vm2061, %v2060, %v1975
        %vm2066 = vcmask 244736
        %v2067 = vsel %vm2066, %v2062, %v1985
        %v2068 = vsel %vm2066, %v2063, %v1987
        %v2069 = vsel %vm2066, %v2064, %v1989
        %v2070 = vsel %vm2066, %v2065, %v1991
        %2075 = vrot.lane.b32.xlu0 %v2067, 32
        %v2076 = vpop.permute.xlu0 %2075
        %2077 = vrot.lane.b32.xlu0 %v2068, 32
        %v2078 = vpop.permute.xlu0 %2077
        %2079 = vrot.lane.b32.xlu0 %v2069, 32
        %v2080 = vpop.permute.xlu0 %2079
        %2081 = vrot.lane.b32.xlu0 %v2070, 32
        %v2082 = vpop.permute.xlu0 %2081
        %vm2087 = vcmask 261120
        %v2088 = vsel %vm2087, %v2067, %v2076
        %v2089 = vsel %vm2087, %v2068, %v2078
        %v2090 = vsel %vm2087, %v2069, %v2080
        %v2091 = vsel %vm2087, %v2070, %v2082
        %vm2092 = vcmask 523264
        %2093 = vst.msk [vmem:[%s419] sm:$0xff] %vm2092, %v2088
        %2094 = vst.msk [vmem:[%s419 + $0x8] sm:$0xff] %vm2092, %v2089
        %2095 = vst.msk [vmem:[%s419 + $0x10] sm:$0xff] %vm2092, %v2090
        %2096 = vst.msk [vmem:[%s419 + $0x18] sm:$0xff] %vm2092, %v2091
        %v2097 = vld [vmem:[%s349] sm:$0xff]
        %v2098 = vld [vmem:[%s349 + $0x8] sm:$0xff]
        %v2099 = vld [vmem:[%s349 + $0x10] sm:$0xff]
        %v2100 = vld [vmem:[%s349 + $0x18] sm:$0xff]
        %v2101 = vmul.f32 %v2097, 0.5
        %v2102 = vmul.f32 %v2098, 0.5
        %v2103 = vmul.f32 %v2099, 0.5
        %v2104 = vmul.f32 %v2100, 0.5
        %v2105 = vsub.f32 0.0, %v2101
        %v2106 = vsub.f32 0.0, %v2102
        %v2107 = vsub.f32 0.0, %v2103
        %v2108 = vsub.f32 0.0, %v2104
        %v2109 = vperm.slane %v2105, 0
        %v2110 = vlaneseq
        %v2111 = vshrl.u32 %v2110, 7
        %2113 = vset.pattern.permute.xlu0 %v2111
        %2114 = vperm.xlu0 %2113, %v2109
        %v2115 = vpop.permute.xlu0 %2114
        %v2116 = vlaneseq
        %v2117 = vshrl.u32 %v2116, 7
        %v2118 = vadd.s32 %v2117, 8
        %2119 = vset.pattern.permute.xlu0 %v2118
        %2120 = vperm.xlu0 %2119, %v2109
        %v2121 = vpop.permute.xlu0 %2120
        %v2122 = vperm.slane %v2105, 1
        %v2123 = vlaneseq
        %v2124 = vshrl.u32 %v2123, 7
        %2126 = vset.pattern.permute.xlu0 %v2124
        %2127 = vperm.xlu0 %2126, %v2122
        %v2128 = vpop.permute.xlu0 %2127
        %v2129 = vlaneseq
        %v2130 = vshrl.u32 %v2129, 7
        %v2131 = vadd.s32 %v2130, 8
        %2132 = vset.pattern.permute.xlu0 %v2131
        %2133 = vperm.xlu0 %2132, %v2122
        %v2134 = vpop.permute.xlu0 %2133
        %v2135 = vperm.slane %v2105, 2
        %v2136 = vlaneseq
        %v2137 = vshrl.u32 %v2136, 7
        %2139 = vset.pattern.permute.xlu0 %v2137
        %2140 = vperm.xlu0 %2139, %v2135
        %v2141 = vpop.permute.xlu0 %2140
        %v2142 = vlaneseq
        %v2143 = vshrl.u32 %v2142, 7
        %v2144 = vadd.s32 %v2143, 8
        %2145 = vset.pattern.permute.xlu0 %v2144
        %2146 = vperm.xlu0 %2145, %v2135
        %v2147 = vpop.permute.xlu0 %2146
        %v2148 = vperm.slane %v2105, 3
        %v2149 = vlaneseq
        %v2150 = vshrl.u32 %v2149, 7
        %2152 = vset.pattern.permute.xlu0 %v2150
        %2153 = vperm.xlu0 %2152, %v2148
        %v2154 = vpop.permute.xlu0 %2153
        %v2155 = vlaneseq
        %v2156 = vshrl.u32 %v2155, 7
        %v2157 = vadd.s32 %v2156, 8
        %2158 = vset.pattern.permute.xlu0 %v2157
        %2159 = vperm.xlu0 %2158, %v2148
        %v2160 = vpop.permute.xlu0 %2159
        %v2161 = vperm.slane %v2105, 4
        %v2162 = vlaneseq
        %v2163 = vshrl.u32 %v2162, 7
        %2165 = vset.pattern.permute.xlu0 %v2163
        %2166 = vperm.xlu0 %2165, %v2161
        %v2167 = vpop.permute.xlu0 %2166
        %v2168 = vlaneseq
        %v2169 = vshrl.u32 %v2168, 7
        %v2170 = vadd.s32 %v2169, 8
        %2171 = vset.pattern.permute.xlu0 %v2170
        %2172 = vperm.xlu0 %2171, %v2161
        %v2173 = vpop.permute.xlu0 %2172
        %v2174 = vperm.slane %v2105, 5
        %v2175 = vlaneseq
        %v2176 = vshrl.u32 %v2175, 7
        %2178 = vset.pattern.permute.xlu0 %v2176
        %2179 = vperm.xlu0 %2178, %v2174
        %v2180 = vpop.permute.xlu0 %2179
        %v2181 = vlaneseq
        %v2182 = vshrl.u32 %v2181, 7
        %v2183 = vadd.s32 %v2182, 8
        %2184 = vset.pattern.permute.xlu0 %v2183
        %2185 = vperm.xlu0 %2184, %v2174
        %v2186 = vpop.permute.xlu0 %2185
        %v2187 = vperm.slane %v2105, 6
        %v2188 = vlaneseq
        %v2189 = vshrl.u32 %v2188, 7
        %2191 = vset.pattern.permute.xlu0 %v2189
        %2192 = vperm.xlu0 %2191, %v2187
        %v2193 = vpop.permute.xlu0 %2192
        %v2194 = vlaneseq
        %v2195 = vshrl.u32 %v2194, 7
        %v2196 = vadd.s32 %v2195, 8
        %2197 = vset.pattern.permute.xlu0 %v2196
        %2198 = vperm.xlu0 %2197, %v2187
        %v2199 = vpop.permute.xlu0 %2198
        %v2200 = vperm.slane %v2105, 7
        %v2201 = vlaneseq
        %v2202 = vshrl.u32 %v2201, 7
        %2204 = vset.pattern.permute.xlu0 %v2202
        %2205 = vperm.xlu0 %2204, %v2200
        %v2206 = vpop.permute.xlu0 %2205
        %v2207 = vlaneseq
        %v2208 = vshrl.u32 %v2207, 7
        %v2209 = vadd.s32 %v2208, 8
        %2210 = vset.pattern.permute.xlu0 %v2209
        %2211 = vperm.xlu0 %2210, %v2200
        %v2212 = vpop.permute.xlu0 %2211
        %v2213 = vperm.slane %v2106, 0
        %v2214 = vlaneseq
        %v2215 = vshrl.u32 %v2214, 7
        %2217 = vset.pattern.permute.xlu0 %v2215
        %2218 = vperm.xlu0 %2217, %v2213
        %v2219 = vpop.permute.xlu0 %2218
        %v2220 = vlaneseq
        %v2221 = vshrl.u32 %v2220, 7
        %v2222 = vadd.s32 %v2221, 8
        %2223 = vset.pattern.permute.xlu0 %v2222
        %2224 = vperm.xlu0 %2223, %v2213
        %v2225 = vpop.permute.xlu0 %2224
        %v2226 = vperm.slane %v2106, 1
        %v2227 = vlaneseq
        %v2228 = vshrl.u32 %v2227, 7
        %2230 = vset.pattern.permute.xlu0 %v2228
        %2231 = vperm.xlu0 %2230, %v2226
        %v2232 = vpop.permute.xlu0 %2231
        %v2233 = vlaneseq
        %v2234 = vshrl.u32 %v2233, 7
        %v2235 = vadd.s32 %v2234, 8
        %2236 = vset.pattern.permute.xlu0 %v2235
        %2237 = vperm.xlu0 %2236, %v2226
        %v2238 = vpop.permute.xlu0 %2237
        %v2239 = vperm.slane %v2106, 2
        %v2240 = vlaneseq
        %v2241 = vshrl.u32 %v2240, 7
        %2243 = vset.pattern.permute.xlu0 %v2241
        %2244 = vperm.xlu0 %2243, %v2239
        %v2245 = vpop.permute.xlu0 %2244
        %v2246 = vlaneseq
        %v2247 = vshrl.u32 %v2246, 7
        %v2248 = vadd.s32 %v2247, 8
        %2249 = vset.pattern.permute.xlu0 %v2248
        %2250 = vperm.xlu0 %2249, %v2239
        %v2251 = vpop.permute.xlu0 %2250
        %v2252 = vperm.slane %v2106, 3
        %v2253 = vlaneseq
        %v2254 = vshrl.u32 %v2253, 7
        %2256 = vset.pattern.permute.xlu0 %v2254
        %2257 = vperm.xlu0 %2256, %v2252
        %v2258 = vpop.permute.xlu0 %2257
        %v2259 = vlaneseq
        %v2260 = vshrl.u32 %v2259, 7
        %v2261 = vadd.s32 %v2260, 8
        %2262 = vset.pattern.permute.xlu0 %v2261
        %2263 = vperm.xlu0 %2262, %v2252
        %v2264 = vpop.permute.xlu0 %2263
        %v2265 = vperm.slane %v2106, 4
        %v2266 = vlaneseq
        %v2267 = vshrl.u32 %v2266, 7
        %2269 = vset.pattern.permute.xlu0 %v2267
        %2270 = vperm.xlu0 %2269, %v2265
        %v2271 = vpop.permute.xlu0 %2270
        %v2272 = vlaneseq
        %v2273 = vshrl.u32 %v2272, 7
        %v2274 = vadd.s32 %v2273, 8
        %2275 = vset.pattern.permute.xlu0 %v2274
        %2276 = vperm.xlu0 %2275, %v2265
        %v2277 = vpop.permute.xlu0 %2276
        %v2278 = vperm.slane %v2106, 5
        %v2279 = vlaneseq
        %v2280 = vshrl.u32 %v2279, 7
        %2282 = vset.pattern.permute.xlu0 %v2280
        %2283 = vperm.xlu0 %2282, %v2278
        %v2284 = vpop.permute.xlu0 %2283
        %v2285 = vlaneseq
        %v2286 = vshrl.u32 %v2285, 7
        %v2287 = vadd.s32 %v2286, 8
        %2288 = vset.pattern.permute.xlu0 %v2287
        %2289 = vperm.xlu0 %2288, %v2278
        %v2290 = vpop.permute.xlu0 %2289
        %v2291 = vperm.slane %v2106, 6
        %v2292 = vlaneseq
        %v2293 = vshrl.u32 %v2292, 7
        %2295 = vset.pattern.permute.xlu0 %v2293
        %2296 = vperm.xlu0 %2295, %v2291
        %v2297 = vpop.permute.xlu0 %2296
        %v2298 = vlaneseq
        %v2299 = vshrl.u32 %v2298, 7
        %v2300 = vadd.s32 %v2299, 8
        %2301 = vset.pattern.permute.xlu0 %v2300
        %2302 = vperm.xlu0 %2301, %v2291
        %v2303 = vpop.permute.xlu0 %2302
        %v2304 = vperm.slane %v2106, 7
        %v2305 = vlaneseq
        %v2306 = vshrl.u32 %v2305, 7
        %2308 = vset.pattern.permute.xlu0 %v2306
        %2309 = vperm.xlu0 %2308, %v2304
        %v2310 = vpop.permute.xlu0 %2309
        %v2311 = vlaneseq
        %v2312 = vshrl.u32 %v2311, 7
        %v2313 = vadd.s32 %v2312, 8
        %2314 = vset.pattern.permute.xlu0 %v2313
        %2315 = vperm.xlu0 %2314, %v2304
        %v2316 = vpop.permute.xlu0 %2315
        %v2317 = vperm.slane %v2107, 0
        %v2318 = vlaneseq
        %v2319 = vshrl.u32 %v2318, 7
        %2321 = vset.pattern.permute.xlu0 %v2319
        %2322 = vperm.xlu0 %2321, %v2317
        %v2323 = vpop.permute.xlu0 %2322
        %v2324 = vlaneseq
        %v2325 = vshrl.u32 %v2324, 7
        %v2326 = vadd.s32 %v2325, 8
        %2327 = vset.pattern.permute.xlu0 %v2326
        %2328 = vperm.xlu0 %2327, %v2317
        %v2329 = vpop.permute.xlu0 %2328
        %v2330 = vperm.slane %v2107, 1
        %v2331 = vlaneseq
        %v2332 = vshrl.u32 %v2331, 7
        %2334 = vset.pattern.permute.xlu0 %v2332
        %2335 = vperm.xlu0 %2334, %v2330
        %v2336 = vpop.permute.xlu0 %2335
        %v2337 = vlaneseq
        %v2338 = vshrl.u32 %v2337, 7
        %v2339 = vadd.s32 %v2338, 8
        %2340 = vset.pattern.permute.xlu0 %v2339
        %2341 = vperm.xlu0 %2340, %v2330
        %v2342 = vpop.permute.xlu0 %2341
        %v2343 = vperm.slane %v2107, 2
        %v2344 = vlaneseq
        %v2345 = vshrl.u32 %v2344, 7
        %2347 = vset.pattern.permute.xlu0 %v2345
        %2348 = vperm.xlu0 %2347, %v2343
        %v2349 = vpop.permute.xlu0 %2348
        %v2350 = vlaneseq
        %v2351 = vshrl.u32 %v2350, 7
        %v2352 = vadd.s32 %v2351, 8
        %2353 = vset.pattern.permute.xlu0 %v2352
        %2354 = vperm.xlu0 %2353, %v2343
        %v2355 = vpop.permute.xlu0 %2354
        %v2356 = vperm.slane %v2107, 3
        %v2357 = vlaneseq
        %v2358 = vshrl.u32 %v2357, 7
        %2360 = vset.pattern.permute.xlu0 %v2358
        %2361 = vperm.xlu0 %2360, %v2356
        %v2362 = vpop.permute.xlu0 %2361
        %v2363 = vlaneseq
        %v2364 = vshrl.u32 %v2363, 7
        %v2365 = vadd.s32 %v2364, 8
        %2366 = vset.pattern.permute.xlu0 %v2365
        %2367 = vperm.xlu0 %2366, %v2356
        %v2368 = vpop.permute.xlu0 %2367
        %v2369 = vperm.slane %v2107, 4
        %v2370 = vlaneseq
        %v2371 = vshrl.u32 %v2370, 7
        %2373 = vset.pattern.permute.xlu0 %v2371
        %2374 = vperm.xlu0 %2373, %v2369
        %v2375 = vpop.permute.xlu0 %2374
        %v2376 = vlaneseq
        %v2377 = vshrl.u32 %v2376, 7
        %v2378 = vadd.s32 %v2377, 8
        %2379 = vset.pattern.permute.xlu0 %v2378
        %2380 = vperm.xlu0 %2379, %v2369
        %v2381 = vpop.permute.xlu0 %2380
        %v2382 = vperm.slane %v2107, 5
        %v2383 = vlaneseq
        %v2384 = vshrl.u32 %v2383, 7
        %2386 = vset.pattern.permute.xlu0 %v2384
        %2387 = vperm.xlu0 %2386, %v2382
        %v2388 = vpop.permute.xlu0 %2387
        %v2389 = vlaneseq
        %v2390 = vshrl.u32 %v2389, 7
        %v2391 = vadd.s32 %v2390, 8
        %2392 = vset.pattern.permute.xlu0 %v2391
        %2393 = vperm.xlu0 %2392, %v2382
        %v2394 = vpop.permute.xlu0 %2393
        %v2395 = vperm.slane %v2107, 6
        %v2396 = vlaneseq
        %v2397 = vshrl.u32 %v2396, 7
        %2399 = vset.pattern.permute.xlu0 %v2397
        %2400 = vperm.xlu0 %2399, %v2395
        %v2401 = vpop.permute.xlu0 %2400
        %v2402 = vlaneseq
        %v2403 = vshrl.u32 %v2402, 7
        %v2404 = vadd.s32 %v2403, 8
        %2405 = vset.pattern.permute.xlu0 %v2404
        %2406 = vperm.xlu0 %2405, %v2395
        %v2407 = vpop.permute.xlu0 %2406
        %v2408 = vperm.slane %v2107, 7
        %v2409 = vlaneseq
        %v2410 = vshrl.u32 %v2409, 7
        %2412 = vset.pattern.permute.xlu0 %v2410
        %2413 = vperm.xlu0 %2412, %v2408
        %v2414 = vpop.permute.xlu0 %2413
        %v2415 = vlaneseq
        %v2416 = vshrl.u32 %v2415, 7
        %v2417 = vadd.s32 %v2416, 8
        %2418 = vset.pattern.permute.xlu0 %v2417
        %2419 = vperm.xlu0 %2418, %v2408
        %v2420 = vpop.permute.xlu0 %2419
        %v2421 = vperm.slane %v2108, 0
        %v2422 = vlaneseq
        %v2423 = vshrl.u32 %v2422, 7
        %2425 = vset.pattern.permute.xlu0 %v2423
        %2426 = vperm.xlu0 %2425, %v2421
        %v2427 = vpop.permute.xlu0 %2426
        %v2428 = vlaneseq
        %v2429 = vshrl.u32 %v2428, 7
        %v2430 = vadd.s32 %v2429, 8
        %2431 = vset.pattern.permute.xlu0 %v2430
        %2432 = vperm.xlu0 %2431, %v2421
        %v2433 = vpop.permute.xlu0 %2432
        %v2434 = vperm.slane %v2108, 1
        %v2435 = vlaneseq
        %v2436 = vshrl.u32 %v2435, 7
        %2438 = vset.pattern.permute.xlu0 %v2436
        %2439 = vperm.xlu0 %2438, %v2434
        %v2440 = vpop.permute.xlu0 %2439
        %v2441 = vlaneseq
        %v2442 = vshrl.u32 %v2441, 7
        %v2443 = vadd.s32 %v2442, 8
        %2444 = vset.pattern.permute.xlu0 %v2443
        %2445 = vperm.xlu0 %2444, %v2434
        %v2446 = vpop.permute.xlu0 %2445
        %v2447 = vperm.slane %v2108, 2
        %v2448 = vlaneseq
        %v2449 = vshrl.u32 %v2448, 7
        %2451 = vset.pattern.permute.xlu0 %v2449
        %2452 = vperm.xlu0 %2451, %v2447
        %v2453 = vpop.permute.xlu0 %2452
        %v2454 = vlaneseq
        %v2455 = vshrl.u32 %v2454, 7
        %v2456 = vadd.s32 %v2455, 8
        %2457 = vset.pattern.permute.xlu0 %v2456
        %2458 = vperm.xlu0 %2457, %v2447
        %v2459 = vpop.permute.xlu0 %2458
        %v2460 = vperm.slane %v2108, 3
        %v2461 = vlaneseq
        %v2462 = vshrl.u32 %v2461, 7
        %2464 = vset.pattern.permute.xlu0 %v2462
        %2465 = vperm.xlu0 %2464, %v2460
        %v2466 = vpop.permute.xlu0 %2465
        %v2467 = vlaneseq
        %v2468 = vshrl.u32 %v2467, 7
        %v2469 = vadd.s32 %v2468, 8
        %2470 = vset.pattern.permute.xlu0 %v2469
        %2471 = vperm.xlu0 %2470, %v2460
        %v2472 = vpop.permute.xlu0 %2471
        %v2473 = vperm.slane %v2108, 4
        %v2474 = vlaneseq
        %v2475 = vshrl.u32 %v2474, 7
        %2477 = vset.pattern.permute.xlu0 %v2475
        %2478 = vperm.xlu0 %2477, %v2473
        %v2479 = vpop.permute.xlu0 %2478
        %v2480 = vlaneseq
        %v2481 = vshrl.u32 %v2480, 7
        %v2482 = vadd.s32 %v2481, 8
        %2483 = vset.pattern.permute.xlu0 %v2482
        %2484 = vperm.xlu0 %2483, %v2473
        %v2485 = vpop.permute.xlu0 %2484
        %v2486 = vperm.slane %v2108, 5
        %v2487 = vlaneseq
        %v2488 = vshrl.u32 %v2487, 7
        %2490 = vset.pattern.permute.xlu0 %v2488
        %2491 = vperm.xlu0 %2490, %v2486
        %v2492 = vpop.permute.xlu0 %2491
        %v2493 = vlaneseq
        %v2494 = vshrl.u32 %v2493, 7
        %v2495 = vadd.s32 %v2494, 8
        %2496 = vset.pattern.permute.xlu0 %v2495
        %2497 = vperm.xlu0 %2496, %v2486
        %v2498 = vpop.permute.xlu0 %2497
        %v2499 = vperm.slane %v2108, 6
        %v2500 = vlaneseq
        %v2501 = vshrl.u32 %v2500, 7
        %2503 = vset.pattern.permute.xlu0 %v2501
        %2504 = vperm.xlu0 %2503, %v2499
        %v2505 = vpop.permute.xlu0 %2504
        %v2506 = vlaneseq
        %v2507 = vshrl.u32 %v2506, 7
        %v2508 = vadd.s32 %v2507, 8
        %2509 = vset.pattern.permute.xlu0 %v2508
        %2510 = vperm.xlu0 %2509, %v2499
        %v2511 = vpop.permute.xlu0 %2510
        %v2512 = vperm.slane %v2108, 7
        %v2513 = vlaneseq
        %v2514 = vshrl.u32 %v2513, 7
        %2516 = vset.pattern.permute.xlu0 %v2514
        %2517 = vperm.xlu0 %2516, %v2512
        %v2518 = vpop.permute.xlu0 %2517
        %v2519 = vlaneseq
        %v2520 = vshrl.u32 %v2519, 7
        %v2521 = vadd.s32 %v2520, 8
        %2522 = vset.pattern.permute.xlu0 %v2521
        %2523 = vperm.xlu0 %2522, %v2512
        %v2524 = vpop.permute.xlu0 %2523
        %v2525 = vperm.slane %v2101, 0
        %v2526 = vlaneseq
        %v2527 = vshrl.u32 %v2526, 7
        %2529 = vset.pattern.permute.xlu0 %v2527
        %2530 = vperm.xlu0 %2529, %v2525
        %v2531 = vpop.permute.xlu0 %2530
        %v2532 = vlaneseq
        %v2533 = vshrl.u32 %v2532, 7
        %v2534 = vadd.s32 %v2533, 8
        %2535 = vset.pattern.permute.xlu0 %v2534
        %2536 = vperm.xlu0 %2535, %v2525
        %v2537 = vpop.permute.xlu0 %2536
        %v2538 = vperm.slane %v2101, 1
        %v2539 = vlaneseq
        %v2540 = vshrl.u32 %v2539, 7
        %2542 = vset.pattern.permute.xlu0 %v2540
        %2543 = vperm.xlu0 %2542, %v2538
        %v2544 = vpop.permute.xlu0 %2543
        %v2545 = vlaneseq
        %v2546 = vshrl.u32 %v2545, 7
        %v2547 = vadd.s32 %v2546, 8
        %2548 = vset.pattern.permute.xlu0 %v2547
        %2549 = vperm.xlu0 %2548, %v2538
        %v2550 = vpop.permute.xlu0 %2549
        %v2551 = vperm.slane %v2101, 2
        %v2552 = vlaneseq
        %v2553 = vshrl.u32 %v2552, 7
        %2555 = vset.pattern.permute.xlu0 %v2553
        %2556 = vperm.xlu0 %2555, %v2551
        %v2557 = vpop.permute.xlu0 %2556
        %v2558 = vlaneseq
        %v2559 = vshrl.u32 %v2558, 7
        %v2560 = vadd.s32 %v2559, 8
        %2561 = vset.pattern.permute.xlu0 %v2560
        %2562 = vperm.xlu0 %2561, %v2551
        %v2563 = vpop.permute.xlu0 %2562
        %v2564 = vperm.slane %v2101, 3
        %v2565 = vlaneseq
        %v2566 = vshrl.u32 %v2565, 7
        %2568 = vset.pattern.permute.xlu0 %v2566
        %2569 = vperm.xlu0 %2568, %v2564
        %v2570 = vpop.permute.xlu0 %2569
        %v2571 = vlaneseq
        %v2572 = vshrl.u32 %v2571, 7
        %v2573 = vadd.s32 %v2572, 8
        %2574 = vset.pattern.permute.xlu0 %v2573
        %2575 = vperm.xlu0 %2574, %v2564
        %v2576 = vpop.permute.xlu0 %2575
        %v2577 = vperm.slane %v2101, 4
        %v2578 = vlaneseq
        %v2579 = vshrl.u32 %v2578, 7
        %2581 = vset.pattern.permute.xlu0 %v2579
        %2582 = vperm.xlu0 %2581, %v2577
        %v2583 = vpop.permute.xlu0 %2582
        %v2584 = vlaneseq
        %v2585 = vshrl.u32 %v2584, 7
        %v2586 = vadd.s32 %v2585, 8
        %2587 = vset.pattern.permute.xlu0 %v2586
        %2588 = vperm.xlu0 %2587, %v2577
        %v2589 = vpop.permute.xlu0 %2588
        %v2590 = vperm.slane %v2101, 5
        %v2591 = vlaneseq
        %v2592 = vshrl.u32 %v2591, 7
        %2594 = vset.pattern.permute.xlu0 %v2592
        %2595 = vperm.xlu0 %2594, %v2590
        %v2596 = vpop.permute.xlu0 %2595
        %v2597 = vlaneseq
        %v2598 = vshrl.u32 %v2597, 7
        %v2599 = vadd.s32 %v2598, 8
        %2600 = vset.pattern.permute.xlu0 %v2599
        %2601 = vperm.xlu0 %2600, %v2590
        %v2602 = vpop.permute.xlu0 %2601
        %v2603 = vperm.slane %v2101, 6
        %v2604 = vlaneseq
        %v2605 = vshrl.u32 %v2604, 7
        %2607 = vset.pattern.permute.xlu0 %v2605
        %2608 = vperm.xlu0 %2607, %v2603
        %v2609 = vpop.permute.xlu0 %2608
        %v2610 = vlaneseq
        %v2611 = vshrl.u32 %v2610, 7
        %v2612 = vadd.s32 %v2611, 8
        %2613 = vset.pattern.permute.xlu0 %v2612
        %2614 = vperm.xlu0 %2613, %v2603
        %v2615 = vpop.permute.xlu0 %2614
        %v2616 = vperm.slane %v2101, 7
        %v2617 = vlaneseq
        %v2618 = vshrl.u32 %v2617, 7
        %2620 = vset.pattern.permute.xlu0 %v2618
        %2621 = vperm.xlu0 %2620, %v2616
        %v2622 = vpop.permute.xlu0 %2621
        %v2623 = vlaneseq
        %v2624 = vshrl.u32 %v2623, 7
        %v2625 = vadd.s32 %v2624, 8
        %2626 = vset.pattern.permute.xlu0 %v2625
        %2627 = vperm.xlu0 %2626, %v2616
        %v2628 = vpop.permute.xlu0 %2627
        %v2629 = vperm.slane %v2102, 0
        %v2630 = vlaneseq
        %v2631 = vshrl.u32 %v2630, 7
        %2633 = vset.pattern.permute.xlu0 %v2631
        %2634 = vperm.xlu0 %2633, %v2629
        %v2635 = vpop.permute.xlu0 %2634
        %v2636 = vlaneseq
        %v2637 = vshrl.u32 %v2636, 7
        %v2638 = vadd.s32 %v2637, 8
        %2639 = vset.pattern.permute.xlu0 %v2638
        %2640 = vperm.xlu0 %2639, %v2629
        %v2641 = vpop.permute.xlu0 %2640
        %v2642 = vperm.slane %v2102, 1
        %v2643 = vlaneseq
        %v2644 = vshrl.u32 %v2643, 7
        %2646 = vset.pattern.permute.xlu0 %v2644
        %2647 = vperm.xlu0 %2646, %v2642
        %v2648 = vpop.permute.xlu0 %2647
        %v2649 = vlaneseq
        %v2650 = vshrl.u32 %v2649, 7
        %v2651 = vadd.s32 %v2650, 8
        %2652 = vset.pattern.permute.xlu0 %v2651
        %2653 = vperm.xlu0 %2652, %v2642
        %v2654 = vpop.permute.xlu0 %2653
        %v2655 = vperm.slane %v2102, 2
        %v2656 = vlaneseq
        %v2657 = vshrl.u32 %v2656, 7
        %2659 = vset.pattern.permute.xlu0 %v2657
        %2660 = vperm.xlu0 %2659, %v2655
        %v2661 = vpop.permute.xlu0 %2660
        %v2662 = vlaneseq
        %v2663 = vshrl.u32 %v2662, 7
        %v2664 = vadd.s32 %v2663, 8
        %2665 = vset.pattern.permute.xlu0 %v2664
        %2666 = vperm.xlu0 %2665, %v2655
        %v2667 = vpop.permute.xlu0 %2666
        %v2668 = vperm.slane %v2102, 3
        %v2669 = vlaneseq
        %v2670 = vshrl.u32 %v2669, 7
        %2672 = vset.pattern.permute.xlu0 %v2670
        %2673 = vperm.xlu0 %2672, %v2668
        %v2674 = vpop.permute.xlu0 %2673
        %v2675 = vlaneseq
        %v2676 = vshrl.u32 %v2675, 7
        %v2677 = vadd.s32 %v2676, 8
        %2678 = vset.pattern.permute.xlu0 %v2677
        %2679 = vperm.xlu0 %2678, %v2668
        %v2680 = vpop.permute.xlu0 %2679
        %v2681 = vperm.slane %v2102, 4
        %v2682 = vlaneseq
        %v2683 = vshrl.u32 %v2682, 7
        %2685 = vset.pattern.permute.xlu0 %v2683
        %2686 = vperm.xlu0 %2685, %v2681
        %v2687 = vpop.permute.xlu0 %2686
        %v2688 = vlaneseq
        %v2689 = vshrl.u32 %v2688, 7
        %v2690 = vadd.s32 %v2689, 8
        %2691 = vset.pattern.permute.xlu0 %v2690
        %2692 = vperm.xlu0 %2691, %v2681
        %v2693 = vpop.permute.xlu0 %2692
        %v2694 = vperm.slane %v2102, 5
        %v2695 = vlaneseq
        %v2696 = vshrl.u32 %v2695, 7
        %2698 = vset.pattern.permute.xlu0 %v2696
        %2699 = vperm.xlu0 %2698, %v2694
        %v2700 = vpop.permute.xlu0 %2699
        %v2701 = vlaneseq
        %v2702 = vshrl.u32 %v2701, 7
        %v2703 = vadd.s32 %v2702, 8
        %2704 = vset.pattern.permute.xlu0 %v2703
        %2705 = vperm.xlu0 %2704, %v2694
        %v2706 = vpop.permute.xlu0 %2705
        %v2707 = vperm.slane %v2102, 6
        %v2708 = vlaneseq
        %v2709 = vshrl.u32 %v2708, 7
        %2711 = vset.pattern.permute.xlu0 %v2709
        %2712 = vperm.xlu0 %2711, %v2707
        %v2713 = vpop.permute.xlu0 %2712
        %v2714 = vlaneseq
        %v2715 = vshrl.u32 %v2714, 7
        %v2716 = vadd.s32 %v2715, 8
        %2717 = vset.pattern.permute.xlu0 %v2716
        %2718 = vperm.xlu0 %2717, %v2707
        %v2719 = vpop.permute.xlu0 %2718
        %v2720 = vperm.slane %v2102, 7
        %v2721 = vlaneseq
        %v2722 = vshrl.u32 %v2721, 7
        %2724 = vset.pattern.permute.xlu0 %v2722
        %2725 = vperm.xlu0 %2724, %v2720
        %v2726 = vpop.permute.xlu0 %2725
        %v2727 = vlaneseq
        %v2728 = vshrl.u32 %v2727, 7
        %v2729 = vadd.s32 %v2728, 8
        %2730 = vset.pattern.permute.xlu0 %v2729
        %2731 = vperm.xlu0 %2730, %v2720
        %v2732 = vpop.permute.xlu0 %2731
        %v2733 = vperm.slane %v2103, 0
        %v2734 = vlaneseq
        %v2735 = vshrl.u32 %v2734, 7
        %2737 = vset.pattern.permute.xlu0 %v2735
        %2738 = vperm.xlu0 %2737, %v2733
        %v2739 = vpop.permute.xlu0 %2738
        %v2740 = vlaneseq
        %v2741 = vshrl.u32 %v2740, 7
        %v2742 = vadd.s32 %v2741, 8
        %2743 = vset.pattern.permute.xlu0 %v2742
        %2744 = vperm.xlu0 %2743, %v2733
        %v2745 = vpop.permute.xlu0 %2744
        %v2746 = vperm.slane %v2103, 1
        %v2747 = vlaneseq
        %v2748 = vshrl.u32 %v2747, 7
        %2750 = vset.pattern.permute.xlu0 %v2748
        %2751 = vperm.xlu0 %2750, %v2746
        %v2752 = vpop.permute.xlu0 %2751
        %v2753 = vlaneseq
        %v2754 = vshrl.u32 %v2753, 7
        %v2755 = vadd.s32 %v2754, 8
        %2756 = vset.pattern.permute.xlu0 %v2755
        %2757 = vperm.xlu0 %2756, %v2746
        %v2758 = vpop.permute.xlu0 %2757
        %v2759 = vperm.slane %v2103, 2
        %v2760 = vlaneseq
        %v2761 = vshrl.u32 %v2760, 7
        %2763 = vset.pattern.permute.xlu0 %v2761
        %2764 = vperm.xlu0 %2763, %v2759
        %v2765 = vpop.permute.xlu0 %2764
        %v2766 = vlaneseq
        %v2767 = vshrl.u32 %v2766, 7
        %v2768 = vadd.s32 %v2767, 8
        %2769 = vset.pattern.permute.xlu0 %v2768
        %2770 = vperm.xlu0 %2769, %v2759
        %v2771 = vpop.permute.xlu0 %2770
        %v2772 = vperm.slane %v2103, 3
        %v2773 = vlaneseq
        %v2774 = vshrl.u32 %v2773, 7
        %2776 = vset.pattern.permute.xlu0 %v2774
        %2777 = vperm.xlu0 %2776, %v2772
        %v2778 = vpop.permute.xlu0 %2777
        %v2779 = vlaneseq
        %v2780 = vshrl.u32 %v2779, 7
        %v2781 = vadd.s32 %v2780, 8
        %2782 = vset.pattern.permute.xlu0 %v2781
        %2783 = vperm.xlu0 %2782, %v2772
        %v2784 = vpop.permute.xlu0 %2783
        %v2785 = vperm.slane %v2103, 4
        %v2786 = vlaneseq
        %v2787 = vshrl.u32 %v2786, 7
        %2789 = vset.pattern.permute.xlu0 %v2787
        %2790 = vperm.xlu0 %2789, %v2785
        %v2791 = vpop.permute.xlu0 %2790
        %v2792 = vlaneseq
        %v2793 = vshrl.u32 %v2792, 7
        %v2794 = vadd.s32 %v2793, 8
        %2795 = vset.pattern.permute.xlu0 %v2794
        %2796 = vperm.xlu0 %2795, %v2785
        %v2797 = vpop.permute.xlu0 %2796
        %v2798 = vperm.slane %v2103, 5
        %v2799 = vlaneseq
        %v2800 = vshrl.u32 %v2799, 7
        %2802 = vset.pattern.permute.xlu0 %v2800
        %2803 = vperm.xlu0 %2802, %v2798
        %v2804 = vpop.permute.xlu0 %2803
        %v2805 = vlaneseq
        %v2806 = vshrl.u32 %v2805, 7
        %v2807 = vadd.s32 %v2806, 8
        %2808 = vset.pattern.permute.xlu0 %v2807
        %2809 = vperm.xlu0 %2808, %v2798
        %v2810 = vpop.permute.xlu0 %2809
        %v2811 = vperm.slane %v2103, 6
        %v2812 = vlaneseq
        %v2813 = vshrl.u32 %v2812, 7
        %2815 = vset.pattern.permute.xlu0 %v2813
        %2816 = vperm.xlu0 %2815, %v2811
        %v2817 = vpop.permute.xlu0 %2816
        %v2818 = vlaneseq
        %v2819 = vshrl.u32 %v2818, 7
        %v2820 = vadd.s32 %v2819, 8
        %2821 = vset.pattern.permute.xlu0 %v2820
        %2822 = vperm.xlu0 %2821, %v2811
        %v2823 = vpop.permute.xlu0 %2822
        %v2824 = vperm.slane %v2103, 7
        %v2825 = vlaneseq
        %v2826 = vshrl.u32 %v2825, 7
        %2828 = vset.pattern.permute.xlu0 %v2826
        %2829 = vperm.xlu0 %2828, %v2824
        %v2830 = vpop.permute.xlu0 %2829
        %v2831 = vlaneseq
        %v2832 = vshrl.u32 %v2831, 7
        %v2833 = vadd.s32 %v2832, 8
        %2834 = vset.pattern.permute.xlu0 %v2833
        %2835 = vperm.xlu0 %2834, %v2824
        %v2836 = vpop.permute.xlu0 %2835
        %v2837 = vperm.slane %v2104, 0
        %v2838 = vlaneseq
        %v2839 = vshrl.u32 %v2838, 7
        %2841 = vset.pattern.permute.xlu0 %v2839
        %2842 = vperm.xlu0 %2841, %v2837
        %v2843 = vpop.permute.xlu0 %2842
        %v2844 = vlaneseq
        %v2845 = vshrl.u32 %v2844, 7
        %v2846 = vadd.s32 %v2845, 8
        %2847 = vset.pattern.permute.xlu0 %v2846
        %2848 = vperm.xlu0 %2847, %v2837
        %v2849 = vpop.permute.xlu0 %2848
        %v2850 = vperm.slane %v2104, 1
        %v2851 = vlaneseq
        %v2852 = vshrl.u32 %v2851, 7
        %2854 = vset.pattern.permute.xlu0 %v2852
        %2855 = vperm.xlu0 %2854, %v2850
        %v2856 = vpop.permute.xlu0 %2855
        %v2857 = vlaneseq
        %v2858 = vshrl.u32 %v2857, 7
        %v2859 = vadd.s32 %v2858, 8
        %2860 = vset.pattern.permute.xlu0 %v2859
        %2861 = vperm.xlu0 %2860, %v2850
        %v2862 = vpop.permute.xlu0 %2861
        %v2863 = vperm.slane %v2104, 2
        %v2864 = vlaneseq
        %v2865 = vshrl.u32 %v2864, 7
        %2867 = vset.pattern.permute.xlu0 %v2865
        %2868 = vperm.xlu0 %2867, %v2863
        %v2869 = vpop.permute.xlu0 %2868
        %v2870 = vlaneseq
        %v2871 = vshrl.u32 %v2870, 7
        %v2872 = vadd.s32 %v2871, 8
        %2873 = vset.pattern.permute.xlu0 %v2872
        %2874 = vperm.xlu0 %2873, %v2863
        %v2875 = vpop.permute.xlu0 %2874
        %v2876 = vperm.slane %v2104, 3
        %v2877 = vlaneseq
        %v2878 = vshrl.u32 %v2877, 7
        %2880 = vset.pattern.permute.xlu0 %v2878
        %2881 = vperm.xlu0 %2880, %v2876
        %v2882 = vpop.permute.xlu0 %2881
        %v2883 = vlaneseq
        %v2884 = vshrl.u32 %v2883, 7
        %v2885 = vadd.s32 %v2884, 8
        %2886 = vset.pattern.permute.xlu0 %v2885
        %2887 = vperm.xlu0 %2886, %v2876
        %v2888 = vpop.permute.xlu0 %2887
        %v2889 = vperm.slane %v2104, 4
        %v2890 = vlaneseq
        %v2891 = vshrl.u32 %v2890, 7
        %2893 = vset.pattern.permute.xlu0 %v2891
        %2894 = vperm.xlu0 %2893, %v2889
        %v2895 = vpop.permute.xlu0 %2894
        %v2896 = vlaneseq
        %v2897 = vshrl.u32 %v2896, 7
        %v2898 = vadd.s32 %v2897, 8
        %2899 = vset.pattern.permute.xlu0 %v2898
        %2900 = vperm.xlu0 %2899, %v2889
        %v2901 = vpop.permute.xlu0 %2900
        %v2902 = vperm.slane %v2104, 5
        %v2903 = vlaneseq
        %v2904 = vshrl.u32 %v2903, 7
        %2906 = vset.pattern.permute.xlu0 %v2904
        %2907 = vperm.xlu0 %2906, %v2902
        %v2908 = vpop.permute.xlu0 %2907
        %v2909 = vlaneseq
        %v2910 = vshrl.u32 %v2909, 7
        %v2911 = vadd.s32 %v2910, 8
        %2912 = vset.pattern.permute.xlu0 %v2911
        %2913 = vperm.xlu0 %2912, %v2902
        %v2914 = vpop.permute.xlu0 %2913
        %v2915 = vperm.slane %v2104, 6
        %v2916 = vlaneseq
        %v2917 = vshrl.u32 %v2916, 7
        %2919 = vset.pattern.permute.xlu0 %v2917
        %2920 = vperm.xlu0 %2919, %v2915
        %v2921 = vpop.permute.xlu0 %2920
        %v2922 = vlaneseq
        %v2923 = vshrl.u32 %v2922, 7
        %v2924 = vadd.s32 %v2923, 8
        %2925 = vset.pattern.permute.xlu0 %v2924
        %2926 = vperm.xlu0 %2925, %v2915
        %v2927 = vpop.permute.xlu0 %2926
        %v2928 = vperm.slane %v2104, 7
        %v2929 = vlaneseq
        %v2930 = vshrl.u32 %v2929, 7
        %2932 = vset.pattern.permute.xlu0 %v2930
        %2933 = vperm.xlu0 %2932, %v2928
        %v2934 = vpop.permute.xlu0 %2933
        %v2935 = vlaneseq
        %v2936 = vshrl.u32 %v2935, 7
        %v2937 = vadd.s32 %v2936, 8
        %2938 = vset.pattern.permute.xlu0 %v2937
        %2939 = vperm.xlu0 %2938, %v2928
        %v2940 = vpop.permute.xlu0 %2939
        %vm2941 = vcmask 7168
        %v2942 = vsel %vm2941, %v2115, %v2531
        %v2943 = vsel %vm2941, %v2121, %v2537
        %v2944 = vsel %vm2941, %v2128, %v2544
        %v2945 = vsel %vm2941, %v2134, %v2550
        %v2946 = vsel %vm2941, %v2141, %v2557
        %v2947 = vsel %vm2941, %v2147, %v2563
        %v2948 = vsel %vm2941, %v2154, %v2570
        %v2949 = vsel %vm2941, %v2160, %v2576
        %v2950 = vsel %vm2941, %v2167, %v2583
        %v2951 = vsel %vm2941, %v2173, %v2589
        %v2952 = vsel %vm2941, %v2180, %v2596
        %v2953 = vsel %vm2941, %v2186, %v2602
        %v2954 = vsel %vm2941, %v2193, %v2609
        %v2955 = vsel %vm2941, %v2199, %v2615
        %v2956 = vsel %vm2941, %v2206, %v2622
        %v2957 = vsel %vm2941, %v2212, %v2628
        %v2958 = vsel %vm2941, %v2219, %v2635
        %v2959 = vsel %vm2941, %v2225, %v2641
        %v2960 = vsel %vm2941, %v2232, %v2648
        %v2961 = vsel %vm2941, %v2238, %v2654
        %v2962 = vsel %vm2941, %v2245, %v2661
        %v2963 = vsel %vm2941, %v2251, %v2667
        %v2964 = vsel %vm2941, %v2258, %v2674
        %v2965 = vsel %vm2941, %v2264, %v2680
        %v2966 = vsel %vm2941, %v2271, %v2687
        %v2967 = vsel %vm2941, %v2277, %v2693
        %v2968 = vsel %vm2941, %v2284, %v2700
        %v2969 = vsel %vm2941, %v2290, %v2706
        %v2970 = vsel %vm2941, %v2297, %v2713
        %v2971 = vsel %vm2941, %v2303, %v2719
        %v2972 = vsel %vm2941, %v2310, %v2726
        %v2973 = vsel %vm2941, %v2316, %v2732
        %v2974 = vsel %vm2941, %v2323, %v2739
        %v2975 = vsel %vm2941, %v2329, %v2745
        %v2976 = vsel %vm2941, %v2336, %v2752
        %v2977 = vsel %vm2941, %v2342, %v2758
        %v2978 = vsel %vm2941, %v2349, %v2765
        %v2979 = vsel %vm2941, %v2355, %v2771
        %v2980 = vsel %vm2941, %v2362, %v2778
        %v2981 = vsel %vm2941, %v2368, %v2784
        %v2982 = vsel %vm2941, %v2375, %v2791
        %v2983 = vsel %vm2941, %v2381, %v2797
        %v2984 = vsel %vm2941, %v2388, %v2804
        %v2985 = vsel %vm2941, %v2394, %v2810
        %v2986 = vsel %vm2941, %v2401, %v2817
        %v2987 = vsel %vm2941, %v2407, %v2823
        %v2988 = vsel %vm2941, %v2414, %v2830
        %v2989 = vsel %vm2941, %v2420, %v2836
        %v2990 = vsel %vm2941, %v2427, %v2843
        %v2991 = vsel %vm2941, %v2433, %v2849
        %v2992 = vsel %vm2941, %v2440, %v2856
        %v2993 = vsel %vm2941, %v2446, %v2862
        %v2994 = vsel %vm2941, %v2453, %v2869
        %v2995 = vsel %vm2941, %v2459, %v2875
        %v2996 = vsel %vm2941, %v2466, %v2882
        %v2997 = vsel %vm2941, %v2472, %v2888
        %v2998 = vsel %vm2941, %v2479, %v2895
        %v2999 = vsel %vm2941, %v2485, %v2901
        %v3000 = vsel %vm2941, %v2492, %v2908
        %v3001 = vsel %vm2941, %v2498, %v2914
        %v3002 = vsel %vm2941, %v2505, %v2921
        %v3003 = vsel %vm2941, %v2511, %v2927
        %v3004 = vsel %vm2941, %v2518, %v2934
        %v3005 = vsel %vm2941, %v2524, %v2940
        %v3006 = vrot.slane %v2946, 4
        %v3007 = vsel %vm860, %v3006, %v2942
        %v3008 = vrot.slane %v2942, 4
        %v3009 = vsel %vm860, %v2946, %v3008
        %v3011 = vunpack.c.l.s4 1983009808
        %v3012 = vunpack.c.0.s8 %v3011
        %v3013 = vperm.slane %v3007, %v3012
        %v3015 = vunpack.c.l.s4 1983009808
        %v3016 = vunpack.c.0.s8 %v3015
        %v3017 = vperm.slane %v3009, %v3016
        %v3018 = vrot.slane %v2948, 4
        %v3019 = vsel %vm860, %v3018, %v2944
        %v3020 = vrot.slane %v2944, 4
        %v3021 = vsel %vm860, %v2948, %v3020
        %v3023 = vunpack.c.l.s4 1983009808
        %v3024 = vunpack.c.0.s8 %v3023
        %v3025 = vperm.slane %v3019, %v3024
        %v3027 = vunpack.c.l.s4 1983009808
        %v3028 = vunpack.c.0.s8 %v3027
        %v3029 = vperm.slane %v3021, %v3028
        %v3030 = vrot.slane %v2954, 4
        %v3031 = vsel %vm860, %v3030, %v2950
        %v3032 = vrot.slane %v2950, 4
        %v3033 = vsel %vm860, %v2954, %v3032
        %v3035 = vunpack.c.l.s4 1983009808
        %v3036 = vunpack.c.0.s8 %v3035
        %v3037 = vperm.slane %v3031, %v3036
        %v3039 = vunpack.c.l.s4 1983009808
        %v3040 = vunpack.c.0.s8 %v3039
        %v3041 = vperm.slane %v3033, %v3040
        %v3042 = vrot.slane %v2956, 4
        %v3043 = vsel %vm860, %v3042, %v2952
        %v3044 = vrot.slane %v2952, 4
        %v3045 = vsel %vm860, %v2956, %v3044
        %v3047 = vunpack.c.l.s4 1983009808
        %v3048 = vunpack.c.0.s8 %v3047
        %v3049 = vperm.slane %v3043, %v3048
        %v3051 = vunpack.c.l.s4 1983009808
        %v3052 = vunpack.c.0.s8 %v3051
        %v3053 = vperm.slane %v3045, %v3052
        %v3054 = vrot.slane %v3025, 4
        %v3055 = vsel %vm860, %v3054, %v3013
        %v3056 = vrot.slane %v3013, 4
        %v3057 = vsel %vm860, %v3025, %v3056
        %v3059 = vunpack.c.l.s4 1934713408
        %v3060 = vunpack.c.0.s8 %v3059
        %v3061 = vperm.slane %v3055, %v3060
        %v3063 = vunpack.c.l.s4 1934713408
        %v3064 = vunpack.c.0.s8 %v3063
        %v3065 = vperm.slane %v3057, %v3064
        %v3066 = vrot.slane %v3029, 4
        %v3067 = vsel %vm860, %v3066, %v3017
        %v3068 = vrot.slane %v3017, 4
        %v3069 = vsel %vm860, %v3029, %v3068
        %v3071 = vunpack.c.l.s4 1934713408
        %v3072 = vunpack.c.0.s8 %v3071
        %v3073 = vperm.slane %v3067, %v3072
        %v3075 = vunpack.c.l.s4 1934713408
        %v3076 = vunpack.c.0.s8 %v3075
        %v3077 = vperm.slane %v3069, %v3076
        %v3078 = vrot.slane %v3049, 4
        %v3079 = vsel %vm860, %v3078, %v3037
        %v3080 = vrot.slane %v3037, 4
        %v3081 = vsel %vm860, %v3049, %v3080
        %v3083 = vunpack.c.l.s4 1934713408
        %v3084 = vunpack.c.0.s8 %v3083
        %v3085 = vperm.slane %v3079, %v3084
        %v3087 = vunpack.c.l.s4 1934713408
        %v3088 = vunpack.c.0.s8 %v3087
        %v3089 = vperm.slane %v3081, %v3088
        %v3090 = vrot.slane %v3053, 4
        %v3091 = vsel %vm860, %v3090, %v3041
        %v3092 = vrot.slane %v3041, 4
        %v3093 = vsel %vm860, %v3053, %v3092
        %v3095 = vunpack.c.l.s4 1934713408
        %v3096 = vunpack.c.0.s8 %v3095
        %v3097 = vperm.slane %v3091, %v3096
        %v3099 = vunpack.c.l.s4 1934713408
        %v3100 = vunpack.c.0.s8 %v3099
        %v3101 = vperm.slane %v3093, %v3100
        %v3102 = vrot.slane %v3085, 4
        %v3103 = vsel %vm860, %v3102, %v3061
        %v3104 = vrot.slane %v3061, 4
        %v3105 = vsel %vm860, %v3085, %v3104
        %v3106 = vrot.slane %v3089, 4
        %v3107 = vsel %vm860, %v3106, %v3065
        %v3108 = vrot.slane %v3065, 4
        %v3109 = vsel %vm860, %v3089, %v3108
        %v3110 = vrot.slane %v3097, 4
        %v3111 = vsel %vm860, %v3110, %v3073
        %v3112 = vrot.slane %v3073, 4
        %v3113 = vsel %vm860, %v3097, %v3112
        %v3114 = vrot.slane %v3101, 4
        %v3115 = vsel %vm860, %v3114, %v3077
        %v3116 = vrot.slane %v3077, 4
        %v3117 = vsel %vm860, %v3101, %v3116
        %v3118 = vrot.slane %v2962, 4
        %v3119 = vsel %vm860, %v3118, %v2958
        %v3120 = vrot.slane %v2958, 4
        %v3121 = vsel %vm860, %v2962, %v3120
        %v3123 = vunpack.c.l.s4 1983009808
        %v3124 = vunpack.c.0.s8 %v3123
        %v3125 = vperm.slane %v3119, %v3124
        %v3127 = vunpack.c.l.s4 1983009808
        %v3128 = vunpack.c.0.s8 %v3127
        %v3129 = vperm.slane %v3121, %v3128
        %v3130 = vrot.slane %v2964, 4
        %v3131 = vsel %vm860, %v3130, %v2960
        %v3132 = vrot.slane %v2960, 4
        %v3133 = vsel %vm860, %v2964, %v3132
        %v3135 = vunpack.c.l.s4 1983009808
        %v3136 = vunpack.c.0.s8 %v3135
        %v3137 = vperm.slane %v3131, %v3136
        %v3139 = vunpack.c.l.s4 1983009808
        %v3140 = vunpack.c.0.s8 %v3139
        %v3141 = vperm.slane %v3133, %v3140
        %v3142 = vrot.slane %v2970, 4
        %v3143 = vsel %vm860, %v3142, %v2966
        %v3144 = vrot.slane %v2966, 4
        %v3145 = vsel %vm860, %v2970, %v3144
        %v3147 = vunpack.c.l.s4 1983009808
        %v3148 = vunpack.c.0.s8 %v3147
        %v3149 = vperm.slane %v3143, %v3148
        %v3151 = vunpack.c.l.s4 1983009808
        %v3152 = vunpack.c.0.s8 %v3151
        %v3153 = vperm.slane %v3145, %v3152
        %v3154 = vrot.slane %v2972, 4
        %v3155 = vsel %vm860, %v3154, %v2968
        %v3156 = vrot.slane %v2968, 4
        %v3157 = vsel %vm860, %v2972, %v3156
        %v3159 = vunpack.c.l.s4 1983009808
        %v3160 = vunpack.c.0.s8 %v3159
        %v3161 = vperm.slane %v3155, %v3160
        %v3163 = vunpack.c.l.s4 1983009808
        %v3164 = vunpack.c.0.s8 %v3163
        %v3165 = vperm.slane %v3157, %v3164
        %v3166 = vrot.slane %v3137, 4
        %v3167 = vsel %vm860, %v3166, %v3125
        %v3168 = vrot.slane %v3125, 4
        %v3169 = vsel %vm860, %v3137, %v3168
        %v3171 = vunpack.c.l.s4 1934713408
        %v3172 = vunpack.c.0.s8 %v3171
        %v3173 = vperm.slane %v3167, %v3172
        %v3175 = vunpack.c.l.s4 1934713408
        %v3176 = vunpack.c.0.s8 %v3175
        %v3177 = vperm.slane %v3169, %v3176
        %v3178 = vrot.slane %v3141, 4
        %v3179 = vsel %vm860, %v3178, %v3129
        %v3180 = vrot.slane %v3129, 4
        %v3181 = vsel %vm860, %v3141, %v3180
        %v3183 = vunpack.c.l.s4 1934713408
        %v3184 = vunpack.c.0.s8 %v3183
        %v3185 = vperm.slane %v3179, %v3184
        %v3187 = vunpack.c.l.s4 1934713408
        %v3188 = vunpack.c.0.s8 %v3187
        %v3189 = vperm.slane %v3181, %v3188
        %v3190 = vrot.slane %v3161, 4
        %v3191 = vsel %vm860, %v3190, %v3149
        %v3192 = vrot.slane %v3149, 4
        %v3193 = vsel %vm860, %v3161, %v3192
        %v3195 = vunpack.c.l.s4 1934713408
        %v3196 = vunpack.c.0.s8 %v3195
        %v3197 = vperm.slane %v3191, %v3196
        %v3199 = vunpack.c.l.s4 1934713408
        %v3200 = vunpack.c.0.s8 %v3199
        %v3201 = vperm.slane %v3193, %v3200
        %v3202 = vrot.slane %v3165, 4
        %v3203 = vsel %vm860, %v3202, %v3153
        %v3204 = vrot.slane %v3153, 4
        %v3205 = vsel %vm860, %v3165, %v3204
        %v3207 = vunpack.c.l.s4 1934713408
        %v3208 = vunpack.c.0.s8 %v3207
        %v3209 = vperm.slane %v3203, %v3208
        %v3211 = vunpack.c.l.s4 1934713408
        %v3212 = vunpack.c.0.s8 %v3211
        %v3213 = vperm.slane %v3205, %v3212
        %v3214 = vrot.slane %v3197, 4
        %v3215 = vsel %vm860, %v3214, %v3173
        %v3216 = vrot.slane %v3173, 4
        %v3217 = vsel %vm860, %v3197, %v3216
        %v3218 = vrot.slane %v3201, 4
        %v3219 = vsel %vm860, %v3218, %v3177
        %v3220 = vrot.slane %v3177, 4
        %v3221 = vsel %vm860, %v3201, %v3220
        %v3222 = vrot.slane %v3209, 4
        %v3223 = vsel %vm860, %v3222, %v3185
        %v3224 = vrot.slane %v3185, 4
        %v3225 = vsel %vm860, %v3209, %v3224
        %v3226 = vrot.slane %v3213, 4
        %v3227 = vsel %vm860, %v3226, %v3189
        %v3228 = vrot.slane %v3189, 4
        %v3229 = vsel %vm860, %v3213, %v3228
        %v3230 = vrot.slane %v2978, 4
        %v3231 = vsel %vm860, %v3230, %v2974
        %v3232 = vrot.slane %v2974, 4
        %v3233 = vsel %vm860, %v2978, %v3232
        %v3235 = vunpack.c.l.s4 1983009808
        %v3236 = vunpack.c.0.s8 %v3235
        %v3237 = vperm.slane %v3231, %v3236
        %v3239 = vunpack.c.l.s4 1983009808
        %v3240 = vunpack.c.0.s8 %v3239
        %v3241 = vperm.slane %v3233, %v3240
        %v3242 = vrot.slane %v2980, 4
        %v3243 = vsel %vm860, %v3242, %v2976
        %v3244 = vrot.slane %v2976, 4
        %v3245 = vsel %vm860, %v2980, %v3244
        %v3247 = vunpack.c.l.s4 1983009808
        %v3248 = vunpack.c.0.s8 %v3247
        %v3249 = vperm.slane %v3243, %v3248
        %v3251 = vunpack.c.l.s4 1983009808
        %v3252 = vunpack.c.0.s8 %v3251
        %v3253 = vperm.slane %v3245, %v3252
        %v3254 = vrot.slane %v2986, 4
        %v3255 = vsel %vm860, %v3254, %v2982
        %v3256 = vrot.slane %v2982, 4
        %v3257 = vsel %vm860, %v2986, %v3256
        %v3259 = vunpack.c.l.s4 1983009808
        %v3260 = vunpack.c.0.s8 %v3259
        %v3261 = vperm.slane %v3255, %v3260
        %v3263 = vunpack.c.l.s4 1983009808
        %v3264 = vunpack.c.0.s8 %v3263
        %v3265 = vperm.slane %v3257, %v3264
        %v3266 = vrot.slane %v2988, 4
        %v3267 = vsel %vm860, %v3266, %v2984
        %v3268 = vrot.slane %v2984, 4
        %v3269 = vsel %vm860, %v2988, %v3268
        %v3271 = vunpack.c.l.s4 1983009808
        %v3272 = vunpack.c.0.s8 %v3271
        %v3273 = vperm.slane %v3267, %v3272
        %v3275 = vunpack.c.l.s4 1983009808
        %v3276 = vunpack.c.0.s8 %v3275
        %v3277 = vperm.slane %v3269, %v3276
        %v3278 = vrot.slane %v3249, 4
        %v3279 = vsel %vm860, %v3278, %v3237
        %v3280 = vrot.slane %v3237, 4
        %v3281 = vsel %vm860, %v3249, %v3280
        %v3283 = vunpack.c.l.s4 1934713408
        %v3284 = vunpack.c.0.s8 %v3283
        %v3285 = vperm.slane %v3279, %v3284
        %v3287 = vunpack.c.l.s4 1934713408
        %v3288 = vunpack.c.0.s8 %v3287
        %v3289 = vperm.slane %v3281, %v3288
        %v3290 = vrot.slane %v3253, 4
        %v3291 = vsel %vm860, %v3290, %v3241
        %v3292 = vrot.slane %v3241, 4
        %v3293 = vsel %vm860, %v3253, %v3292
        %v3295 = vunpack.c.l.s4 1934713408
        %v3296 = vunpack.c.0.s8 %v3295
        %v3297 = vperm.slane %v3291, %v3296
        %v3299 = vunpack.c.l.s4 1934713408
        %v3300 = vunpack.c.0.s8 %v3299
        %v3301 = vperm.slane %v3293, %v3300
        %v3302 = vrot.slane %v3273, 4
        %v3303 = vsel %vm860, %v3302, %v3261
        %v3304 = vrot.slane %v3261, 4
        %v3305 = vsel %vm860, %v3273, %v3304
        %v3307 = vunpack.c.l.s4 1934713408
        %v3308 = vunpack.c.0.s8 %v3307
        %v3309 = vperm.slane %v3303, %v3308
        %v3311 = vunpack.c.l.s4 1934713408
        %v3312 = vunpack.c.0.s8 %v3311
        %v3313 = vperm.slane %v3305, %v3312
        %v3314 = vrot.slane %v3277, 4
        %v3315 = vsel %vm860, %v3314, %v3265
        %v3316 = vrot.slane %v3265, 4
        %v3317 = vsel %vm860, %v3277, %v3316
        %v3319 = vunpack.c.l.s4 1934713408
        %v3320 = vunpack.c.0.s8 %v3319
        %v3321 = vperm.slane %v3315, %v3320
        %v3323 = vunpack.c.l.s4 1934713408
        %v3324 = vunpack.c.0.s8 %v3323
        %v3325 = vperm.slane %v3317, %v3324
        %v3326 = vrot.slane %v3309, 4
        %v3327 = vsel %vm860, %v3326, %v3285
        %v3328 = vrot.slane %v3285, 4
        %v3329 = vsel %vm860, %v3309, %v3328
        %v3330 = vrot.slane %v3313, 4
        %v3331 = vsel %vm860, %v3330, %v3289
        %v3332 = vrot.slane %v3289, 4
        %v3333 = vsel %vm860, %v3313, %v3332
        %v3334 = vrot.slane %v3321, 4
        %v3335 = vsel %vm860, %v3334, %v3297
        %v3336 = vrot.slane %v3297, 4
        %v3337 = vsel %vm860, %v3321, %v3336
        %v3338 = vrot.slane %v3325, 4
        %v3339 = vsel %vm860, %v3338, %v3301
        %v3340 = vrot.slane %v3301, 4
        %v3341 = vsel %vm860, %v3325, %v3340
        %v3342 = vrot.slane %v2994, 4
        %v3343 = vsel %vm860, %v3342, %v2990
        %v3344 = vrot.slane %v2990, 4
        %v3345 = vsel %vm860, %v2994, %v3344
        %v3347 = vunpack.c.l.s4 1983009808
        %v3348 = vunpack.c.0.s8 %v3347
        %v3349 = vperm.slane %v3343, %v3348
        %v3351 = vunpack.c.l.s4 1983009808
        %v3352 = vunpack.c.0.s8 %v3351
        %v3353 = vperm.slane %v3345, %v3352
        %v3354 = vrot.slane %v2996, 4
        %v3355 = vsel %vm860, %v3354, %v2992
        %v3356 = vrot.slane %v2992, 4
        %v3357 = vsel %vm860, %v2996, %v3356
        %v3359 = vunpack.c.l.s4 1983009808
        %v3360 = vunpack.c.0.s8 %v3359
        %v3361 = vperm.slane %v3355, %v3360
        %v3363 = vunpack.c.l.s4 1983009808
        %v3364 = vunpack.c.0.s8 %v3363
        %v3365 = vperm.slane %v3357, %v3364
        %v3366 = vrot.slane %v3002, 4
        %v3367 = vsel %vm860, %v3366, %v2998
        %v3368 = vrot.slane %v2998, 4
        %v3369 = vsel %vm860, %v3002, %v3368
        %v3371 = vunpack.c.l.s4 1983009808
        %v3372 = vunpack.c.0.s8 %v3371
        %v3373 = vperm.slane %v3367, %v3372
        %v3375 = vunpack.c.l.s4 1983009808
        %v3376 = vunpack.c.0.s8 %v3375
        %v3377 = vperm.slane %v3369, %v3376
        %v3378 = vrot.slane %v3004, 4
        %v3379 = vsel %vm860, %v3378, %v3000
        %v3380 = vrot.slane %v3000, 4
        %v3381 = vsel %vm860, %v3004, %v3380
        %v3383 = vunpack.c.l.s4 1983009808
        %v3384 = vunpack.c.0.s8 %v3383
        %v3385 = vperm.slane %v3379, %v3384
        %v3387 = vunpack.c.l.s4 1983009808
        %v3388 = vunpack.c.0.s8 %v3387
        %v3389 = vperm.slane %v3381, %v3388
        %v3390 = vrot.slane %v3361, 4
        %v3391 = vsel %vm860, %v3390, %v3349
        %v3392 = vrot.slane %v3349, 4
        %v3393 = vsel %vm860, %v3361, %v3392
        %v3395 = vunpack.c.l.s4 1934713408
        %v3396 = vunpack.c.0.s8 %v3395
        %v3397 = vperm.slane %v3391, %v3396
        %v3399 = vunpack.c.l.s4 1934713408
        %v3400 = vunpack.c.0.s8 %v3399
        %v3401 = vperm.slane %v3393, %v3400
        %v3402 = vrot.slane %v3365, 4
        %v3403 = vsel %vm860, %v3402, %v3353
        %v3404 = vrot.slane %v3353, 4
        %v3405 = vsel %vm860, %v3365, %v3404
        %v3407 = vunpack.c.l.s4 1934713408
        %v3408 = vunpack.c.0.s8 %v3407
        %v3409 = vperm.slane %v3403, %v3408
        %v3411 = vunpack.c.l.s4 1934713408
        %v3412 = vunpack.c.0.s8 %v3411
        %v3413 = vperm.slane %v3405, %v3412
        %v3414 = vrot.slane %v3385, 4
        %v3415 = vsel %vm860, %v3414, %v3373
        %v3416 = vrot.slane %v3373, 4
        %v3417 = vsel %vm860, %v3385, %v3416
        %v3419 = vunpack.c.l.s4 1934713408
        %v3420 = vunpack.c.0.s8 %v3419
        %v3421 = vperm.slane %v3415, %v3420
        %v3423 = vunpack.c.l.s4 1934713408
        %v3424 = vunpack.c.0.s8 %v3423
        %v3425 = vperm.slane %v3417, %v3424
        %v3426 = vrot.slane %v3389, 4
        %v3427 = vsel %vm860, %v3426, %v3377
        %v3428 = vrot.slane %v3377, 4
        %v3429 = vsel %vm860, %v3389, %v3428
        %v3431 = vunpack.c.l.s4 1934713408
        %v3432 = vunpack.c.0.s8 %v3431
        %v3433 = vperm.slane %v3427, %v3432
        %v3435 = vunpack.c.l.s4 1934713408
        %v3436 = vunpack.c.0.s8 %v3435
        %v3437 = vperm.slane %v3429, %v3436
        %v3438 = vrot.slane %v3421, 4
        %v3439 = vsel %vm860, %v3438, %v3397
        %v3440 = vrot.slane %v3397, 4
        %v3441 = vsel %vm860, %v3421, %v3440
        %v3442 = vrot.slane %v3425, 4
        %v3443 = vsel %vm860, %v3442, %v3401
        %v3444 = vrot.slane %v3401, 4
        %v3445 = vsel %vm860, %v3425, %v3444
        %v3446 = vrot.slane %v3433, 4
        %v3447 = vsel %vm860, %v3446, %v3409
        %v3448 = vrot.slane %v3409, 4
        %v3449 = vsel %vm860, %v3433, %v3448
        %v3450 = vrot.slane %v3437, 4
        %v3451 = vsel %vm860, %v3450, %v3413
        %v3452 = vrot.slane %v3413, 4
        %v3453 = vsel %vm860, %v3437, %v3452
        %v3454 = vrot.slane %v2947, 4
        %v3455 = vsel %vm860, %v3454, %v2943
        %v3456 = vrot.slane %v2943, 4
        %v3457 = vsel %vm860, %v2947, %v3456
        %v3459 = vunpack.c.l.s4 1983009808
        %v3460 = vunpack.c.0.s8 %v3459
        %v3461 = vperm.slane %v3455, %v3460
        %v3463 = vunpack.c.l.s4 1983009808
        %v3464 = vunpack.c.0.s8 %v3463
        %v3465 = vperm.slane %v3457, %v3464
        %v3466 = vrot.slane %v2949, 4
        %v3467 = vsel %vm860, %v3466, %v2945
        %v3468 = vrot.slane %v2945, 4
        %v3469 = vsel %vm860, %v2949, %v3468
        %v3471 = vunpack.c.l.s4 1983009808
        %v3472 = vunpack.c.0.s8 %v3471
        %v3473 = vperm.slane %v3467, %v3472
        %v3475 = vunpack.c.l.s4 1983009808
        %v3476 = vunpack.c.0.s8 %v3475
        %v3477 = vperm.slane %v3469, %v3476
        %v3478 = vrot.slane %v2955, 4
        %v3479 = vsel %vm860, %v3478, %v2951
        %v3480 = vrot.slane %v2951, 4
        %v3481 = vsel %vm860, %v2955, %v3480
        %v3483 = vunpack.c.l.s4 1983009808
        %v3484 = vunpack.c.0.s8 %v3483
        %v3485 = vperm.slane %v3479, %v3484
        %v3487 = vunpack.c.l.s4 1983009808
        %v3488 = vunpack.c.0.s8 %v3487
        %v3489 = vperm.slane %v3481, %v3488
        %v3490 = vrot.slane %v2957, 4
        %v3491 = vsel %vm860, %v3490, %v2953
        %v3492 = vrot.slane %v2953, 4
        %v3493 = vsel %vm860, %v2957, %v3492
        %v3495 = vunpack.c.l.s4 1983009808
        %v3496 = vunpack.c.0.s8 %v3495
        %v3497 = vperm.slane %v3491, %v3496
        %v3499 = vunpack.c.l.s4 1983009808
        %v3500 = vunpack.c.0.s8 %v3499
        %v3501 = vperm.slane %v3493, %v3500
        %v3502 = vrot.slane %v3473, 4
        %v3503 = vsel %vm860, %v3502, %v3461
        %v3504 = vrot.slane %v3461, 4
        %v3505 = vsel %vm860, %v3473, %v3504
        %v3507 = vunpack.c.l.s4 1934713408
        %v3508 = vunpack.c.0.s8 %v3507
        %v3509 = vperm.slane %v3503, %v3508
        %v3511 = vunpack.c.l.s4 1934713408
        %v3512 = vunpack.c.0.s8 %v3511
        %v3513 = vperm.slane %v3505, %v3512
        %v3514 = vrot.slane %v3477, 4
        %v3515 = vsel %vm860, %v3514, %v3465
        %v3516 = vrot.slane %v3465, 4
        %v3517 = vsel %vm860, %v3477, %v3516
        %v3519 = vunpack.c.l.s4 1934713408
        %v3520 = vunpack.c.0.s8 %v3519
        %v3521 = vperm.slane %v3515, %v3520
        %v3523 = vunpack.c.l.s4 1934713408
        %v3524 = vunpack.c.0.s8 %v3523
        %v3525 = vperm.slane %v3517, %v3524
        %v3526 = vrot.slane %v3497, 4
        %v3527 = vsel %vm860, %v3526, %v3485
        %v3528 = vrot.slane %v3485, 4
        %v3529 = vsel %vm860, %v3497, %v3528
        %v3531 = vunpack.c.l.s4 1934713408
        %v3532 = vunpack.c.0.s8 %v3531
        %v3533 = vperm.slane %v3527, %v3532
        %v3535 = vunpack.c.l.s4 1934713408
        %v3536 = vunpack.c.0.s8 %v3535
        %v3537 = vperm.slane %v3529, %v3536
        %v3538 = vrot.slane %v3501, 4
        %v3539 = vsel %vm860, %v3538, %v3489
        %v3540 = vrot.slane %v3489, 4
        %v3541 = vsel %vm860, %v3501, %v3540
        %v3543 = vunpack.c.l.s4 1934713408
        %v3544 = vunpack.c.0.s8 %v3543
        %v3545 = vperm.slane %v3539, %v3544
        %v3547 = vunpack.c.l.s4 1934713408
        %v3548 = vunpack.c.0.s8 %v3547
        %v3549 = vperm.slane %v3541, %v3548
        %v3550 = vrot.slane %v3533, 4
        %v3551 = vsel %vm860, %v3550, %v3509
        %v3552 = vrot.slane %v3509, 4
        %v3553 = vsel %vm860, %v3533, %v3552
        %v3554 = vrot.slane %v3537, 4
        %v3555 = vsel %vm860, %v3554, %v3513
        %v3556 = vrot.slane %v3513, 4
        %v3557 = vsel %vm860, %v3537, %v3556
        %v3558 = vrot.slane %v3545, 4
        %v3559 = vsel %vm860, %v3558, %v3521
        %v3560 = vrot.slane %v3521, 4
        %v3561 = vsel %vm860, %v3545, %v3560
        %v3562 = vrot.slane %v3549, 4
        %v3563 = vsel %vm860, %v3562, %v3525
        %v3564 = vrot.slane %v3525, 4
        %v3565 = vsel %vm860, %v3549, %v3564
        %v3566 = vrot.slane %v2963, 4
        %v3567 = vsel %vm860, %v3566, %v2959
        %v3568 = vrot.slane %v2959, 4
        %v3569 = vsel %vm860, %v2963, %v3568
        %v3571 = vunpack.c.l.s4 1983009808
        %v3572 = vunpack.c.0.s8 %v3571
        %v3573 = vperm.slane %v3567, %v3572
        %v3575 = vunpack.c.l.s4 1983009808
        %v3576 = vunpack.c.0.s8 %v3575
        %v3577 = vperm.slane %v3569, %v3576
        %v3578 = vrot.slane %v2965, 4
        %v3579 = vsel %vm860, %v3578, %v2961
        %v3580 = vrot.slane %v2961, 4
        %v3581 = vsel %vm860, %v2965, %v3580
        %v3583 = vunpack.c.l.s4 1983009808
        %v3584 = vunpack.c.0.s8 %v3583
        %v3585 = vperm.slane %v3579, %v3584
        %v3587 = vunpack.c.l.s4 1983009808
        %v3588 = vunpack.c.0.s8 %v3587
        %v3589 = vperm.slane %v3581, %v3588
        %v3590 = vrot.slane %v2971, 4
        %v3591 = vsel %vm860, %v3590, %v2967
        %v3592 = vrot.slane %v2967, 4
        %v3593 = vsel %vm860, %v2971, %v3592
        %v3595 = vunpack.c.l.s4 1983009808
        %v3596 = vunpack.c.0.s8 %v3595
        %v3597 = vperm.slane %v3591, %v3596
        %v3599 = vunpack.c.l.s4 1983009808
        %v3600 = vunpack.c.0.s8 %v3599
        %v3601 = vperm.slane %v3593, %v3600
        %v3602 = vrot.slane %v2973, 4
        %v3603 = vsel %vm860, %v3602, %v2969
        %v3604 = vrot.slane %v2969, 4
        %v3605 = vsel %vm860, %v2973, %v3604
        %v3607 = vunpack.c.l.s4 1983009808
        %v3608 = vunpack.c.0.s8 %v3607
        %v3609 = vperm.slane %v3603, %v3608
        %v3611 = vunpack.c.l.s4 1983009808
        %v3612 = vunpack.c.0.s8 %v3611
        %v3613 = vperm.slane %v3605, %v3612
        %v3614 = vrot.slane %v3585, 4
        %v3615 = vsel %vm860, %v3614, %v3573
        %v3616 = vrot.slane %v3573, 4
        %v3617 = vsel %vm860, %v3585, %v3616
        %v3619 = vunpack.c.l.s4 1934713408
        %v3620 = vunpack.c.0.s8 %v3619
        %v3621 = vperm.slane %v3615, %v3620
        %v3623 = vunpack.c.l.s4 1934713408
        %v3624 = vunpack.c.0.s8 %v3623
        %v3625 = vperm.slane %v3617, %v3624
        %v3626 = vrot.slane %v3589, 4
        %v3627 = vsel %vm860, %v3626, %v3577
        %v3628 = vrot.slane %v3577, 4
        %v3629 = vsel %vm860, %v3589, %v3628
        %v3631 = vunpack.c.l.s4 1934713408
        %v3632 = vunpack.c.0.s8 %v3631
        %v3633 = vperm.slane %v3627, %v3632
        %v3635 = vunpack.c.l.s4 1934713408
        %v3636 = vunpack.c.0.s8 %v3635
        %v3637 = vperm.slane %v3629, %v3636
        %v3638 = vrot.slane %v3609, 4
        %v3639 = vsel %vm860, %v3638, %v3597
        %v3640 = vrot.slane %v3597, 4
        %v3641 = vsel %vm860, %v3609, %v3640
        %v3643 = vunpack.c.l.s4 1934713408
        %v3644 = vunpack.c.0.s8 %v3643
        %v3645 = vperm.slane %v3639, %v3644
        %v3647 = vunpack.c.l.s4 1934713408
        %v3648 = vunpack.c.0.s8 %v3647
        %v3649 = vperm.slane %v3641, %v3648
        %v3650 = vrot.slane %v3613, 4
        %v3651 = vsel %vm860, %v3650, %v3601
        %v3652 = vrot.slane %v3601, 4
        %v3653 = vsel %vm860, %v3613, %v3652
        %v3655 = vunpack.c.l.s4 1934713408
        %v3656 = vunpack.c.0.s8 %v3655
        %v3657 = vperm.slane %v3651, %v3656
        %v3659 = vunpack.c.l.s4 1934713408
        %v3660 = vunpack.c.0.s8 %v3659
        %v3661 = vperm.slane %v3653, %v3660
        %v3662 = vrot.slane %v3645, 4
        %v3663 = vsel %vm860, %v3662, %v3621
        %v3664 = vrot.slane %v3621, 4
        %v3665 = vsel %vm860, %v3645, %v3664
        %v3666 = vrot.slane %v3649, 4
        %v3667 = vsel %vm860, %v3666, %v3625
        %v3668 = vrot.slane %v3625, 4
        %v3669 = vsel %vm860, %v3649, %v3668
        %v3670 = vrot.slane %v3657, 4
        %v3671 = vsel %vm860, %v3670, %v3633
        %v3672 = vrot.slane %v3633, 4
        %v3673 = vsel %vm860, %v3657, %v3672
        %v3674 = vrot.slane %v3661, 4
        %v3675 = vsel %vm860, %v3674, %v3637
        %v3676 = vrot.slane %v3637, 4
        %v3677 = vsel %vm860, %v3661, %v3676
        %v3678 = vrot.slane %v2979, 4
        %v3679 = vsel %vm860, %v3678, %v2975
        %v3680 = vrot.slane %v2975, 4
        %v3681 = vsel %vm860, %v2979, %v3680
        %v3683 = vunpack.c.l.s4 1983009808
        %v3684 = vunpack.c.0.s8 %v3683
        %v3685 = vperm.slane %v3679, %v3684
        %v3687 = vunpack.c.l.s4 1983009808
        %v3688 = vunpack.c.0.s8 %v3687
        %v3689 = vperm.slane %v3681, %v3688
        %v3690 = vrot.slane %v2981, 4
        %v3691 = vsel %vm860, %v3690, %v2977
        %v3692 = vrot.slane %v2977, 4
        %v3693 = vsel %vm860, %v2981, %v3692
        %v3695 = vunpack.c.l.s4 1983009808
        %v3696 = vunpack.c.0.s8 %v3695
        %v3697 = vperm.slane %v3691, %v3696
        %v3699 = vunpack.c.l.s4 1983009808
        %v3700 = vunpack.c.0.s8 %v3699
        %v3701 = vperm.slane %v3693, %v3700
        %v3702 = vrot.slane %v2987, 4
        %v3703 = vsel %vm860, %v3702, %v2983
        %v3704 = vrot.slane %v2983, 4
        %v3705 = vsel %vm860, %v2987, %v3704
        %v3707 = vunpack.c.l.s4 1983009808
        %v3708 = vunpack.c.0.s8 %v3707
        %v3709 = vperm.slane %v3703, %v3708
        %v3711 = vunpack.c.l.s4 1983009808
        %v3712 = vunpack.c.0.s8 %v3711
        %v3713 = vperm.slane %v3705, %v3712
        %v3714 = vrot.slane %v2989, 4
        %v3715 = vsel %vm860, %v3714, %v2985
        %v3716 = vrot.slane %v2985, 4
        %v3717 = vsel %vm860, %v2989, %v3716
        %v3719 = vunpack.c.l.s4 1983009808
        %v3720 = vunpack.c.0.s8 %v3719
        %v3721 = vperm.slane %v3715, %v3720
        %v3723 = vunpack.c.l.s4 1983009808
        %v3724 = vunpack.c.0.s8 %v3723
        %v3725 = vperm.slane %v3717, %v3724
        %v3726 = vrot.slane %v3697, 4
        %v3727 = vsel %vm860, %v3726, %v3685
        %v3728 = vrot.slane %v3685, 4
        %v3729 = vsel %vm860, %v3697, %v3728
        %v3731 = vunpack.c.l.s4 1934713408
        %v3732 = vunpack.c.0.s8 %v3731
        %v3733 = vperm.slane %v3727, %v3732
        %v3735 = vunpack.c.l.s4 1934713408
        %v3736 = vunpack.c.0.s8 %v3735
        %v3737 = vperm.slane %v3729, %v3736
        %v3738 = vrot.slane %v3701, 4
        %v3739 = vsel %vm860, %v3738, %v3689
        %v3740 = vrot.slane %v3689, 4
        %v3741 = vsel %vm860, %v3701, %v3740
        %v3743 = vunpack.c.l.s4 1934713408
        %v3744 = vunpack.c.0.s8 %v3743
        %v3745 = vperm.slane %v3739, %v3744
        %v3747 = vunpack.c.l.s4 1934713408
        %v3748 = vunpack.c.0.s8 %v3747
        %v3749 = vperm.slane %v3741, %v3748
        %v3750 = vrot.slane %v3721, 4
        %v3751 = vsel %vm860, %v3750, %v3709
        %v3752 = vrot.slane %v3709, 4
        %v3753 = vsel %vm860, %v3721, %v3752
        %v3755 = vunpack.c.l.s4 1934713408
        %v3756 = vunpack.c.0.s8 %v3755
        %v3757 = vperm.slane %v3751, %v3756
        %v3759 = vunpack.c.l.s4 1934713408
        %v3760 = vunpack.c.0.s8 %v3759
        %v3761 = vperm.slane %v3753, %v3760
        %v3762 = vrot.slane %v3725, 4
        %v3763 = vsel %vm860, %v3762, %v3713
        %v3764 = vrot.slane %v3713, 4
        %v3765 = vsel %vm860, %v3725, %v3764
        %v3767 = vunpack.c.l.s4 1934713408
        %v3768 = vunpack.c.0.s8 %v3767
        %v3769 = vperm.slane %v3763, %v3768
        %v3771 = vunpack.c.l.s4 1934713408
        %v3772 = vunpack.c.0.s8 %v3771
        %v3773 = vperm.slane %v3765, %v3772
        %v3774 = vrot.slane %v3757, 4
        %v3775 = vsel %vm860, %v3774, %v3733
        %v3776 = vrot.slane %v3733, 4
        %v3777 = vsel %vm860, %v3757, %v3776
        %v3778 = vrot.slane %v3761, 4
        %v3779 = vsel %vm860, %v3778, %v3737
        %v3780 = vrot.slane %v3737, 4
        %v3781 = vsel %vm860, %v3761, %v3780
        %v3782 = vrot.slane %v3769, 4
        %v3783 = vsel %vm860, %v3782, %v3745
        %v3784 = vrot.slane %v3745, 4
        %v3785 = vsel %vm860, %v3769, %v3784
        %v3786 = vrot.slane %v3773, 4
        %v3787 = vsel %vm860, %v3786, %v3749
        %v3788 = vrot.slane %v3749, 4
        %v3789 = vsel %vm860, %v3773, %v3788
        %v3790 = vrot.slane %v2995, 4
        %v3791 = vsel %vm860, %v3790, %v2991
        %v3792 = vrot.slane %v2991, 4
        %v3793 = vsel %vm860, %v2995, %v3792
        %v3795 = vunpack.c.l.s4 1983009808
        %v3796 = vunpack.c.0.s8 %v3795
        %v3797 = vperm.slane %v3791, %v3796
        %v3799 = vunpack.c.l.s4 1983009808
        %v3800 = vunpack.c.0.s8 %v3799
        %v3801 = vperm.slane %v3793, %v3800
        %v3802 = vrot.slane %v2997, 4
        %v3803 = vsel %vm860, %v3802, %v2993
        %v3804 = vrot.slane %v2993, 4
        %v3805 = vsel %vm860, %v2997, %v3804
        %v3807 = vunpack.c.l.s4 1983009808
        %v3808 = vunpack.c.0.s8 %v3807
        %v3809 = vperm.slane %v3803, %v3808
        %v3811 = vunpack.c.l.s4 1983009808
        %v3812 = vunpack.c.0.s8 %v3811
        %v3813 = vperm.slane %v3805, %v3812
        %v3814 = vrot.slane %v3003, 4
        %v3815 = vsel %vm860, %v3814, %v2999
        %v3816 = vrot.slane %v2999, 4
        %v3817 = vsel %vm860, %v3003, %v3816
        %v3819 = vunpack.c.l.s4 1983009808
        %v3820 = vunpack.c.0.s8 %v3819
        %v3821 = vperm.slane %v3815, %v3820
        %v3823 = vunpack.c.l.s4 1983009808
        %v3824 = vunpack.c.0.s8 %v3823
        %v3825 = vperm.slane %v3817, %v3824
        %v3826 = vrot.slane %v3005, 4
        %v3827 = vsel %vm860, %v3826, %v3001
        %v3828 = vrot.slane %v3001, 4
        %v3829 = vsel %vm860, %v3005, %v3828
        %v3831 = vunpack.c.l.s4 1983009808
        %v3832 = vunpack.c.0.s8 %v3831
        %v3833 = vperm.slane %v3827, %v3832
        %v3835 = vunpack.c.l.s4 1983009808
        %v3836 = vunpack.c.0.s8 %v3835
        %v3837 = vperm.slane %v3829, %v3836
        %v3838 = vrot.slane %v3809, 4
        %v3839 = vsel %vm860, %v3838, %v3797
        %v3840 = vrot.slane %v3797, 4
        %v3841 = vsel %vm860, %v3809, %v3840
        %v3843 = vunpack.c.l.s4 1934713408
        %v3844 = vunpack.c.0.s8 %v3843
        %v3845 = vperm.slane %v3839, %v3844
        %v3847 = vunpack.c.l.s4 1934713408
        %v3848 = vunpack.c.0.s8 %v3847
        %v3849 = vperm.slane %v3841, %v3848
        %v3850 = vrot.slane %v3813, 4
        %v3851 = vsel %vm860, %v3850, %v3801
        %v3852 = vrot.slane %v3801, 4
        %v3853 = vsel %vm860, %v3813, %v3852
        %v3855 = vunpack.c.l.s4 1934713408
        %v3856 = vunpack.c.0.s8 %v3855
        %v3857 = vperm.slane %v3851, %v3856
        %v3859 = vunpack.c.l.s4 1934713408
        %v3860 = vunpack.c.0.s8 %v3859
        %v3861 = vperm.slane %v3853, %v3860
        %v3862 = vrot.slane %v3833, 4
        %v3863 = vsel %vm860, %v3862, %v3821
        %v3864 = vrot.slane %v3821, 4
        %v3865 = vsel %vm860, %v3833, %v3864
        %v3867 = vunpack.c.l.s4 1934713408
        %v3868 = vunpack.c.0.s8 %v3867
        %v3869 = vperm.slane %v3863, %v3868
        %v3871 = vunpack.c.l.s4 1934713408
        %v3872 = vunpack.c.0.s8 %v3871
        %v3873 = vperm.slane %v3865, %v3872
        %v3874 = vrot.slane %v3837, 4
        %v3875 = vsel %vm860, %v3874, %v3825
        %v3876 = vrot.slane %v3825, 4
        %v3877 = vsel %vm860, %v3837, %v3876
        %v3879 = vunpack.c.l.s4 1934713408
        %v3880 = vunpack.c.0.s8 %v3879
        %v3881 = vperm.slane %v3875, %v3880
        %v3883 = vunpack.c.l.s4 1934713408
        %v3884 = vunpack.c.0.s8 %v3883
        %v3885 = vperm.slane %v3877, %v3884
        %v3886 = vrot.slane %v3869, 4
        %v3887 = vsel %vm860, %v3886, %v3845
        %v3888 = vrot.slane %v3845, 4
        %v3889 = vsel %vm860, %v3869, %v3888
        %v3890 = vrot.slane %v3873, 4
        %v3891 = vsel %vm860, %v3890, %v3849
        %v3892 = vrot.slane %v3849, 4
        %v3893 = vsel %vm860, %v3873, %v3892
        %v3894 = vrot.slane %v3881, 4
        %v3895 = vsel %vm860, %v3894, %v3857
        %v3896 = vrot.slane %v3857, 4
        %v3897 = vsel %vm860, %v3881, %v3896
        %v3898 = vrot.slane %v3885, 4
        %v3899 = vsel %vm860, %v3898, %v3861
        %v3900 = vrot.slane %v3861, 4
        %v3901 = vsel %vm860, %v3885, %v3900
        %3906 = vrot.lane.b32.xlu0 %v3105, 2
        %v3907 = vpop.permute.xlu0 %3906
        %3908 = vrot.lane.b32.xlu0 %v3217, 2
        %v3909 = vpop.permute.xlu0 %3908
        %3910 = vrot.lane.b32.xlu0 %v3329, 2
        %v3911 = vpop.permute.xlu0 %3910
        %3912 = vrot.lane.b32.xlu0 %v3441, 2
        %v3913 = vpop.permute.xlu0 %3912
        %3922 = vrot.lane.b32.xlu0 %v3107, 4
        %v3923 = vpop.permute.xlu0 %3922
        %3924 = vrot.lane.b32.xlu0 %v3219, 4
        %v3925 = vpop.permute.xlu0 %3924
        %3926 = vrot.lane.b32.xlu0 %v3331, 4
        %v3927 = vpop.permute.xlu0 %3926
        %3928 = vrot.lane.b32.xlu0 %v3443, 4
        %v3929 = vpop.permute.xlu0 %3928
        %3938 = vrot.lane.b32.xlu0 %v3109, 6
        %v3939 = vpop.permute.xlu0 %3938
        %3940 = vrot.lane.b32.xlu0 %v3221, 6
        %v3941 = vpop.permute.xlu0 %3940
        %3942 = vrot.lane.b32.xlu0 %v3333, 6
        %v3943 = vpop.permute.xlu0 %3942
        %3944 = vrot.lane.b32.xlu0 %v3445, 6
        %v3945 = vpop.permute.xlu0 %3944
        %3954 = vrot.lane.b32.xlu0 %v3111, 8
        %v3955 = vpop.permute.xlu0 %3954
        %3956 = vrot.lane.b32.xlu0 %v3223, 8
        %v3957 = vpop.permute.xlu0 %3956
        %3958 = vrot.lane.b32.xlu0 %v3335, 8
        %v3959 = vpop.permute.xlu0 %3958
        %3960 = vrot.lane.b32.xlu0 %v3447, 8
        %v3961 = vpop.permute.xlu0 %3960
        %3970 = vrot.lane.b32.xlu0 %v3113, 10
        %v3971 = vpop.permute.xlu0 %3970
        %3972 = vrot.lane.b32.xlu0 %v3225, 10
        %v3973 = vpop.permute.xlu0 %3972
        %3974 = vrot.lane.b32.xlu0 %v3337, 10
        %v3975 = vpop.permute.xlu0 %3974
        %3976 = vrot.lane.b32.xlu0 %v3449, 10
        %v3977 = vpop.permute.xlu0 %3976
        %3986 = vrot.lane.b32.xlu0 %v3115, 12
        %v3987 = vpop.permute.xlu0 %3986
        %3988 = vrot.lane.b32.xlu0 %v3227, 12
        %v3989 = vpop.permute.xlu0 %3988
        %3990 = vrot.lane.b32.xlu0 %v3339, 12
        %v3991 = vpop.permute.xlu0 %3990
        %3992 = vrot.lane.b32.xlu0 %v3451, 12
        %v3993 = vpop.permute.xlu0 %3992
        %4002 = vrot.lane.b32.xlu0 %v3117, 14
        %v4003 = vpop.permute.xlu0 %4002
        %4004 = vrot.lane.b32.xlu0 %v3229, 14
        %v4005 = vpop.permute.xlu0 %4004
        %4006 = vrot.lane.b32.xlu0 %v3341, 14
        %v4007 = vpop.permute.xlu0 %4006
        %4008 = vrot.lane.b32.xlu0 %v3453, 14
        %v4009 = vpop.permute.xlu0 %4008
        %4018 = vrot.lane.b32.xlu0 %v3551, 16
        %v4019 = vpop.permute.xlu0 %4018
        %4020 = vrot.lane.b32.xlu0 %v3663, 16
        %v4021 = vpop.permute.xlu0 %4020
        %4022 = vrot.lane.b32.xlu0 %v3775, 16
        %v4023 = vpop.permute.xlu0 %4022
        %4024 = vrot.lane.b32.xlu0 %v3887, 16
        %v4025 = vpop.permute.xlu0 %4024
        %4034 = vrot.lane.b32.xlu0 %v3553, 18
        %v4035 = vpop.permute.xlu0 %4034
        %4036 = vrot.lane.b32.xlu0 %v3665, 18
        %v4037 = vpop.permute.xlu0 %4036
        %4038 = vrot.lane.b32.xlu0 %v3777, 18
        %v4039 = vpop.permute.xlu0 %4038
        %4040 = vrot.lane.b32.xlu0 %v3889, 18
        %v4041 = vpop.permute.xlu0 %4040
        %4050 = vrot.lane.b32.xlu0 %v3555, 20
        %v4051 = vpop.permute.xlu0 %4050
        %4052 = vrot.lane.b32.xlu0 %v3667, 20
        %v4053 = vpop.permute.xlu0 %4052
        %4054 = vrot.lane.b32.xlu0 %v3779, 20
        %v4055 = vpop.permute.xlu0 %4054
        %4056 = vrot.lane.b32.xlu0 %v3891, 20
        %v4057 = vpop.permute.xlu0 %4056
        %4066 = vrot.lane.b32.xlu0 %v3557, 22
        %v4067 = vpop.permute.xlu0 %4066
        %4068 = vrot.lane.b32.xlu0 %v3669, 22
        %v4069 = vpop.permute.xlu0 %4068
        %4070 = vrot.lane.b32.xlu0 %v3781, 22
        %v4071 = vpop.permute.xlu0 %4070
        %4072 = vrot.lane.b32.xlu0 %v3893, 22
        %v4073 = vpop.permute.xlu0 %4072
        %4082 = vrot.lane.b32.xlu0 %v3559, 24
        %v4083 = vpop.permute.xlu0 %4082
        %4084 = vrot.lane.b32.xlu0 %v3671, 24
        %v4085 = vpop.permute.xlu0 %4084
        %4086 = vrot.lane.b32.xlu0 %v3783, 24
        %v4087 = vpop.permute.xlu0 %4086
        %4088 = vrot.lane.b32.xlu0 %v3895, 24
        %v4089 = vpop.permute.xlu0 %4088
        %4098 = vrot.lane.b32.xlu0 %v3561, 26
        %v4099 = vpop.permute.xlu0 %4098
        %4100 = vrot.lane.b32.xlu0 %v3673, 26
        %v4101 = vpop.permute.xlu0 %4100
        %4102 = vrot.lane.b32.xlu0 %v3785, 26
        %v4103 = vpop.permute.xlu0 %4102
        %4104 = vrot.lane.b32.xlu0 %v3897, 26
        %v4105 = vpop.permute.xlu0 %4104
        %4114 = vrot.lane.b32.xlu0 %v3563, 28
        %v4115 = vpop.permute.xlu0 %4114
        %4116 = vrot.lane.b32.xlu0 %v3675, 28
        %v4117 = vpop.permute.xlu0 %4116
        %4118 = vrot.lane.b32.xlu0 %v3787, 28
        %v4119 = vpop.permute.xlu0 %4118
        %4120 = vrot.lane.b32.xlu0 %v3899, 28
        %v4121 = vpop.permute.xlu0 %4120
        %4130 = vrot.lane.b32.xlu0 %v3565, 30
        %v4131 = vpop.permute.xlu0 %4130
        %4132 = vrot.lane.b32.xlu0 %v3677, 30
        %v4133 = vpop.permute.xlu0 %4132
        %4134 = vrot.lane.b32.xlu0 %v3789, 30
        %v4135 = vpop.permute.xlu0 %4134
        %4136 = vrot.lane.b32.xlu0 %v3901, 30
        %v4137 = vpop.permute.xlu0 %4136
        %v4142 = vsel %vm1996, %v3103, %v3907
        %v4143 = vsel %vm1996, %v3215, %v3909
        %v4144 = vsel %vm1996, %v3327, %v3911
        %v4145 = vsel %vm1996, %v3439, %v3913
        %v4146 = vsel %vm2001, %v4142, %v3923
        %v4147 = vsel %vm2001, %v4143, %v3925
        %v4148 = vsel %vm2001, %v4144, %v3927
        %v4149 = vsel %vm2001, %v4145, %v3929
        %v4150 = vsel %vm2006, %v4146, %v3939
        %v4151 = vsel %vm2006, %v4147, %v3941
        %v4152 = vsel %vm2006, %v4148, %v3943
        %v4153 = vsel %vm2006, %v4149, %v3945
        %v4154 = vsel %vm2011, %v4150, %v3955
        %v4155 = vsel %vm2011, %v4151, %v3957
        %v4156 = vsel %vm2011, %v4152, %v3959
        %v4157 = vsel %vm2011, %v4153, %v3961
        %v4158 = vsel %vm2016, %v4154, %v3971
        %v4159 = vsel %vm2016, %v4155, %v3973
        %v4160 = vsel %vm2016, %v4156, %v3975
        %v4161 = vsel %vm2016, %v4157, %v3977
        %v4162 = vsel %vm2021, %v4158, %v3987
        %v4163 = vsel %vm2021, %v4159, %v3989
        %v4164 = vsel %vm2021, %v4160, %v3991
        %v4165 = vsel %vm2021, %v4161, %v3993
        %v4166 = vsel %vm2026, %v4162, %v4003
        %v4167 = vsel %vm2026, %v4163, %v4005
        %v4168 = vsel %vm2026, %v4164, %v4007
        %v4169 = vsel %vm2026, %v4165, %v4009
        %v4170 = vsel %vm2031, %v4166, %v4019
        %v4171 = vsel %vm2031, %v4167, %v4021
        %v4172 = vsel %vm2031, %v4168, %v4023
        %v4173 = vsel %vm2031, %v4169, %v4025
        %v4174 = vsel %vm2036, %v4170, %v4035
        %v4175 = vsel %vm2036, %v4171, %v4037
        %v4176 = vsel %vm2036, %v4172, %v4039
        %v4177 = vsel %vm2036, %v4173, %v4041
        %v4178 = vsel %vm2041, %v4174, %v4051
        %v4179 = vsel %vm2041, %v4175, %v4053
        %v4180 = vsel %vm2041, %v4176, %v4055
        %v4181 = vsel %vm2041, %v4177, %v4057
        %v4182 = vsel %vm2046, %v4178, %v4067
        %v4183 = vsel %vm2046, %v4179, %v4069
        %v4184 = vsel %vm2046, %v4180, %v4071
        %v4185 = vsel %vm2046, %v4181, %v4073
        %v4186 = vsel %vm2051, %v4182, %v4083
        %v4187 = vsel %vm2051, %v4183, %v4085
        %v4188 = vsel %vm2051, %v4184, %v4087
        %v4189 = vsel %vm2051, %v4185, %v4089
        %v4190 = vsel %vm2056, %v4186, %v4099
        %v4191 = vsel %vm2056, %v4187, %v4101
        %v4192 = vsel %vm2056, %v4188, %v4103
        %v4193 = vsel %vm2056, %v4189, %v4105
        %v4194 = vsel %vm2061, %v4190, %v4115
        %v4195 = vsel %vm2061, %v4191, %v4117
        %v4196 = vsel %vm2061, %v4192, %v4119
        %v4197 = vsel %vm2061, %v4193, %v4121
        %v4198 = vsel %vm2066, %v4194, %v4131
        %v4199 = vsel %vm2066, %v4195, %v4133
        %v4200 = vsel %vm2066, %v4196, %v4135
        %v4201 = vsel %vm2066, %v4197, %v4137
        %4206 = vrot.lane.b32.xlu0 %v4198, 32
        %v4207 = vpop.permute.xlu0 %4206
        %4208 = vrot.lane.b32.xlu0 %v4199, 32
        %v4209 = vpop.permute.xlu0 %4208
        %4210 = vrot.lane.b32.xlu0 %v4200, 32
        %v4211 = vpop.permute.xlu0 %4210
        %4212 = vrot.lane.b32.xlu0 %v4201, 32
        %v4213 = vpop.permute.xlu0 %4212
        %v4218 = vsel %vm2087, %v4198, %v4207
        %v4219 = vsel %vm2087, %v4199, %v4209
        %v4220 = vsel %vm2087, %v4200, %v4211
        %v4221 = vsel %vm2087, %v4201, %v4213
        %s4222 = scalar_lea.vmem %s419, 32 [#allocation9]
        %4223 = vst.msk [vmem:[%s4222] sm:$0xff] %vm2092, %v4218
        %4224 = vst.msk [vmem:[%s4222 + $0x8] sm:$0xff] %vm2092, %v4219
        %4225 = vst.msk [vmem:[%s4222 + $0x10] sm:$0xff] %vm2092, %v4220
        %4226 = vst.msk [vmem:[%s4222 + $0x18] sm:$0xff] %vm2092, %v4221
        %v4227 = vld [vmem:[%s359] sm:$0xff]
        %v4228 = vld [vmem:[%s359 + $0x8] sm:$0xff]
        %v4229 = vld [vmem:[%s359 + $0x10] sm:$0xff]
        %v4230 = vld [vmem:[%s359 + $0x18] sm:$0xff]
        %v4231 = vmul.f32 %v4227, 0.5
        %v4232 = vmul.f32 %v4228, 0.5
        %v4233 = vmul.f32 %v4229, 0.5
        %v4234 = vmul.f32 %v4230, 0.5
        %v4235 = vsub.f32 0.0, %v4231
        %v4236 = vsub.f32 0.0, %v4232
        %v4237 = vsub.f32 0.0, %v4233
        %v4238 = vsub.f32 0.0, %v4234
        %v4239 = vperm.slane %v4235, 0
        %v4240 = vlaneseq
        %v4241 = vshrl.u32 %v4240, 7
        %4243 = vset.pattern.permute.xlu0 %v4241
        %4244 = vperm.xlu0 %4243, %v4239
        %v4245 = vpop.permute.xlu0 %4244
        %v4246 = vlaneseq
        %v4247 = vshrl.u32 %v4246, 7
        %v4248 = vadd.s32 %v4247, 8
        %4249 = vset.pattern.permute.xlu0 %v4248
        %4250 = vperm.xlu0 %4249, %v4239
        %v4251 = vpop.permute.xlu0 %4250
        %v4252 = vperm.slane %v4235, 1
        %v4253 = vlaneseq
        %v4254 = vshrl.u32 %v4253, 7
        %4256 = vset.pattern.permute.xlu0 %v4254
        %4257 = vperm.xlu0 %4256, %v4252
        %v4258 = vpop.permute.xlu0 %4257
        %v4259 = vlaneseq
        %v4260 = vshrl.u32 %v4259, 7
        %v4261 = vadd.s32 %v4260, 8
        %4262 = vset.pattern.permute.xlu0 %v4261
        %4263 = vperm.xlu0 %4262, %v4252
        %v4264 = vpop.permute.xlu0 %4263
        %v4265 = vperm.slane %v4235, 2
        %v4266 = vlaneseq
        %v4267 = vshrl.u32 %v4266, 7
        %4269 = vset.pattern.permute.xlu0 %v4267
        %4270 = vperm.xlu0 %4269, %v4265
        %v4271 = vpop.permute.xlu0 %4270
        %v4272 = vlaneseq
        %v4273 = vshrl.u32 %v4272, 7
        %v4274 = vadd.s32 %v4273, 8
        %4275 = vset.pattern.permute.xlu0 %v4274
        %4276 = vperm.xlu0 %4275, %v4265
        %v4277 = vpop.permute.xlu0 %4276
        %v4278 = vperm.slane %v4235, 3
        %v4279 = vlaneseq
        %v4280 = vshrl.u32 %v4279, 7
        %4282 = vset.pattern.permute.xlu0 %v4280
        %4283 = vperm.xlu0 %4282, %v4278
        %v4284 = vpop.permute.xlu0 %4283
        %v4285 = vlaneseq
        %v4286 = vshrl.u32 %v4285, 7
        %v4287 = vadd.s32 %v4286, 8
        %4288 = vset.pattern.permute.xlu0 %v4287
        %4289 = vperm.xlu0 %4288, %v4278
        %v4290 = vpop.permute.xlu0 %4289
        %v4291 = vperm.slane %v4235, 4
        %v4292 = vlaneseq
        %v4293 = vshrl.u32 %v4292, 7
        %4295 = vset.pattern.permute.xlu0 %v4293
        %4296 = vperm.xlu0 %4295, %v4291
        %v4297 = vpop.permute.xlu0 %4296
        %v4298 = vlaneseq
        %v4299 = vshrl.u32 %v4298, 7
        %v4300 = vadd.s32 %v4299, 8
        %4301 = vset.pattern.permute.xlu0 %v4300
        %4302 = vperm.xlu0 %4301, %v4291
        %v4303 = vpop.permute.xlu0 %4302
        %v4304 = vperm.slane %v4235, 5
        %v4305 = vlaneseq
        %v4306 = vshrl.u32 %v4305, 7
        %4308 = vset.pattern.permute.xlu0 %v4306
        %4309 = vperm.xlu0 %4308, %v4304
        %v4310 = vpop.permute.xlu0 %4309
        %v4311 = vlaneseq
        %v4312 = vshrl.u32 %v4311, 7
        %v4313 = vadd.s32 %v4312, 8
        %4314 = vset.pattern.permute.xlu0 %v4313
        %4315 = vperm.xlu0 %4314, %v4304
        %v4316 = vpop.permute.xlu0 %4315
        %v4317 = vperm.slane %v4235, 6
        %v4318 = vlaneseq
        %v4319 = vshrl.u32 %v4318, 7
        %4321 = vset.pattern.permute.xlu0 %v4319
        %4322 = vperm.xlu0 %4321, %v4317
        %v4323 = vpop.permute.xlu0 %4322
        %v4324 = vlaneseq
        %v4325 = vshrl.u32 %v4324, 7
        %v4326 = vadd.s32 %v4325, 8
        %4327 = vset.pattern.permute.xlu0 %v4326
        %4328 = vperm.xlu0 %4327, %v4317
        %v4329 = vpop.permute.xlu0 %4328
        %v4330 = vperm.slane %v4235, 7
        %v4331 = vlaneseq
        %v4332 = vshrl.u32 %v4331, 7
        %4334 = vset.pattern.permute.xlu0 %v4332
        %4335 = vperm.xlu0 %4334, %v4330
        %v4336 = vpop.permute.xlu0 %4335
        %v4337 = vlaneseq
        %v4338 = vshrl.u32 %v4337, 7
        %v4339 = vadd.s32 %v4338, 8
        %4340 = vset.pattern.permute.xlu0 %v4339
        %4341 = vperm.xlu0 %4340, %v4330
        %v4342 = vpop.permute.xlu0 %4341
        %v4343 = vperm.slane %v4236, 0
        %v4344 = vlaneseq
        %v4345 = vshrl.u32 %v4344, 7
        %4347 = vset.pattern.permute.xlu0 %v4345
        %4348 = vperm.xlu0 %4347, %v4343
        %v4349 = vpop.permute.xlu0 %4348
        %v4350 = vlaneseq
        %v4351 = vshrl.u32 %v4350, 7
        %v4352 = vadd.s32 %v4351, 8
        %4353 = vset.pattern.permute.xlu0 %v4352
        %4354 = vperm.xlu0 %4353, %v4343
        %v4355 = vpop.permute.xlu0 %4354
        %v4356 = vperm.slane %v4236, 1
        %v4357 = vlaneseq
        %v4358 = vshrl.u32 %v4357, 7
        %4360 = vset.pattern.permute.xlu0 %v4358
        %4361 = vperm.xlu0 %4360, %v4356
        %v4362 = vpop.permute.xlu0 %4361
        %v4363 = vlaneseq
        %v4364 = vshrl.u32 %v4363, 7
        %v4365 = vadd.s32 %v4364, 8
        %4366 = vset.pattern.permute.xlu0 %v4365
        %4367 = vperm.xlu0 %4366, %v4356
        %v4368 = vpop.permute.xlu0 %4367
        %v4369 = vperm.slane %v4236, 2
        %v4370 = vlaneseq
        %v4371 = vshrl.u32 %v4370, 7
        %4373 = vset.pattern.permute.xlu0 %v4371
        %4374 = vperm.xlu0 %4373, %v4369
        %v4375 = vpop.permute.xlu0 %4374
        %v4376 = vlaneseq
        %v4377 = vshrl.u32 %v4376, 7
        %v4378 = vadd.s32 %v4377, 8
        %4379 = vset.pattern.permute.xlu0 %v4378
        %4380 = vperm.xlu0 %4379, %v4369
        %v4381 = vpop.permute.xlu0 %4380
        %v4382 = vperm.slane %v4236, 3
        %v4383 = vlaneseq
        %v4384 = vshrl.u32 %v4383, 7
        %4386 = vset.pattern.permute.xlu0 %v4384
        %4387 = vperm.xlu0 %4386, %v4382
        %v4388 = vpop.permute.xlu0 %4387
        %v4389 = vlaneseq
        %v4390 = vshrl.u32 %v4389, 7
        %v4391 = vadd.s32 %v4390, 8
        %4392 = vset.pattern.permute.xlu0 %v4391
        %4393 = vperm.xlu0 %4392, %v4382
        %v4394 = vpop.permute.xlu0 %4393
        %v4395 = vperm.slane %v4236, 4
        %v4396 = vlaneseq
        %v4397 = vshrl.u32 %v4396, 7
        %4399 = vset.pattern.permute.xlu0 %v4397
        %4400 = vperm.xlu0 %4399, %v4395
        %v4401 = vpop.permute.xlu0 %4400
        %v4402 = vlaneseq
        %v4403 = vshrl.u32 %v4402, 7
        %v4404 = vadd.s32 %v4403, 8
        %4405 = vset.pattern.permute.xlu0 %v4404
        %4406 = vperm.xlu0 %4405, %v4395
        %v4407 = vpop.permute.xlu0 %4406
        %v4408 = vperm.slane %v4236, 5
        %v4409 = vlaneseq
        %v4410 = vshrl.u32 %v4409, 7
        %4412 = vset.pattern.permute.xlu0 %v4410
        %4413 = vperm.xlu0 %4412, %v4408
        %v4414 = vpop.permute.xlu0 %4413
        %v4415 = vlaneseq
        %v4416 = vshrl.u32 %v4415, 7
        %v4417 = vadd.s32 %v4416, 8
        %4418 = vset.pattern.permute.xlu0 %v4417
        %4419 = vperm.xlu0 %4418, %v4408
        %v4420 = vpop.permute.xlu0 %4419
        %v4421 = vperm.slane %v4236, 6
        %v4422 = vlaneseq
        %v4423 = vshrl.u32 %v4422, 7
        %4425 = vset.pattern.permute.xlu0 %v4423
        %4426 = vperm.xlu0 %4425, %v4421
        %v4427 = vpop.permute.xlu0 %4426
        %v4428 = vlaneseq
        %v4429 = vshrl.u32 %v4428, 7
        %v4430 = vadd.s32 %v4429, 8
        %4431 = vset.pattern.permute.xlu0 %v4430
        %4432 = vperm.xlu0 %4431, %v4421
        %v4433 = vpop.permute.xlu0 %4432
        %v4434 = vperm.slane %v4236, 7
        %v4435 = vlaneseq
        %v4436 = vshrl.u32 %v4435, 7
        %4438 = vset.pattern.permute.xlu0 %v4436
        %4439 = vperm.xlu0 %4438, %v4434
        %v4440 = vpop.permute.xlu0 %4439
        %v4441 = vlaneseq
        %v4442 = vshrl.u32 %v4441, 7
        %v4443 = vadd.s32 %v4442, 8
        %4444 = vset.pattern.permute.xlu0 %v4443
        %4445 = vperm.xlu0 %4444, %v4434
        %v4446 = vpop.permute.xlu0 %4445
        %v4447 = vperm.slane %v4237, 0
        %v4448 = vlaneseq
        %v4449 = vshrl.u32 %v4448, 7
        %4451 = vset.pattern.permute.xlu0 %v4449
        %4452 = vperm.xlu0 %4451, %v4447
        %v4453 = vpop.permute.xlu0 %4452
        %v4454 = vlaneseq
        %v4455 = vshrl.u32 %v4454, 7
        %v4456 = vadd.s32 %v4455, 8
        %4457 = vset.pattern.permute.xlu0 %v4456
        %4458 = vperm.xlu0 %4457, %v4447
        %v4459 = vpop.permute.xlu0 %4458
        %v4460 = vperm.slane %v4237, 1
        %v4461 = vlaneseq
        %v4462 = vshrl.u32 %v4461, 7
        %4464 = vset.pattern.permute.xlu0 %v4462
        %4465 = vperm.xlu0 %4464, %v4460
        %v4466 = vpop.permute.xlu0 %4465
        %v4467 = vlaneseq
        %v4468 = vshrl.u32 %v4467, 7
        %v4469 = vadd.s32 %v4468, 8
        %4470 = vset.pattern.permute.xlu0 %v4469
        %4471 = vperm.xlu0 %4470, %v4460
        %v4472 = vpop.permute.xlu0 %4471
        %v4473 = vperm.slane %v4237, 2
        %v4474 = vlaneseq
        %v4475 = vshrl.u32 %v4474, 7
        %4477 = vset.pattern.permute.xlu0 %v4475
        %4478 = vperm.xlu0 %4477, %v4473
        %v4479 = vpop.permute.xlu0 %4478
        %v4480 = vlaneseq
        %v4481 = vshrl.u32 %v4480, 7
        %v4482 = vadd.s32 %v4481, 8
        %4483 = vset.pattern.permute.xlu0 %v4482
        %4484 = vperm.xlu0 %4483, %v4473
        %v4485 = vpop.permute.xlu0 %4484
        %v4486 = vperm.slane %v4237, 3
        %v4487 = vlaneseq
        %v4488 = vshrl.u32 %v4487, 7
        %4490 = vset.pattern.permute.xlu0 %v4488
        %4491 = vperm.xlu0 %4490, %v4486
        %v4492 = vpop.permute.xlu0 %4491
        %v4493 = vlaneseq
        %v4494 = vshrl.u32 %v4493, 7
        %v4495 = vadd.s32 %v4494, 8
        %4496 = vset.pattern.permute.xlu0 %v4495
        %4497 = vperm.xlu0 %4496, %v4486
        %v4498 = vpop.permute.xlu0 %4497
        %v4499 = vperm.slane %v4237, 4
        %v4500 = vlaneseq
        %v4501 = vshrl.u32 %v4500, 7
        %4503 = vset.pattern.permute.xlu0 %v4501
        %4504 = vperm.xlu0 %4503, %v4499
        %v4505 = vpop.permute.xlu0 %4504
        %v4506 = vlaneseq
        %v4507 = vshrl.u32 %v4506, 7
        %v4508 = vadd.s32 %v4507, 8
        %4509 = vset.pattern.permute.xlu0 %v4508
        %4510 = vperm.xlu0 %4509, %v4499
        %v4511 = vpop.permute.xlu0 %4510
        %v4512 = vperm.slane %v4237, 5
        %v4513 = vlaneseq
        %v4514 = vshrl.u32 %v4513, 7
        %4516 = vset.pattern.permute.xlu0 %v4514
        %4517 = vperm.xlu0 %4516, %v4512
        %v4518 = vpop.permute.xlu0 %4517
        %v4519 = vlaneseq
        %v4520 = vshrl.u32 %v4519, 7
        %v4521 = vadd.s32 %v4520, 8
        %4522 = vset.pattern.permute.xlu0 %v4521
        %4523 = vperm.xlu0 %4522, %v4512
        %v4524 = vpop.permute.xlu0 %4523
        %v4525 = vperm.slane %v4237, 6
        %v4526 = vlaneseq
        %v4527 = vshrl.u32 %v4526, 7
        %4529 = vset.pattern.permute.xlu0 %v4527
        %4530 = vperm.xlu0 %4529, %v4525
        %v4531 = vpop.permute.xlu0 %4530
        %v4532 = vlaneseq
        %v4533 = vshrl.u32 %v4532, 7
        %v4534 = vadd.s32 %v4533, 8
        %4535 = vset.pattern.permute.xlu0 %v4534
        %4536 = vperm.xlu0 %4535, %v4525
        %v4537 = vpop.permute.xlu0 %4536
        %v4538 = vperm.slane %v4237, 7
        %v4539 = vlaneseq
        %v4540 = vshrl.u32 %v4539, 7
        %4542 = vset.pattern.permute.xlu0 %v4540
        %4543 = vperm.xlu0 %4542, %v4538
        %v4544 = vpop.permute.xlu0 %4543
        %v4545 = vlaneseq
        %v4546 = vshrl.u32 %v4545, 7
        %v4547 = vadd.s32 %v4546, 8
        %4548 = vset.pattern.permute.xlu0 %v4547
        %4549 = vperm.xlu0 %4548, %v4538
        %v4550 = vpop.permute.xlu0 %4549
        %v4551 = vperm.slane %v4238, 0
        %v4552 = vlaneseq
        %v4553 = vshrl.u32 %v4552, 7
        %4555 = vset.pattern.permute.xlu0 %v4553
        %4556 = vperm.xlu0 %4555, %v4551
        %v4557 = vpop.permute.xlu0 %4556
        %v4558 = vlaneseq
        %v4559 = vshrl.u32 %v4558, 7
        %v4560 = vadd.s32 %v4559, 8
        %4561 = vset.pattern.permute.xlu0 %v4560
        %4562 = vperm.xlu0 %4561, %v4551
        %v4563 = vpop.permute.xlu0 %4562
        %v4564 = vperm.slane %v4238, 1
        %v4565 = vlaneseq
        %v4566 = vshrl.u32 %v4565, 7
        %4568 = vset.pattern.permute.xlu0 %v4566
        %4569 = vperm.xlu0 %4568, %v4564
        %v4570 = vpop.permute.xlu0 %4569
        %v4571 = vlaneseq
        %v4572 = vshrl.u32 %v4571, 7
        %v4573 = vadd.s32 %v4572, 8
        %4574 = vset.pattern.permute.xlu0 %v4573
        %4575 = vperm.xlu0 %4574, %v4564
        %v4576 = vpop.permute.xlu0 %4575
        %v4577 = vperm.slane %v4238, 2
        %v4578 = vlaneseq
        %v4579 = vshrl.u32 %v4578, 7
        %4581 = vset.pattern.permute.xlu0 %v4579
        %4582 = vperm.xlu0 %4581, %v4577
        %v4583 = vpop.permute.xlu0 %4582
        %v4584 = vlaneseq
        %v4585 = vshrl.u32 %v4584, 7
        %v4586 = vadd.s32 %v4585, 8
        %4587 = vset.pattern.permute.xlu0 %v4586
        %4588 = vperm.xlu0 %4587, %v4577
        %v4589 = vpop.permute.xlu0 %4588
        %v4590 = vperm.slane %v4238, 3
        %v4591 = vlaneseq
        %v4592 = vshrl.u32 %v4591, 7
        %4594 = vset.pattern.permute.xlu0 %v4592
        %4595 = vperm.xlu0 %4594, %v4590
        %v4596 = vpop.permute.xlu0 %4595
        %v4597 = vlaneseq
        %v4598 = vshrl.u32 %v4597, 7
        %v4599 = vadd.s32 %v4598, 8
        %4600 = vset.pattern.permute.xlu0 %v4599
        %4601 = vperm.xlu0 %4600, %v4590
        %v4602 = vpop.permute.xlu0 %4601
        %v4603 = vperm.slane %v4238, 4
        %v4604 = vlaneseq
        %v4605 = vshrl.u32 %v4604, 7
        %4607 = vset.pattern.permute.xlu0 %v4605
        %4608 = vperm.xlu0 %4607, %v4603
        %v4609 = vpop.permute.xlu0 %4608
        %v4610 = vlaneseq
        %v4611 = vshrl.u32 %v4610, 7
        %v4612 = vadd.s32 %v4611, 8
        %4613 = vset.pattern.permute.xlu0 %v4612
        %4614 = vperm.xlu0 %4613, %v4603
        %v4615 = vpop.permute.xlu0 %4614
        %v4616 = vperm.slane %v4238, 5
        %v4617 = vlaneseq
        %v4618 = vshrl.u32 %v4617, 7
        %4620 = vset.pattern.permute.xlu0 %v4618
        %4621 = vperm.xlu0 %4620, %v4616
        %v4622 = vpop.permute.xlu0 %4621
        %v4623 = vlaneseq
        %v4624 = vshrl.u32 %v4623, 7
        %v4625 = vadd.s32 %v4624, 8
        %4626 = vset.pattern.permute.xlu0 %v4625
        %4627 = vperm.xlu0 %4626, %v4616
        %v4628 = vpop.permute.xlu0 %4627
        %v4629 = vperm.slane %v4238, 6
        %v4630 = vlaneseq
        %v4631 = vshrl.u32 %v4630, 7
        %4633 = vset.pattern.permute.xlu0 %v4631
        %4634 = vperm.xlu0 %4633, %v4629
        %v4635 = vpop.permute.xlu0 %4634
        %v4636 = vlaneseq
        %v4637 = vshrl.u32 %v4636, 7
        %v4638 = vadd.s32 %v4637, 8
        %4639 = vset.pattern.permute.xlu0 %v4638
        %4640 = vperm.xlu0 %4639, %v4629
        %v4641 = vpop.permute.xlu0 %4640
        %v4642 = vperm.slane %v4238, 7
        %v4643 = vlaneseq
        %v4644 = vshrl.u32 %v4643, 7
        %4646 = vset.pattern.permute.xlu0 %v4644
        %4647 = vperm.xlu0 %4646, %v4642
        %v4648 = vpop.permute.xlu0 %4647
        %v4649 = vlaneseq
        %v4650 = vshrl.u32 %v4649, 7
        %v4651 = vadd.s32 %v4650, 8
        %4652 = vset.pattern.permute.xlu0 %v4651
        %4653 = vperm.xlu0 %4652, %v4642
        %v4654 = vpop.permute.xlu0 %4653
        %v4655 = vrot.slane %v4271, 4
        %v4656 = vsel %vm860, %v4655, %v4245
        %v4657 = vrot.slane %v4245, 4
        %v4658 = vsel %vm860, %v4271, %v4657
        %v4660 = vunpack.c.l.s4 1983009808
        %v4661 = vunpack.c.0.s8 %v4660
        %v4662 = vperm.slane %v4656, %v4661
        %v4664 = vunpack.c.l.s4 1983009808
        %v4665 = vunpack.c.0.s8 %v4664
        %v4666 = vperm.slane %v4658, %v4665
        %v4667 = vrot.slane %v4284, 4
        %v4668 = vsel %vm860, %v4667, %v4258
        %v4669 = vrot.slane %v4258, 4
        %v4670 = vsel %vm860, %v4284, %v4669
        %v4672 = vunpack.c.l.s4 1983009808
        %v4673 = vunpack.c.0.s8 %v4672
        %v4674 = vperm.slane %v4668, %v4673
        %v4676 = vunpack.c.l.s4 1983009808
        %v4677 = vunpack.c.0.s8 %v4676
        %v4678 = vperm.slane %v4670, %v4677
        %v4679 = vrot.slane %v4323, 4
        %v4680 = vsel %vm860, %v4679, %v4297
        %v4681 = vrot.slane %v4297, 4
        %v4682 = vsel %vm860, %v4323, %v4681
        %v4684 = vunpack.c.l.s4 1983009808
        %v4685 = vunpack.c.0.s8 %v4684
        %v4686 = vperm.slane %v4680, %v4685
        %v4688 = vunpack.c.l.s4 1983009808
        %v4689 = vunpack.c.0.s8 %v4688
        %v4690 = vperm.slane %v4682, %v4689
        %v4691 = vrot.slane %v4336, 4
        %v4692 = vsel %vm860, %v4691, %v4310
        %v4693 = vrot.slane %v4310, 4
        %v4694 = vsel %vm860, %v4336, %v4693
        %v4696 = vunpack.c.l.s4 1983009808
        %v4697 = vunpack.c.0.s8 %v4696
        %v4698 = vperm.slane %v4692, %v4697
        %v4700 = vunpack.c.l.s4 1983009808
        %v4701 = vunpack.c.0.s8 %v4700
        %v4702 = vperm.slane %v4694, %v4701
        %v4703 = vrot.slane %v4674, 4
        %v4704 = vsel %vm860, %v4703, %v4662
        %v4705 = vrot.slane %v4662, 4
        %v4706 = vsel %vm860, %v4674, %v4705
        %v4708 = vunpack.c.l.s4 1934713408
        %v4709 = vunpack.c.0.s8 %v4708
        %v4710 = vperm.slane %v4704, %v4709
        %v4712 = vunpack.c.l.s4 1934713408
        %v4713 = vunpack.c.0.s8 %v4712
        %v4714 = vperm.slane %v4706, %v4713
        %v4715 = vrot.slane %v4678, 4
        %v4716 = vsel %vm860, %v4715, %v4666
        %v4717 = vrot.slane %v4666, 4
        %v4718 = vsel %vm860, %v4678, %v4717
        %v4720 = vunpack.c.l.s4 1934713408
        %v4721 = vunpack.c.0.s8 %v4720
        %v4722 = vperm.slane %v4716, %v4721
        %v4724 = vunpack.c.l.s4 1934713408
        %v4725 = vunpack.c.0.s8 %v4724
        %v4726 = vperm.slane %v4718, %v4725
        %v4727 = vrot.slane %v4698, 4
        %v4728 = vsel %vm860, %v4727, %v4686
        %v4729 = vrot.slane %v4686, 4
        %v4730 = vsel %vm860, %v4698, %v4729
        %v4732 = vunpack.c.l.s4 1934713408
        %v4733 = vunpack.c.0.s8 %v4732
        %v4734 = vperm.slane %v4728, %v4733
        %v4736 = vunpack.c.l.s4 1934713408
        %v4737 = vunpack.c.0.s8 %v4736
        %v4738 = vperm.slane %v4730, %v4737
        %v4739 = vrot.slane %v4702, 4
        %v4740 = vsel %vm860, %v4739, %v4690
        %v4741 = vrot.slane %v4690, 4
        %v4742 = vsel %vm860, %v4702, %v4741
        %v4744 = vunpack.c.l.s4 1934713408
        %v4745 = vunpack.c.0.s8 %v4744
        %v4746 = vperm.slane %v4740, %v4745
        %v4748 = vunpack.c.l.s4 1934713408
        %v4749 = vunpack.c.0.s8 %v4748
        %v4750 = vperm.slane %v4742, %v4749
        %v4751 = vrot.slane %v4734, 4
        %v4752 = vsel %vm860, %v4751, %v4710
        %v4753 = vrot.slane %v4710, 4
        %v4754 = vsel %vm860, %v4734, %v4753
        %v4755 = vrot.slane %v4738, 4
        %v4756 = vsel %vm860, %v4755, %v4714
        %v4757 = vrot.slane %v4714, 4
        %v4758 = vsel %vm860, %v4738, %v4757
        %v4759 = vrot.slane %v4746, 4
        %v4760 = vsel %vm860, %v4759, %v4722
        %v4761 = vrot.slane %v4722, 4
        %v4762 = vsel %vm860, %v4746, %v4761
        %v4763 = vrot.slane %v4750, 4
        %v4764 = vsel %vm860, %v4763, %v4726
        %v4765 = vrot.slane %v4726, 4
        %v4766 = vsel %vm860, %v4750, %v4765
        %v4767 = vrot.slane %v4375, 4
        %v4768 = vsel %vm860, %v4767, %v4349
        %v4769 = vrot.slane %v4349, 4
        %v4770 = vsel %vm860, %v4375, %v4769
        %v4772 = vunpack.c.l.s4 1983009808
        %v4773 = vunpack.c.0.s8 %v4772
        %v4774 = vperm.slane %v4768, %v4773
        %v4776 = vunpack.c.l.s4 1983009808
        %v4777 = vunpack.c.0.s8 %v4776
        %v4778 = vperm.slane %v4770, %v4777
        %v4779 = vrot.slane %v4388, 4
        %v4780 = vsel %vm860, %v4779, %v4362
        %v4781 = vrot.slane %v4362, 4
        %v4782 = vsel %vm860, %v4388, %v4781
        %v4784 = vunpack.c.l.s4 1983009808
        %v4785 = vunpack.c.0.s8 %v4784
        %v4786 = vperm.slane %v4780, %v4785
        %v4788 = vunpack.c.l.s4 1983009808
        %v4789 = vunpack.c.0.s8 %v4788
        %v4790 = vperm.slane %v4782, %v4789
        %v4791 = vrot.slane %v4427, 4
        %v4792 = vsel %vm860, %v4791, %v4401
        %v4793 = vrot.slane %v4401, 4
        %v4794 = vsel %vm860, %v4427, %v4793
        %v4796 = vunpack.c.l.s4 1983009808
        %v4797 = vunpack.c.0.s8 %v4796
        %v4798 = vperm.slane %v4792, %v4797
        %v4800 = vunpack.c.l.s4 1983009808
        %v4801 = vunpack.c.0.s8 %v4800
        %v4802 = vperm.slane %v4794, %v4801
        %v4803 = vrot.slane %v4440, 4
        %v4804 = vsel %vm860, %v4803, %v4414
        %v4805 = vrot.slane %v4414, 4
        %v4806 = vsel %vm860, %v4440, %v4805
        %v4808 = vunpack.c.l.s4 1983009808
        %v4809 = vunpack.c.0.s8 %v4808
        %v4810 = vperm.slane %v4804, %v4809
        %v4812 = vunpack.c.l.s4 1983009808
        %v4813 = vunpack.c.0.s8 %v4812
        %v4814 = vperm.slane %v4806, %v4813
        %v4815 = vrot.slane %v4786, 4
        %v4816 = vsel %vm860, %v4815, %v4774
        %v4817 = vrot.slane %v4774, 4
        %v4818 = vsel %vm860, %v4786, %v4817
        %v4820 = vunpack.c.l.s4 1934713408
        %v4821 = vunpack.c.0.s8 %v4820
        %v4822 = vperm.slane %v4816, %v4821
        %v4824 = vunpack.c.l.s4 1934713408
        %v4825 = vunpack.c.0.s8 %v4824
        %v4826 = vperm.slane %v4818, %v4825
        %v4827 = vrot.slane %v4790, 4
        %v4828 = vsel %vm860, %v4827, %v4778
        %v4829 = vrot.slane %v4778, 4
        %v4830 = vsel %vm860, %v4790, %v4829
        %v4832 = vunpack.c.l.s4 1934713408
        %v4833 = vunpack.c.0.s8 %v4832
        %v4834 = vperm.slane %v4828, %v4833
        %v4836 = vunpack.c.l.s4 1934713408
        %v4837 = vunpack.c.0.s8 %v4836
        %v4838 = vperm.slane %v4830, %v4837
        %v4839 = vrot.slane %v4810, 4
        %v4840 = vsel %vm860, %v4839, %v4798
        %v4841 = vrot.slane %v4798, 4
        %v4842 = vsel %vm860, %v4810, %v4841
        %v4844 = vunpack.c.l.s4 1934713408
        %v4845 = vunpack.c.0.s8 %v4844
        %v4846 = vperm.slane %v4840, %v4845
        %v4848 = vunpack.c.l.s4 1934713408
        %v4849 = vunpack.c.0.s8 %v4848
        %v4850 = vperm.slane %v4842, %v4849
        %v4851 = vrot.slane %v4814, 4
        %v4852 = vsel %vm860, %v4851, %v4802
        %v4853 = vrot.slane %v4802, 4
        %v4854 = vsel %vm860, %v4814, %v4853
        %v4856 = vunpack.c.l.s4 1934713408
        %v4857 = vunpack.c.0.s8 %v4856
        %v4858 = vperm.slane %v4852, %v4857
        %v4860 = vunpack.c.l.s4 1934713408
        %v4861 = vunpack.c.0.s8 %v4860
        %v4862 = vperm.slane %v4854, %v4861
        %v4863 = vrot.slane %v4846, 4
        %v4864 = vsel %vm860, %v4863, %v4822
        %v4865 = vrot.slane %v4822, 4
        %v4866 = vsel %vm860, %v4846, %v4865
        %v4867 = vrot.slane %v4850, 4
        %v4868 = vsel %vm860, %v4867, %v4826
        %v4869 = vrot.slane %v4826, 4
        %v4870 = vsel %vm860, %v4850, %v4869
        %v4871 = vrot.slane %v4858, 4
        %v4872 = vsel %vm860, %v4871, %v4834
        %v4873 = vrot.slane %v4834, 4
        %v4874 = vsel %vm860, %v4858, %v4873
        %v4875 = vrot.slane %v4862, 4
        %v4876 = vsel %vm860, %v4875, %v4838
        %v4877 = vrot.slane %v4838, 4
        %v4878 = vsel %vm860, %v4862, %v4877
        %v4879 = vrot.slane %v4479, 4
        %v4880 = vsel %vm860, %v4879, %v4453
        %v4881 = vrot.slane %v4453, 4
        %v4882 = vsel %vm860, %v4479, %v4881
        %v4884 = vunpack.c.l.s4 1983009808
        %v4885 = vunpack.c.0.s8 %v4884
        %v4886 = vperm.slane %v4880, %v4885
        %v4888 = vunpack.c.l.s4 1983009808
        %v4889 = vunpack.c.0.s8 %v4888
        %v4890 = vperm.slane %v4882, %v4889
        %v4891 = vrot.slane %v4492, 4
        %v4892 = vsel %vm860, %v4891, %v4466
        %v4893 = vrot.slane %v4466, 4
        %v4894 = vsel %vm860, %v4492, %v4893
        %v4896 = vunpack.c.l.s4 1983009808
        %v4897 = vunpack.c.0.s8 %v4896
        %v4898 = vperm.slane %v4892, %v4897
        %v4900 = vunpack.c.l.s4 1983009808
        %v4901 = vunpack.c.0.s8 %v4900
        %v4902 = vperm.slane %v4894, %v4901
        %v4903 = vrot.slane %v4531, 4
        %v4904 = vsel %vm860, %v4903, %v4505
        %v4905 = vrot.slane %v4505, 4
        %v4906 = vsel %vm860, %v4531, %v4905
        %v4908 = vunpack.c.l.s4 1983009808
        %v4909 = vunpack.c.0.s8 %v4908
        %v4910 = vperm.slane %v4904, %v4909
        %v4912 = vunpack.c.l.s4 1983009808
        %v4913 = vunpack.c.0.s8 %v4912
        %v4914 = vperm.slane %v4906, %v4913
        %v4915 = vrot.slane %v4544, 4
        %v4916 = vsel %vm860, %v4915, %v4518
        %v4917 = vrot.slane %v4518, 4
        %v4918 = vsel %vm860, %v4544, %v4917
        %v4920 = vunpack.c.l.s4 1983009808
        %v4921 = vunpack.c.0.s8 %v4920
        %v4922 = vperm.slane %v4916, %v4921
        %v4924 = vunpack.c.l.s4 1983009808
        %v4925 = vunpack.c.0.s8 %v4924
        %v4926 = vperm.slane %v4918, %v4925
        %v4927 = vrot.slane %v4898, 4
        %v4928 = vsel %vm860, %v4927, %v4886
        %v4929 = vrot.slane %v4886, 4
        %v4930 = vsel %vm860, %v4898, %v4929
        %v4932 = vunpack.c.l.s4 1934713408
        %v4933 = vunpack.c.0.s8 %v4932
        %v4934 = vperm.slane %v4928, %v4933
        %v4936 = vunpack.c.l.s4 1934713408
        %v4937 = vunpack.c.0.s8 %v4936
        %v4938 = vperm.slane %v4930, %v4937
        %v4939 = vrot.slane %v4902, 4
        %v4940 = vsel %vm860, %v4939, %v4890
        %v4941 = vrot.slane %v4890, 4
        %v4942 = vsel %vm860, %v4902, %v4941
        %v4944 = vunpack.c.l.s4 1934713408
        %v4945 = vunpack.c.0.s8 %v4944
        %v4946 = vperm.slane %v4940, %v4945
        %v4948 = vunpack.c.l.s4 1934713408
        %v4949 = vunpack.c.0.s8 %v4948
        %v4950 = vperm.slane %v4942, %v4949
        %v4951 = vrot.slane %v4922, 4
        %v4952 = vsel %vm860, %v4951, %v4910
        %v4953 = vrot.slane %v4910, 4
        %v4954 = vsel %vm860, %v4922, %v4953
        %v4956 = vunpack.c.l.s4 1934713408
        %v4957 = vunpack.c.0.s8 %v4956
        %v4958 = vperm.slane %v4952, %v4957
        %v4960 = vunpack.c.l.s4 1934713408
        %v4961 = vunpack.c.0.s8 %v4960
        %v4962 = vperm.slane %v4954, %v4961
        %v4963 = vrot.slane %v4926, 4
        %v4964 = vsel %vm860, %v4963, %v4914
        %v4965 = vrot.slane %v4914, 4
        %v4966 = vsel %vm860, %v4926, %v4965
        %v4968 = vunpack.c.l.s4 1934713408
        %v4969 = vunpack.c.0.s8 %v4968
        %v4970 = vperm.slane %v4964, %v4969
        %v4972 = vunpack.c.l.s4 1934713408
        %v4973 = vunpack.c.0.s8 %v4972
        %v4974 = vperm.slane %v4966, %v4973
        %v4975 = vrot.slane %v4958, 4
        %v4976 = vsel %vm860, %v4975, %v4934
        %v4977 = vrot.slane %v4934, 4
        %v4978 = vsel %vm860, %v4958, %v4977
        %v4979 = vrot.slane %v4962, 4
        %v4980 = vsel %vm860, %v4979, %v4938
        %v4981 = vrot.slane %v4938, 4
        %v4982 = vsel %vm860, %v4962, %v4981
        %v4983 = vrot.slane %v4970, 4
        %v4984 = vsel %vm860, %v4983, %v4946
        %v4985 = vrot.slane %v4946, 4
        %v4986 = vsel %vm860, %v4970, %v4985
        %v4987 = vrot.slane %v4974, 4
        %v4988 = vsel %vm860, %v4987, %v4950
        %v4989 = vrot.slane %v4950, 4
        %v4990 = vsel %vm860, %v4974, %v4989
        %v4991 = vrot.slane %v4583, 4
        %v4992 = vsel %vm860, %v4991, %v4557
        %v4993 = vrot.slane %v4557, 4
        %v4994 = vsel %vm860, %v4583, %v4993
        %v4996 = vunpack.c.l.s4 1983009808
        %v4997 = vunpack.c.0.s8 %v4996
        %v4998 = vperm.slane %v4992, %v4997
        %v5000 = vunpack.c.l.s4 1983009808
        %v5001 = vunpack.c.0.s8 %v5000
        %v5002 = vperm.slane %v4994, %v5001
        %v5003 = vrot.slane %v4596, 4
        %v5004 = vsel %vm860, %v5003, %v4570
        %v5005 = vrot.slane %v4570, 4
        %v5006 = vsel %vm860, %v4596, %v5005
        %v5008 = vunpack.c.l.s4 1983009808
        %v5009 = vunpack.c.0.s8 %v5008
        %v5010 = vperm.slane %v5004, %v5009
        %v5012 = vunpack.c.l.s4 1983009808
        %v5013 = vunpack.c.0.s8 %v5012
        %v5014 = vperm.slane %v5006, %v5013
        %v5015 = vrot.slane %v4635, 4
        %v5016 = vsel %vm860, %v5015, %v4609
        %v5017 = vrot.slane %v4609, 4
        %v5018 = vsel %vm860, %v4635, %v5017
        %v5020 = vunpack.c.l.s4 1983009808
        %v5021 = vunpack.c.0.s8 %v5020
        %v5022 = vperm.slane %v5016, %v5021
        %v5024 = vunpack.c.l.s4 1983009808
        %v5025 = vunpack.c.0.s8 %v5024
        %v5026 = vperm.slane %v5018, %v5025
        %v5027 = vrot.slane %v4648, 4
        %v5028 = vsel %vm860, %v5027, %v4622
        %v5029 = vrot.slane %v4622, 4
        %v5030 = vsel %vm860, %v4648, %v5029
        %v5032 = vunpack.c.l.s4 1983009808
        %v5033 = vunpack.c.0.s8 %v5032
        %v5034 = vperm.slane %v5028, %v5033
        %v5036 = vunpack.c.l.s4 1983009808
        %v5037 = vunpack.c.0.s8 %v5036
        %v5038 = vperm.slane %v5030, %v5037
        %v5039 = vrot.slane %v5010, 4
        %v5040 = vsel %vm860, %v5039, %v4998
        %v5041 = vrot.slane %v4998, 4
        %v5042 = vsel %vm860, %v5010, %v5041
        %v5044 = vunpack.c.l.s4 1934713408
        %v5045 = vunpack.c.0.s8 %v5044
        %v5046 = vperm.slane %v5040, %v5045
        %v5048 = vunpack.c.l.s4 1934713408
        %v5049 = vunpack.c.0.s8 %v5048
        %v5050 = vperm.slane %v5042, %v5049
        %v5051 = vrot.slane %v5014, 4
        %v5052 = vsel %vm860, %v5051, %v5002
        %v5053 = vrot.slane %v5002, 4
        %v5054 = vsel %vm860, %v5014, %v5053
        %v5056 = vunpack.c.l.s4 1934713408
        %v5057 = vunpack.c.0.s8 %v5056
        %v5058 = vperm.slane %v5052, %v5057
        %v5060 = vunpack.c.l.s4 1934713408
        %v5061 = vunpack.c.0.s8 %v5060
        %v5062 = vperm.slane %v5054, %v5061
        %v5063 = vrot.slane %v5034, 4
        %v5064 = vsel %vm860, %v5063, %v5022
        %v5065 = vrot.slane %v5022, 4
        %v5066 = vsel %vm860, %v5034, %v5065
        %v5068 = vunpack.c.l.s4 1934713408
        %v5069 = vunpack.c.0.s8 %v5068
        %v5070 = vperm.slane %v5064, %v5069
        %v5072 = vunpack.c.l.s4 1934713408
        %v5073 = vunpack.c.0.s8 %v5072
        %v5074 = vperm.slane %v5066, %v5073
        %v5075 = vrot.slane %v5038, 4
        %v5076 = vsel %vm860, %v5075, %v5026
        %v5077 = vrot.slane %v5026, 4
        %v5078 = vsel %vm860, %v5038, %v5077
        %v5080 = vunpack.c.l.s4 1934713408
        %v5081 = vunpack.c.0.s8 %v5080
        %v5082 = vperm.slane %v5076, %v5081
        %v5084 = vunpack.c.l.s4 1934713408
        %v5085 = vunpack.c.0.s8 %v5084
        %v5086 = vperm.slane %v5078, %v5085
        %v5087 = vrot.slane %v5070, 4
        %v5088 = vsel %vm860, %v5087, %v5046
        %v5089 = vrot.slane %v5046, 4
        %v5090 = vsel %vm860, %v5070, %v5089
        %v5091 = vrot.slane %v5074, 4
        %v5092 = vsel %vm860, %v5091, %v5050
        %v5093 = vrot.slane %v5050, 4
        %v5094 = vsel %vm860, %v5074, %v5093
        %v5095 = vrot.slane %v5082, 4
        %v5096 = vsel %vm860, %v5095, %v5058
        %v5097 = vrot.slane %v5058, 4
        %v5098 = vsel %vm860, %v5082, %v5097
        %v5099 = vrot.slane %v5086, 4
        %v5100 = vsel %vm860, %v5099, %v5062
        %v5101 = vrot.slane %v5062, 4
        %v5102 = vsel %vm860, %v5086, %v5101
        %v5103 = vrot.slane %v4277, 4
        %v5104 = vsel %vm860, %v5103, %v4251
        %v5105 = vrot.slane %v4251, 4
        %v5106 = vsel %vm860, %v4277, %v5105
        %v5108 = vunpack.c.l.s4 1983009808
        %v5109 = vunpack.c.0.s8 %v5108
        %v5110 = vperm.slane %v5104, %v5109
        %v5112 = vunpack.c.l.s4 1983009808
        %v5113 = vunpack.c.0.s8 %v5112
        %v5114 = vperm.slane %v5106, %v5113
        %v5115 = vrot.slane %v4290, 4
        %v5116 = vsel %vm860, %v5115, %v4264
        %v5117 = vrot.slane %v4264, 4
        %v5118 = vsel %vm860, %v4290, %v5117
        %v5120 = vunpack.c.l.s4 1983009808
        %v5121 = vunpack.c.0.s8 %v5120
        %v5122 = vperm.slane %v5116, %v5121
        %v5124 = vunpack.c.l.s4 1983009808
        %v5125 = vunpack.c.0.s8 %v5124
        %v5126 = vperm.slane %v5118, %v5125
        %v5127 = vrot.slane %v4329, 4
        %v5128 = vsel %vm860, %v5127, %v4303
        %v5129 = vrot.slane %v4303, 4
        %v5130 = vsel %vm860, %v4329, %v5129
        %v5132 = vunpack.c.l.s4 1983009808
        %v5133 = vunpack.c.0.s8 %v5132
        %v5134 = vperm.slane %v5128, %v5133
        %v5136 = vunpack.c.l.s4 1983009808
        %v5137 = vunpack.c.0.s8 %v5136
        %v5138 = vperm.slane %v5130, %v5137
        %v5139 = vrot.slane %v4342, 4
        %v5140 = vsel %vm860, %v5139, %v4316
        %v5141 = vrot.slane %v4316, 4
        %v5142 = vsel %vm860, %v4342, %v5141
        %v5144 = vunpack.c.l.s4 1983009808
        %v5145 = vunpack.c.0.s8 %v5144
        %v5146 = vperm.slane %v5140, %v5145
        %v5148 = vunpack.c.l.s4 1983009808
        %v5149 = vunpack.c.0.s8 %v5148
        %v5150 = vperm.slane %v5142, %v5149
        %v5151 = vrot.slane %v5122, 4
        %v5152 = vsel %vm860, %v5151, %v5110
        %v5153 = vrot.slane %v5110, 4
        %v5154 = vsel %vm860, %v5122, %v5153
        %v5156 = vunpack.c.l.s4 1934713408
        %v5157 = vunpack.c.0.s8 %v5156
        %v5158 = vperm.slane %v5152, %v5157
        %v5160 = vunpack.c.l.s4 1934713408
        %v5161 = vunpack.c.0.s8 %v5160
        %v5162 = vperm.slane %v5154, %v5161
        %v5163 = vrot.slane %v5126, 4
        %v5164 = vsel %vm860, %v5163, %v5114
        %v5165 = vrot.slane %v5114, 4
        %v5166 = vsel %vm860, %v5126, %v5165
        %v5168 = vunpack.c.l.s4 1934713408
        %v5169 = vunpack.c.0.s8 %v5168
        %v5170 = vperm.slane %v5164, %v5169
        %v5172 = vunpack.c.l.s4 1934713408
        %v5173 = vunpack.c.0.s8 %v5172
        %v5174 = vperm.slane %v5166, %v5173
        %v5175 = vrot.slane %v5146, 4
        %v5176 = vsel %vm860, %v5175, %v5134
        %v5177 = vrot.slane %v5134, 4
        %v5178 = vsel %vm860, %v5146, %v5177
        %v5180 = vunpack.c.l.s4 1934713408
        %v5181 = vunpack.c.0.s8 %v5180
        %v5182 = vperm.slane %v5176, %v5181
        %v5184 = vunpack.c.l.s4 1934713408
        %v5185 = vunpack.c.0.s8 %v5184
        %v5186 = vperm.slane %v5178, %v5185
        %v5187 = vrot.slane %v5150, 4
        %v5188 = vsel %vm860, %v5187, %v5138
        %v5189 = vrot.slane %v5138, 4
        %v5190 = vsel %vm860, %v5150, %v5189
        %v5192 = vunpack.c.l.s4 1934713408
        %v5193 = vunpack.c.0.s8 %v5192
        %v5194 = vperm.slane %v5188, %v5193
        %v5196 = vunpack.c.l.s4 1934713408
        %v5197 = vunpack.c.0.s8 %v5196
        %v5198 = vperm.slane %v5190, %v5197
        %v5199 = vrot.slane %v5182, 4
        %v5200 = vsel %vm860, %v5199, %v5158
        %v5201 = vrot.slane %v5158, 4
        %v5202 = vsel %vm860, %v5182, %v5201
        %v5203 = vrot.slane %v5186, 4
        %v5204 = vsel %vm860, %v5203, %v5162
        %v5205 = vrot.slane %v5162, 4
        %v5206 = vsel %vm860, %v5186, %v5205
        %v5207 = vrot.slane %v5194, 4
        %v5208 = vsel %vm860, %v5207, %v5170
        %v5209 = vrot.slane %v5170, 4
        %v5210 = vsel %vm860, %v5194, %v5209
        %v5211 = vrot.slane %v5198, 4
        %v5212 = vsel %vm860, %v5211, %v5174
        %v5213 = vrot.slane %v5174, 4
        %v5214 = vsel %vm860, %v5198, %v5213
        %v5215 = vrot.slane %v4381, 4
        %v5216 = vsel %vm860, %v5215, %v4355
        %v5217 = vrot.slane %v4355, 4
        %v5218 = vsel %vm860, %v4381, %v5217
        %v5220 = vunpack.c.l.s4 1983009808
        %v5221 = vunpack.c.0.s8 %v5220
        %v5222 = vperm.slane %v5216, %v5221
        %v5224 = vunpack.c.l.s4 1983009808
        %v5225 = vunpack.c.0.s8 %v5224
        %v5226 = vperm.slane %v5218, %v5225
        %v5227 = vrot.slane %v4394, 4
        %v5228 = vsel %vm860, %v5227, %v4368
        %v5229 = vrot.slane %v4368, 4
        %v5230 = vsel %vm860, %v4394, %v5229
        %v5232 = vunpack.c.l.s4 1983009808
        %v5233 = vunpack.c.0.s8 %v5232
        %v5234 = vperm.slane %v5228, %v5233
        %v5236 = vunpack.c.l.s4 1983009808
        %v5237 = vunpack.c.0.s8 %v5236
        %v5238 = vperm.slane %v5230, %v5237
        %v5239 = vrot.slane %v4433, 4
        %v5240 = vsel %vm860, %v5239, %v4407
        %v5241 = vrot.slane %v4407, 4
        %v5242 = vsel %vm860, %v4433, %v5241
        %v5244 = vunpack.c.l.s4 1983009808
        %v5245 = vunpack.c.0.s8 %v5244
        %v5246 = vperm.slane %v5240, %v5245
        %v5248 = vunpack.c.l.s4 1983009808
        %v5249 = vunpack.c.0.s8 %v5248
        %v5250 = vperm.slane %v5242, %v5249
        %v5251 = vrot.slane %v4446, 4
        %v5252 = vsel %vm860, %v5251, %v4420
        %v5253 = vrot.slane %v4420, 4
        %v5254 = vsel %vm860, %v4446, %v5253
        %v5256 = vunpack.c.l.s4 1983009808
        %v5257 = vunpack.c.0.s8 %v5256
        %v5258 = vperm.slane %v5252, %v5257
        %v5260 = vunpack.c.l.s4 1983009808
        %v5261 = vunpack.c.0.s8 %v5260
        %v5262 = vperm.slane %v5254, %v5261
        %v5263 = vrot.slane %v5234, 4
        %v5264 = vsel %vm860, %v5263, %v5222
        %v5265 = vrot.slane %v5222, 4
        %v5266 = vsel %vm860, %v5234, %v5265
        %v5268 = vunpack.c.l.s4 1934713408
        %v5269 = vunpack.c.0.s8 %v5268
        %v5270 = vperm.slane %v5264, %v5269
        %v5272 = vunpack.c.l.s4 1934713408
        %v5273 = vunpack.c.0.s8 %v5272
        %v5274 = vperm.slane %v5266, %v5273
        %v5275 = vrot.slane %v5238, 4
        %v5276 = vsel %vm860, %v5275, %v5226
        %v5277 = vrot.slane %v5226, 4
        %v5278 = vsel %vm860, %v5238, %v5277
        %v5280 = vunpack.c.l.s4 1934713408
        %v5281 = vunpack.c.0.s8 %v5280
        %v5282 = vperm.slane %v5276, %v5281
        %v5284 = vunpack.c.l.s4 1934713408
        %v5285 = vunpack.c.0.s8 %v5284
        %v5286 = vperm.slane %v5278, %v5285
        %v5287 = vrot.slane %v5258, 4
        %v5288 = vsel %vm860, %v5287, %v5246
        %v5289 = vrot.slane %v5246, 4
        %v5290 = vsel %vm860, %v5258, %v5289
        %v5292 = vunpack.c.l.s4 1934713408
        %v5293 = vunpack.c.0.s8 %v5292
        %v5294 = vperm.slane %v5288, %v5293
        %v5296 = vunpack.c.l.s4 1934713408
        %v5297 = vunpack.c.0.s8 %v5296
        %v5298 = vperm.slane %v5290, %v5297
        %v5299 = vrot.slane %v5262, 4
        %v5300 = vsel %vm860, %v5299, %v5250
        %v5301 = vrot.slane %v5250, 4
        %v5302 = vsel %vm860, %v5262, %v5301
        %v5304 = vunpack.c.l.s4 1934713408
        %v5305 = vunpack.c.0.s8 %v5304
        %v5306 = vperm.slane %v5300, %v5305
        %v5308 = vunpack.c.l.s4 1934713408
        %v5309 = vunpack.c.0.s8 %v5308
        %v5310 = vperm.slane %v5302, %v5309
        %v5311 = vrot.slane %v5294, 4
        %v5312 = vsel %vm860, %v5311, %v5270
        %v5313 = vrot.slane %v5270, 4
        %v5314 = vsel %vm860, %v5294, %v5313
        %v5315 = vrot.slane %v5298, 4
        %v5316 = vsel %vm860, %v5315, %v5274
        %v5317 = vrot.slane %v5274, 4
        %v5318 = vsel %vm860, %v5298, %v5317
        %v5319 = vrot.slane %v5306, 4
        %v5320 = vsel %vm860, %v5319, %v5282
        %v5321 = vrot.slane %v5282, 4
        %v5322 = vsel %vm860, %v5306, %v5321
        %v5323 = vrot.slane %v5310, 4
        %v5324 = vsel %vm860, %v5323, %v5286
        %v5325 = vrot.slane %v5286, 4
        %v5326 = vsel %vm860, %v5310, %v5325
        %v5327 = vrot.slane %v4485, 4
        %v5328 = vsel %vm860, %v5327, %v4459
        %v5329 = vrot.slane %v4459, 4
        %v5330 = vsel %vm860, %v4485, %v5329
        %v5332 = vunpack.c.l.s4 1983009808
        %v5333 = vunpack.c.0.s8 %v5332
        %v5334 = vperm.slane %v5328, %v5333
        %v5336 = vunpack.c.l.s4 1983009808
        %v5337 = vunpack.c.0.s8 %v5336
        %v5338 = vperm.slane %v5330, %v5337
        %v5339 = vrot.slane %v4498, 4
        %v5340 = vsel %vm860, %v5339, %v4472
        %v5341 = vrot.slane %v4472, 4
        %v5342 = vsel %vm860, %v4498, %v5341
        %v5344 = vunpack.c.l.s4 1983009808
        %v5345 = vunpack.c.0.s8 %v5344
        %v5346 = vperm.slane %v5340, %v5345
        %v5348 = vunpack.c.l.s4 1983009808
        %v5349 = vunpack.c.0.s8 %v5348
        %v5350 = vperm.slane %v5342, %v5349
        %v5351 = vrot.slane %v4537, 4
        %v5352 = vsel %vm860, %v5351, %v4511
        %v5353 = vrot.slane %v4511, 4
        %v5354 = vsel %vm860, %v4537, %v5353
        %v5356 = vunpack.c.l.s4 1983009808
        %v5357 = vunpack.c.0.s8 %v5356
        %v5358 = vperm.slane %v5352, %v5357
        %v5360 = vunpack.c.l.s4 1983009808
        %v5361 = vunpack.c.0.s8 %v5360
        %v5362 = vperm.slane %v5354, %v5361
        %v5363 = vrot.slane %v4550, 4
        %v5364 = vsel %vm860, %v5363, %v4524
        %v5365 = vrot.slane %v4524, 4
        %v5366 = vsel %vm860, %v4550, %v5365
        %v5368 = vunpack.c.l.s4 1983009808
        %v5369 = vunpack.c.0.s8 %v5368
        %v5370 = vperm.slane %v5364, %v5369
        %v5372 = vunpack.c.l.s4 1983009808
        %v5373 = vunpack.c.0.s8 %v5372
        %v5374 = vperm.slane %v5366, %v5373
        %v5375 = vrot.slane %v5346, 4
        %v5376 = vsel %vm860, %v5375, %v5334
        %v5377 = vrot.slane %v5334, 4
        %v5378 = vsel %vm860, %v5346, %v5377
        %v5380 = vunpack.c.l.s4 1934713408
        %v5381 = vunpack.c.0.s8 %v5380
        %v5382 = vperm.slane %v5376, %v5381
        %v5384 = vunpack.c.l.s4 1934713408
        %v5385 = vunpack.c.0.s8 %v5384
        %v5386 = vperm.slane %v5378, %v5385
        %v5387 = vrot.slane %v5350, 4
        %v5388 = vsel %vm860, %v5387, %v5338
        %v5389 = vrot.slane %v5338, 4
        %v5390 = vsel %vm860, %v5350, %v5389
        %v5392 = vunpack.c.l.s4 1934713408
        %v5393 = vunpack.c.0.s8 %v5392
        %v5394 = vperm.slane %v5388, %v5393
        %v5396 = vunpack.c.l.s4 1934713408
        %v5397 = vunpack.c.0.s8 %v5396
        %v5398 = vperm.slane %v5390, %v5397
        %v5399 = vrot.slane %v5370, 4
        %v5400 = vsel %vm860, %v5399, %v5358
        %v5401 = vrot.slane %v5358, 4
        %v5402 = vsel %vm860, %v5370, %v5401
        %v5404 = vunpack.c.l.s4 1934713408
        %v5405 = vunpack.c.0.s8 %v5404
        %v5406 = vperm.slane %v5400, %v5405
        %v5408 = vunpack.c.l.s4 1934713408
        %v5409 = vunpack.c.0.s8 %v5408
        %v5410 = vperm.slane %v5402, %v5409
        %v5411 = vrot.slane %v5374, 4
        %v5412 = vsel %vm860, %v5411, %v5362
        %v5413 = vrot.slane %v5362, 4
        %v5414 = vsel %vm860, %v5374, %v5413
        %v5416 = vunpack.c.l.s4 1934713408
        %v5417 = vunpack.c.0.s8 %v5416
        %v5418 = vperm.slane %v5412, %v5417
        %v5420 = vunpack.c.l.s4 1934713408
        %v5421 = vunpack.c.0.s8 %v5420
        %v5422 = vperm.slane %v5414, %v5421
        %v5423 = vrot.slane %v5406, 4
        %v5424 = vsel %vm860, %v5423, %v5382
        %v5425 = vrot.slane %v5382, 4
        %v5426 = vsel %vm860, %v5406, %v5425
        %v5427 = vrot.slane %v5410, 4
        %v5428 = vsel %vm860, %v5427, %v5386
        %v5429 = vrot.slane %v5386, 4
        %v5430 = vsel %vm860, %v5410, %v5429
        %v5431 = vrot.slane %v5418, 4
        %v5432 = vsel %vm860, %v5431, %v5394
        %v5433 = vrot.slane %v5394, 4
        %v5434 = vsel %vm860, %v5418, %v5433
        %v5435 = vrot.slane %v5422, 4
        %v5436 = vsel %vm860, %v5435, %v5398
        %v5437 = vrot.slane %v5398, 4
        %v5438 = vsel %vm860, %v5422, %v5437
        %v5439 = vrot.slane %v4589, 4
        %v5440 = vsel %vm860, %v5439, %v4563
        %v5441 = vrot.slane %v4563, 4
        %v5442 = vsel %vm860, %v4589, %v5441
        %v5444 = vunpack.c.l.s4 1983009808
        %v5445 = vunpack.c.0.s8 %v5444
        %v5446 = vperm.slane %v5440, %v5445
        %v5448 = vunpack.c.l.s4 1983009808
        %v5449 = vunpack.c.0.s8 %v5448
        %v5450 = vperm.slane %v5442, %v5449
        %v5451 = vrot.slane %v4602, 4
        %v5452 = vsel %vm860, %v5451, %v4576
        %v5453 = vrot.slane %v4576, 4
        %v5454 = vsel %vm860, %v4602, %v5453
        %v5456 = vunpack.c.l.s4 1983009808
        %v5457 = vunpack.c.0.s8 %v5456
        %v5458 = vperm.slane %v5452, %v5457
        %v5460 = vunpack.c.l.s4 1983009808
        %v5461 = vunpack.c.0.s8 %v5460
        %v5462 = vperm.slane %v5454, %v5461
        %v5463 = vrot.slane %v4641, 4
        %v5464 = vsel %vm860, %v5463, %v4615
        %v5465 = vrot.slane %v4615, 4
        %v5466 = vsel %vm860, %v4641, %v5465
        %v5468 = vunpack.c.l.s4 1983009808
        %v5469 = vunpack.c.0.s8 %v5468
        %v5470 = vperm.slane %v5464, %v5469
        %v5472 = vunpack.c.l.s4 1983009808
        %v5473 = vunpack.c.0.s8 %v5472
        %v5474 = vperm.slane %v5466, %v5473
        %v5475 = vrot.slane %v4654, 4
        %v5476 = vsel %vm860, %v5475, %v4628
        %v5477 = vrot.slane %v4628, 4
        %v5478 = vsel %vm860, %v4654, %v5477
        %v5480 = vunpack.c.l.s4 1983009808
        %v5481 = vunpack.c.0.s8 %v5480
        %v5482 = vperm.slane %v5476, %v5481
        %v5484 = vunpack.c.l.s4 1983009808
        %v5485 = vunpack.c.0.s8 %v5484
        %v5486 = vperm.slane %v5478, %v5485
        %v5487 = vrot.slane %v5458, 4
        %v5488 = vsel %vm860, %v5487, %v5446
        %v5489 = vrot.slane %v5446, 4
        %v5490 = vsel %vm860, %v5458, %v5489
        %v5492 = vunpack.c.l.s4 1934713408
        %v5493 = vunpack.c.0.s8 %v5492
        %v5494 = vperm.slane %v5488, %v5493
        %v5496 = vunpack.c.l.s4 1934713408
        %v5497 = vunpack.c.0.s8 %v5496
        %v5498 = vperm.slane %v5490, %v5497
        %v5499 = vrot.slane %v5462, 4
        %v5500 = vsel %vm860, %v5499, %v5450
        %v5501 = vrot.slane %v5450, 4
        %v5502 = vsel %vm860, %v5462, %v5501
        %v5504 = vunpack.c.l.s4 1934713408
        %v5505 = vunpack.c.0.s8 %v5504
        %v5506 = vperm.slane %v5500, %v5505
        %v5508 = vunpack.c.l.s4 1934713408
        %v5509 = vunpack.c.0.s8 %v5508
        %v5510 = vperm.slane %v5502, %v5509
        %v5511 = vrot.slane %v5482, 4
        %v5512 = vsel %vm860, %v5511, %v5470
        %v5513 = vrot.slane %v5470, 4
        %v5514 = vsel %vm860, %v5482, %v5513
        %v5516 = vunpack.c.l.s4 1934713408
        %v5517 = vunpack.c.0.s8 %v5516
        %v5518 = vperm.slane %v5512, %v5517
        %v5520 = vunpack.c.l.s4 1934713408
        %v5521 = vunpack.c.0.s8 %v5520
        %v5522 = vperm.slane %v5514, %v5521
        %v5523 = vrot.slane %v5486, 4
        %v5524 = vsel %vm860, %v5523, %v5474
        %v5525 = vrot.slane %v5474, 4
        %v5526 = vsel %vm860, %v5486, %v5525
        %v5528 = vunpack.c.l.s4 1934713408
        %v5529 = vunpack.c.0.s8 %v5528
        %v5530 = vperm.slane %v5524, %v5529
        %v5532 = vunpack.c.l.s4 1934713408
        %v5533 = vunpack.c.0.s8 %v5532
        %v5534 = vperm.slane %v5526, %v5533
        %v5535 = vrot.slane %v5518, 4
        %v5536 = vsel %vm860, %v5535, %v5494
        %v5537 = vrot.slane %v5494, 4
        %v5538 = vsel %vm860, %v5518, %v5537
        %v5539 = vrot.slane %v5522, 4
        %v5540 = vsel %vm860, %v5539, %v5498
        %v5541 = vrot.slane %v5498, 4
        %v5542 = vsel %vm860, %v5522, %v5541
        %v5543 = vrot.slane %v5530, 4
        %v5544 = vsel %vm860, %v5543, %v5506
        %v5545 = vrot.slane %v5506, 4
        %v5546 = vsel %vm860, %v5530, %v5545
        %v5547 = vrot.slane %v5534, 4
        %v5548 = vsel %vm860, %v5547, %v5510
        %v5549 = vrot.slane %v5510, 4
        %v5550 = vsel %vm860, %v5534, %v5549
        %5555 = vrot.lane.b32.xlu0 %v4754, 2
        %v5556 = vpop.permute.xlu0 %5555
        %5557 = vrot.lane.b32.xlu0 %v4866, 2
        %v5558 = vpop.permute.xlu0 %5557
        %5559 = vrot.lane.b32.xlu0 %v4978, 2
        %v5560 = vpop.permute.xlu0 %5559
        %5561 = vrot.lane.b32.xlu0 %v5090, 2
        %v5562 = vpop.permute.xlu0 %5561
        %5571 = vrot.lane.b32.xlu0 %v4756, 4
        %v5572 = vpop.permute.xlu0 %5571
        %5573 = vrot.lane.b32.xlu0 %v4868, 4
        %v5574 = vpop.permute.xlu0 %5573
        %5575 = vrot.lane.b32.xlu0 %v4980, 4
        %v5576 = vpop.permute.xlu0 %5575
        %5577 = vrot.lane.b32.xlu0 %v5092, 4
        %v5578 = vpop.permute.xlu0 %5577
        %5587 = vrot.lane.b32.xlu0 %v4758, 6
        %v5588 = vpop.permute.xlu0 %5587
        %5589 = vrot.lane.b32.xlu0 %v4870, 6
        %v5590 = vpop.permute.xlu0 %5589
        %5591 = vrot.lane.b32.xlu0 %v4982, 6
        %v5592 = vpop.permute.xlu0 %5591
        %5593 = vrot.lane.b32.xlu0 %v5094, 6
        %v5594 = vpop.permute.xlu0 %5593
        %5603 = vrot.lane.b32.xlu0 %v4760, 8
        %v5604 = vpop.permute.xlu0 %5603
        %5605 = vrot.lane.b32.xlu0 %v4872, 8
        %v5606 = vpop.permute.xlu0 %5605
        %5607 = vrot.lane.b32.xlu0 %v4984, 8
        %v5608 = vpop.permute.xlu0 %5607
        %5609 = vrot.lane.b32.xlu0 %v5096, 8
        %v5610 = vpop.permute.xlu0 %5609
        %5619 = vrot.lane.b32.xlu0 %v4762, 10
        %v5620 = vpop.permute.xlu0 %5619
        %5621 = vrot.lane.b32.xlu0 %v4874, 10
        %v5622 = vpop.permute.xlu0 %5621
        %5623 = vrot.lane.b32.xlu0 %v4986, 10
        %v5624 = vpop.permute.xlu0 %5623
        %5625 = vrot.lane.b32.xlu0 %v5098, 10
        %v5626 = vpop.permute.xlu0 %5625
        %5635 = vrot.lane.b32.xlu0 %v4764, 12
        %v5636 = vpop.permute.xlu0 %5635
        %5637 = vrot.lane.b32.xlu0 %v4876, 12
        %v5638 = vpop.permute.xlu0 %5637
        %5639 = vrot.lane.b32.xlu0 %v4988, 12
        %v5640 = vpop.permute.xlu0 %5639
        %5641 = vrot.lane.b32.xlu0 %v5100, 12
        %v5642 = vpop.permute.xlu0 %5641
        %5651 = vrot.lane.b32.xlu0 %v4766, 14
        %v5652 = vpop.permute.xlu0 %5651
        %5653 = vrot.lane.b32.xlu0 %v4878, 14
        %v5654 = vpop.permute.xlu0 %5653
        %5655 = vrot.lane.b32.xlu0 %v4990, 14
        %v5656 = vpop.permute.xlu0 %5655
        %5657 = vrot.lane.b32.xlu0 %v5102, 14
        %v5658 = vpop.permute.xlu0 %5657
        %5667 = vrot.lane.b32.xlu0 %v5200, 16
        %v5668 = vpop.permute.xlu0 %5667
        %5669 = vrot.lane.b32.xlu0 %v5312, 16
        %v5670 = vpop.permute.xlu0 %5669
        %5671 = vrot.lane.b32.xlu0 %v5424, 16
        %v5672 = vpop.permute.xlu0 %5671
        %5673 = vrot.lane.b32.xlu0 %v5536, 16
        %v5674 = vpop.permute.xlu0 %5673
        %5683 = vrot.lane.b32.xlu0 %v5202, 18
        %v5684 = vpop.permute.xlu0 %5683
        %5685 = vrot.lane.b32.xlu0 %v5314, 18
        %v5686 = vpop.permute.xlu0 %5685
        %5687 = vrot.lane.b32.xlu0 %v5426, 18
        %v5688 = vpop.permute.xlu0 %5687
        %5689 = vrot.lane.b32.xlu0 %v5538, 18
        %v5690 = vpop.permute.xlu0 %5689
        %5699 = vrot.lane.b32.xlu0 %v5204, 20
        %v5700 = vpop.permute.xlu0 %5699
        %5701 = vrot.lane.b32.xlu0 %v5316, 20
        %v5702 = vpop.permute.xlu0 %5701
        %5703 = vrot.lane.b32.xlu0 %v5428, 20
        %v5704 = vpop.permute.xlu0 %5703
        %5705 = vrot.lane.b32.xlu0 %v5540, 20
        %v5706 = vpop.permute.xlu0 %5705
        %5715 = vrot.lane.b32.xlu0 %v5206, 22
        %v5716 = vpop.permute.xlu0 %5715
        %5717 = vrot.lane.b32.xlu0 %v5318, 22
        %v5718 = vpop.permute.xlu0 %5717
        %5719 = vrot.lane.b32.xlu0 %v5430, 22
        %v5720 = vpop.permute.xlu0 %5719
        %5721 = vrot.lane.b32.xlu0 %v5542, 22
        %v5722 = vpop.permute.xlu0 %5721
        %5731 = vrot.lane.b32.xlu0 %v5208, 24
        %v5732 = vpop.permute.xlu0 %5731
        %5733 = vrot.lane.b32.xlu0 %v5320, 24
        %v5734 = vpop.permute.xlu0 %5733
        %5735 = vrot.lane.b32.xlu0 %v5432, 24
        %v5736 = vpop.permute.xlu0 %5735
        %5737 = vrot.lane.b32.xlu0 %v5544, 24
        %v5738 = vpop.permute.xlu0 %5737
        %5747 = vrot.lane.b32.xlu0 %v5210, 26
        %v5748 = vpop.permute.xlu0 %5747
        %5749 = vrot.lane.b32.xlu0 %v5322, 26
        %v5750 = vpop.permute.xlu0 %5749
        %5751 = vrot.lane.b32.xlu0 %v5434, 26
        %v5752 = vpop.permute.xlu0 %5751
        %5753 = vrot.lane.b32.xlu0 %v5546, 26
        %v5754 = vpop.permute.xlu0 %5753
        %5763 = vrot.lane.b32.xlu0 %v5212, 28
        %v5764 = vpop.permute.xlu0 %5763
        %5765 = vrot.lane.b32.xlu0 %v5324, 28
        %v5766 = vpop.permute.xlu0 %5765
        %5767 = vrot.lane.b32.xlu0 %v5436, 28
        %v5768 = vpop.permute.xlu0 %5767
        %5769 = vrot.lane.b32.xlu0 %v5548, 28
        %v5770 = vpop.permute.xlu0 %5769
        %5779 = vrot.lane.b32.xlu0 %v5214, 30
        %v5780 = vpop.permute.xlu0 %5779
        %5781 = vrot.lane.b32.xlu0 %v5326, 30
        %v5782 = vpop.permute.xlu0 %5781
        %5783 = vrot.lane.b32.xlu0 %v5438, 30
        %v5784 = vpop.permute.xlu0 %5783
        %5785 = vrot.lane.b32.xlu0 %v5550, 30
        %v5786 = vpop.permute.xlu0 %5785
        %v5791 = vsel %vm1996, %v4752, %v5556
        %v5792 = vsel %vm1996, %v4864, %v5558
        %v5793 = vsel %vm1996, %v4976, %v5560
        %v5794 = vsel %vm1996, %v5088, %v5562
        %v5795 = vsel %vm2001, %v5791, %v5572
        %v5796 = vsel %vm2001, %v5792, %v5574
        %v5797 = vsel %vm2001, %v5793, %v5576
        %v5798 = vsel %vm2001, %v5794, %v5578
        %v5799 = vsel %vm2006, %v5795, %v5588
        %v5800 = vsel %vm2006, %v5796, %v5590
        %v5801 = vsel %vm2006, %v5797, %v5592
        %v5802 = vsel %vm2006, %v5798, %v5594
        %v5803 = vsel %vm2011, %v5799, %v5604
        %v5804 = vsel %vm2011, %v5800, %v5606
        %v5805 = vsel %vm2011, %v5801, %v5608
        %v5806 = vsel %vm2011, %v5802, %v5610
        %v5807 = vsel %vm2016, %v5803, %v5620
        %v5808 = vsel %vm2016, %v5804, %v5622
        %v5809 = vsel %vm2016, %v5805, %v5624
        %v5810 = vsel %vm2016, %v5806, %v5626
        %v5811 = vsel %vm2021, %v5807, %v5636
        %v5812 = vsel %vm2021, %v5808, %v5638
        %v5813 = vsel %vm2021, %v5809, %v5640
        %v5814 = vsel %vm2021, %v5810, %v5642
        %v5815 = vsel %vm2026, %v5811, %v5652
        %v5816 = vsel %vm2026, %v5812, %v5654
        %v5817 = vsel %vm2026, %v5813, %v5656
        %v5818 = vsel %vm2026, %v5814, %v5658
        %v5819 = vsel %vm2031, %v5815, %v5668
        %v5820 = vsel %vm2031, %v5816, %v5670
        %v5821 = vsel %vm2031, %v5817, %v5672
        %v5822 = vsel %vm2031, %v5818, %v5674
        %v5823 = vsel %vm2036, %v5819, %v5684
        %v5824 = vsel %vm2036, %v5820, %v5686
        %v5825 = vsel %vm2036, %v5821, %v5688
        %v5826 = vsel %vm2036, %v5822, %v5690
        %v5827 = vsel %vm2041, %v5823, %v5700
        %v5828 = vsel %vm2041, %v5824, %v5702
        %v5829 = vsel %vm2041, %v5825, %v5704
        %v5830 = vsel %vm2041, %v5826, %v5706
        %v5831 = vsel %vm2046, %v5827, %v5716
        %v5832 = vsel %vm2046, %v5828, %v5718
        %v5833 = vsel %vm2046, %v5829, %v5720
        %v5834 = vsel %vm2046, %v5830, %v5722
        %v5835 = vsel %vm2051, %v5831, %v5732
        %v5836 = vsel %vm2051, %v5832, %v5734
        %v5837 = vsel %vm2051, %v5833, %v5736
        %v5838 = vsel %vm2051, %v5834, %v5738
        %v5839 = vsel %vm2056, %v5835, %v5748
        %v5840 = vsel %vm2056, %v5836, %v5750
        %v5841 = vsel %vm2056, %v5837, %v5752
        %v5842 = vsel %vm2056, %v5838, %v5754
        %v5843 = vsel %vm2061, %v5839, %v5764
        %v5844 = vsel %vm2061, %v5840, %v5766
        %v5845 = vsel %vm2061, %v5841, %v5768
        %v5846 = vsel %vm2061, %v5842, %v5770
        %v5847 = vsel %vm2066, %v5843, %v5780
        %v5848 = vsel %vm2066, %v5844, %v5782
        %v5849 = vsel %vm2066, %v5845, %v5784
        %v5850 = vsel %vm2066, %v5846, %v5786
        %v5851 = vperm.slane %v4231, 0
        %v5852 = vlaneseq
        %v5853 = vshrl.u32 %v5852, 7
        %5855 = vset.pattern.permute.xlu0 %v5853
        %5856 = vperm.xlu0 %5855, %v5851
        %v5857 = vpop.permute.xlu0 %5856
        %v5858 = vlaneseq
        %v5859 = vshrl.u32 %v5858, 7
        %v5860 = vadd.s32 %v5859, 8
        %5861 = vset.pattern.permute.xlu0 %v5860
        %5862 = vperm.xlu0 %5861, %v5851
        %v5863 = vpop.permute.xlu0 %5862
        %v5864 = vperm.slane %v4231, 1
        %v5865 = vlaneseq
        %v5866 = vshrl.u32 %v5865, 7
        %5868 = vset.pattern.permute.xlu0 %v5866
        %5869 = vperm.xlu0 %5868, %v5864
        %v5870 = vpop.permute.xlu0 %5869
        %v5871 = vlaneseq
        %v5872 = vshrl.u32 %v5871, 7
        %v5873 = vadd.s32 %v5872, 8
        %5874 = vset.pattern.permute.xlu0 %v5873
        %5875 = vperm.xlu0 %5874, %v5864
        %v5876 = vpop.permute.xlu0 %5875
        %v5877 = vperm.slane %v4231, 2
        %v5878 = vlaneseq
        %v5879 = vshrl.u32 %v5878, 7
        %5881 = vset.pattern.permute.xlu0 %v5879
        %5882 = vperm.xlu0 %5881, %v5877
        %v5883 = vpop.permute.xlu0 %5882
        %v5884 = vlaneseq
        %v5885 = vshrl.u32 %v5884, 7
        %v5886 = vadd.s32 %v5885, 8
        %5887 = vset.pattern.permute.xlu0 %v5886
        %5888 = vperm.xlu0 %5887, %v5877
        %v5889 = vpop.permute.xlu0 %5888
        %v5890 = vperm.slane %v4231, 3
        %v5891 = vlaneseq
        %v5892 = vshrl.u32 %v5891, 7
        %5894 = vset.pattern.permute.xlu0 %v5892
        %5895 = vperm.xlu0 %5894, %v5890
        %v5896 = vpop.permute.xlu0 %5895
        %v5897 = vlaneseq
        %v5898 = vshrl.u32 %v5897, 7
        %v5899 = vadd.s32 %v5898, 8
        %5900 = vset.pattern.permute.xlu0 %v5899
        %5901 = vperm.xlu0 %5900, %v5890
        %v5902 = vpop.permute.xlu0 %5901
        %v5903 = vperm.slane %v4231, 4
        %v5904 = vlaneseq
        %v5905 = vshrl.u32 %v5904, 7
        %5907 = vset.pattern.permute.xlu0 %v5905
        %5908 = vperm.xlu0 %5907, %v5903
        %v5909 = vpop.permute.xlu0 %5908
        %v5910 = vlaneseq
        %v5911 = vshrl.u32 %v5910, 7
        %v5912 = vadd.s32 %v5911, 8
        %5913 = vset.pattern.permute.xlu0 %v5912
        %5914 = vperm.xlu0 %5913, %v5903
        %v5915 = vpop.permute.xlu0 %5914
        %v5916 = vperm.slane %v4231, 5
        %v5917 = vlaneseq
        %v5918 = vshrl.u32 %v5917, 7
        %5920 = vset.pattern.permute.xlu0 %v5918
        %5921 = vperm.xlu0 %5920, %v5916
        %v5922 = vpop.permute.xlu0 %5921
        %v5923 = vlaneseq
        %v5924 = vshrl.u32 %v5923, 7
        %v5925 = vadd.s32 %v5924, 8
        %5926 = vset.pattern.permute.xlu0 %v5925
        %5927 = vperm.xlu0 %5926, %v5916
        %v5928 = vpop.permute.xlu0 %5927
        %v5929 = vperm.slane %v4231, 6
        %v5930 = vlaneseq
        %v5931 = vshrl.u32 %v5930, 7
        %5933 = vset.pattern.permute.xlu0 %v5931
        %5934 = vperm.xlu0 %5933, %v5929
        %v5935 = vpop.permute.xlu0 %5934
        %v5936 = vlaneseq
        %v5937 = vshrl.u32 %v5936, 7
        %v5938 = vadd.s32 %v5937, 8
        %5939 = vset.pattern.permute.xlu0 %v5938
        %5940 = vperm.xlu0 %5939, %v5929
        %v5941 = vpop.permute.xlu0 %5940
        %v5942 = vperm.slane %v4231, 7
        %v5943 = vlaneseq
        %v5944 = vshrl.u32 %v5943, 7
        %5946 = vset.pattern.permute.xlu0 %v5944
        %5947 = vperm.xlu0 %5946, %v5942
        %v5948 = vpop.permute.xlu0 %5947
        %v5949 = vlaneseq
        %v5950 = vshrl.u32 %v5949, 7
        %v5951 = vadd.s32 %v5950, 8
        %5952 = vset.pattern.permute.xlu0 %v5951
        %5953 = vperm.xlu0 %5952, %v5942
        %v5954 = vpop.permute.xlu0 %5953
        %v5955 = vperm.slane %v4232, 0
        %v5956 = vlaneseq
        %v5957 = vshrl.u32 %v5956, 7
        %5959 = vset.pattern.permute.xlu0 %v5957
        %5960 = vperm.xlu0 %5959, %v5955
        %v5961 = vpop.permute.xlu0 %5960
        %v5962 = vlaneseq
        %v5963 = vshrl.u32 %v5962, 7
        %v5964 = vadd.s32 %v5963, 8
        %5965 = vset.pattern.permute.xlu0 %v5964
        %5966 = vperm.xlu0 %5965, %v5955
        %v5967 = vpop.permute.xlu0 %5966
        %v5968 = vperm.slane %v4232, 1
        %v5969 = vlaneseq
        %v5970 = vshrl.u32 %v5969, 7
        %5972 = vset.pattern.permute.xlu0 %v5970
        %5973 = vperm.xlu0 %5972, %v5968
        %v5974 = vpop.permute.xlu0 %5973
        %v5975 = vlaneseq
        %v5976 = vshrl.u32 %v5975, 7
        %v5977 = vadd.s32 %v5976, 8
        %5978 = vset.pattern.permute.xlu0 %v5977
        %5979 = vperm.xlu0 %5978, %v5968
        %v5980 = vpop.permute.xlu0 %5979
        %v5981 = vperm.slane %v4232, 2
        %v5982 = vlaneseq
        %v5983 = vshrl.u32 %v5982, 7
        %5985 = vset.pattern.permute.xlu0 %v5983
        %5986 = vperm.xlu0 %5985, %v5981
        %v5987 = vpop.permute.xlu0 %5986
        %v5988 = vlaneseq
        %v5989 = vshrl.u32 %v5988, 7
        %v5990 = vadd.s32 %v5989, 8
        %5991 = vset.pattern.permute.xlu0 %v5990
        %5992 = vperm.xlu0 %5991, %v5981
        %v5993 = vpop.permute.xlu0 %5992
        %v5994 = vperm.slane %v4232, 3
        %v5995 = vlaneseq
        %v5996 = vshrl.u32 %v5995, 7
        %5998 = vset.pattern.permute.xlu0 %v5996
        %5999 = vperm.xlu0 %5998, %v5994
        %v6000 = vpop.permute.xlu0 %5999
        %v6001 = vlaneseq
        %v6002 = vshrl.u32 %v6001, 7
        %v6003 = vadd.s32 %v6002, 8
        %6004 = vset.pattern.permute.xlu0 %v6003
        %6005 = vperm.xlu0 %6004, %v5994
        %v6006 = vpop.permute.xlu0 %6005
        %v6007 = vperm.slane %v4232, 4
        %v6008 = vlaneseq
        %v6009 = vshrl.u32 %v6008, 7
        %6011 = vset.pattern.permute.xlu0 %v6009
        %6012 = vperm.xlu0 %6011, %v6007
        %v6013 = vpop.permute.xlu0 %6012
        %v6014 = vlaneseq
        %v6015 = vshrl.u32 %v6014, 7
        %v6016 = vadd.s32 %v6015, 8
        %6017 = vset.pattern.permute.xlu0 %v6016
        %6018 = vperm.xlu0 %6017, %v6007
        %v6019 = vpop.permute.xlu0 %6018
        %v6020 = vperm.slane %v4232, 5
        %v6021 = vlaneseq
        %v6022 = vshrl.u32 %v6021, 7
        %6024 = vset.pattern.permute.xlu0 %v6022
        %6025 = vperm.xlu0 %6024, %v6020
        %v6026 = vpop.permute.xlu0 %6025
        %v6027 = vlaneseq
        %v6028 = vshrl.u32 %v6027, 7
        %v6029 = vadd.s32 %v6028, 8
        %6030 = vset.pattern.permute.xlu0 %v6029
        %6031 = vperm.xlu0 %6030, %v6020
        %v6032 = vpop.permute.xlu0 %6031
        %v6033 = vperm.slane %v4232, 6
        %v6034 = vlaneseq
        %v6035 = vshrl.u32 %v6034, 7
        %6037 = vset.pattern.permute.xlu0 %v6035
        %6038 = vperm.xlu0 %6037, %v6033
        %v6039 = vpop.permute.xlu0 %6038
        %v6040 = vlaneseq
        %v6041 = vshrl.u32 %v6040, 7
        %v6042 = vadd.s32 %v6041, 8
        %6043 = vset.pattern.permute.xlu0 %v6042
        %6044 = vperm.xlu0 %6043, %v6033
        %v6045 = vpop.permute.xlu0 %6044
        %v6046 = vperm.slane %v4232, 7
        %v6047 = vlaneseq
        %v6048 = vshrl.u32 %v6047, 7
        %6050 = vset.pattern.permute.xlu0 %v6048
        %6051 = vperm.xlu0 %6050, %v6046
        %v6052 = vpop.permute.xlu0 %6051
        %v6053 = vlaneseq
        %v6054 = vshrl.u32 %v6053, 7
        %v6055 = vadd.s32 %v6054, 8
        %6056 = vset.pattern.permute.xlu0 %v6055
        %6057 = vperm.xlu0 %6056, %v6046
        %v6058 = vpop.permute.xlu0 %6057
        %v6059 = vperm.slane %v4233, 0
        %v6060 = vlaneseq
        %v6061 = vshrl.u32 %v6060, 7
        %6063 = vset.pattern.permute.xlu0 %v6061
        %6064 = vperm.xlu0 %6063, %v6059
        %v6065 = vpop.permute.xlu0 %6064
        %v6066 = vlaneseq
        %v6067 = vshrl.u32 %v6066, 7
        %v6068 = vadd.s32 %v6067, 8
        %6069 = vset.pattern.permute.xlu0 %v6068
        %6070 = vperm.xlu0 %6069, %v6059
        %v6071 = vpop.permute.xlu0 %6070
        %v6072 = vperm.slane %v4233, 1
        %v6073 = vlaneseq
        %v6074 = vshrl.u32 %v6073, 7
        %6076 = vset.pattern.permute.xlu0 %v6074
        %6077 = vperm.xlu0 %6076, %v6072
        %v6078 = vpop.permute.xlu0 %6077
        %v6079 = vlaneseq
        %v6080 = vshrl.u32 %v6079, 7
        %v6081 = vadd.s32 %v6080, 8
        %6082 = vset.pattern.permute.xlu0 %v6081
        %6083 = vperm.xlu0 %6082, %v6072
        %v6084 = vpop.permute.xlu0 %6083
        %v6085 = vperm.slane %v4233, 2
        %v6086 = vlaneseq
        %v6087 = vshrl.u32 %v6086, 7
        %6089 = vset.pattern.permute.xlu0 %v6087
        %6090 = vperm.xlu0 %6089, %v6085
        %v6091 = vpop.permute.xlu0 %6090
        %v6092 = vlaneseq
        %v6093 = vshrl.u32 %v6092, 7
        %v6094 = vadd.s32 %v6093, 8
        %6095 = vset.pattern.permute.xlu0 %v6094
        %6096 = vperm.xlu0 %6095, %v6085
        %v6097 = vpop.permute.xlu0 %6096
        %v6098 = vperm.slane %v4233, 3
        %v6099 = vlaneseq
        %v6100 = vshrl.u32 %v6099, 7
        %6102 = vset.pattern.permute.xlu0 %v6100
        %6103 = vperm.xlu0 %6102, %v6098
        %v6104 = vpop.permute.xlu0 %6103
        %v6105 = vlaneseq
        %v6106 = vshrl.u32 %v6105, 7
        %v6107 = vadd.s32 %v6106, 8
        %6108 = vset.pattern.permute.xlu0 %v6107
        %6109 = vperm.xlu0 %6108, %v6098
        %v6110 = vpop.permute.xlu0 %6109
        %v6111 = vperm.slane %v4233, 4
        %v6112 = vlaneseq
        %v6113 = vshrl.u32 %v6112, 7
        %6115 = vset.pattern.permute.xlu0 %v6113
        %6116 = vperm.xlu0 %6115, %v6111
        %v6117 = vpop.permute.xlu0 %6116
        %v6118 = vlaneseq
        %v6119 = vshrl.u32 %v6118, 7
        %v6120 = vadd.s32 %v6119, 8
        %6121 = vset.pattern.permute.xlu0 %v6120
        %6122 = vperm.xlu0 %6121, %v6111
        %v6123 = vpop.permute.xlu0 %6122
        %v6124 = vperm.slane %v4233, 5
        %v6125 = vlaneseq
        %v6126 = vshrl.u32 %v6125, 7
        %6128 = vset.pattern.permute.xlu0 %v6126
        %6129 = vperm.xlu0 %6128, %v6124
        %v6130 = vpop.permute.xlu0 %6129
        %v6131 = vlaneseq
        %v6132 = vshrl.u32 %v6131, 7
        %v6133 = vadd.s32 %v6132, 8
        %6134 = vset.pattern.permute.xlu0 %v6133
        %6135 = vperm.xlu0 %6134, %v6124
        %v6136 = vpop.permute.xlu0 %6135
        %v6137 = vperm.slane %v4233, 6
        %v6138 = vlaneseq
        %v6139 = vshrl.u32 %v6138, 7
        %6141 = vset.pattern.permute.xlu0 %v6139
        %6142 = vperm.xlu0 %6141, %v6137
        %v6143 = vpop.permute.xlu0 %6142
        %v6144 = vlaneseq
        %v6145 = vshrl.u32 %v6144, 7
        %v6146 = vadd.s32 %v6145, 8
        %6147 = vset.pattern.permute.xlu0 %v6146
        %6148 = vperm.xlu0 %6147, %v6137
        %v6149 = vpop.permute.xlu0 %6148
        %v6150 = vperm.slane %v4233, 7
        %v6151 = vlaneseq
        %v6152 = vshrl.u32 %v6151, 7
        %6154 = vset.pattern.permute.xlu0 %v6152
        %6155 = vperm.xlu0 %6154, %v6150
        %v6156 = vpop.permute.xlu0 %6155
        %v6157 = vlaneseq
        %v6158 = vshrl.u32 %v6157, 7
        %v6159 = vadd.s32 %v6158, 8
        %6160 = vset.pattern.permute.xlu0 %v6159
        %6161 = vperm.xlu0 %6160, %v6150
        %v6162 = vpop.permute.xlu0 %6161
        %v6163 = vperm.slane %v4234, 0
        %v6164 = vlaneseq
        %v6165 = vshrl.u32 %v6164, 7
        %6167 = vset.pattern.permute.xlu0 %v6165
        %6168 = vperm.xlu0 %6167, %v6163
        %v6169 = vpop.permute.xlu0 %6168
        %v6170 = vlaneseq
        %v6171 = vshrl.u32 %v6170, 7
        %v6172 = vadd.s32 %v6171, 8
        %6173 = vset.pattern.permute.xlu0 %v6172
        %6174 = vperm.xlu0 %6173, %v6163
        %v6175 = vpop.permute.xlu0 %6174
        %v6176 = vperm.slane %v4234, 1
        %v6177 = vlaneseq
        %v6178 = vshrl.u32 %v6177, 7
        %6180 = vset.pattern.permute.xlu0 %v6178
        %6181 = vperm.xlu0 %6180, %v6176
        %v6182 = vpop.permute.xlu0 %6181
        %v6183 = vlaneseq
        %v6184 = vshrl.u32 %v6183, 7
        %v6185 = vadd.s32 %v6184, 8
        %6186 = vset.pattern.permute.xlu0 %v6185
        %6187 = vperm.xlu0 %6186, %v6176
        %v6188 = vpop.permute.xlu0 %6187
        %v6189 = vperm.slane %v4234, 2
        %v6190 = vlaneseq
        %v6191 = vshrl.u32 %v6190, 7
        %6193 = vset.pattern.permute.xlu0 %v6191
        %6194 = vperm.xlu0 %6193, %v6189
        %v6195 = vpop.permute.xlu0 %6194
        %v6196 = vlaneseq
        %v6197 = vshrl.u32 %v6196, 7
        %v6198 = vadd.s32 %v6197, 8
        %6199 = vset.pattern.permute.xlu0 %v6198
        %6200 = vperm.xlu0 %6199, %v6189
        %v6201 = vpop.permute.xlu0 %6200
        %v6202 = vperm.slane %v4234, 3
        %v6203 = vlaneseq
        %v6204 = vshrl.u32 %v6203, 7
        %6206 = vset.pattern.permute.xlu0 %v6204
        %6207 = vperm.xlu0 %6206, %v6202
        %v6208 = vpop.permute.xlu0 %6207
        %v6209 = vlaneseq
        %v6210 = vshrl.u32 %v6209, 7
        %v6211 = vadd.s32 %v6210, 8
        %6212 = vset.pattern.permute.xlu0 %v6211
        %6213 = vperm.xlu0 %6212, %v6202
        %v6214 = vpop.permute.xlu0 %6213
        %v6215 = vperm.slane %v4234, 4
        %v6216 = vlaneseq
        %v6217 = vshrl.u32 %v6216, 7
        %6219 = vset.pattern.permute.xlu0 %v6217
        %6220 = vperm.xlu0 %6219, %v6215
        %v6221 = vpop.permute.xlu0 %6220
        %v6222 = vlaneseq
        %v6223 = vshrl.u32 %v6222, 7
        %v6224 = vadd.s32 %v6223, 8
        %6225 = vset.pattern.permute.xlu0 %v6224
        %6226 = vperm.xlu0 %6225, %v6215
        %v6227 = vpop.permute.xlu0 %6226
        %v6228 = vperm.slane %v4234, 5
        %v6229 = vlaneseq
        %v6230 = vshrl.u32 %v6229, 7
        %6232 = vset.pattern.permute.xlu0 %v6230
        %6233 = vperm.xlu0 %6232, %v6228
        %v6234 = vpop.permute.xlu0 %6233
        %v6235 = vlaneseq
        %v6236 = vshrl.u32 %v6235, 7
        %v6237 = vadd.s32 %v6236, 8
        %6238 = vset.pattern.permute.xlu0 %v6237
        %6239 = vperm.xlu0 %6238, %v6228
        %v6240 = vpop.permute.xlu0 %6239
        %v6241 = vperm.slane %v4234, 6
        %v6242 = vlaneseq
        %v6243 = vshrl.u32 %v6242, 7
        %6245 = vset.pattern.permute.xlu0 %v6243
        %6246 = vperm.xlu0 %6245, %v6241
        %v6247 = vpop.permute.xlu0 %6246
        %v6248 = vlaneseq
        %v6249 = vshrl.u32 %v6248, 7
        %v6250 = vadd.s32 %v6249, 8
        %6251 = vset.pattern.permute.xlu0 %v6250
        %6252 = vperm.xlu0 %6251, %v6241
        %v6253 = vpop.permute.xlu0 %6252
        %v6254 = vperm.slane %v4234, 7
        %v6255 = vlaneseq
        %v6256 = vshrl.u32 %v6255, 7
        %6258 = vset.pattern.permute.xlu0 %v6256
        %6259 = vperm.xlu0 %6258, %v6254
        %v6260 = vpop.permute.xlu0 %6259
        %v6261 = vlaneseq
        %v6262 = vshrl.u32 %v6261, 7
        %v6263 = vadd.s32 %v6262, 8
        %6264 = vset.pattern.permute.xlu0 %v6263
        %6265 = vperm.xlu0 %6264, %v6254
        %v6266 = vpop.permute.xlu0 %6265
        %v6267 = vrot.slane %v5883, 4
        %v6268 = vsel %vm860, %v6267, %v5857
        %v6269 = vrot.slane %v5857, 4
        %v6270 = vsel %vm860, %v5883, %v6269
        %v6272 = vunpack.c.l.s4 1983009808
        %v6273 = vunpack.c.0.s8 %v6272
        %v6274 = vperm.slane %v6268, %v6273
        %v6276 = vunpack.c.l.s4 1983009808
        %v6277 = vunpack.c.0.s8 %v6276
        %v6278 = vperm.slane %v6270, %v6277
        %v6279 = vrot.slane %v5896, 4
        %v6280 = vsel %vm860, %v6279, %v5870
        %v6281 = vrot.slane %v5870, 4
        %v6282 = vsel %vm860, %v5896, %v6281
        %v6284 = vunpack.c.l.s4 1983009808
        %v6285 = vunpack.c.0.s8 %v6284
        %v6286 = vperm.slane %v6280, %v6285
        %v6288 = vunpack.c.l.s4 1983009808
        %v6289 = vunpack.c.0.s8 %v6288
        %v6290 = vperm.slane %v6282, %v6289
        %v6291 = vrot.slane %v5935, 4
        %v6292 = vsel %vm860, %v6291, %v5909
        %v6293 = vrot.slane %v5909, 4
        %v6294 = vsel %vm860, %v5935, %v6293
        %v6296 = vunpack.c.l.s4 1983009808
        %v6297 = vunpack.c.0.s8 %v6296
        %v6298 = vperm.slane %v6292, %v6297
        %v6300 = vunpack.c.l.s4 1983009808
        %v6301 = vunpack.c.0.s8 %v6300
        %v6302 = vperm.slane %v6294, %v6301
        %v6303 = vrot.slane %v5948, 4
        %v6304 = vsel %vm860, %v6303, %v5922
        %v6305 = vrot.slane %v5922, 4
        %v6306 = vsel %vm860, %v5948, %v6305
        %v6308 = vunpack.c.l.s4 1983009808
        %v6309 = vunpack.c.0.s8 %v6308
        %v6310 = vperm.slane %v6304, %v6309
        %v6312 = vunpack.c.l.s4 1983009808
        %v6313 = vunpack.c.0.s8 %v6312
        %v6314 = vperm.slane %v6306, %v6313
        %v6315 = vrot.slane %v6286, 4
        %v6316 = vsel %vm860, %v6315, %v6274
        %v6317 = vrot.slane %v6274, 4
        %v6318 = vsel %vm860, %v6286, %v6317
        %v6320 = vunpack.c.l.s4 1934713408
        %v6321 = vunpack.c.0.s8 %v6320
        %v6322 = vperm.slane %v6316, %v6321
        %v6324 = vunpack.c.l.s4 1934713408
        %v6325 = vunpack.c.0.s8 %v6324
        %v6326 = vperm.slane %v6318, %v6325
        %v6327 = vrot.slane %v6290, 4
        %v6328 = vsel %vm860, %v6327, %v6278
        %v6329 = vrot.slane %v6278, 4
        %v6330 = vsel %vm860, %v6290, %v6329
        %v6332 = vunpack.c.l.s4 1934713408
        %v6333 = vunpack.c.0.s8 %v6332
        %v6334 = vperm.slane %v6328, %v6333
        %v6336 = vunpack.c.l.s4 1934713408
        %v6337 = vunpack.c.0.s8 %v6336
        %v6338 = vperm.slane %v6330, %v6337
        %v6339 = vrot.slane %v6310, 4
        %v6340 = vsel %vm860, %v6339, %v6298
        %v6341 = vrot.slane %v6298, 4
        %v6342 = vsel %vm860, %v6310, %v6341
        %v6344 = vunpack.c.l.s4 1934713408
        %v6345 = vunpack.c.0.s8 %v6344
        %v6346 = vperm.slane %v6340, %v6345
        %v6348 = vunpack.c.l.s4 1934713408
        %v6349 = vunpack.c.0.s8 %v6348
        %v6350 = vperm.slane %v6342, %v6349
        %v6351 = vrot.slane %v6314, 4
        %v6352 = vsel %vm860, %v6351, %v6302
        %v6353 = vrot.slane %v6302, 4
        %v6354 = vsel %vm860, %v6314, %v6353
        %v6356 = vunpack.c.l.s4 1934713408
        %v6357 = vunpack.c.0.s8 %v6356
        %v6358 = vperm.slane %v6352, %v6357
        %v6360 = vunpack.c.l.s4 1934713408
        %v6361 = vunpack.c.0.s8 %v6360
        %v6362 = vperm.slane %v6354, %v6361
        %v6363 = vrot.slane %v6346, 4
        %v6364 = vsel %vm860, %v6363, %v6322
        %v6365 = vrot.slane %v6322, 4
        %v6366 = vsel %vm860, %v6346, %v6365
        %v6367 = vrot.slane %v6350, 4
        %v6368 = vsel %vm860, %v6367, %v6326
        %v6369 = vrot.slane %v6326, 4
        %v6370 = vsel %vm860, %v6350, %v6369
        %v6371 = vrot.slane %v6358, 4
        %v6372 = vsel %vm860, %v6371, %v6334
        %v6373 = vrot.slane %v6334, 4
        %v6374 = vsel %vm860, %v6358, %v6373
        %v6375 = vrot.slane %v6362, 4
        %v6376 = vsel %vm860, %v6375, %v6338
        %v6377 = vrot.slane %v6338, 4
        %v6378 = vsel %vm860, %v6362, %v6377
        %v6379 = vrot.slane %v5987, 4
        %v6380 = vsel %vm860, %v6379, %v5961
        %v6381 = vrot.slane %v5961, 4
        %v6382 = vsel %vm860, %v5987, %v6381
        %v6384 = vunpack.c.l.s4 1983009808
        %v6385 = vunpack.c.0.s8 %v6384
        %v6386 = vperm.slane %v6380, %v6385
        %v6388 = vunpack.c.l.s4 1983009808
        %v6389 = vunpack.c.0.s8 %v6388
        %v6390 = vperm.slane %v6382, %v6389
        %v6391 = vrot.slane %v6000, 4
        %v6392 = vsel %vm860, %v6391, %v5974
        %v6393 = vrot.slane %v5974, 4
        %v6394 = vsel %vm860, %v6000, %v6393
        %v6396 = vunpack.c.l.s4 1983009808
        %v6397 = vunpack.c.0.s8 %v6396
        %v6398 = vperm.slane %v6392, %v6397
        %v6400 = vunpack.c.l.s4 1983009808
        %v6401 = vunpack.c.0.s8 %v6400
        %v6402 = vperm.slane %v6394, %v6401
        %v6403 = vrot.slane %v6039, 4
        %v6404 = vsel %vm860, %v6403, %v6013
        %v6405 = vrot.slane %v6013, 4
        %v6406 = vsel %vm860, %v6039, %v6405
        %v6408 = vunpack.c.l.s4 1983009808
        %v6409 = vunpack.c.0.s8 %v6408
        %v6410 = vperm.slane %v6404, %v6409
        %v6412 = vunpack.c.l.s4 1983009808
        %v6413 = vunpack.c.0.s8 %v6412
        %v6414 = vperm.slane %v6406, %v6413
        %v6415 = vrot.slane %v6052, 4
        %v6416 = vsel %vm860, %v6415, %v6026
        %v6417 = vrot.slane %v6026, 4
        %v6418 = vsel %vm860, %v6052, %v6417
        %v6420 = vunpack.c.l.s4 1983009808
        %v6421 = vunpack.c.0.s8 %v6420
        %v6422 = vperm.slane %v6416, %v6421
        %v6424 = vunpack.c.l.s4 1983009808
        %v6425 = vunpack.c.0.s8 %v6424
        %v6426 = vperm.slane %v6418, %v6425
        %v6427 = vrot.slane %v6398, 4
        %v6428 = vsel %vm860, %v6427, %v6386
        %v6429 = vrot.slane %v6386, 4
        %v6430 = vsel %vm860, %v6398, %v6429
        %v6432 = vunpack.c.l.s4 1934713408
        %v6433 = vunpack.c.0.s8 %v6432
        %v6434 = vperm.slane %v6428, %v6433
        %v6436 = vunpack.c.l.s4 1934713408
        %v6437 = vunpack.c.0.s8 %v6436
        %v6438 = vperm.slane %v6430, %v6437
        %v6439 = vrot.slane %v6402, 4
        %v6440 = vsel %vm860, %v6439, %v6390
        %v6441 = vrot.slane %v6390, 4
        %v6442 = vsel %vm860, %v6402, %v6441
        %v6444 = vunpack.c.l.s4 1934713408
        %v6445 = vunpack.c.0.s8 %v6444
        %v6446 = vperm.slane %v6440, %v6445
        %v6448 = vunpack.c.l.s4 1934713408
        %v6449 = vunpack.c.0.s8 %v6448
        %v6450 = vperm.slane %v6442, %v6449
        %v6451 = vrot.slane %v6422, 4
        %v6452 = vsel %vm860, %v6451, %v6410
        %v6453 = vrot.slane %v6410, 4
        %v6454 = vsel %vm860, %v6422, %v6453
        %v6456 = vunpack.c.l.s4 1934713408
        %v6457 = vunpack.c.0.s8 %v6456
        %v6458 = vperm.slane %v6452, %v6457
        %v6460 = vunpack.c.l.s4 1934713408
        %v6461 = vunpack.c.0.s8 %v6460
        %v6462 = vperm.slane %v6454, %v6461
        %v6463 = vrot.slane %v6426, 4
        %v6464 = vsel %vm860, %v6463, %v6414
        %v6465 = vrot.slane %v6414, 4
        %v6466 = vsel %vm860, %v6426, %v6465
        %v6468 = vunpack.c.l.s4 1934713408
        %v6469 = vunpack.c.0.s8 %v6468
        %v6470 = vperm.slane %v6464, %v6469
        %v6472 = vunpack.c.l.s4 1934713408
        %v6473 = vunpack.c.0.s8 %v6472
        %v6474 = vperm.slane %v6466, %v6473
        %v6475 = vrot.slane %v6458, 4
        %v6476 = vsel %vm860, %v6475, %v6434
        %v6477 = vrot.slane %v6434, 4
        %v6478 = vsel %vm860, %v6458, %v6477
        %v6479 = vrot.slane %v6462, 4
        %v6480 = vsel %vm860, %v6479, %v6438
        %v6481 = vrot.slane %v6438, 4
        %v6482 = vsel %vm860, %v6462, %v6481
        %v6483 = vrot.slane %v6470, 4
        %v6484 = vsel %vm860, %v6483, %v6446
        %v6485 = vrot.slane %v6446, 4
        %v6486 = vsel %vm860, %v6470, %v6485
        %v6487 = vrot.slane %v6474, 4
        %v6488 = vsel %vm860, %v6487, %v6450
        %v6489 = vrot.slane %v6450, 4
        %v6490 = vsel %vm860, %v6474, %v6489
        %v6491 = vrot.slane %v6091, 4
        %v6492 = vsel %vm860, %v6491, %v6065
        %v6493 = vrot.slane %v6065, 4
        %v6494 = vsel %vm860, %v6091, %v6493
        %v6496 = vunpack.c.l.s4 1983009808
        %v6497 = vunpack.c.0.s8 %v6496
        %v6498 = vperm.slane %v6492, %v6497
        %v6500 = vunpack.c.l.s4 1983009808
        %v6501 = vunpack.c.0.s8 %v6500
        %v6502 = vperm.slane %v6494, %v6501
        %v6503 = vrot.slane %v6104, 4
        %v6504 = vsel %vm860, %v6503, %v6078
        %v6505 = vrot.slane %v6078, 4
        %v6506 = vsel %vm860, %v6104, %v6505
        %v6508 = vunpack.c.l.s4 1983009808
        %v6509 = vunpack.c.0.s8 %v6508
        %v6510 = vperm.slane %v6504, %v6509
        %v6512 = vunpack.c.l.s4 1983009808
        %v6513 = vunpack.c.0.s8 %v6512
        %v6514 = vperm.slane %v6506, %v6513
        %v6515 = vrot.slane %v6143, 4
        %v6516 = vsel %vm860, %v6515, %v6117
        %v6517 = vrot.slane %v6117, 4
        %v6518 = vsel %vm860, %v6143, %v6517
        %v6520 = vunpack.c.l.s4 1983009808
        %v6521 = vunpack.c.0.s8 %v6520
        %v6522 = vperm.slane %v6516, %v6521
        %v6524 = vunpack.c.l.s4 1983009808
        %v6525 = vunpack.c.0.s8 %v6524
        %v6526 = vperm.slane %v6518, %v6525
        %v6527 = vrot.slane %v6156, 4
        %v6528 = vsel %vm860, %v6527, %v6130
        %v6529 = vrot.slane %v6130, 4
        %v6530 = vsel %vm860, %v6156, %v6529
        %v6532 = vunpack.c.l.s4 1983009808
        %v6533 = vunpack.c.0.s8 %v6532
        %v6534 = vperm.slane %v6528, %v6533
        %v6536 = vunpack.c.l.s4 1983009808
        %v6537 = vunpack.c.0.s8 %v6536
        %v6538 = vperm.slane %v6530, %v6537
        %v6539 = vrot.slane %v6510, 4
        %v6540 = vsel %vm860, %v6539, %v6498
        %v6541 = vrot.slane %v6498, 4
        %v6542 = vsel %vm860, %v6510, %v6541
        %v6544 = vunpack.c.l.s4 1934713408
        %v6545 = vunpack.c.0.s8 %v6544
        %v6546 = vperm.slane %v6540, %v6545
        %v6548 = vunpack.c.l.s4 1934713408
        %v6549 = vunpack.c.0.s8 %v6548
        %v6550 = vperm.slane %v6542, %v6549
        %v6551 = vrot.slane %v6514, 4
        %v6552 = vsel %vm860, %v6551, %v6502
        %v6553 = vrot.slane %v6502, 4
        %v6554 = vsel %vm860, %v6514, %v6553
        %v6556 = vunpack.c.l.s4 1934713408
        %v6557 = vunpack.c.0.s8 %v6556
        %v6558 = vperm.slane %v6552, %v6557
        %v6560 = vunpack.c.l.s4 1934713408
        %v6561 = vunpack.c.0.s8 %v6560
        %v6562 = vperm.slane %v6554, %v6561
        %v6563 = vrot.slane %v6534, 4
        %v6564 = vsel %vm860, %v6563, %v6522
        %v6565 = vrot.slane %v6522, 4
        %v6566 = vsel %vm860, %v6534, %v6565
        %v6568 = vunpack.c.l.s4 1934713408
        %v6569 = vunpack.c.0.s8 %v6568
        %v6570 = vperm.slane %v6564, %v6569
        %v6572 = vunpack.c.l.s4 1934713408
        %v6573 = vunpack.c.0.s8 %v6572
        %v6574 = vperm.slane %v6566, %v6573
        %v6575 = vrot.slane %v6538, 4
        %v6576 = vsel %vm860, %v6575, %v6526
        %v6577 = vrot.slane %v6526, 4
        %v6578 = vsel %vm860, %v6538, %v6577
        %v6580 = vunpack.c.l.s4 1934713408
        %v6581 = vunpack.c.0.s8 %v6580
        %v6582 = vperm.slane %v6576, %v6581
        %v6584 = vunpack.c.l.s4 1934713408
        %v6585 = vunpack.c.0.s8 %v6584
        %v6586 = vperm.slane %v6578, %v6585
        %v6587 = vrot.slane %v6570, 4
        %v6588 = vsel %vm860, %v6587, %v6546
        %v6589 = vrot.slane %v6546, 4
        %v6590 = vsel %vm860, %v6570, %v6589
        %v6591 = vrot.slane %v6574, 4
        %v6592 = vsel %vm860, %v6591, %v6550
        %v6593 = vrot.slane %v6550, 4
        %v6594 = vsel %vm860, %v6574, %v6593
        %v6595 = vrot.slane %v6582, 4
        %v6596 = vsel %vm860, %v6595, %v6558
        %v6597 = vrot.slane %v6558, 4
        %v6598 = vsel %vm860, %v6582, %v6597
        %v6599 = vrot.slane %v6586, 4
        %v6600 = vsel %vm860, %v6599, %v6562
        %v6601 = vrot.slane %v6562, 4
        %v6602 = vsel %vm860, %v6586, %v6601
        %v6603 = vrot.slane %v6195, 4
        %v6604 = vsel %vm860, %v6603, %v6169
        %v6605 = vrot.slane %v6169, 4
        %v6606 = vsel %vm860, %v6195, %v6605
        %v6608 = vunpack.c.l.s4 1983009808
        %v6609 = vunpack.c.0.s8 %v6608
        %v6610 = vperm.slane %v6604, %v6609
        %v6612 = vunpack.c.l.s4 1983009808
        %v6613 = vunpack.c.0.s8 %v6612
        %v6614 = vperm.slane %v6606, %v6613
        %v6615 = vrot.slane %v6208, 4
        %v6616 = vsel %vm860, %v6615, %v6182
        %v6617 = vrot.slane %v6182, 4
        %v6618 = vsel %vm860, %v6208, %v6617
        %v6620 = vunpack.c.l.s4 1983009808
        %v6621 = vunpack.c.0.s8 %v6620
        %v6622 = vperm.slane %v6616, %v6621
        %v6624 = vunpack.c.l.s4 1983009808
        %v6625 = vunpack.c.0.s8 %v6624
        %v6626 = vperm.slane %v6618, %v6625
        %v6627 = vrot.slane %v6247, 4
        %v6628 = vsel %vm860, %v6627, %v6221
        %v6629 = vrot.slane %v6221, 4
        %v6630 = vsel %vm860, %v6247, %v6629
        %v6632 = vunpack.c.l.s4 1983009808
        %v6633 = vunpack.c.0.s8 %v6632
        %v6634 = vperm.slane %v6628, %v6633
        %v6636 = vunpack.c.l.s4 1983009808
        %v6637 = vunpack.c.0.s8 %v6636
        %v6638 = vperm.slane %v6630, %v6637
        %v6639 = vrot.slane %v6260, 4
        %v6640 = vsel %vm860, %v6639, %v6234
        %v6641 = vrot.slane %v6234, 4
        %v6642 = vsel %vm860, %v6260, %v6641
        %v6644 = vunpack.c.l.s4 1983009808
        %v6645 = vunpack.c.0.s8 %v6644
        %v6646 = vperm.slane %v6640, %v6645
        %v6648 = vunpack.c.l.s4 1983009808
        %v6649 = vunpack.c.0.s8 %v6648
        %v6650 = vperm.slane %v6642, %v6649
        %v6651 = vrot.slane %v6622, 4
        %v6652 = vsel %vm860, %v6651, %v6610
        %v6653 = vrot.slane %v6610, 4
        %v6654 = vsel %vm860, %v6622, %v6653
        %v6656 = vunpack.c.l.s4 1934713408
        %v6657 = vunpack.c.0.s8 %v6656
        %v6658 = vperm.slane %v6652, %v6657
        %v6660 = vunpack.c.l.s4 1934713408
        %v6661 = vunpack.c.0.s8 %v6660
        %v6662 = vperm.slane %v6654, %v6661
        %v6663 = vrot.slane %v6626, 4
        %v6664 = vsel %vm860, %v6663, %v6614
        %v6665 = vrot.slane %v6614, 4
        %v6666 = vsel %vm860, %v6626, %v6665
        %v6668 = vunpack.c.l.s4 1934713408
        %v6669 = vunpack.c.0.s8 %v6668
        %v6670 = vperm.slane %v6664, %v6669
        %v6672 = vunpack.c.l.s4 1934713408
        %v6673 = vunpack.c.0.s8 %v6672
        %v6674 = vperm.slane %v6666, %v6673
        %v6675 = vrot.slane %v6646, 4
        %v6676 = vsel %vm860, %v6675, %v6634
        %v6677 = vrot.slane %v6634, 4
        %v6678 = vsel %vm860, %v6646, %v6677
        %v6680 = vunpack.c.l.s4 1934713408
        %v6681 = vunpack.c.0.s8 %v6680
        %v6682 = vperm.slane %v6676, %v6681
        %v6684 = vunpack.c.l.s4 1934713408
        %v6685 = vunpack.c.0.s8 %v6684
        %v6686 = vperm.slane %v6678, %v6685
        %v6687 = vrot.slane %v6650, 4
        %v6688 = vsel %vm860, %v6687, %v6638
        %v6689 = vrot.slane %v6638, 4
        %v6690 = vsel %vm860, %v6650, %v6689
        %v6692 = vunpack.c.l.s4 1934713408
        %v6693 = vunpack.c.0.s8 %v6692
        %v6694 = vperm.slane %v6688, %v6693
        %v6696 = vunpack.c.l.s4 1934713408
        %v6697 = vunpack.c.0.s8 %v6696
        %v6698 = vperm.slane %v6690, %v6697
        %v6699 = vrot.slane %v6682, 4
        %v6700 = vsel %vm860, %v6699, %v6658
        %v6701 = vrot.slane %v6658, 4
        %v6702 = vsel %vm860, %v6682, %v6701
        %v6703 = vrot.slane %v6686, 4
        %v6704 = vsel %vm860, %v6703, %v6662
        %v6705 = vrot.slane %v6662, 4
        %v6706 = vsel %vm860, %v6686, %v6705
        %v6707 = vrot.slane %v6694, 4
        %v6708 = vsel %vm860, %v6707, %v6670
        %v6709 = vrot.slane %v6670, 4
        %v6710 = vsel %vm860, %v6694, %v6709
        %v6711 = vrot.slane %v6698, 4
        %v6712 = vsel %vm860, %v6711, %v6674
        %v6713 = vrot.slane %v6674, 4
        %v6714 = vsel %vm860, %v6698, %v6713
        %v6715 = vrot.slane %v5889, 4
        %v6716 = vsel %vm860, %v6715, %v5863
        %v6717 = vrot.slane %v5863, 4
        %v6718 = vsel %vm860, %v5889, %v6717
        %v6720 = vunpack.c.l.s4 1983009808
        %v6721 = vunpack.c.0.s8 %v6720
        %v6722 = vperm.slane %v6716, %v6721
        %v6724 = vunpack.c.l.s4 1983009808
        %v6725 = vunpack.c.0.s8 %v6724
        %v6726 = vperm.slane %v6718, %v6725
        %v6727 = vrot.slane %v5902, 4
        %v6728 = vsel %vm860, %v6727, %v5876
        %v6729 = vrot.slane %v5876, 4
        %v6730 = vsel %vm860, %v5902, %v6729
        %v6732 = vunpack.c.l.s4 1983009808
        %v6733 = vunpack.c.0.s8 %v6732
        %v6734 = vperm.slane %v6728, %v6733
        %v6736 = vunpack.c.l.s4 1983009808
        %v6737 = vunpack.c.0.s8 %v6736
        %v6738 = vperm.slane %v6730, %v6737
        %v6739 = vrot.slane %v5941, 4
        %v6740 = vsel %vm860, %v6739, %v5915
        %v6741 = vrot.slane %v5915, 4
        %v6742 = vsel %vm860, %v5941, %v6741
        %v6744 = vunpack.c.l.s4 1983009808
        %v6745 = vunpack.c.0.s8 %v6744
        %v6746 = vperm.slane %v6740, %v6745
        %v6748 = vunpack.c.l.s4 1983009808
        %v6749 = vunpack.c.0.s8 %v6748
        %v6750 = vperm.slane %v6742, %v6749
        %v6751 = vrot.slane %v5954, 4
        %v6752 = vsel %vm860, %v6751, %v5928
        %v6753 = vrot.slane %v5928, 4
        %v6754 = vsel %vm860, %v5954, %v6753
        %v6756 = vunpack.c.l.s4 1983009808
        %v6757 = vunpack.c.0.s8 %v6756
        %v6758 = vperm.slane %v6752, %v6757
        %v6760 = vunpack.c.l.s4 1983009808
        %v6761 = vunpack.c.0.s8 %v6760
        %v6762 = vperm.slane %v6754, %v6761
        %v6763 = vrot.slane %v6734, 4
        %v6764 = vsel %vm860, %v6763, %v6722
        %v6765 = vrot.slane %v6722, 4
        %v6766 = vsel %vm860, %v6734, %v6765
        %v6768 = vunpack.c.l.s4 1934713408
        %v6769 = vunpack.c.0.s8 %v6768
        %v6770 = vperm.slane %v6764, %v6769
        %v6772 = vunpack.c.l.s4 1934713408
        %v6773 = vunpack.c.0.s8 %v6772
        %v6774 = vperm.slane %v6766, %v6773
        %v6775 = vrot.slane %v6738, 4
        %v6776 = vsel %vm860, %v6775, %v6726
        %v6777 = vrot.slane %v6726, 4
        %v6778 = vsel %vm860, %v6738, %v6777
        %v6780 = vunpack.c.l.s4 1934713408
        %v6781 = vunpack.c.0.s8 %v6780
        %v6782 = vperm.slane %v6776, %v6781
        %v6784 = vunpack.c.l.s4 1934713408
        %v6785 = vunpack.c.0.s8 %v6784
        %v6786 = vperm.slane %v6778, %v6785
        %v6787 = vrot.slane %v6758, 4
        %v6788 = vsel %vm860, %v6787, %v6746
        %v6789 = vrot.slane %v6746, 4
        %v6790 = vsel %vm860, %v6758, %v6789
        %v6792 = vunpack.c.l.s4 1934713408
        %v6793 = vunpack.c.0.s8 %v6792
        %v6794 = vperm.slane %v6788, %v6793
        %v6796 = vunpack.c.l.s4 1934713408
        %v6797 = vunpack.c.0.s8 %v6796
        %v6798 = vperm.slane %v6790, %v6797
        %v6799 = vrot.slane %v6762, 4
        %v6800 = vsel %vm860, %v6799, %v6750
        %v6801 = vrot.slane %v6750, 4
        %v6802 = vsel %vm860, %v6762, %v6801
        %v6804 = vunpack.c.l.s4 1934713408
        %v6805 = vunpack.c.0.s8 %v6804
        %v6806 = vperm.slane %v6800, %v6805
        %v6808 = vunpack.c.l.s4 1934713408
        %v6809 = vunpack.c.0.s8 %v6808
        %v6810 = vperm.slane %v6802, %v6809
        %v6811 = vrot.slane %v6794, 4
        %v6812 = vsel %vm860, %v6811, %v6770
        %v6813 = vrot.slane %v6770, 4
        %v6814 = vsel %vm860, %v6794, %v6813
        %v6815 = vrot.slane %v6798, 4
        %v6816 = vsel %vm860, %v6815, %v6774
        %v6817 = vrot.slane %v6774, 4
        %v6818 = vsel %vm860, %v6798, %v6817
        %v6819 = vrot.slane %v6806, 4
        %v6820 = vsel %vm860, %v6819, %v6782
        %v6821 = vrot.slane %v6782, 4
        %v6822 = vsel %vm860, %v6806, %v6821
        %v6823 = vrot.slane %v6810, 4
        %v6824 = vsel %vm860, %v6823, %v6786
        %v6825 = vrot.slane %v6786, 4
        %v6826 = vsel %vm860, %v6810, %v6825
        %v6827 = vrot.slane %v5993, 4
        %v6828 = vsel %vm860, %v6827, %v5967
        %v6829 = vrot.slane %v5967, 4
        %v6830 = vsel %vm860, %v5993, %v6829
        %v6832 = vunpack.c.l.s4 1983009808
        %v6833 = vunpack.c.0.s8 %v6832
        %v6834 = vperm.slane %v6828, %v6833
        %v6836 = vunpack.c.l.s4 1983009808
        %v6837 = vunpack.c.0.s8 %v6836
        %v6838 = vperm.slane %v6830, %v6837
        %v6839 = vrot.slane %v6006, 4
        %v6840 = vsel %vm860, %v6839, %v5980
        %v6841 = vrot.slane %v5980, 4
        %v6842 = vsel %vm860, %v6006, %v6841
        %v6844 = vunpack.c.l.s4 1983009808
        %v6845 = vunpack.c.0.s8 %v6844
        %v6846 = vperm.slane %v6840, %v6845
        %v6848 = vunpack.c.l.s4 1983009808
        %v6849 = vunpack.c.0.s8 %v6848
        %v6850 = vperm.slane %v6842, %v6849
        %v6851 = vrot.slane %v6045, 4
        %v6852 = vsel %vm860, %v6851, %v6019
        %v6853 = vrot.slane %v6019, 4
        %v6854 = vsel %vm860, %v6045, %v6853
        %v6856 = vunpack.c.l.s4 1983009808
        %v6857 = vunpack.c.0.s8 %v6856
        %v6858 = vperm.slane %v6852, %v6857
        %v6860 = vunpack.c.l.s4 1983009808
        %v6861 = vunpack.c.0.s8 %v6860
        %v6862 = vperm.slane %v6854, %v6861
        %v6863 = vrot.slane %v6058, 4
        %v6864 = vsel %vm860, %v6863, %v6032
        %v6865 = vrot.slane %v6032, 4
        %v6866 = vsel %vm860, %v6058, %v6865
        %v6868 = vunpack.c.l.s4 1983009808
        %v6869 = vunpack.c.0.s8 %v6868
        %v6870 = vperm.slane %v6864, %v6869
        %v6872 = vunpack.c.l.s4 1983009808
        %v6873 = vunpack.c.0.s8 %v6872
        %v6874 = vperm.slane %v6866, %v6873
        %v6875 = vrot.slane %v6846, 4
        %v6876 = vsel %vm860, %v6875, %v6834
        %v6877 = vrot.slane %v6834, 4
        %v6878 = vsel %vm860, %v6846, %v6877
        %v6880 = vunpack.c.l.s4 1934713408
        %v6881 = vunpack.c.0.s8 %v6880
        %v6882 = vperm.slane %v6876, %v6881
        %v6884 = vunpack.c.l.s4 1934713408
        %v6885 = vunpack.c.0.s8 %v6884
        %v6886 = vperm.slane %v6878, %v6885
        %v6887 = vrot.slane %v6850, 4
        %v6888 = vsel %vm860, %v6887, %v6838
        %v6889 = vrot.slane %v6838, 4
        %v6890 = vsel %vm860, %v6850, %v6889
        %v6892 = vunpack.c.l.s4 1934713408
        %v6893 = vunpack.c.0.s8 %v6892
        %v6894 = vperm.slane %v6888, %v6893
        %v6896 = vunpack.c.l.s4 1934713408
        %v6897 = vunpack.c.0.s8 %v6896
        %v6898 = vperm.slane %v6890, %v6897
        %v6899 = vrot.slane %v6870, 4
        %v6900 = vsel %vm860, %v6899, %v6858
        %v6901 = vrot.slane %v6858, 4
        %v6902 = vsel %vm860, %v6870, %v6901
        %v6904 = vunpack.c.l.s4 1934713408
        %v6905 = vunpack.c.0.s8 %v6904
        %v6906 = vperm.slane %v6900, %v6905
        %v6908 = vunpack.c.l.s4 1934713408
        %v6909 = vunpack.c.0.s8 %v6908
        %v6910 = vperm.slane %v6902, %v6909
        %v6911 = vrot.slane %v6874, 4
        %v6912 = vsel %vm860, %v6911, %v6862
        %v6913 = vrot.slane %v6862, 4
        %v6914 = vsel %vm860, %v6874, %v6913
        %v6916 = vunpack.c.l.s4 1934713408
        %v6917 = vunpack.c.0.s8 %v6916
        %v6918 = vperm.slane %v6912, %v6917
        %v6920 = vunpack.c.l.s4 1934713408
        %v6921 = vunpack.c.0.s8 %v6920
        %v6922 = vperm.slane %v6914, %v6921
        %v6923 = vrot.slane %v6906, 4
        %v6924 = vsel %vm860, %v6923, %v6882
        %v6925 = vrot.slane %v6882, 4
        %v6926 = vsel %vm860, %v6906, %v6925
        %v6927 = vrot.slane %v6910, 4
        %v6928 = vsel %vm860, %v6927, %v6886
        %v6929 = vrot.slane %v6886, 4
        %v6930 = vsel %vm860, %v6910, %v6929
        %v6931 = vrot.slane %v6918, 4
        %v6932 = vsel %vm860, %v6931, %v6894
        %v6933 = vrot.slane %v6894, 4
        %v6934 = vsel %vm860, %v6918, %v6933
        %v6935 = vrot.slane %v6922, 4
        %v6936 = vsel %vm860, %v6935, %v6898
        %v6937 = vrot.slane %v6898, 4
        %v6938 = vsel %vm860, %v6922, %v6937
        %v6939 = vrot.slane %v6097, 4
        %v6940 = vsel %vm860, %v6939, %v6071
        %v6941 = vrot.slane %v6071, 4
        %v6942 = vsel %vm860, %v6097, %v6941
        %v6944 = vunpack.c.l.s4 1983009808
        %v6945 = vunpack.c.0.s8 %v6944
        %v6946 = vperm.slane %v6940, %v6945
        %v6948 = vunpack.c.l.s4 1983009808
        %v6949 = vunpack.c.0.s8 %v6948
        %v6950 = vperm.slane %v6942, %v6949
        %v6951 = vrot.slane %v6110, 4
        %v6952 = vsel %vm860, %v6951, %v6084
        %v6953 = vrot.slane %v6084, 4
        %v6954 = vsel %vm860, %v6110, %v6953
        %v6956 = vunpack.c.l.s4 1983009808
        %v6957 = vunpack.c.0.s8 %v6956
        %v6958 = vperm.slane %v6952, %v6957
        %v6960 = vunpack.c.l.s4 1983009808
        %v6961 = vunpack.c.0.s8 %v6960
        %v6962 = vperm.slane %v6954, %v6961
        %v6963 = vrot.slane %v6149, 4
        %v6964 = vsel %vm860, %v6963, %v6123
        %v6965 = vrot.slane %v6123, 4
        %v6966 = vsel %vm860, %v6149, %v6965
        %v6968 = vunpack.c.l.s4 1983009808
        %v6969 = vunpack.c.0.s8 %v6968
        %v6970 = vperm.slane %v6964, %v6969
        %v6972 = vunpack.c.l.s4 1983009808
        %v6973 = vunpack.c.0.s8 %v6972
        %v6974 = vperm.slane %v6966, %v6973
        %v6975 = vrot.slane %v6162, 4
        %v6976 = vsel %vm860, %v6975, %v6136
        %v6977 = vrot.slane %v6136, 4
        %v6978 = vsel %vm860, %v6162, %v6977
        %v6980 = vunpack.c.l.s4 1983009808
        %v6981 = vunpack.c.0.s8 %v6980
        %v6982 = vperm.slane %v6976, %v6981
        %v6984 = vunpack.c.l.s4 1983009808
        %v6985 = vunpack.c.0.s8 %v6984
        %v6986 = vperm.slane %v6978, %v6985
        %v6987 = vrot.slane %v6958, 4
        %v6988 = vsel %vm860, %v6987, %v6946
        %v6989 = vrot.slane %v6946, 4
        %v6990 = vsel %vm860, %v6958, %v6989
        %v6992 = vunpack.c.l.s4 1934713408
        %v6993 = vunpack.c.0.s8 %v6992
        %v6994 = vperm.slane %v6988, %v6993
        %v6996 = vunpack.c.l.s4 1934713408
        %v6997 = vunpack.c.0.s8 %v6996
        %v6998 = vperm.slane %v6990, %v6997
        %v6999 = vrot.slane %v6962, 4
        %v7000 = vsel %vm860, %v6999, %v6950
        %v7001 = vrot.slane %v6950, 4
        %v7002 = vsel %vm860, %v6962, %v7001
        %v7004 = vunpack.c.l.s4 1934713408
        %v7005 = vunpack.c.0.s8 %v7004
        %v7006 = vperm.slane %v7000, %v7005
        %v7008 = vunpack.c.l.s4 1934713408
        %v7009 = vunpack.c.0.s8 %v7008
        %v7010 = vperm.slane %v7002, %v7009
        %v7011 = vrot.slane %v6982, 4
        %v7012 = vsel %vm860, %v7011, %v6970
        %v7013 = vrot.slane %v6970, 4
        %v7014 = vsel %vm860, %v6982, %v7013
        %v7016 = vunpack.c.l.s4 1934713408
        %v7017 = vunpack.c.0.s8 %v7016
        %v7018 = vperm.slane %v7012, %v7017
        %v7020 = vunpack.c.l.s4 1934713408
        %v7021 = vunpack.c.0.s8 %v7020
        %v7022 = vperm.slane %v7014, %v7021
        %v7023 = vrot.slane %v6986, 4
        %v7024 = vsel %vm860, %v7023, %v6974
        %v7025 = vrot.slane %v6974, 4
        %v7026 = vsel %vm860, %v6986, %v7025
        %v7028 = vunpack.c.l.s4 1934713408
        %v7029 = vunpack.c.0.s8 %v7028
        %v7030 = vperm.slane %v7024, %v7029
        %v7032 = vunpack.c.l.s4 1934713408
        %v7033 = vunpack.c.0.s8 %v7032
        %v7034 = vperm.slane %v7026, %v7033
        %v7035 = vrot.slane %v7018, 4
        %v7036 = vsel %vm860, %v7035, %v6994
        %v7037 = vrot.slane %v6994, 4
        %v7038 = vsel %vm860, %v7018, %v7037
        %v7039 = vrot.slane %v7022, 4
        %v7040 = vsel %vm860, %v7039, %v6998
        %v7041 = vrot.slane %v6998, 4
        %v7042 = vsel %vm860, %v7022, %v7041
        %v7043 = vrot.slane %v7030, 4
        %v7044 = vsel %vm860, %v7043, %v7006
        %v7045 = vrot.slane %v7006, 4
        %v7046 = vsel %vm860, %v7030, %v7045
        %v7047 = vrot.slane %v7034, 4
        %v7048 = vsel %vm860, %v7047, %v7010
        %v7049 = vrot.slane %v7010, 4
        %v7050 = vsel %vm860, %v7034, %v7049
        %v7051 = vrot.slane %v6201, 4
        %v7052 = vsel %vm860, %v7051, %v6175
        %v7053 = vrot.slane %v6175, 4
        %v7054 = vsel %vm860, %v6201, %v7053
        %v7056 = vunpack.c.l.s4 1983009808
        %v7057 = vunpack.c.0.s8 %v7056
        %v7058 = vperm.slane %v7052, %v7057
        %v7060 = vunpack.c.l.s4 1983009808
        %v7061 = vunpack.c.0.s8 %v7060
        %v7062 = vperm.slane %v7054, %v7061
        %v7063 = vrot.slane %v6214, 4
        %v7064 = vsel %vm860, %v7063, %v6188
        %v7065 = vrot.slane %v6188, 4
        %v7066 = vsel %vm860, %v6214, %v7065
        %v7068 = vunpack.c.l.s4 1983009808
        %v7069 = vunpack.c.0.s8 %v7068
        %v7070 = vperm.slane %v7064, %v7069
        %v7072 = vunpack.c.l.s4 1983009808
        %v7073 = vunpack.c.0.s8 %v7072
        %v7074 = vperm.slane %v7066, %v7073
        %v7075 = vrot.slane %v6253, 4
        %v7076 = vsel %vm860, %v7075, %v6227
        %v7077 = vrot.slane %v6227, 4
        %v7078 = vsel %vm860, %v6253, %v7077
        %v7080 = vunpack.c.l.s4 1983009808
        %v7081 = vunpack.c.0.s8 %v7080
        %v7082 = vperm.slane %v7076, %v7081
        %v7084 = vunpack.c.l.s4 1983009808
        %v7085 = vunpack.c.0.s8 %v7084
        %v7086 = vperm.slane %v7078, %v7085
        %v7087 = vrot.slane %v6266, 4
        %v7088 = vsel %vm860, %v7087, %v6240
        %v7089 = vrot.slane %v6240, 4
        %v7090 = vsel %vm860, %v6266, %v7089
        %v7092 = vunpack.c.l.s4 1983009808
        %v7093 = vunpack.c.0.s8 %v7092
        %v7094 = vperm.slane %v7088, %v7093
        %v7096 = vunpack.c.l.s4 1983009808
        %v7097 = vunpack.c.0.s8 %v7096
        %v7098 = vperm.slane %v7090, %v7097
        %v7099 = vrot.slane %v7070, 4
        %v7100 = vsel %vm860, %v7099, %v7058
        %v7101 = vrot.slane %v7058, 4
        %v7102 = vsel %vm860, %v7070, %v7101
        %v7104 = vunpack.c.l.s4 1934713408
        %v7105 = vunpack.c.0.s8 %v7104
        %v7106 = vperm.slane %v7100, %v7105
        %v7108 = vunpack.c.l.s4 1934713408
        %v7109 = vunpack.c.0.s8 %v7108
        %v7110 = vperm.slane %v7102, %v7109
        %v7111 = vrot.slane %v7074, 4
        %v7112 = vsel %vm860, %v7111, %v7062
        %v7113 = vrot.slane %v7062, 4
        %v7114 = vsel %vm860, %v7074, %v7113
        %v7116 = vunpack.c.l.s4 1934713408
        %v7117 = vunpack.c.0.s8 %v7116
        %v7118 = vperm.slane %v7112, %v7117
        %v7120 = vunpack.c.l.s4 1934713408
        %v7121 = vunpack.c.0.s8 %v7120
        %v7122 = vperm.slane %v7114, %v7121
        %v7123 = vrot.slane %v7094, 4
        %v7124 = vsel %vm860, %v7123, %v7082
        %v7125 = vrot.slane %v7082, 4
        %v7126 = vsel %vm860, %v7094, %v7125
        %v7128 = vunpack.c.l.s4 1934713408
        %v7129 = vunpack.c.0.s8 %v7128
        %v7130 = vperm.slane %v7124, %v7129
        %v7132 = vunpack.c.l.s4 1934713408
        %v7133 = vunpack.c.0.s8 %v7132
        %v7134 = vperm.slane %v7126, %v7133
        %v7135 = vrot.slane %v7098, 4
        %v7136 = vsel %vm860, %v7135, %v7086
        %v7137 = vrot.slane %v7086, 4
        %v7138 = vsel %vm860, %v7098, %v7137
        %v7140 = vunpack.c.l.s4 1934713408
        %v7141 = vunpack.c.0.s8 %v7140
        %v7142 = vperm.slane %v7136, %v7141
        %v7144 = vunpack.c.l.s4 1934713408
        %v7145 = vunpack.c.0.s8 %v7144
        %v7146 = vperm.slane %v7138, %v7145
        %v7147 = vrot.slane %v7130, 4
        %v7148 = vsel %vm860, %v7147, %v7106
        %v7149 = vrot.slane %v7106, 4
        %v7150 = vsel %vm860, %v7130, %v7149
        %v7151 = vrot.slane %v7134, 4
        %v7152 = vsel %vm860, %v7151, %v7110
        %v7153 = vrot.slane %v7110, 4
        %v7154 = vsel %vm860, %v7134, %v7153
        %v7155 = vrot.slane %v7142, 4
        %v7156 = vsel %vm860, %v7155, %v7118
        %v7157 = vrot.slane %v7118, 4
        %v7158 = vsel %vm860, %v7142, %v7157
        %v7159 = vrot.slane %v7146, 4
        %v7160 = vsel %vm860, %v7159, %v7122
        %v7161 = vrot.slane %v7122, 4
        %v7162 = vsel %vm860, %v7146, %v7161
        %7167 = vrot.lane.b32.xlu0 %v6366, 2
        %v7168 = vpop.permute.xlu0 %7167
        %7169 = vrot.lane.b32.xlu0 %v6478, 2
        %v7170 = vpop.permute.xlu0 %7169
        %7171 = vrot.lane.b32.xlu0 %v6590, 2
        %v7172 = vpop.permute.xlu0 %7171
        %7173 = vrot.lane.b32.xlu0 %v6702, 2
        %v7174 = vpop.permute.xlu0 %7173
        %7183 = vrot.lane.b32.xlu0 %v6368, 4
        %v7184 = vpop.permute.xlu0 %7183
        %7185 = vrot.lane.b32.xlu0 %v6480, 4
        %v7186 = vpop.permute.xlu0 %7185
        %7187 = vrot.lane.b32.xlu0 %v6592, 4
        %v7188 = vpop.permute.xlu0 %7187
        %7189 = vrot.lane.b32.xlu0 %v6704, 4
        %v7190 = vpop.permute.xlu0 %7189
        %7199 = vrot.lane.b32.xlu0 %v6370, 6
        %v7200 = vpop.permute.xlu0 %7199
        %7201 = vrot.lane.b32.xlu0 %v6482, 6
        %v7202 = vpop.permute.xlu0 %7201
        %7203 = vrot.lane.b32.xlu0 %v6594, 6
        %v7204 = vpop.permute.xlu0 %7203
        %7205 = vrot.lane.b32.xlu0 %v6706, 6
        %v7206 = vpop.permute.xlu0 %7205
        %7215 = vrot.lane.b32.xlu0 %v6372, 8
        %v7216 = vpop.permute.xlu0 %7215
        %7217 = vrot.lane.b32.xlu0 %v6484, 8
        %v7218 = vpop.permute.xlu0 %7217
        %7219 = vrot.lane.b32.xlu0 %v6596, 8
        %v7220 = vpop.permute.xlu0 %7219
        %7221 = vrot.lane.b32.xlu0 %v6708, 8
        %v7222 = vpop.permute.xlu0 %7221
        %7231 = vrot.lane.b32.xlu0 %v6374, 10
        %v7232 = vpop.permute.xlu0 %7231
        %7233 = vrot.lane.b32.xlu0 %v6486, 10
        %v7234 = vpop.permute.xlu0 %7233
        %7235 = vrot.lane.b32.xlu0 %v6598, 10
        %v7236 = vpop.permute.xlu0 %7235
        %7237 = vrot.lane.b32.xlu0 %v6710, 10
        %v7238 = vpop.permute.xlu0 %7237
        %7247 = vrot.lane.b32.xlu0 %v6376, 12
        %v7248 = vpop.permute.xlu0 %7247
        %7249 = vrot.lane.b32.xlu0 %v6488, 12
        %v7250 = vpop.permute.xlu0 %7249
        %7251 = vrot.lane.b32.xlu0 %v6600, 12
        %v7252 = vpop.permute.xlu0 %7251
        %7253 = vrot.lane.b32.xlu0 %v6712, 12
        %v7254 = vpop.permute.xlu0 %7253
        %7263 = vrot.lane.b32.xlu0 %v6378, 14
        %v7264 = vpop.permute.xlu0 %7263
        %7265 = vrot.lane.b32.xlu0 %v6490, 14
        %v7266 = vpop.permute.xlu0 %7265
        %7267 = vrot.lane.b32.xlu0 %v6602, 14
        %v7268 = vpop.permute.xlu0 %7267
        %7269 = vrot.lane.b32.xlu0 %v6714, 14
        %v7270 = vpop.permute.xlu0 %7269
        %7279 = vrot.lane.b32.xlu0 %v6812, 16
        %v7280 = vpop.permute.xlu0 %7279
        %7281 = vrot.lane.b32.xlu0 %v6924, 16
        %v7282 = vpop.permute.xlu0 %7281
        %7283 = vrot.lane.b32.xlu0 %v7036, 16
        %v7284 = vpop.permute.xlu0 %7283
        %7285 = vrot.lane.b32.xlu0 %v7148, 16
        %v7286 = vpop.permute.xlu0 %7285
        %7295 = vrot.lane.b32.xlu0 %v6814, 18
        %v7296 = vpop.permute.xlu0 %7295
        %7297 = vrot.lane.b32.xlu0 %v6926, 18
        %v7298 = vpop.permute.xlu0 %7297
        %7299 = vrot.lane.b32.xlu0 %v7038, 18
        %v7300 = vpop.permute.xlu0 %7299
        %7301 = vrot.lane.b32.xlu0 %v7150, 18
        %v7302 = vpop.permute.xlu0 %7301
        %7311 = vrot.lane.b32.xlu0 %v6816, 20
        %v7312 = vpop.permute.xlu0 %7311
        %7313 = vrot.lane.b32.xlu0 %v6928, 20
        %v7314 = vpop.permute.xlu0 %7313
        %7315 = vrot.lane.b32.xlu0 %v7040, 20
        %v7316 = vpop.permute.xlu0 %7315
        %7317 = vrot.lane.b32.xlu0 %v7152, 20
        %v7318 = vpop.permute.xlu0 %7317
        %7327 = vrot.lane.b32.xlu0 %v6818, 22
        %v7328 = vpop.permute.xlu0 %7327
        %7329 = vrot.lane.b32.xlu0 %v6930, 22
        %v7330 = vpop.permute.xlu0 %7329
        %7331 = vrot.lane.b32.xlu0 %v7042, 22
        %v7332 = vpop.permute.xlu0 %7331
        %7333 = vrot.lane.b32.xlu0 %v7154, 22
        %v7334 = vpop.permute.xlu0 %7333
        %7343 = vrot.lane.b32.xlu0 %v6820, 24
        %v7344 = vpop.permute.xlu0 %7343
        %7345 = vrot.lane.b32.xlu0 %v6932, 24
        %v7346 = vpop.permute.xlu0 %7345
        %7347 = vrot.lane.b32.xlu0 %v7044, 24
        %v7348 = vpop.permute.xlu0 %7347
        %7349 = vrot.lane.b32.xlu0 %v7156, 24
        %v7350 = vpop.permute.xlu0 %7349
        %7359 = vrot.lane.b32.xlu0 %v6822, 26
        %v7360 = vpop.permute.xlu0 %7359
        %7361 = vrot.lane.b32.xlu0 %v6934, 26
        %v7362 = vpop.permute.xlu0 %7361
        %7363 = vrot.lane.b32.xlu0 %v7046, 26
        %v7364 = vpop.permute.xlu0 %7363
        %7365 = vrot.lane.b32.xlu0 %v7158, 26
        %v7366 = vpop.permute.xlu0 %7365
        %7375 = vrot.lane.b32.xlu0 %v6824, 28
        %v7376 = vpop.permute.xlu0 %7375
        %7377 = vrot.lane.b32.xlu0 %v6936, 28
        %v7378 = vpop.permute.xlu0 %7377
        %7379 = vrot.lane.b32.xlu0 %v7048, 28
        %v7380 = vpop.permute.xlu0 %7379
        %7381 = vrot.lane.b32.xlu0 %v7160, 28
        %v7382 = vpop.permute.xlu0 %7381
        %7391 = vrot.lane.b32.xlu0 %v6826, 30
        %v7392 = vpop.permute.xlu0 %7391
        %7393 = vrot.lane.b32.xlu0 %v6938, 30
        %v7394 = vpop.permute.xlu0 %7393
        %7395 = vrot.lane.b32.xlu0 %v7050, 30
        %v7396 = vpop.permute.xlu0 %7395
        %7397 = vrot.lane.b32.xlu0 %v7162, 30
        %v7398 = vpop.permute.xlu0 %7397
        %v7403 = vsel %vm1996, %v6364, %v7168
        %v7404 = vsel %vm1996, %v6476, %v7170
        %v7405 = vsel %vm1996, %v6588, %v7172
        %v7406 = vsel %vm1996, %v6700, %v7174
        %v7407 = vsel %vm2001, %v7403, %v7184
        %v7408 = vsel %vm2001, %v7404, %v7186
        %v7409 = vsel %vm2001, %v7405, %v7188
        %v7410 = vsel %vm2001, %v7406, %v7190
        %v7411 = vsel %vm2006, %v7407, %v7200
        %v7412 = vsel %vm2006, %v7408, %v7202
        %v7413 = vsel %vm2006, %v7409, %v7204
        %v7414 = vsel %vm2006, %v7410, %v7206
        %v7415 = vsel %vm2011, %v7411, %v7216
        %v7416 = vsel %vm2011, %v7412, %v7218
        %v7417 = vsel %vm2011, %v7413, %v7220
        %v7418 = vsel %vm2011, %v7414, %v7222
        %v7419 = vsel %vm2016, %v7415, %v7232
        %v7420 = vsel %vm2016, %v7416, %v7234
        %v7421 = vsel %vm2016, %v7417, %v7236
        %v7422 = vsel %vm2016, %v7418, %v7238
        %v7423 = vsel %vm2021, %v7419, %v7248
        %v7424 = vsel %vm2021, %v7420, %v7250
        %v7425 = vsel %vm2021, %v7421, %v7252
        %v7426 = vsel %vm2021, %v7422, %v7254
        %v7427 = vsel %vm2026, %v7423, %v7264
        %v7428 = vsel %vm2026, %v7424, %v7266
        %v7429 = vsel %vm2026, %v7425, %v7268
        %v7430 = vsel %vm2026, %v7426, %v7270
        %v7431 = vsel %vm2031, %v7427, %v7280
        %v7432 = vsel %vm2031, %v7428, %v7282
        %v7433 = vsel %vm2031, %v7429, %v7284
        %v7434 = vsel %vm2031, %v7430, %v7286
        %v7435 = vsel %vm2036, %v7431, %v7296
        %v7436 = vsel %vm2036, %v7432, %v7298
        %v7437 = vsel %vm2036, %v7433, %v7300
        %v7438 = vsel %vm2036, %v7434, %v7302
        %v7439 = vsel %vm2041, %v7435, %v7312
        %v7440 = vsel %vm2041, %v7436, %v7314
        %v7441 = vsel %vm2041, %v7437, %v7316
        %v7442 = vsel %vm2041, %v7438, %v7318
        %v7443 = vsel %vm2046, %v7439, %v7328
        %v7444 = vsel %vm2046, %v7440, %v7330
        %v7445 = vsel %vm2046, %v7441, %v7332
        %v7446 = vsel %vm2046, %v7442, %v7334
        %v7447 = vsel %vm2051, %v7443, %v7344
        %v7448 = vsel %vm2051, %v7444, %v7346
        %v7449 = vsel %vm2051, %v7445, %v7348
        %v7450 = vsel %vm2051, %v7446, %v7350
        %v7451 = vsel %vm2056, %v7447, %v7360
        %v7452 = vsel %vm2056, %v7448, %v7362
        %v7453 = vsel %vm2056, %v7449, %v7364
        %v7454 = vsel %vm2056, %v7450, %v7366
        %v7455 = vsel %vm2061, %v7451, %v7376
        %v7456 = vsel %vm2061, %v7452, %v7378
        %v7457 = vsel %vm2061, %v7453, %v7380
        %v7458 = vsel %vm2061, %v7454, %v7382
        %v7459 = vsel %vm2066, %v7455, %v7392
        %v7460 = vsel %vm2066, %v7456, %v7394
        %v7461 = vsel %vm2066, %v7457, %v7396
        %v7462 = vsel %vm2066, %v7458, %v7398
        %7467 = vrot.lane.b32.xlu0 %v7459, 32
        %v7468 = vpop.permute.xlu0 %7467
        %7469 = vrot.lane.b32.xlu0 %v7460, 32
        %v7470 = vpop.permute.xlu0 %7469
        %7471 = vrot.lane.b32.xlu0 %v7461, 32
        %v7472 = vpop.permute.xlu0 %7471
        %7473 = vrot.lane.b32.xlu0 %v7462, 32
        %v7474 = vpop.permute.xlu0 %7473
        %v7479 = vsel %vm2087, %v5847, %v7468
        %v7480 = vsel %vm2087, %v5848, %v7470
        %v7481 = vsel %vm2087, %v5849, %v7472
        %v7482 = vsel %vm2087, %v5850, %v7474
        %s7483 = scalar_lea.vmem %s419, 64 [#allocation9]
        %7484 = vst.msk [vmem:[%s7483] sm:$0xff] %vm2092, %v7479
        %7485 = vst.msk [vmem:[%s7483 + $0x8] sm:$0xff] %vm2092, %v7480
        %7486 = vst.msk [vmem:[%s7483 + $0x10] sm:$0xff] %vm2092, %v7481
        %7487 = vst.msk [vmem:[%s7483 + $0x18] sm:$0xff] %vm2092, %v7482
        %v7488 = vld [vmem:[%s369] sm:$0xff]
        %v7489 = vld [vmem:[%s369 + $0x8] sm:$0xff]
        %v7490 = vld [vmem:[%s369 + $0x10] sm:$0xff]
        %v7491 = vld [vmem:[%s369 + $0x18] sm:$0xff]
        %v7492 = vmul.f32 %v7488, 0.5
        %v7493 = vmul.f32 %v7489, 0.5
        %v7494 = vmul.f32 %v7490, 0.5
        %v7495 = vmul.f32 %v7491, 0.5
        %v7496 = vsub.f32 0.0, %v7492
        %v7497 = vsub.f32 0.0, %v7493
        %v7498 = vsub.f32 0.0, %v7494
        %v7499 = vsub.f32 0.0, %v7495
        %v7500 = vperm.slane %v7492, 0
        %v7501 = vlaneseq
        %v7502 = vshrl.u32 %v7501, 7
        %7504 = vset.pattern.permute.xlu0 %v7502
        %7505 = vperm.xlu0 %7504, %v7500
        %v7506 = vpop.permute.xlu0 %7505
        %v7507 = vlaneseq
        %v7508 = vshrl.u32 %v7507, 7
        %v7509 = vadd.s32 %v7508, 8
        %7510 = vset.pattern.permute.xlu0 %v7509
        %7511 = vperm.xlu0 %7510, %v7500
        %v7512 = vpop.permute.xlu0 %7511
        %v7513 = vperm.slane %v7492, 1
        %v7514 = vlaneseq
        %v7515 = vshrl.u32 %v7514, 7
        %7517 = vset.pattern.permute.xlu0 %v7515
        %7518 = vperm.xlu0 %7517, %v7513
        %v7519 = vpop.permute.xlu0 %7518
        %v7520 = vlaneseq
        %v7521 = vshrl.u32 %v7520, 7
        %v7522 = vadd.s32 %v7521, 8
        %7523 = vset.pattern.permute.xlu0 %v7522
        %7524 = vperm.xlu0 %7523, %v7513
        %v7525 = vpop.permute.xlu0 %7524
        %v7526 = vperm.slane %v7492, 2
        %v7527 = vlaneseq
        %v7528 = vshrl.u32 %v7527, 7
        %7530 = vset.pattern.permute.xlu0 %v7528
        %7531 = vperm.xlu0 %7530, %v7526
        %v7532 = vpop.permute.xlu0 %7531
        %v7533 = vlaneseq
        %v7534 = vshrl.u32 %v7533, 7
        %v7535 = vadd.s32 %v7534, 8
        %7536 = vset.pattern.permute.xlu0 %v7535
        %7537 = vperm.xlu0 %7536, %v7526
        %v7538 = vpop.permute.xlu0 %7537
        %v7539 = vperm.slane %v7492, 3
        %v7540 = vlaneseq
        %v7541 = vshrl.u32 %v7540, 7
        %7543 = vset.pattern.permute.xlu0 %v7541
        %7544 = vperm.xlu0 %7543, %v7539
        %v7545 = vpop.permute.xlu0 %7544
        %v7546 = vlaneseq
        %v7547 = vshrl.u32 %v7546, 7
        %v7548 = vadd.s32 %v7547, 8
        %7549 = vset.pattern.permute.xlu0 %v7548
        %7550 = vperm.xlu0 %7549, %v7539
        %v7551 = vpop.permute.xlu0 %7550
        %v7552 = vperm.slane %v7492, 4
        %v7553 = vlaneseq
        %v7554 = vshrl.u32 %v7553, 7
        %7556 = vset.pattern.permute.xlu0 %v7554
        %7557 = vperm.xlu0 %7556, %v7552
        %v7558 = vpop.permute.xlu0 %7557
        %v7559 = vlaneseq
        %v7560 = vshrl.u32 %v7559, 7
        %v7561 = vadd.s32 %v7560, 8
        %7562 = vset.pattern.permute.xlu0 %v7561
        %7563 = vperm.xlu0 %7562, %v7552
        %v7564 = vpop.permute.xlu0 %7563
        %v7565 = vperm.slane %v7492, 5
        %v7566 = vlaneseq
        %v7567 = vshrl.u32 %v7566, 7
        %7569 = vset.pattern.permute.xlu0 %v7567
        %7570 = vperm.xlu0 %7569, %v7565
        %v7571 = vpop.permute.xlu0 %7570
        %v7572 = vlaneseq
        %v7573 = vshrl.u32 %v7572, 7
        %v7574 = vadd.s32 %v7573, 8
        %7575 = vset.pattern.permute.xlu0 %v7574
        %7576 = vperm.xlu0 %7575, %v7565
        %v7577 = vpop.permute.xlu0 %7576
        %v7578 = vperm.slane %v7492, 6
        %v7579 = vlaneseq
        %v7580 = vshrl.u32 %v7579, 7
        %7582 = vset.pattern.permute.xlu0 %v7580
        %7583 = vperm.xlu0 %7582, %v7578
        %v7584 = vpop.permute.xlu0 %7583
        %v7585 = vlaneseq
        %v7586 = vshrl.u32 %v7585, 7
        %v7587 = vadd.s32 %v7586, 8
        %7588 = vset.pattern.permute.xlu0 %v7587
        %7589 = vperm.xlu0 %7588, %v7578
        %v7590 = vpop.permute.xlu0 %7589
        %v7591 = vperm.slane %v7492, 7
        %v7592 = vlaneseq
        %v7593 = vshrl.u32 %v7592, 7
        %7595 = vset.pattern.permute.xlu0 %v7593
        %7596 = vperm.xlu0 %7595, %v7591
        %v7597 = vpop.permute.xlu0 %7596
        %v7598 = vlaneseq
        %v7599 = vshrl.u32 %v7598, 7
        %v7600 = vadd.s32 %v7599, 8
        %7601 = vset.pattern.permute.xlu0 %v7600
        %7602 = vperm.xlu0 %7601, %v7591
        %v7603 = vpop.permute.xlu0 %7602
        %v7604 = vperm.slane %v7493, 0
        %v7605 = vlaneseq
        %v7606 = vshrl.u32 %v7605, 7
        %7608 = vset.pattern.permute.xlu0 %v7606
        %7609 = vperm.xlu0 %7608, %v7604
        %v7610 = vpop.permute.xlu0 %7609
        %v7611 = vlaneseq
        %v7612 = vshrl.u32 %v7611, 7
        %v7613 = vadd.s32 %v7612, 8
        %7614 = vset.pattern.permute.xlu0 %v7613
        %7615 = vperm.xlu0 %7614, %v7604
        %v7616 = vpop.permute.xlu0 %7615
        %v7617 = vperm.slane %v7493, 1
        %v7618 = vlaneseq
        %v7619 = vshrl.u32 %v7618, 7
        %7621 = vset.pattern.permute.xlu0 %v7619
        %7622 = vperm.xlu0 %7621, %v7617
        %v7623 = vpop.permute.xlu0 %7622
        %v7624 = vlaneseq
        %v7625 = vshrl.u32 %v7624, 7
        %v7626 = vadd.s32 %v7625, 8
        %7627 = vset.pattern.permute.xlu0 %v7626
        %7628 = vperm.xlu0 %7627, %v7617
        %v7629 = vpop.permute.xlu0 %7628
        %v7630 = vperm.slane %v7493, 2
        %v7631 = vlaneseq
        %v7632 = vshrl.u32 %v7631, 7
        %7634 = vset.pattern.permute.xlu0 %v7632
        %7635 = vperm.xlu0 %7634, %v7630
        %v7636 = vpop.permute.xlu0 %7635
        %v7637 = vlaneseq
        %v7638 = vshrl.u32 %v7637, 7
        %v7639 = vadd.s32 %v7638, 8
        %7640 = vset.pattern.permute.xlu0 %v7639
        %7641 = vperm.xlu0 %7640, %v7630
        %v7642 = vpop.permute.xlu0 %7641
        %v7643 = vperm.slane %v7493, 3
        %v7644 = vlaneseq
        %v7645 = vshrl.u32 %v7644, 7
        %7647 = vset.pattern.permute.xlu0 %v7645
        %7648 = vperm.xlu0 %7647, %v7643
        %v7649 = vpop.permute.xlu0 %7648
        %v7650 = vlaneseq
        %v7651 = vshrl.u32 %v7650, 7
        %v7652 = vadd.s32 %v7651, 8
        %7653 = vset.pattern.permute.xlu0 %v7652
        %7654 = vperm.xlu0 %7653, %v7643
        %v7655 = vpop.permute.xlu0 %7654
        %v7656 = vperm.slane %v7493, 4
        %v7657 = vlaneseq
        %v7658 = vshrl.u32 %v7657, 7
        %7660 = vset.pattern.permute.xlu0 %v7658
        %7661 = vperm.xlu0 %7660, %v7656
        %v7662 = vpop.permute.xlu0 %7661
        %v7663 = vlaneseq
        %v7664 = vshrl.u32 %v7663, 7
        %v7665 = vadd.s32 %v7664, 8
        %7666 = vset.pattern.permute.xlu0 %v7665
        %7667 = vperm.xlu0 %7666, %v7656
        %v7668 = vpop.permute.xlu0 %7667
        %v7669 = vperm.slane %v7493, 5
        %v7670 = vlaneseq
        %v7671 = vshrl.u32 %v7670, 7
        %7673 = vset.pattern.permute.xlu0 %v7671
        %7674 = vperm.xlu0 %7673, %v7669
        %v7675 = vpop.permute.xlu0 %7674
        %v7676 = vlaneseq
        %v7677 = vshrl.u32 %v7676, 7
        %v7678 = vadd.s32 %v7677, 8
        %7679 = vset.pattern.permute.xlu0 %v7678
        %7680 = vperm.xlu0 %7679, %v7669
        %v7681 = vpop.permute.xlu0 %7680
        %v7682 = vperm.slane %v7493, 6
        %v7683 = vlaneseq
        %v7684 = vshrl.u32 %v7683, 7
        %7686 = vset.pattern.permute.xlu0 %v7684
        %7687 = vperm.xlu0 %7686, %v7682
        %v7688 = vpop.permute.xlu0 %7687
        %v7689 = vlaneseq
        %v7690 = vshrl.u32 %v7689, 7
        %v7691 = vadd.s32 %v7690, 8
        %7692 = vset.pattern.permute.xlu0 %v7691
        %7693 = vperm.xlu0 %7692, %v7682
        %v7694 = vpop.permute.xlu0 %7693
        %v7695 = vperm.slane %v7493, 7
        %v7696 = vlaneseq
        %v7697 = vshrl.u32 %v7696, 7
        %7699 = vset.pattern.permute.xlu0 %v7697
        %7700 = vperm.xlu0 %7699, %v7695
        %v7701 = vpop.permute.xlu0 %7700
        %v7702 = vlaneseq
        %v7703 = vshrl.u32 %v7702, 7
        %v7704 = vadd.s32 %v7703, 8
        %7705 = vset.pattern.permute.xlu0 %v7704
        %7706 = vperm.xlu0 %7705, %v7695
        %v7707 = vpop.permute.xlu0 %7706
        %v7708 = vperm.slane %v7494, 0
        %v7709 = vlaneseq
        %v7710 = vshrl.u32 %v7709, 7
        %7712 = vset.pattern.permute.xlu0 %v7710
        %7713 = vperm.xlu0 %7712, %v7708
        %v7714 = vpop.permute.xlu0 %7713
        %v7715 = vlaneseq
        %v7716 = vshrl.u32 %v7715, 7
        %v7717 = vadd.s32 %v7716, 8
        %7718 = vset.pattern.permute.xlu0 %v7717
        %7719 = vperm.xlu0 %7718, %v7708
        %v7720 = vpop.permute.xlu0 %7719
        %v7721 = vperm.slane %v7494, 1
        %v7722 = vlaneseq
        %v7723 = vshrl.u32 %v7722, 7
        %7725 = vset.pattern.permute.xlu0 %v7723
        %7726 = vperm.xlu0 %7725, %v7721
        %v7727 = vpop.permute.xlu0 %7726
        %v7728 = vlaneseq
        %v7729 = vshrl.u32 %v7728, 7
        %v7730 = vadd.s32 %v7729, 8
        %7731 = vset.pattern.permute.xlu0 %v7730
        %7732 = vperm.xlu0 %7731, %v7721
        %v7733 = vpop.permute.xlu0 %7732
        %v7734 = vperm.slane %v7494, 2
        %v7735 = vlaneseq
        %v7736 = vshrl.u32 %v7735, 7
        %7738 = vset.pattern.permute.xlu0 %v7736
        %7739 = vperm.xlu0 %7738, %v7734
        %v7740 = vpop.permute.xlu0 %7739
        %v7741 = vlaneseq
        %v7742 = vshrl.u32 %v7741, 7
        %v7743 = vadd.s32 %v7742, 8
        %7744 = vset.pattern.permute.xlu0 %v7743
        %7745 = vperm.xlu0 %7744, %v7734
        %v7746 = vpop.permute.xlu0 %7745
        %v7747 = vperm.slane %v7494, 3
        %v7748 = vlaneseq
        %v7749 = vshrl.u32 %v7748, 7
        %7751 = vset.pattern.permute.xlu0 %v7749
        %7752 = vperm.xlu0 %7751, %v7747
        %v7753 = vpop.permute.xlu0 %7752
        %v7754 = vlaneseq
        %v7755 = vshrl.u32 %v7754, 7
        %v7756 = vadd.s32 %v7755, 8
        %7757 = vset.pattern.permute.xlu0 %v7756
        %7758 = vperm.xlu0 %7757, %v7747
        %v7759 = vpop.permute.xlu0 %7758
        %v7760 = vperm.slane %v7494, 4
        %v7761 = vlaneseq
        %v7762 = vshrl.u32 %v7761, 7
        %7764 = vset.pattern.permute.xlu0 %v7762
        %7765 = vperm.xlu0 %7764, %v7760
        %v7766 = vpop.permute.xlu0 %7765
        %v7767 = vlaneseq
        %v7768 = vshrl.u32 %v7767, 7
        %v7769 = vadd.s32 %v7768, 8
        %7770 = vset.pattern.permute.xlu0 %v7769
        %7771 = vperm.xlu0 %7770, %v7760
        %v7772 = vpop.permute.xlu0 %7771
        %v7773 = vperm.slane %v7494, 5
        %v7774 = vlaneseq
        %v7775 = vshrl.u32 %v7774, 7
        %7777 = vset.pattern.permute.xlu0 %v7775
        %7778 = vperm.xlu0 %7777, %v7773
        %v7779 = vpop.permute.xlu0 %7778
        %v7780 = vlaneseq
        %v7781 = vshrl.u32 %v7780, 7
        %v7782 = vadd.s32 %v7781, 8
        %7783 = vset.pattern.permute.xlu0 %v7782
        %7784 = vperm.xlu0 %7783, %v7773
        %v7785 = vpop.permute.xlu0 %7784
        %v7786 = vperm.slane %v7494, 6
        %v7787 = vlaneseq
        %v7788 = vshrl.u32 %v7787, 7
        %7790 = vset.pattern.permute.xlu0 %v7788
        %7791 = vperm.xlu0 %7790, %v7786
        %v7792 = vpop.permute.xlu0 %7791
        %v7793 = vlaneseq
        %v7794 = vshrl.u32 %v7793, 7
        %v7795 = vadd.s32 %v7794, 8
        %7796 = vset.pattern.permute.xlu0 %v7795
        %7797 = vperm.xlu0 %7796, %v7786
        %v7798 = vpop.permute.xlu0 %7797
        %v7799 = vperm.slane %v7494, 7
        %v7800 = vlaneseq
        %v7801 = vshrl.u32 %v7800, 7
        %7803 = vset.pattern.permute.xlu0 %v7801
        %7804 = vperm.xlu0 %7803, %v7799
        %v7805 = vpop.permute.xlu0 %7804
        %v7806 = vlaneseq
        %v7807 = vshrl.u32 %v7806, 7
        %v7808 = vadd.s32 %v7807, 8
        %7809 = vset.pattern.permute.xlu0 %v7808
        %7810 = vperm.xlu0 %7809, %v7799
        %v7811 = vpop.permute.xlu0 %7810
        %v7812 = vperm.slane %v7495, 0
        %v7813 = vlaneseq
        %v7814 = vshrl.u32 %v7813, 7
        %7816 = vset.pattern.permute.xlu0 %v7814
        %7817 = vperm.xlu0 %7816, %v7812
        %v7818 = vpop.permute.xlu0 %7817
        %v7819 = vlaneseq
        %v7820 = vshrl.u32 %v7819, 7
        %v7821 = vadd.s32 %v7820, 8
        %7822 = vset.pattern.permute.xlu0 %v7821
        %7823 = vperm.xlu0 %7822, %v7812
        %v7824 = vpop.permute.xlu0 %7823
        %v7825 = vperm.slane %v7495, 1
        %v7826 = vlaneseq
        %v7827 = vshrl.u32 %v7826, 7
        %7829 = vset.pattern.permute.xlu0 %v7827
        %7830 = vperm.xlu0 %7829, %v7825
        %v7831 = vpop.permute.xlu0 %7830
        %v7832 = vlaneseq
        %v7833 = vshrl.u32 %v7832, 7
        %v7834 = vadd.s32 %v7833, 8
        %7835 = vset.pattern.permute.xlu0 %v7834
        %7836 = vperm.xlu0 %7835, %v7825
        %v7837 = vpop.permute.xlu0 %7836
        %v7838 = vperm.slane %v7495, 2
        %v7839 = vlaneseq
        %v7840 = vshrl.u32 %v7839, 7
        %7842 = vset.pattern.permute.xlu0 %v7840
        %7843 = vperm.xlu0 %7842, %v7838
        %v7844 = vpop.permute.xlu0 %7843
        %v7845 = vlaneseq
        %v7846 = vshrl.u32 %v7845, 7
        %v7847 = vadd.s32 %v7846, 8
        %7848 = vset.pattern.permute.xlu0 %v7847
        %7849 = vperm.xlu0 %7848, %v7838
        %v7850 = vpop.permute.xlu0 %7849
        %v7851 = vperm.slane %v7495, 3
        %v7852 = vlaneseq
        %v7853 = vshrl.u32 %v7852, 7
        %7855 = vset.pattern.permute.xlu0 %v7853
        %7856 = vperm.xlu0 %7855, %v7851
        %v7857 = vpop.permute.xlu0 %7856
        %v7858 = vlaneseq
        %v7859 = vshrl.u32 %v7858, 7
        %v7860 = vadd.s32 %v7859, 8
        %7861 = vset.pattern.permute.xlu0 %v7860
        %7862 = vperm.xlu0 %7861, %v7851
        %v7863 = vpop.permute.xlu0 %7862
        %v7864 = vperm.slane %v7495, 4
        %v7865 = vlaneseq
        %v7866 = vshrl.u32 %v7865, 7
        %7868 = vset.pattern.permute.xlu0 %v7866
        %7869 = vperm.xlu0 %7868, %v7864
        %v7870 = vpop.permute.xlu0 %7869
        %v7871 = vlaneseq
        %v7872 = vshrl.u32 %v7871, 7
        %v7873 = vadd.s32 %v7872, 8
        %7874 = vset.pattern.permute.xlu0 %v7873
        %7875 = vperm.xlu0 %7874, %v7864
        %v7876 = vpop.permute.xlu0 %7875
        %v7877 = vperm.slane %v7495, 5
        %v7878 = vlaneseq
        %v7879 = vshrl.u32 %v7878, 7
        %7881 = vset.pattern.permute.xlu0 %v7879
        %7882 = vperm.xlu0 %7881, %v7877
        %v7883 = vpop.permute.xlu0 %7882
        %v7884 = vlaneseq
        %v7885 = vshrl.u32 %v7884, 7
        %v7886 = vadd.s32 %v7885, 8
        %7887 = vset.pattern.permute.xlu0 %v7886
        %7888 = vperm.xlu0 %7887, %v7877
        %v7889 = vpop.permute.xlu0 %7888
        %v7890 = vperm.slane %v7495, 6
        %v7891 = vlaneseq
        %v7892 = vshrl.u32 %v7891, 7
        %7894 = vset.pattern.permute.xlu0 %v7892
        %7895 = vperm.xlu0 %7894, %v7890
        %v7896 = vpop.permute.xlu0 %7895
        %v7897 = vlaneseq
        %v7898 = vshrl.u32 %v7897, 7
        %v7899 = vadd.s32 %v7898, 8
        %7900 = vset.pattern.permute.xlu0 %v7899
        %7901 = vperm.xlu0 %7900, %v7890
        %v7902 = vpop.permute.xlu0 %7901
        %v7903 = vperm.slane %v7495, 7
        %v7904 = vlaneseq
        %v7905 = vshrl.u32 %v7904, 7
        %7907 = vset.pattern.permute.xlu0 %v7905
        %7908 = vperm.xlu0 %7907, %v7903
        %v7909 = vpop.permute.xlu0 %7908
        %v7910 = vlaneseq
        %v7911 = vshrl.u32 %v7910, 7
        %v7912 = vadd.s32 %v7911, 8
        %7913 = vset.pattern.permute.xlu0 %v7912
        %7914 = vperm.xlu0 %7913, %v7903
        %v7915 = vpop.permute.xlu0 %7914
        %v7916 = vperm.slane %v7496, 0
        %v7917 = vlaneseq
        %v7918 = vshrl.u32 %v7917, 7
        %7920 = vset.pattern.permute.xlu0 %v7918
        %7921 = vperm.xlu0 %7920, %v7916
        %v7922 = vpop.permute.xlu0 %7921
        %v7923 = vlaneseq
        %v7924 = vshrl.u32 %v7923, 7
        %v7925 = vadd.s32 %v7924, 8
        %7926 = vset.pattern.permute.xlu0 %v7925
        %7927 = vperm.xlu0 %7926, %v7916
        %v7928 = vpop.permute.xlu0 %7927
        %v7929 = vperm.slane %v7496, 1
        %v7930 = vlaneseq
        %v7931 = vshrl.u32 %v7930, 7
        %7933 = vset.pattern.permute.xlu0 %v7931
        %7934 = vperm.xlu0 %7933, %v7929
        %v7935 = vpop.permute.xlu0 %7934
        %v7936 = vlaneseq
        %v7937 = vshrl.u32 %v7936, 7
        %v7938 = vadd.s32 %v7937, 8
        %7939 = vset.pattern.permute.xlu0 %v7938
        %7940 = vperm.xlu0 %7939, %v7929
        %v7941 = vpop.permute.xlu0 %7940
        %v7942 = vperm.slane %v7496, 2
        %v7943 = vlaneseq
        %v7944 = vshrl.u32 %v7943, 7
        %7946 = vset.pattern.permute.xlu0 %v7944
        %7947 = vperm.xlu0 %7946, %v7942
        %v7948 = vpop.permute.xlu0 %7947
        %v7949 = vlaneseq
        %v7950 = vshrl.u32 %v7949, 7
        %v7951 = vadd.s32 %v7950, 8
        %7952 = vset.pattern.permute.xlu0 %v7951
        %7953 = vperm.xlu0 %7952, %v7942
        %v7954 = vpop.permute.xlu0 %7953
        %v7955 = vperm.slane %v7496, 3
        %v7956 = vlaneseq
        %v7957 = vshrl.u32 %v7956, 7
        %7959 = vset.pattern.permute.xlu0 %v7957
        %7960 = vperm.xlu0 %7959, %v7955
        %v7961 = vpop.permute.xlu0 %7960
        %v7962 = vlaneseq
        %v7963 = vshrl.u32 %v7962, 7
        %v7964 = vadd.s32 %v7963, 8
        %7965 = vset.pattern.permute.xlu0 %v7964
        %7966 = vperm.xlu0 %7965, %v7955
        %v7967 = vpop.permute.xlu0 %7966
        %v7968 = vperm.slane %v7496, 4
        %v7969 = vlaneseq
        %v7970 = vshrl.u32 %v7969, 7
        %7972 = vset.pattern.permute.xlu0 %v7970
        %7973 = vperm.xlu0 %7972, %v7968
        %v7974 = vpop.permute.xlu0 %7973
        %v7975 = vlaneseq
        %v7976 = vshrl.u32 %v7975, 7
        %v7977 = vadd.s32 %v7976, 8
        %7978 = vset.pattern.permute.xlu0 %v7977
        %7979 = vperm.xlu0 %7978, %v7968
        %v7980 = vpop.permute.xlu0 %7979
        %v7981 = vperm.slane %v7496, 5
        %v7982 = vlaneseq
        %v7983 = vshrl.u32 %v7982, 7
        %7985 = vset.pattern.permute.xlu0 %v7983
        %7986 = vperm.xlu0 %7985, %v7981
        %v7987 = vpop.permute.xlu0 %7986
        %v7988 = vlaneseq
        %v7989 = vshrl.u32 %v7988, 7
        %v7990 = vadd.s32 %v7989, 8
        %7991 = vset.pattern.permute.xlu0 %v7990
        %7992 = vperm.xlu0 %7991, %v7981
        %v7993 = vpop.permute.xlu0 %7992
        %v7994 = vperm.slane %v7496, 6
        %v7995 = vlaneseq
        %v7996 = vshrl.u32 %v7995, 7
        %7998 = vset.pattern.permute.xlu0 %v7996
        %7999 = vperm.xlu0 %7998, %v7994
        %v8000 = vpop.permute.xlu0 %7999
        %v8001 = vlaneseq
        %v8002 = vshrl.u32 %v8001, 7
        %v8003 = vadd.s32 %v8002, 8
        %8004 = vset.pattern.permute.xlu0 %v8003
        %8005 = vperm.xlu0 %8004, %v7994
        %v8006 = vpop.permute.xlu0 %8005
        %v8007 = vperm.slane %v7496, 7
        %v8008 = vlaneseq
        %v8009 = vshrl.u32 %v8008, 7
        %8011 = vset.pattern.permute.xlu0 %v8009
        %8012 = vperm.xlu0 %8011, %v8007
        %v8013 = vpop.permute.xlu0 %8012
        %v8014 = vlaneseq
        %v8015 = vshrl.u32 %v8014, 7
        %v8016 = vadd.s32 %v8015, 8
        %8017 = vset.pattern.permute.xlu0 %v8016
        %8018 = vperm.xlu0 %8017, %v8007
        %v8019 = vpop.permute.xlu0 %8018
        %v8020 = vperm.slane %v7497, 0
        %v8021 = vlaneseq
        %v8022 = vshrl.u32 %v8021, 7
        %8024 = vset.pattern.permute.xlu0 %v8022
        %8025 = vperm.xlu0 %8024, %v8020
        %v8026 = vpop.permute.xlu0 %8025
        %v8027 = vlaneseq
        %v8028 = vshrl.u32 %v8027, 7
        %v8029 = vadd.s32 %v8028, 8
        %8030 = vset.pattern.permute.xlu0 %v8029
        %8031 = vperm.xlu0 %8030, %v8020
        %v8032 = vpop.permute.xlu0 %8031
        %v8033 = vperm.slane %v7497, 1
        %v8034 = vlaneseq
        %v8035 = vshrl.u32 %v8034, 7
        %8037 = vset.pattern.permute.xlu0 %v8035
        %8038 = vperm.xlu0 %8037, %v8033
        %v8039 = vpop.permute.xlu0 %8038
        %v8040 = vlaneseq
        %v8041 = vshrl.u32 %v8040, 7
        %v8042 = vadd.s32 %v8041, 8
        %8043 = vset.pattern.permute.xlu0 %v8042
        %8044 = vperm.xlu0 %8043, %v8033
        %v8045 = vpop.permute.xlu0 %8044
        %v8046 = vperm.slane %v7497, 2
        %v8047 = vlaneseq
        %v8048 = vshrl.u32 %v8047, 7
        %8050 = vset.pattern.permute.xlu0 %v8048
        %8051 = vperm.xlu0 %8050, %v8046
        %v8052 = vpop.permute.xlu0 %8051
        %v8053 = vlaneseq
        %v8054 = vshrl.u32 %v8053, 7
        %v8055 = vadd.s32 %v8054, 8
        %8056 = vset.pattern.permute.xlu0 %v8055
        %8057 = vperm.xlu0 %8056, %v8046
        %v8058 = vpop.permute.xlu0 %8057
        %v8059 = vperm.slane %v7497, 3
        %v8060 = vlaneseq
        %v8061 = vshrl.u32 %v8060, 7
        %8063 = vset.pattern.permute.xlu0 %v8061
        %8064 = vperm.xlu0 %8063, %v8059
        %v8065 = vpop.permute.xlu0 %8064
        %v8066 = vlaneseq
        %v8067 = vshrl.u32 %v8066, 7
        %v8068 = vadd.s32 %v8067, 8
        %8069 = vset.pattern.permute.xlu0 %v8068
        %8070 = vperm.xlu0 %8069, %v8059
        %v8071 = vpop.permute.xlu0 %8070
        %v8072 = vperm.slane %v7497, 4
        %v8073 = vlaneseq
        %v8074 = vshrl.u32 %v8073, 7
        %8076 = vset.pattern.permute.xlu0 %v8074
        %8077 = vperm.xlu0 %8076, %v8072
        %v8078 = vpop.permute.xlu0 %8077
        %v8079 = vlaneseq
        %v8080 = vshrl.u32 %v8079, 7
        %v8081 = vadd.s32 %v8080, 8
        %8082 = vset.pattern.permute.xlu0 %v8081
        %8083 = vperm.xlu0 %8082, %v8072
        %v8084 = vpop.permute.xlu0 %8083
        %v8085 = vperm.slane %v7497, 5
        %v8086 = vlaneseq
        %v8087 = vshrl.u32 %v8086, 7
        %8089 = vset.pattern.permute.xlu0 %v8087
        %8090 = vperm.xlu0 %8089, %v8085
        %v8091 = vpop.permute.xlu0 %8090
        %v8092 = vlaneseq
        %v8093 = vshrl.u32 %v8092, 7
        %v8094 = vadd.s32 %v8093, 8
        %8095 = vset.pattern.permute.xlu0 %v8094
        %8096 = vperm.xlu0 %8095, %v8085
        %v8097 = vpop.permute.xlu0 %8096
        %v8098 = vperm.slane %v7497, 6
        %v8099 = vlaneseq
        %v8100 = vshrl.u32 %v8099, 7
        %8102 = vset.pattern.permute.xlu0 %v8100
        %8103 = vperm.xlu0 %8102, %v8098
        %v8104 = vpop.permute.xlu0 %8103
        %v8105 = vlaneseq
        %v8106 = vshrl.u32 %v8105, 7
        %v8107 = vadd.s32 %v8106, 8
        %8108 = vset.pattern.permute.xlu0 %v8107
        %8109 = vperm.xlu0 %8108, %v8098
        %v8110 = vpop.permute.xlu0 %8109
        %v8111 = vperm.slane %v7497, 7
        %v8112 = vlaneseq
        %v8113 = vshrl.u32 %v8112, 7
        %8115 = vset.pattern.permute.xlu0 %v8113
        %8116 = vperm.xlu0 %8115, %v8111
        %v8117 = vpop.permute.xlu0 %8116
        %v8118 = vlaneseq
        %v8119 = vshrl.u32 %v8118, 7
        %v8120 = vadd.s32 %v8119, 8
        %8121 = vset.pattern.permute.xlu0 %v8120
        %8122 = vperm.xlu0 %8121, %v8111
        %v8123 = vpop.permute.xlu0 %8122
        %v8124 = vperm.slane %v7498, 0
        %v8125 = vlaneseq
        %v8126 = vshrl.u32 %v8125, 7
        %8128 = vset.pattern.permute.xlu0 %v8126
        %8129 = vperm.xlu0 %8128, %v8124
        %v8130 = vpop.permute.xlu0 %8129
        %v8131 = vlaneseq
        %v8132 = vshrl.u32 %v8131, 7
        %v8133 = vadd.s32 %v8132, 8
        %8134 = vset.pattern.permute.xlu0 %v8133
        %8135 = vperm.xlu0 %8134, %v8124
        %v8136 = vpop.permute.xlu0 %8135
        %v8137 = vperm.slane %v7498, 1
        %v8138 = vlaneseq
        %v8139 = vshrl.u32 %v8138, 7
        %8141 = vset.pattern.permute.xlu0 %v8139
        %8142 = vperm.xlu0 %8141, %v8137
        %v8143 = vpop.permute.xlu0 %8142
        %v8144 = vlaneseq
        %v8145 = vshrl.u32 %v8144, 7
        %v8146 = vadd.s32 %v8145, 8
        %8147 = vset.pattern.permute.xlu0 %v8146
        %8148 = vperm.xlu0 %8147, %v8137
        %v8149 = vpop.permute.xlu0 %8148
        %v8150 = vperm.slane %v7498, 2
        %v8151 = vlaneseq
        %v8152 = vshrl.u32 %v8151, 7
        %8154 = vset.pattern.permute.xlu0 %v8152
        %8155 = vperm.xlu0 %8154, %v8150
        %v8156 = vpop.permute.xlu0 %8155
        %v8157 = vlaneseq
        %v8158 = vshrl.u32 %v8157, 7
        %v8159 = vadd.s32 %v8158, 8
        %8160 = vset.pattern.permute.xlu0 %v8159
        %8161 = vperm.xlu0 %8160, %v8150
        %v8162 = vpop.permute.xlu0 %8161
        %v8163 = vperm.slane %v7498, 3
        %v8164 = vlaneseq
        %v8165 = vshrl.u32 %v8164, 7
        %8167 = vset.pattern.permute.xlu0 %v8165
        %8168 = vperm.xlu0 %8167, %v8163
        %v8169 = vpop.permute.xlu0 %8168
        %v8170 = vlaneseq
        %v8171 = vshrl.u32 %v8170, 7
        %v8172 = vadd.s32 %v8171, 8
        %8173 = vset.pattern.permute.xlu0 %v8172
        %8174 = vperm.xlu0 %8173, %v8163
        %v8175 = vpop.permute.xlu0 %8174
        %v8176 = vperm.slane %v7498, 4
        %v8177 = vlaneseq
        %v8178 = vshrl.u32 %v8177, 7
        %8180 = vset.pattern.permute.xlu0 %v8178
        %8181 = vperm.xlu0 %8180, %v8176
        %v8182 = vpop.permute.xlu0 %8181
        %v8183 = vlaneseq
        %v8184 = vshrl.u32 %v8183, 7
        %v8185 = vadd.s32 %v8184, 8
        %8186 = vset.pattern.permute.xlu0 %v8185
        %8187 = vperm.xlu0 %8186, %v8176
        %v8188 = vpop.permute.xlu0 %8187
        %v8189 = vperm.slane %v7498, 5
        %v8190 = vlaneseq
        %v8191 = vshrl.u32 %v8190, 7
        %8193 = vset.pattern.permute.xlu0 %v8191
        %8194 = vperm.xlu0 %8193, %v8189
        %v8195 = vpop.permute.xlu0 %8194
        %v8196 = vlaneseq
        %v8197 = vshrl.u32 %v8196, 7
        %v8198 = vadd.s32 %v8197, 8
        %8199 = vset.pattern.permute.xlu0 %v8198
        %8200 = vperm.xlu0 %8199, %v8189
        %v8201 = vpop.permute.xlu0 %8200
        %v8202 = vperm.slane %v7498, 6
        %v8203 = vlaneseq
        %v8204 = vshrl.u32 %v8203, 7
        %8206 = vset.pattern.permute.xlu0 %v8204
        %8207 = vperm.xlu0 %8206, %v8202
        %v8208 = vpop.permute.xlu0 %8207
        %v8209 = vlaneseq
        %v8210 = vshrl.u32 %v8209, 7
        %v8211 = vadd.s32 %v8210, 8
        %8212 = vset.pattern.permute.xlu0 %v8211
        %8213 = vperm.xlu0 %8212, %v8202
        %v8214 = vpop.permute.xlu0 %8213
        %v8215 = vperm.slane %v7498, 7
        %v8216 = vlaneseq
        %v8217 = vshrl.u32 %v8216, 7
        %8219 = vset.pattern.permute.xlu0 %v8217
        %8220 = vperm.xlu0 %8219, %v8215
        %v8221 = vpop.permute.xlu0 %8220
        %v8222 = vlaneseq
        %v8223 = vshrl.u32 %v8222, 7
        %v8224 = vadd.s32 %v8223, 8
        %8225 = vset.pattern.permute.xlu0 %v8224
        %8226 = vperm.xlu0 %8225, %v8215
        %v8227 = vpop.permute.xlu0 %8226
        %v8228 = vperm.slane %v7499, 0
        %v8229 = vlaneseq
        %v8230 = vshrl.u32 %v8229, 7
        %8232 = vset.pattern.permute.xlu0 %v8230
        %8233 = vperm.xlu0 %8232, %v8228
        %v8234 = vpop.permute.xlu0 %8233
        %v8235 = vlaneseq
        %v8236 = vshrl.u32 %v8235, 7
        %v8237 = vadd.s32 %v8236, 8
        %8238 = vset.pattern.permute.xlu0 %v8237
        %8239 = vperm.xlu0 %8238, %v8228
        %v8240 = vpop.permute.xlu0 %8239
        %v8241 = vperm.slane %v7499, 1
        %v8242 = vlaneseq
        %v8243 = vshrl.u32 %v8242, 7
        %8245 = vset.pattern.permute.xlu0 %v8243
        %8246 = vperm.xlu0 %8245, %v8241
        %v8247 = vpop.permute.xlu0 %8246
        %v8248 = vlaneseq
        %v8249 = vshrl.u32 %v8248, 7
        %v8250 = vadd.s32 %v8249, 8
        %8251 = vset.pattern.permute.xlu0 %v8250
        %8252 = vperm.xlu0 %8251, %v8241
        %v8253 = vpop.permute.xlu0 %8252
        %v8254 = vperm.slane %v7499, 2
        %v8255 = vlaneseq
        %v8256 = vshrl.u32 %v8255, 7
        %8258 = vset.pattern.permute.xlu0 %v8256
        %8259 = vperm.xlu0 %8258, %v8254
        %v8260 = vpop.permute.xlu0 %8259
        %v8261 = vlaneseq
        %v8262 = vshrl.u32 %v8261, 7
        %v8263 = vadd.s32 %v8262, 8
        %8264 = vset.pattern.permute.xlu0 %v8263
        %8265 = vperm.xlu0 %8264, %v8254
        %v8266 = vpop.permute.xlu0 %8265
        %v8267 = vperm.slane %v7499, 3
        %v8268 = vlaneseq
        %v8269 = vshrl.u32 %v8268, 7
        %8271 = vset.pattern.permute.xlu0 %v8269
        %8272 = vperm.xlu0 %8271, %v8267
        %v8273 = vpop.permute.xlu0 %8272
        %v8274 = vlaneseq
        %v8275 = vshrl.u32 %v8274, 7
        %v8276 = vadd.s32 %v8275, 8
        %8277 = vset.pattern.permute.xlu0 %v8276
        %8278 = vperm.xlu0 %8277, %v8267
        %v8279 = vpop.permute.xlu0 %8278
        %v8280 = vperm.slane %v7499, 4
        %v8281 = vlaneseq
        %v8282 = vshrl.u32 %v8281, 7
        %8284 = vset.pattern.permute.xlu0 %v8282
        %8285 = vperm.xlu0 %8284, %v8280
        %v8286 = vpop.permute.xlu0 %8285
        %v8287 = vlaneseq
        %v8288 = vshrl.u32 %v8287, 7
        %v8289 = vadd.s32 %v8288, 8
        %8290 = vset.pattern.permute.xlu0 %v8289
        %8291 = vperm.xlu0 %8290, %v8280
        %v8292 = vpop.permute.xlu0 %8291
        %v8293 = vperm.slane %v7499, 5
        %v8294 = vlaneseq
        %v8295 = vshrl.u32 %v8294, 7
        %8297 = vset.pattern.permute.xlu0 %v8295
        %8298 = vperm.xlu0 %8297, %v8293
        %v8299 = vpop.permute.xlu0 %8298
        %v8300 = vlaneseq
        %v8301 = vshrl.u32 %v8300, 7
        %v8302 = vadd.s32 %v8301, 8
        %8303 = vset.pattern.permute.xlu0 %v8302
        %8304 = vperm.xlu0 %8303, %v8293
        %v8305 = vpop.permute.xlu0 %8304
        %v8306 = vperm.slane %v7499, 6
        %v8307 = vlaneseq
        %v8308 = vshrl.u32 %v8307, 7
        %8310 = vset.pattern.permute.xlu0 %v8308
        %8311 = vperm.xlu0 %8310, %v8306
        %v8312 = vpop.permute.xlu0 %8311
        %v8313 = vlaneseq
        %v8314 = vshrl.u32 %v8313, 7
        %v8315 = vadd.s32 %v8314, 8
        %8316 = vset.pattern.permute.xlu0 %v8315
        %8317 = vperm.xlu0 %8316, %v8306
        %v8318 = vpop.permute.xlu0 %8317
        %v8319 = vperm.slane %v7499, 7
        %v8320 = vlaneseq
        %v8321 = vshrl.u32 %v8320, 7
        %8323 = vset.pattern.permute.xlu0 %v8321
        %8324 = vperm.xlu0 %8323, %v8319
        %v8325 = vpop.permute.xlu0 %8324
        %v8326 = vlaneseq
        %v8327 = vshrl.u32 %v8326, 7
        %v8328 = vadd.s32 %v8327, 8
        %8329 = vset.pattern.permute.xlu0 %v8328
        %8330 = vperm.xlu0 %8329, %v8319
        %v8331 = vpop.permute.xlu0 %8330
        %v8332 = vsel %vm2941, %v7506, %v7922
        %v8333 = vsel %vm2941, %v7512, %v7928
        %v8334 = vsel %vm2941, %v7519, %v7935
        %v8335 = vsel %vm2941, %v7525, %v7941
        %v8336 = vsel %vm2941, %v7532, %v7948
        %v8337 = vsel %vm2941, %v7538, %v7954
        %v8338 = vsel %vm2941, %v7545, %v7961
        %v8339 = vsel %vm2941, %v7551, %v7967
        %v8340 = vsel %vm2941, %v7558, %v7974
        %v8341 = vsel %vm2941, %v7564, %v7980
        %v8342 = vsel %vm2941, %v7571, %v7987
        %v8343 = vsel %vm2941, %v7577, %v7993
        %v8344 = vsel %vm2941, %v7584, %v8000
        %v8345 = vsel %vm2941, %v7590, %v8006
        %v8346 = vsel %vm2941, %v7597, %v8013
        %v8347 = vsel %vm2941, %v7603, %v8019
        %v8348 = vsel %vm2941, %v7610, %v8026
        %v8349 = vsel %vm2941, %v7616, %v8032
        %v8350 = vsel %vm2941, %v7623, %v8039
        %v8351 = vsel %vm2941, %v7629, %v8045
        %v8352 = vsel %vm2941, %v7636, %v8052
        %v8353 = vsel %vm2941, %v7642, %v8058
        %v8354 = vsel %vm2941, %v7649, %v8065
        %v8355 = vsel %vm2941, %v7655, %v8071
        %v8356 = vsel %vm2941, %v7662, %v8078
        %v8357 = vsel %vm2941, %v7668, %v8084
        %v8358 = vsel %vm2941, %v7675, %v8091
        %v8359 = vsel %vm2941, %v7681, %v8097
        %v8360 = vsel %vm2941, %v7688, %v8104
        %v8361 = vsel %vm2941, %v7694, %v8110
        %v8362 = vsel %vm2941, %v7701, %v8117
        %v8363 = vsel %vm2941, %v7707, %v8123
        %v8364 = vsel %vm2941, %v7714, %v8130
        %v8365 = vsel %vm2941, %v7720, %v8136
        %v8366 = vsel %vm2941, %v7727, %v8143
        %v8367 = vsel %vm2941, %v7733, %v8149
        %v8368 = vsel %vm2941, %v7740, %v8156
        %v8369 = vsel %vm2941, %v7746, %v8162
        %v8370 = vsel %vm2941, %v7753, %v8169
        %v8371 = vsel %vm2941, %v7759, %v8175
        %v8372 = vsel %vm2941, %v7766, %v8182
        %v8373 = vsel %vm2941, %v7772, %v8188
        %v8374 = vsel %vm2941, %v7779, %v8195
        %v8375 = vsel %vm2941, %v7785, %v8201
        %v8376 = vsel %vm2941, %v7792, %v8208
        %v8377 = vsel %vm2941, %v7798, %v8214
        %v8378 = vsel %vm2941, %v7805, %v8221
        %v8379 = vsel %vm2941, %v7811, %v8227
        %v8380 = vsel %vm2941, %v7818, %v8234
        %v8381 = vsel %vm2941, %v7824, %v8240
        %v8382 = vsel %vm2941, %v7831, %v8247
        %v8383 = vsel %vm2941, %v7837, %v8253
        %v8384 = vsel %vm2941, %v7844, %v8260
        %v8385 = vsel %vm2941, %v7850, %v8266
        %v8386 = vsel %vm2941, %v7857, %v8273
        %v8387 = vsel %vm2941, %v7863, %v8279
        %v8388 = vsel %vm2941, %v7870, %v8286
        %v8389 = vsel %vm2941, %v7876, %v8292
        %v8390 = vsel %vm2941, %v7883, %v8299
        %v8391 = vsel %vm2941, %v7889, %v8305
        %v8392 = vsel %vm2941, %v7896, %v8312
        %v8393 = vsel %vm2941, %v7902, %v8318
        %v8394 = vsel %vm2941, %v7909, %v8325
        %v8395 = vsel %vm2941, %v7915, %v8331
        %v8396 = vrot.slane %v8336, 4
        %v8397 = vsel %vm860, %v8396, %v8332
        %v8398 = vrot.slane %v8332, 4
        %v8399 = vsel %vm860, %v8336, %v8398
        %v8401 = vunpack.c.l.s4 1983009808
        %v8402 = vunpack.c.0.s8 %v8401
        %v8403 = vperm.slane %v8397, %v8402
        %v8405 = vunpack.c.l.s4 1983009808
        %v8406 = vunpack.c.0.s8 %v8405
        %v8407 = vperm.slane %v8399, %v8406
        %v8408 = vrot.slane %v8338, 4
        %v8409 = vsel %vm860, %v8408, %v8334
        %v8410 = vrot.slane %v8334, 4
        %v8411 = vsel %vm860, %v8338, %v8410
        %v8413 = vunpack.c.l.s4 1983009808
        %v8414 = vunpack.c.0.s8 %v8413
        %v8415 = vperm.slane %v8409, %v8414
        %v8417 = vunpack.c.l.s4 1983009808
        %v8418 = vunpack.c.0.s8 %v8417
        %v8419 = vperm.slane %v8411, %v8418
        %v8420 = vrot.slane %v8344, 4
        %v8421 = vsel %vm860, %v8420, %v8340
        %v8422 = vrot.slane %v8340, 4
        %v8423 = vsel %vm860, %v8344, %v8422
        %v8425 = vunpack.c.l.s4 1983009808
        %v8426 = vunpack.c.0.s8 %v8425
        %v8427 = vperm.slane %v8421, %v8426
        %v8429 = vunpack.c.l.s4 1983009808
        %v8430 = vunpack.c.0.s8 %v8429
        %v8431 = vperm.slane %v8423, %v8430
        %v8432 = vrot.slane %v8346, 4
        %v8433 = vsel %vm860, %v8432, %v8342
        %v8434 = vrot.slane %v8342, 4
        %v8435 = vsel %vm860, %v8346, %v8434
        %v8437 = vunpack.c.l.s4 1983009808
        %v8438 = vunpack.c.0.s8 %v8437
        %v8439 = vperm.slane %v8433, %v8438
        %v8441 = vunpack.c.l.s4 1983009808
        %v8442 = vunpack.c.0.s8 %v8441
        %v8443 = vperm.slane %v8435, %v8442
        %v8444 = vrot.slane %v8415, 4
        %v8445 = vsel %vm860, %v8444, %v8403
        %v8446 = vrot.slane %v8403, 4
        %v8447 = vsel %vm860, %v8415, %v8446
        %v8449 = vunpack.c.l.s4 1934713408
        %v8450 = vunpack.c.0.s8 %v8449
        %v8451 = vperm.slane %v8445, %v8450
        %v8453 = vunpack.c.l.s4 1934713408
        %v8454 = vunpack.c.0.s8 %v8453
        %v8455 = vperm.slane %v8447, %v8454
        %v8456 = vrot.slane %v8419, 4
        %v8457 = vsel %vm860, %v8456, %v8407
        %v8458 = vrot.slane %v8407, 4
        %v8459 = vsel %vm860, %v8419, %v8458
        %v8461 = vunpack.c.l.s4 1934713408
        %v8462 = vunpack.c.0.s8 %v8461
        %v8463 = vperm.slane %v8457, %v8462
        %v8465 = vunpack.c.l.s4 1934713408
        %v8466 = vunpack.c.0.s8 %v8465
        %v8467 = vperm.slane %v8459, %v8466
        %v8468 = vrot.slane %v8439, 4
        %v8469 = vsel %vm860, %v8468, %v8427
        %v8470 = vrot.slane %v8427, 4
        %v8471 = vsel %vm860, %v8439, %v8470
        %v8473 = vunpack.c.l.s4 1934713408
        %v8474 = vunpack.c.0.s8 %v8473
        %v8475 = vperm.slane %v8469, %v8474
        %v8477 = vunpack.c.l.s4 1934713408
        %v8478 = vunpack.c.0.s8 %v8477
        %v8479 = vperm.slane %v8471, %v8478
        %v8480 = vrot.slane %v8443, 4
        %v8481 = vsel %vm860, %v8480, %v8431
        %v8482 = vrot.slane %v8431, 4
        %v8483 = vsel %vm860, %v8443, %v8482
        %v8485 = vunpack.c.l.s4 1934713408
        %v8486 = vunpack.c.0.s8 %v8485
        %v8487 = vperm.slane %v8481, %v8486
        %v8489 = vunpack.c.l.s4 1934713408
        %v8490 = vunpack.c.0.s8 %v8489
        %v8491 = vperm.slane %v8483, %v8490
        %v8492 = vrot.slane %v8475, 4
        %v8493 = vsel %vm860, %v8492, %v8451
        %v8494 = vrot.slane %v8451, 4
        %v8495 = vsel %vm860, %v8475, %v8494
        %v8496 = vrot.slane %v8479, 4
        %v8497 = vsel %vm860, %v8496, %v8455
        %v8498 = vrot.slane %v8455, 4
        %v8499 = vsel %vm860, %v8479, %v8498
        %v8500 = vrot.slane %v8487, 4
        %v8501 = vsel %vm860, %v8500, %v8463
        %v8502 = vrot.slane %v8463, 4
        %v8503 = vsel %vm860, %v8487, %v8502
        %v8504 = vrot.slane %v8491, 4
        %v8505 = vsel %vm860, %v8504, %v8467
        %v8506 = vrot.slane %v8467, 4
        %v8507 = vsel %vm860, %v8491, %v8506
        %v8508 = vrot.slane %v8352, 4
        %v8509 = vsel %vm860, %v8508, %v8348
        %v8510 = vrot.slane %v8348, 4
        %v8511 = vsel %vm860, %v8352, %v8510
        %v8513 = vunpack.c.l.s4 1983009808
        %v8514 = vunpack.c.0.s8 %v8513
        %v8515 = vperm.slane %v8509, %v8514
        %v8517 = vunpack.c.l.s4 1983009808
        %v8518 = vunpack.c.0.s8 %v8517
        %v8519 = vperm.slane %v8511, %v8518
        %v8520 = vrot.slane %v8354, 4
        %v8521 = vsel %vm860, %v8520, %v8350
        %v8522 = vrot.slane %v8350, 4
        %v8523 = vsel %vm860, %v8354, %v8522
        %v8525 = vunpack.c.l.s4 1983009808
        %v8526 = vunpack.c.0.s8 %v8525
        %v8527 = vperm.slane %v8521, %v8526
        %v8529 = vunpack.c.l.s4 1983009808
        %v8530 = vunpack.c.0.s8 %v8529
        %v8531 = vperm.slane %v8523, %v8530
        %v8532 = vrot.slane %v8360, 4
        %v8533 = vsel %vm860, %v8532, %v8356
        %v8534 = vrot.slane %v8356, 4
        %v8535 = vsel %vm860, %v8360, %v8534
        %v8537 = vunpack.c.l.s4 1983009808
        %v8538 = vunpack.c.0.s8 %v8537
        %v8539 = vperm.slane %v8533, %v8538
        %v8541 = vunpack.c.l.s4 1983009808
        %v8542 = vunpack.c.0.s8 %v8541
        %v8543 = vperm.slane %v8535, %v8542
        %v8544 = vrot.slane %v8362, 4
        %v8545 = vsel %vm860, %v8544, %v8358
        %v8546 = vrot.slane %v8358, 4
        %v8547 = vsel %vm860, %v8362, %v8546
        %v8549 = vunpack.c.l.s4 1983009808
        %v8550 = vunpack.c.0.s8 %v8549
        %v8551 = vperm.slane %v8545, %v8550
        %v8553 = vunpack.c.l.s4 1983009808
        %v8554 = vunpack.c.0.s8 %v8553
        %v8555 = vperm.slane %v8547, %v8554
        %v8556 = vrot.slane %v8527, 4
        %v8557 = vsel %vm860, %v8556, %v8515
        %v8558 = vrot.slane %v8515, 4
        %v8559 = vsel %vm860, %v8527, %v8558
        %v8561 = vunpack.c.l.s4 1934713408
        %v8562 = vunpack.c.0.s8 %v8561
        %v8563 = vperm.slane %v8557, %v8562
        %v8565 = vunpack.c.l.s4 1934713408
        %v8566 = vunpack.c.0.s8 %v8565
        %v8567 = vperm.slane %v8559, %v8566
        %v8568 = vrot.slane %v8531, 4
        %v8569 = vsel %vm860, %v8568, %v8519
        %v8570 = vrot.slane %v8519, 4
        %v8571 = vsel %vm860, %v8531, %v8570
        %v8573 = vunpack.c.l.s4 1934713408
        %v8574 = vunpack.c.0.s8 %v8573
        %v8575 = vperm.slane %v8569, %v8574
        %v8577 = vunpack.c.l.s4 1934713408
        %v8578 = vunpack.c.0.s8 %v8577
        %v8579 = vperm.slane %v8571, %v8578
        %v8580 = vrot.slane %v8551, 4
        %v8581 = vsel %vm860, %v8580, %v8539
        %v8582 = vrot.slane %v8539, 4
        %v8583 = vsel %vm860, %v8551, %v8582
        %v8585 = vunpack.c.l.s4 1934713408
        %v8586 = vunpack.c.0.s8 %v8585
        %v8587 = vperm.slane %v8581, %v8586
        %v8589 = vunpack.c.l.s4 1934713408
        %v8590 = vunpack.c.0.s8 %v8589
        %v8591 = vperm.slane %v8583, %v8590
        %v8592 = vrot.slane %v8555, 4
        %v8593 = vsel %vm860, %v8592, %v8543
        %v8594 = vrot.slane %v8543, 4
        %v8595 = vsel %vm860, %v8555, %v8594
        %v8597 = vunpack.c.l.s4 1934713408
        %v8598 = vunpack.c.0.s8 %v8597
        %v8599 = vperm.slane %v8593, %v8598
        %v8601 = vunpack.c.l.s4 1934713408
        %v8602 = vunpack.c.0.s8 %v8601
        %v8603 = vperm.slane %v8595, %v8602
        %v8604 = vrot.slane %v8587, 4
        %v8605 = vsel %vm860, %v8604, %v8563
        %v8606 = vrot.slane %v8563, 4
        %v8607 = vsel %vm860, %v8587, %v8606
        %v8608 = vrot.slane %v8591, 4
        %v8609 = vsel %vm860, %v8608, %v8567
        %v8610 = vrot.slane %v8567, 4
        %v8611 = vsel %vm860, %v8591, %v8610
        %v8612 = vrot.slane %v8599, 4
        %v8613 = vsel %vm860, %v8612, %v8575
        %v8614 = vrot.slane %v8575, 4
        %v8615 = vsel %vm860, %v8599, %v8614
        %v8616 = vrot.slane %v8603, 4
        %v8617 = vsel %vm860, %v8616, %v8579
        %v8618 = vrot.slane %v8579, 4
        %v8619 = vsel %vm860, %v8603, %v8618
        %v8620 = vrot.slane %v8368, 4
        %v8621 = vsel %vm860, %v8620, %v8364
        %v8622 = vrot.slane %v8364, 4
        %v8623 = vsel %vm860, %v8368, %v8622
        %v8625 = vunpack.c.l.s4 1983009808
        %v8626 = vunpack.c.0.s8 %v8625
        %v8627 = vperm.slane %v8621, %v8626
        %v8629 = vunpack.c.l.s4 1983009808
        %v8630 = vunpack.c.0.s8 %v8629
        %v8631 = vperm.slane %v8623, %v8630
        %v8632 = vrot.slane %v8370, 4
        %v8633 = vsel %vm860, %v8632, %v8366
        %v8634 = vrot.slane %v8366, 4
        %v8635 = vsel %vm860, %v8370, %v8634
        %v8637 = vunpack.c.l.s4 1983009808
        %v8638 = vunpack.c.0.s8 %v8637
        %v8639 = vperm.slane %v8633, %v8638
        %v8641 = vunpack.c.l.s4 1983009808
        %v8642 = vunpack.c.0.s8 %v8641
        %v8643 = vperm.slane %v8635, %v8642
        %v8644 = vrot.slane %v8376, 4
        %v8645 = vsel %vm860, %v8644, %v8372
        %v8646 = vrot.slane %v8372, 4
        %v8647 = vsel %vm860, %v8376, %v8646
        %v8649 = vunpack.c.l.s4 1983009808
        %v8650 = vunpack.c.0.s8 %v8649
        %v8651 = vperm.slane %v8645, %v8650
        %v8653 = vunpack.c.l.s4 1983009808
        %v8654 = vunpack.c.0.s8 %v8653
        %v8655 = vperm.slane %v8647, %v8654
        %v8656 = vrot.slane %v8378, 4
        %v8657 = vsel %vm860, %v8656, %v8374
        %v8658 = vrot.slane %v8374, 4
        %v8659 = vsel %vm860, %v8378, %v8658
        %v8661 = vunpack.c.l.s4 1983009808
        %v8662 = vunpack.c.0.s8 %v8661
        %v8663 = vperm.slane %v8657, %v8662
        %v8665 = vunpack.c.l.s4 1983009808
        %v8666 = vunpack.c.0.s8 %v8665
        %v8667 = vperm.slane %v8659, %v8666
        %v8668 = vrot.slane %v8639, 4
        %v8669 = vsel %vm860, %v8668, %v8627
        %v8670 = vrot.slane %v8627, 4
        %v8671 = vsel %vm860, %v8639, %v8670
        %v8673 = vunpack.c.l.s4 1934713408
        %v8674 = vunpack.c.0.s8 %v8673
        %v8675 = vperm.slane %v8669, %v8674
        %v8677 = vunpack.c.l.s4 1934713408
        %v8678 = vunpack.c.0.s8 %v8677
        %v8679 = vperm.slane %v8671, %v8678
        %v8680 = vrot.slane %v8643, 4
        %v8681 = vsel %vm860, %v8680, %v8631
        %v8682 = vrot.slane %v8631, 4
        %v8683 = vsel %vm860, %v8643, %v8682
        %v8685 = vunpack.c.l.s4 1934713408
        %v8686 = vunpack.c.0.s8 %v8685
        %v8687 = vperm.slane %v8681, %v8686
        %v8689 = vunpack.c.l.s4 1934713408
        %v8690 = vunpack.c.0.s8 %v8689
        %v8691 = vperm.slane %v8683, %v8690
        %v8692 = vrot.slane %v8663, 4
        %v8693 = vsel %vm860, %v8692, %v8651
        %v8694 = vrot.slane %v8651, 4
        %v8695 = vsel %vm860, %v8663, %v8694
        %v8697 = vunpack.c.l.s4 1934713408
        %v8698 = vunpack.c.0.s8 %v8697
        %v8699 = vperm.slane %v8693, %v8698
        %v8701 = vunpack.c.l.s4 1934713408
        %v8702 = vunpack.c.0.s8 %v8701
        %v8703 = vperm.slane %v8695, %v8702
        %v8704 = vrot.slane %v8667, 4
        %v8705 = vsel %vm860, %v8704, %v8655
        %v8706 = vrot.slane %v8655, 4
        %v8707 = vsel %vm860, %v8667, %v8706
        %v8709 = vunpack.c.l.s4 1934713408
        %v8710 = vunpack.c.0.s8 %v8709
        %v8711 = vperm.slane %v8705, %v8710
        %v8713 = vunpack.c.l.s4 1934713408
        %v8714 = vunpack.c.0.s8 %v8713
        %v8715 = vperm.slane %v8707, %v8714
        %v8716 = vrot.slane %v8699, 4
        %v8717 = vsel %vm860, %v8716, %v8675
        %v8718 = vrot.slane %v8675, 4
        %v8719 = vsel %vm860, %v8699, %v8718
        %v8720 = vrot.slane %v8703, 4
        %v8721 = vsel %vm860, %v8720, %v8679
        %v8722 = vrot.slane %v8679, 4
        %v8723 = vsel %vm860, %v8703, %v8722
        %v8724 = vrot.slane %v8711, 4
        %v8725 = vsel %vm860, %v8724, %v8687
        %v8726 = vrot.slane %v8687, 4
        %v8727 = vsel %vm860, %v8711, %v8726
        %v8728 = vrot.slane %v8715, 4
        %v8729 = vsel %vm860, %v8728, %v8691
        %v8730 = vrot.slane %v8691, 4
        %v8731 = vsel %vm860, %v8715, %v8730
        %v8732 = vrot.slane %v8384, 4
        %v8733 = vsel %vm860, %v8732, %v8380
        %v8734 = vrot.slane %v8380, 4
        %v8735 = vsel %vm860, %v8384, %v8734
        %v8737 = vunpack.c.l.s4 1983009808
        %v8738 = vunpack.c.0.s8 %v8737
        %v8739 = vperm.slane %v8733, %v8738
        %v8741 = vunpack.c.l.s4 1983009808
        %v8742 = vunpack.c.0.s8 %v8741
        %v8743 = vperm.slane %v8735, %v8742
        %v8744 = vrot.slane %v8386, 4
        %v8745 = vsel %vm860, %v8744, %v8382
        %v8746 = vrot.slane %v8382, 4
        %v8747 = vsel %vm860, %v8386, %v8746
        %v8749 = vunpack.c.l.s4 1983009808
        %v8750 = vunpack.c.0.s8 %v8749
        %v8751 = vperm.slane %v8745, %v8750
        %v8753 = vunpack.c.l.s4 1983009808
        %v8754 = vunpack.c.0.s8 %v8753
        %v8755 = vperm.slane %v8747, %v8754
        %v8756 = vrot.slane %v8392, 4
        %v8757 = vsel %vm860, %v8756, %v8388
        %v8758 = vrot.slane %v8388, 4
        %v8759 = vsel %vm860, %v8392, %v8758
        %v8761 = vunpack.c.l.s4 1983009808
        %v8762 = vunpack.c.0.s8 %v8761
        %v8763 = vperm.slane %v8757, %v8762
        %v8765 = vunpack.c.l.s4 1983009808
        %v8766 = vunpack.c.0.s8 %v8765
        %v8767 = vperm.slane %v8759, %v8766
        %v8768 = vrot.slane %v8394, 4
        %v8769 = vsel %vm860, %v8768, %v8390
        %v8770 = vrot.slane %v8390, 4
        %v8771 = vsel %vm860, %v8394, %v8770
        %v8773 = vunpack.c.l.s4 1983009808
        %v8774 = vunpack.c.0.s8 %v8773
        %v8775 = vperm.slane %v8769, %v8774
        %v8777 = vunpack.c.l.s4 1983009808
        %v8778 = vunpack.c.0.s8 %v8777
        %v8779 = vperm.slane %v8771, %v8778
        %v8780 = vrot.slane %v8751, 4
        %v8781 = vsel %vm860, %v8780, %v8739
        %v8782 = vrot.slane %v8739, 4
        %v8783 = vsel %vm860, %v8751, %v8782
        %v8785 = vunpack.c.l.s4 1934713408
        %v8786 = vunpack.c.0.s8 %v8785
        %v8787 = vperm.slane %v8781, %v8786
        %v8789 = vunpack.c.l.s4 1934713408
        %v8790 = vunpack.c.0.s8 %v8789
        %v8791 = vperm.slane %v8783, %v8790
        %v8792 = vrot.slane %v8755, 4
        %v8793 = vsel %vm860, %v8792, %v8743
        %v8794 = vrot.slane %v8743, 4
        %v8795 = vsel %vm860, %v8755, %v8794
        %v8797 = vunpack.c.l.s4 1934713408
        %v8798 = vunpack.c.0.s8 %v8797
        %v8799 = vperm.slane %v8793, %v8798
        %v8801 = vunpack.c.l.s4 1934713408
        %v8802 = vunpack.c.0.s8 %v8801
        %v8803 = vperm.slane %v8795, %v8802
        %v8804 = vrot.slane %v8775, 4
        %v8805 = vsel %vm860, %v8804, %v8763
        %v8806 = vrot.slane %v8763, 4
        %v8807 = vsel %vm860, %v8775, %v8806
        %v8809 = vunpack.c.l.s4 1934713408
        %v8810 = vunpack.c.0.s8 %v8809
        %v8811 = vperm.slane %v8805, %v8810
        %v8813 = vunpack.c.l.s4 1934713408
        %v8814 = vunpack.c.0.s8 %v8813
        %v8815 = vperm.slane %v8807, %v8814
        %v8816 = vrot.slane %v8779, 4
        %v8817 = vsel %vm860, %v8816, %v8767
        %v8818 = vrot.slane %v8767, 4
        %v8819 = vsel %vm860, %v8779, %v8818
        %v8821 = vunpack.c.l.s4 1934713408
        %v8822 = vunpack.c.0.s8 %v8821
        %v8823 = vperm.slane %v8817, %v8822
        %v8825 = vunpack.c.l.s4 1934713408
        %v8826 = vunpack.c.0.s8 %v8825
        %v8827 = vperm.slane %v8819, %v8826
        %v8828 = vrot.slane %v8811, 4
        %v8829 = vsel %vm860, %v8828, %v8787
        %v8830 = vrot.slane %v8787, 4
        %v8831 = vsel %vm860, %v8811, %v8830
        %v8832 = vrot.slane %v8815, 4
        %v8833 = vsel %vm860, %v8832, %v8791
        %v8834 = vrot.slane %v8791, 4
        %v8835 = vsel %vm860, %v8815, %v8834
        %v8836 = vrot.slane %v8823, 4
        %v8837 = vsel %vm860, %v8836, %v8799
        %v8838 = vrot.slane %v8799, 4
        %v8839 = vsel %vm860, %v8823, %v8838
        %v8840 = vrot.slane %v8827, 4
        %v8841 = vsel %vm860, %v8840, %v8803
        %v8842 = vrot.slane %v8803, 4
        %v8843 = vsel %vm860, %v8827, %v8842
        %v8844 = vrot.slane %v8337, 4
        %v8845 = vsel %vm860, %v8844, %v8333
        %v8846 = vrot.slane %v8333, 4
        %v8847 = vsel %vm860, %v8337, %v8846
        %v8849 = vunpack.c.l.s4 1983009808
        %v8850 = vunpack.c.0.s8 %v8849
        %v8851 = vperm.slane %v8845, %v8850
        %v8853 = vunpack.c.l.s4 1983009808
        %v8854 = vunpack.c.0.s8 %v8853
        %v8855 = vperm.slane %v8847, %v8854
        %v8856 = vrot.slane %v8339, 4
        %v8857 = vsel %vm860, %v8856, %v8335
        %v8858 = vrot.slane %v8335, 4
        %v8859 = vsel %vm860, %v8339, %v8858
        %v8861 = vunpack.c.l.s4 1983009808
        %v8862 = vunpack.c.0.s8 %v8861
        %v8863 = vperm.slane %v8857, %v8862
        %v8865 = vunpack.c.l.s4 1983009808
        %v8866 = vunpack.c.0.s8 %v8865
        %v8867 = vperm.slane %v8859, %v8866
        %v8868 = vrot.slane %v8345, 4
        %v8869 = vsel %vm860, %v8868, %v8341
        %v8870 = vrot.slane %v8341, 4
        %v8871 = vsel %vm860, %v8345, %v8870
        %v8873 = vunpack.c.l.s4 1983009808
        %v8874 = vunpack.c.0.s8 %v8873
        %v8875 = vperm.slane %v8869, %v8874
        %v8877 = vunpack.c.l.s4 1983009808
        %v8878 = vunpack.c.0.s8 %v8877
        %v8879 = vperm.slane %v8871, %v8878
        %v8880 = vrot.slane %v8347, 4
        %v8881 = vsel %vm860, %v8880, %v8343
        %v8882 = vrot.slane %v8343, 4
        %v8883 = vsel %vm860, %v8347, %v8882
        %v8885 = vunpack.c.l.s4 1983009808
        %v8886 = vunpack.c.0.s8 %v8885
        %v8887 = vperm.slane %v8881, %v8886
        %v8889 = vunpack.c.l.s4 1983009808
        %v8890 = vunpack.c.0.s8 %v8889
        %v8891 = vperm.slane %v8883, %v8890
        %v8892 = vrot.slane %v8863, 4
        %v8893 = vsel %vm860, %v8892, %v8851
        %v8894 = vrot.slane %v8851, 4
        %v8895 = vsel %vm860, %v8863, %v8894
        %v8897 = vunpack.c.l.s4 1934713408
        %v8898 = vunpack.c.0.s8 %v8897
        %v8899 = vperm.slane %v8893, %v8898
        %v8901 = vunpack.c.l.s4 1934713408
        %v8902 = vunpack.c.0.s8 %v8901
        %v8903 = vperm.slane %v8895, %v8902
        %v8904 = vrot.slane %v8867, 4
        %v8905 = vsel %vm860, %v8904, %v8855
        %v8906 = vrot.slane %v8855, 4
        %v8907 = vsel %vm860, %v8867, %v8906
        %v8909 = vunpack.c.l.s4 1934713408
        %v8910 = vunpack.c.0.s8 %v8909
        %v8911 = vperm.slane %v8905, %v8910
        %v8913 = vunpack.c.l.s4 1934713408
        %v8914 = vunpack.c.0.s8 %v8913
        %v8915 = vperm.slane %v8907, %v8914
        %v8916 = vrot.slane %v8887, 4
        %v8917 = vsel %vm860, %v8916, %v8875
        %v8918 = vrot.slane %v8875, 4
        %v8919 = vsel %vm860, %v8887, %v8918
        %v8921 = vunpack.c.l.s4 1934713408
        %v8922 = vunpack.c.0.s8 %v8921
        %v8923 = vperm.slane %v8917, %v8922
        %v8925 = vunpack.c.l.s4 1934713408
        %v8926 = vunpack.c.0.s8 %v8925
        %v8927 = vperm.slane %v8919, %v8926
        %v8928 = vrot.slane %v8891, 4
        %v8929 = vsel %vm860, %v8928, %v8879
        %v8930 = vrot.slane %v8879, 4
        %v8931 = vsel %vm860, %v8891, %v8930
        %v8933 = vunpack.c.l.s4 1934713408
        %v8934 = vunpack.c.0.s8 %v8933
        %v8935 = vperm.slane %v8929, %v8934
        %v8937 = vunpack.c.l.s4 1934713408
        %v8938 = vunpack.c.0.s8 %v8937
        %v8939 = vperm.slane %v8931, %v8938
        %v8940 = vrot.slane %v8923, 4
        %v8941 = vsel %vm860, %v8940, %v8899
        %v8942 = vrot.slane %v8899, 4
        %v8943 = vsel %vm860, %v8923, %v8942
        %v8944 = vrot.slane %v8927, 4
        %v8945 = vsel %vm860, %v8944, %v8903
        %v8946 = vrot.slane %v8903, 4
        %v8947 = vsel %vm860, %v8927, %v8946
        %v8948 = vrot.slane %v8935, 4
        %v8949 = vsel %vm860, %v8948, %v8911
        %v8950 = vrot.slane %v8911, 4
        %v8951 = vsel %vm860, %v8935, %v8950
        %v8952 = vrot.slane %v8939, 4
        %v8953 = vsel %vm860, %v8952, %v8915
        %v8954 = vrot.slane %v8915, 4
        %v8955 = vsel %vm860, %v8939, %v8954
        %v8956 = vrot.slane %v8353, 4
        %v8957 = vsel %vm860, %v8956, %v8349
        %v8958 = vrot.slane %v8349, 4
        %v8959 = vsel %vm860, %v8353, %v8958
        %v8961 = vunpack.c.l.s4 1983009808
        %v8962 = vunpack.c.0.s8 %v8961
        %v8963 = vperm.slane %v8957, %v8962
        %v8965 = vunpack.c.l.s4 1983009808
        %v8966 = vunpack.c.0.s8 %v8965
        %v8967 = vperm.slane %v8959, %v8966
        %v8968 = vrot.slane %v8355, 4
        %v8969 = vsel %vm860, %v8968, %v8351
        %v8970 = vrot.slane %v8351, 4
        %v8971 = vsel %vm860, %v8355, %v8970
        %v8973 = vunpack.c.l.s4 1983009808
        %v8974 = vunpack.c.0.s8 %v8973
        %v8975 = vperm.slane %v8969, %v8974
        %v8977 = vunpack.c.l.s4 1983009808
        %v8978 = vunpack.c.0.s8 %v8977
        %v8979 = vperm.slane %v8971, %v8978
        %v8980 = vrot.slane %v8361, 4
        %v8981 = vsel %vm860, %v8980, %v8357
        %v8982 = vrot.slane %v8357, 4
        %v8983 = vsel %vm860, %v8361, %v8982
        %v8985 = vunpack.c.l.s4 1983009808
        %v8986 = vunpack.c.0.s8 %v8985
        %v8987 = vperm.slane %v8981, %v8986
        %v8989 = vunpack.c.l.s4 1983009808
        %v8990 = vunpack.c.0.s8 %v8989
        %v8991 = vperm.slane %v8983, %v8990
        %v8992 = vrot.slane %v8363, 4
        %v8993 = vsel %vm860, %v8992, %v8359
        %v8994 = vrot.slane %v8359, 4
        %v8995 = vsel %vm860, %v8363, %v8994
        %v8997 = vunpack.c.l.s4 1983009808
        %v8998 = vunpack.c.0.s8 %v8997
        %v8999 = vperm.slane %v8993, %v8998
        %v9001 = vunpack.c.l.s4 1983009808
        %v9002 = vunpack.c.0.s8 %v9001
        %v9003 = vperm.slane %v8995, %v9002
        %v9004 = vrot.slane %v8975, 4
        %v9005 = vsel %vm860, %v9004, %v8963
        %v9006 = vrot.slane %v8963, 4
        %v9007 = vsel %vm860, %v8975, %v9006
        %v9009 = vunpack.c.l.s4 1934713408
        %v9010 = vunpack.c.0.s8 %v9009
        %v9011 = vperm.slane %v9005, %v9010
        %v9013 = vunpack.c.l.s4 1934713408
        %v9014 = vunpack.c.0.s8 %v9013
        %v9015 = vperm.slane %v9007, %v9014
        %v9016 = vrot.slane %v8979, 4
        %v9017 = vsel %vm860, %v9016, %v8967
        %v9018 = vrot.slane %v8967, 4
        %v9019 = vsel %vm860, %v8979, %v9018
        %v9021 = vunpack.c.l.s4 1934713408
        %v9022 = vunpack.c.0.s8 %v9021
        %v9023 = vperm.slane %v9017, %v9022
        %v9025 = vunpack.c.l.s4 1934713408
        %v9026 = vunpack.c.0.s8 %v9025
        %v9027 = vperm.slane %v9019, %v9026
        %v9028 = vrot.slane %v8999, 4
        %v9029 = vsel %vm860, %v9028, %v8987
        %v9030 = vrot.slane %v8987, 4
        %v9031 = vsel %vm860, %v8999, %v9030
        %v9033 = vunpack.c.l.s4 1934713408
        %v9034 = vunpack.c.0.s8 %v9033
        %v9035 = vperm.slane %v9029, %v9034
        %v9037 = vunpack.c.l.s4 1934713408
        %v9038 = vunpack.c.0.s8 %v9037
        %v9039 = vperm.slane %v9031, %v9038
        %v9040 = vrot.slane %v9003, 4
        %v9041 = vsel %vm860, %v9040, %v8991
        %v9042 = vrot.slane %v8991, 4
        %v9043 = vsel %vm860, %v9003, %v9042
        %v9045 = vunpack.c.l.s4 1934713408
        %v9046 = vunpack.c.0.s8 %v9045
        %v9047 = vperm.slane %v9041, %v9046
        %v9049 = vunpack.c.l.s4 1934713408
        %v9050 = vunpack.c.0.s8 %v9049
        %v9051 = vperm.slane %v9043, %v9050
        %v9052 = vrot.slane %v9035, 4
        %v9053 = vsel %vm860, %v9052, %v9011
        %v9054 = vrot.slane %v9011, 4
        %v9055 = vsel %vm860, %v9035, %v9054
        %v9056 = vrot.slane %v9039, 4
        %v9057 = vsel %vm860, %v9056, %v9015
        %v9058 = vrot.slane %v9015, 4
        %v9059 = vsel %vm860, %v9039, %v9058
        %v9060 = vrot.slane %v9047, 4
        %v9061 = vsel %vm860, %v9060, %v9023
        %v9062 = vrot.slane %v9023, 4
        %v9063 = vsel %vm860, %v9047, %v9062
        %v9064 = vrot.slane %v9051, 4
        %v9065 = vsel %vm860, %v9064, %v9027
        %v9066 = vrot.slane %v9027, 4
        %v9067 = vsel %vm860, %v9051, %v9066
        %v9068 = vrot.slane %v8369, 4
        %v9069 = vsel %vm860, %v9068, %v8365
        %v9070 = vrot.slane %v8365, 4
        %v9071 = vsel %vm860, %v8369, %v9070
        %v9073 = vunpack.c.l.s4 1983009808
        %v9074 = vunpack.c.0.s8 %v9073
        %v9075 = vperm.slane %v9069, %v9074
        %v9077 = vunpack.c.l.s4 1983009808
        %v9078 = vunpack.c.0.s8 %v9077
        %v9079 = vperm.slane %v9071, %v9078
        %v9080 = vrot.slane %v8371, 4
        %v9081 = vsel %vm860, %v9080, %v8367
        %v9082 = vrot.slane %v8367, 4
        %v9083 = vsel %vm860, %v8371, %v9082
        %v9085 = vunpack.c.l.s4 1983009808
        %v9086 = vunpack.c.0.s8 %v9085
        %v9087 = vperm.slane %v9081, %v9086
        %v9089 = vunpack.c.l.s4 1983009808
        %v9090 = vunpack.c.0.s8 %v9089
        %v9091 = vperm.slane %v9083, %v9090
        %v9092 = vrot.slane %v8377, 4
        %v9093 = vsel %vm860, %v9092, %v8373
        %v9094 = vrot.slane %v8373, 4
        %v9095 = vsel %vm860, %v8377, %v9094
        %v9097 = vunpack.c.l.s4 1983009808
        %v9098 = vunpack.c.0.s8 %v9097
        %v9099 = vperm.slane %v9093, %v9098
        %v9101 = vunpack.c.l.s4 1983009808
        %v9102 = vunpack.c.0.s8 %v9101
        %v9103 = vperm.slane %v9095, %v9102
        %v9104 = vrot.slane %v8379, 4
        %v9105 = vsel %vm860, %v9104, %v8375
        %v9106 = vrot.slane %v8375, 4
        %v9107 = vsel %vm860, %v8379, %v9106
        %v9109 = vunpack.c.l.s4 1983009808
        %v9110 = vunpack.c.0.s8 %v9109
        %v9111 = vperm.slane %v9105, %v9110
        %v9113 = vunpack.c.l.s4 1983009808
        %v9114 = vunpack.c.0.s8 %v9113
        %v9115 = vperm.slane %v9107, %v9114
        %v9116 = vrot.slane %v9087, 4
        %v9117 = vsel %vm860, %v9116, %v9075
        %v9118 = vrot.slane %v9075, 4
        %v9119 = vsel %vm860, %v9087, %v9118
        %v9121 = vunpack.c.l.s4 1934713408
        %v9122 = vunpack.c.0.s8 %v9121
        %v9123 = vperm.slane %v9117, %v9122
        %v9125 = vunpack.c.l.s4 1934713408
        %v9126 = vunpack.c.0.s8 %v9125
        %v9127 = vperm.slane %v9119, %v9126
        %v9128 = vrot.slane %v9091, 4
        %v9129 = vsel %vm860, %v9128, %v9079
        %v9130 = vrot.slane %v9079, 4
        %v9131 = vsel %vm860, %v9091, %v9130
        %v9133 = vunpack.c.l.s4 1934713408
        %v9134 = vunpack.c.0.s8 %v9133
        %v9135 = vperm.slane %v9129, %v9134
        %v9137 = vunpack.c.l.s4 1934713408
        %v9138 = vunpack.c.0.s8 %v9137
        %v9139 = vperm.slane %v9131, %v9138
        %v9140 = vrot.slane %v9111, 4
        %v9141 = vsel %vm860, %v9140, %v9099
        %v9142 = vrot.slane %v9099, 4
        %v9143 = vsel %vm860, %v9111, %v9142
        %v9145 = vunpack.c.l.s4 1934713408
        %v9146 = vunpack.c.0.s8 %v9145
        %v9147 = vperm.slane %v9141, %v9146
        %v9149 = vunpack.c.l.s4 1934713408
        %v9150 = vunpack.c.0.s8 %v9149
        %v9151 = vperm.slane %v9143, %v9150
        %v9152 = vrot.slane %v9115, 4
        %v9153 = vsel %vm860, %v9152, %v9103
        %v9154 = vrot.slane %v9103, 4
        %v9155 = vsel %vm860, %v9115, %v9154
        %v9157 = vunpack.c.l.s4 1934713408
        %v9158 = vunpack.c.0.s8 %v9157
        %v9159 = vperm.slane %v9153, %v9158
        %v9161 = vunpack.c.l.s4 1934713408
        %v9162 = vunpack.c.0.s8 %v9161
        %v9163 = vperm.slane %v9155, %v9162
        %v9164 = vrot.slane %v9147, 4
        %v9165 = vsel %vm860, %v9164, %v9123
        %v9166 = vrot.slane %v9123, 4
        %v9167 = vsel %vm860, %v9147, %v9166
        %v9168 = vrot.slane %v9151, 4
        %v9169 = vsel %vm860, %v9168, %v9127
        %v9170 = vrot.slane %v9127, 4
        %v9171 = vsel %vm860, %v9151, %v9170
        %v9172 = vrot.slane %v9159, 4
        %v9173 = vsel %vm860, %v9172, %v9135
        %v9174 = vrot.slane %v9135, 4
        %v9175 = vsel %vm860, %v9159, %v9174
        %v9176 = vrot.slane %v9163, 4
        %v9177 = vsel %vm860, %v9176, %v9139
        %v9178 = vrot.slane %v9139, 4
        %v9179 = vsel %vm860, %v9163, %v9178
        %v9180 = vrot.slane %v8385, 4
        %v9181 = vsel %vm860, %v9180, %v8381
        %v9182 = vrot.slane %v8381, 4
        %v9183 = vsel %vm860, %v8385, %v9182
        %v9185 = vunpack.c.l.s4 1983009808
        %v9186 = vunpack.c.0.s8 %v9185
        %v9187 = vperm.slane %v9181, %v9186
        %v9189 = vunpack.c.l.s4 1983009808
        %v9190 = vunpack.c.0.s8 %v9189
        %v9191 = vperm.slane %v9183, %v9190
        %v9192 = vrot.slane %v8387, 4
        %v9193 = vsel %vm860, %v9192, %v8383
        %v9194 = vrot.slane %v8383, 4
        %v9195 = vsel %vm860, %v8387, %v9194
        %v9197 = vunpack.c.l.s4 1983009808
        %v9198 = vunpack.c.0.s8 %v9197
        %v9199 = vperm.slane %v9193, %v9198
        %v9201 = vunpack.c.l.s4 1983009808
        %v9202 = vunpack.c.0.s8 %v9201
        %v9203 = vperm.slane %v9195, %v9202
        %v9204 = vrot.slane %v8393, 4
        %v9205 = vsel %vm860, %v9204, %v8389
        %v9206 = vrot.slane %v8389, 4
        %v9207 = vsel %vm860, %v8393, %v9206
        %v9209 = vunpack.c.l.s4 1983009808
        %v9210 = vunpack.c.0.s8 %v9209
        %v9211 = vperm.slane %v9205, %v9210
        %v9213 = vunpack.c.l.s4 1983009808
        %v9214 = vunpack.c.0.s8 %v9213
        %v9215 = vperm.slane %v9207, %v9214
        %v9216 = vrot.slane %v8395, 4
        %v9217 = vsel %vm860, %v9216, %v8391
        %v9218 = vrot.slane %v8391, 4
        %v9219 = vsel %vm860, %v8395, %v9218
        %v9221 = vunpack.c.l.s4 1983009808
        %v9222 = vunpack.c.0.s8 %v9221
        %v9223 = vperm.slane %v9217, %v9222
        %v9225 = vunpack.c.l.s4 1983009808
        %v9226 = vunpack.c.0.s8 %v9225
        %v9227 = vperm.slane %v9219, %v9226
        %v9228 = vrot.slane %v9199, 4
        %v9229 = vsel %vm860, %v9228, %v9187
        %v9230 = vrot.slane %v9187, 4
        %v9231 = vsel %vm860, %v9199, %v9230
        %v9233 = vunpack.c.l.s4 1934713408
        %v9234 = vunpack.c.0.s8 %v9233
        %v9235 = vperm.slane %v9229, %v9234
        %v9237 = vunpack.c.l.s4 1934713408
        %v9238 = vunpack.c.0.s8 %v9237
        %v9239 = vperm.slane %v9231, %v9238
        %v9240 = vrot.slane %v9203, 4
        %v9241 = vsel %vm860, %v9240, %v9191
        %v9242 = vrot.slane %v9191, 4
        %v9243 = vsel %vm860, %v9203, %v9242
        %v9245 = vunpack.c.l.s4 1934713408
        %v9246 = vunpack.c.0.s8 %v9245
        %v9247 = vperm.slane %v9241, %v9246
        %v9249 = vunpack.c.l.s4 1934713408
        %v9250 = vunpack.c.0.s8 %v9249
        %v9251 = vperm.slane %v9243, %v9250
        %v9252 = vrot.slane %v9223, 4
        %v9253 = vsel %vm860, %v9252, %v9211
        %v9254 = vrot.slane %v9211, 4
        %v9255 = vsel %vm860, %v9223, %v9254
        %v9257 = vunpack.c.l.s4 1934713408
        %v9258 = vunpack.c.0.s8 %v9257
        %v9259 = vperm.slane %v9253, %v9258
        %v9261 = vunpack.c.l.s4 1934713408
        %v9262 = vunpack.c.0.s8 %v9261
        %v9263 = vperm.slane %v9255, %v9262
        %v9264 = vrot.slane %v9227, 4
        %v9265 = vsel %vm860, %v9264, %v9215
        %v9266 = vrot.slane %v9215, 4
        %v9267 = vsel %vm860, %v9227, %v9266
        %v9269 = vunpack.c.l.s4 1934713408
        %v9270 = vunpack.c.0.s8 %v9269
        %v9271 = vperm.slane %v9265, %v9270
        %v9273 = vunpack.c.l.s4 1934713408
        %v9274 = vunpack.c.0.s8 %v9273
        %v9275 = vperm.slane %v9267, %v9274
        %v9276 = vrot.slane %v9259, 4
        %v9277 = vsel %vm860, %v9276, %v9235
        %v9278 = vrot.slane %v9235, 4
        %v9279 = vsel %vm860, %v9259, %v9278
        %v9280 = vrot.slane %v9263, 4
        %v9281 = vsel %vm860, %v9280, %v9239
        %v9282 = vrot.slane %v9239, 4
        %v9283 = vsel %vm860, %v9263, %v9282
        %v9284 = vrot.slane %v9271, 4
        %v9285 = vsel %vm860, %v9284, %v9247
        %v9286 = vrot.slane %v9247, 4
        %v9287 = vsel %vm860, %v9271, %v9286
        %v9288 = vrot.slane %v9275, 4
        %v9289 = vsel %vm860, %v9288, %v9251
        %v9290 = vrot.slane %v9251, 4
        %v9291 = vsel %vm860, %v9275, %v9290
        %9296 = vrot.lane.b32.xlu0 %v8495, 2
        %v9297 = vpop.permute.xlu0 %9296
        %9298 = vrot.lane.b32.xlu0 %v8607, 2
        %v9299 = vpop.permute.xlu0 %9298
        %9300 = vrot.lane.b32.xlu0 %v8719, 2
        %v9301 = vpop.permute.xlu0 %9300
        %9302 = vrot.lane.b32.xlu0 %v8831, 2
        %v9303 = vpop.permute.xlu0 %9302
        %9312 = vrot.lane.b32.xlu0 %v8497, 4
        %v9313 = vpop.permute.xlu0 %9312
        %9314 = vrot.lane.b32.xlu0 %v8609, 4
        %v9315 = vpop.permute.xlu0 %9314
        %9316 = vrot.lane.b32.xlu0 %v8721, 4
        %v9317 = vpop.permute.xlu0 %9316
        %9318 = vrot.lane.b32.xlu0 %v8833, 4
        %v9319 = vpop.permute.xlu0 %9318
        %9328 = vrot.lane.b32.xlu0 %v8499, 6
        %v9329 = vpop.permute.xlu0 %9328
        %9330 = vrot.lane.b32.xlu0 %v8611, 6
        %v9331 = vpop.permute.xlu0 %9330
        %9332 = vrot.lane.b32.xlu0 %v8723, 6
        %v9333 = vpop.permute.xlu0 %9332
        %9334 = vrot.lane.b32.xlu0 %v8835, 6
        %v9335 = vpop.permute.xlu0 %9334
        %9344 = vrot.lane.b32.xlu0 %v8501, 8
        %v9345 = vpop.permute.xlu0 %9344
        %9346 = vrot.lane.b32.xlu0 %v8613, 8
        %v9347 = vpop.permute.xlu0 %9346
        %9348 = vrot.lane.b32.xlu0 %v8725, 8
        %v9349 = vpop.permute.xlu0 %9348
        %9350 = vrot.lane.b32.xlu0 %v8837, 8
        %v9351 = vpop.permute.xlu0 %9350
        %9360 = vrot.lane.b32.xlu0 %v8503, 10
        %v9361 = vpop.permute.xlu0 %9360
        %9362 = vrot.lane.b32.xlu0 %v8615, 10
        %v9363 = vpop.permute.xlu0 %9362
        %9364 = vrot.lane.b32.xlu0 %v8727, 10
        %v9365 = vpop.permute.xlu0 %9364
        %9366 = vrot.lane.b32.xlu0 %v8839, 10
        %v9367 = vpop.permute.xlu0 %9366
        %9376 = vrot.lane.b32.xlu0 %v8505, 12
        %v9377 = vpop.permute.xlu0 %9376
        %9378 = vrot.lane.b32.xlu0 %v8617, 12
        %v9379 = vpop.permute.xlu0 %9378
        %9380 = vrot.lane.b32.xlu0 %v8729, 12
        %v9381 = vpop.permute.xlu0 %9380
        %9382 = vrot.lane.b32.xlu0 %v8841, 12
        %v9383 = vpop.permute.xlu0 %9382
        %9392 = vrot.lane.b32.xlu0 %v8507, 14
        %v9393 = vpop.permute.xlu0 %9392
        %9394 = vrot.lane.b32.xlu0 %v8619, 14
        %v9395 = vpop.permute.xlu0 %9394
        %9396 = vrot.lane.b32.xlu0 %v8731, 14
        %v9397 = vpop.permute.xlu0 %9396
        %9398 = vrot.lane.b32.xlu0 %v8843, 14
        %v9399 = vpop.permute.xlu0 %9398
        %9408 = vrot.lane.b32.xlu0 %v8941, 16
        %v9409 = vpop.permute.xlu0 %9408
        %9410 = vrot.lane.b32.xlu0 %v9053, 16
        %v9411 = vpop.permute.xlu0 %9410
        %9412 = vrot.lane.b32.xlu0 %v9165, 16
        %v9413 = vpop.permute.xlu0 %9412
        %9414 = vrot.lane.b32.xlu0 %v9277, 16
        %v9415 = vpop.permute.xlu0 %9414
        %9424 = vrot.lane.b32.xlu0 %v8943, 18
        %v9425 = vpop.permute.xlu0 %9424
        %9426 = vrot.lane.b32.xlu0 %v9055, 18
        %v9427 = vpop.permute.xlu0 %9426
        %9428 = vrot.lane.b32.xlu0 %v9167, 18
        %v9429 = vpop.permute.xlu0 %9428
        %9430 = vrot.lane.b32.xlu0 %v9279, 18
        %v9431 = vpop.permute.xlu0 %9430
        %9440 = vrot.lane.b32.xlu0 %v8945, 20
        %v9441 = vpop.permute.xlu0 %9440
        %9442 = vrot.lane.b32.xlu0 %v9057, 20
        %v9443 = vpop.permute.xlu0 %9442
        %9444 = vrot.lane.b32.xlu0 %v9169, 20
        %v9445 = vpop.permute.xlu0 %9444
        %9446 = vrot.lane.b32.xlu0 %v9281, 20
        %v9447 = vpop.permute.xlu0 %9446
        %9456 = vrot.lane.b32.xlu0 %v8947, 22
        %v9457 = vpop.permute.xlu0 %9456
        %9458 = vrot.lane.b32.xlu0 %v9059, 22
        %v9459 = vpop.permute.xlu0 %9458
        %9460 = vrot.lane.b32.xlu0 %v9171, 22
        %v9461 = vpop.permute.xlu0 %9460
        %9462 = vrot.lane.b32.xlu0 %v9283, 22
        %v9463 = vpop.permute.xlu0 %9462
        %9472 = vrot.lane.b32.xlu0 %v8949, 24
        %v9473 = vpop.permute.xlu0 %9472
        %9474 = vrot.lane.b32.xlu0 %v9061, 24
        %v9475 = vpop.permute.xlu0 %9474
        %9476 = vrot.lane.b32.xlu0 %v9173, 24
        %v9477 = vpop.permute.xlu0 %9476
        %9478 = vrot.lane.b32.xlu0 %v9285, 24
        %v9479 = vpop.permute.xlu0 %9478
        %9488 = vrot.lane.b32.xlu0 %v8951, 26
        %v9489 = vpop.permute.xlu0 %9488
        %9490 = vrot.lane.b32.xlu0 %v9063, 26
        %v9491 = vpop.permute.xlu0 %9490
        %9492 = vrot.lane.b32.xlu0 %v9175, 26
        %v9493 = vpop.permute.xlu0 %9492
        %9494 = vrot.lane.b32.xlu0 %v9287, 26
        %v9495 = vpop.permute.xlu0 %9494
        %9504 = vrot.lane.b32.xlu0 %v8953, 28
        %v9505 = vpop.permute.xlu0 %9504
        %9506 = vrot.lane.b32.xlu0 %v9065, 28
        %v9507 = vpop.permute.xlu0 %9506
        %9508 = vrot.lane.b32.xlu0 %v9177, 28
        %v9509 = vpop.permute.xlu0 %9508
        %9510 = vrot.lane.b32.xlu0 %v9289, 28
        %v9511 = vpop.permute.xlu0 %9510
        %9520 = vrot.lane.b32.xlu0 %v8955, 30
        %v9521 = vpop.permute.xlu0 %9520
        %9522 = vrot.lane.b32.xlu0 %v9067, 30
        %v9523 = vpop.permute.xlu0 %9522
        %9524 = vrot.lane.b32.xlu0 %v9179, 30
        %v9525 = vpop.permute.xlu0 %9524
        %9526 = vrot.lane.b32.xlu0 %v9291, 30
        %v9527 = vpop.permute.xlu0 %9526
        %v9532 = vsel %vm1996, %v8493, %v9297
        %v9533 = vsel %vm1996, %v8605, %v9299
        %v9534 = vsel %vm1996, %v8717, %v9301
        %v9535 = vsel %vm1996, %v8829, %v9303
        %v9536 = vsel %vm2001, %v9532, %v9313
        %v9537 = vsel %vm2001, %v9533, %v9315
        %v9538 = vsel %vm2001, %v9534, %v9317
        %v9539 = vsel %vm2001, %v9535, %v9319
        %v9540 = vsel %vm2006, %v9536, %v9329
        %v9541 = vsel %vm2006, %v9537, %v9331
        %v9542 = vsel %vm2006, %v9538, %v9333
        %v9543 = vsel %vm2006, %v9539, %v9335
        %v9544 = vsel %vm2011, %v9540, %v9345
        %v9545 = vsel %vm2011, %v9541, %v9347
        %v9546 = vsel %vm2011, %v9542, %v9349
        %v9547 = vsel %vm2011, %v9543, %v9351
        %v9548 = vsel %vm2016, %v9544, %v9361
        %v9549 = vsel %vm2016, %v9545, %v9363
        %v9550 = vsel %vm2016, %v9546, %v9365
        %v9551 = vsel %vm2016, %v9547, %v9367
        %v9552 = vsel %vm2021, %v9548, %v9377
        %v9553 = vsel %vm2021, %v9549, %v9379
        %v9554 = vsel %vm2021, %v9550, %v9381
        %v9555 = vsel %vm2021, %v9551, %v9383
        %v9556 = vsel %vm2026, %v9552, %v9393
        %v9557 = vsel %vm2026, %v9553, %v9395
        %v9558 = vsel %vm2026, %v9554, %v9397
        %v9559 = vsel %vm2026, %v9555, %v9399
        %v9560 = vsel %vm2031, %v9556, %v9409
        %v9561 = vsel %vm2031, %v9557, %v9411
        %v9562 = vsel %vm2031, %v9558, %v9413
        %v9563 = vsel %vm2031, %v9559, %v9415
        %v9564 = vsel %vm2036, %v9560, %v9425
        %v9565 = vsel %vm2036, %v9561, %v9427
        %v9566 = vsel %vm2036, %v9562, %v9429
        %v9567 = vsel %vm2036, %v9563, %v9431
        %v9568 = vsel %vm2041, %v9564, %v9441
        %v9569 = vsel %vm2041, %v9565, %v9443
        %v9570 = vsel %vm2041, %v9566, %v9445
        %v9571 = vsel %vm2041, %v9567, %v9447
        %v9572 = vsel %vm2046, %v9568, %v9457
        %v9573 = vsel %vm2046, %v9569, %v9459
        %v9574 = vsel %vm2046, %v9570, %v9461
        %v9575 = vsel %vm2046, %v9571, %v9463
        %v9576 = vsel %vm2051, %v9572, %v9473
        %v9577 = vsel %vm2051, %v9573, %v9475
        %v9578 = vsel %vm2051, %v9574, %v9477
        %v9579 = vsel %vm2051, %v9575, %v9479
        %v9580 = vsel %vm2056, %v9576, %v9489
        %v9581 = vsel %vm2056, %v9577, %v9491
        %v9582 = vsel %vm2056, %v9578, %v9493
        %v9583 = vsel %vm2056, %v9579, %v9495
        %v9584 = vsel %vm2061, %v9580, %v9505
        %v9585 = vsel %vm2061, %v9581, %v9507
        %v9586 = vsel %vm2061, %v9582, %v9509
        %v9587 = vsel %vm2061, %v9583, %v9511
        %v9588 = vsel %vm2066, %v9584, %v9521
        %v9589 = vsel %vm2066, %v9585, %v9523
        %v9590 = vsel %vm2066, %v9586, %v9525
        %v9591 = vsel %vm2066, %v9587, %v9527
        %v9592 = vsel %vm2941, %v7922, %v7506
        %v9593 = vsel %vm2941, %v7928, %v7512
        %v9594 = vsel %vm2941, %v7935, %v7519
        %v9595 = vsel %vm2941, %v7941, %v7525
        %v9596 = vsel %vm2941, %v7948, %v7532
        %v9597 = vsel %vm2941, %v7954, %v7538
        %v9598 = vsel %vm2941, %v7961, %v7545
        %v9599 = vsel %vm2941, %v7967, %v7551
        %v9600 = vsel %vm2941, %v7974, %v7558
        %v9601 = vsel %vm2941, %v7980, %v7564
        %v9602 = vsel %vm2941, %v7987, %v7571
        %v9603 = vsel %vm2941, %v7993, %v7577
        %v9604 = vsel %vm2941, %v8000, %v7584
        %v9605 = vsel %vm2941, %v8006, %v7590
        %v9606 = vsel %vm2941, %v8013, %v7597
        %v9607 = vsel %vm2941, %v8019, %v7603
        %v9608 = vsel %vm2941, %v8026, %v7610
        %v9609 = vsel %vm2941, %v8032, %v7616
        %v9610 = vsel %vm2941, %v8039, %v7623
        %v9611 = vsel %vm2941, %v8045, %v7629
        %v9612 = vsel %vm2941, %v8052, %v7636
        %v9613 = vsel %vm2941, %v8058, %v7642
        %v9614 = vsel %vm2941, %v8065, %v7649
        %v9615 = vsel %vm2941, %v8071, %v7655
        %v9616 = vsel %vm2941, %v8078, %v7662
        %v9617 = vsel %vm2941, %v8084, %v7668
        %v9618 = vsel %vm2941, %v8091, %v7675
        %v9619 = vsel %vm2941, %v8097, %v7681
        %v9620 = vsel %vm2941, %v8104, %v7688
        %v9621 = vsel %vm2941, %v8110, %v7694
        %v9622 = vsel %vm2941, %v8117, %v7701
        %v9623 = vsel %vm2941, %v8123, %v7707
        %v9624 = vsel %vm2941, %v8130, %v7714
        %v9625 = vsel %vm2941, %v8136, %v7720
        %v9626 = vsel %vm2941, %v8143, %v7727
        %v9627 = vsel %vm2941, %v8149, %v7733
        %v9628 = vsel %vm2941, %v8156, %v7740
        %v9629 = vsel %vm2941, %v8162, %v7746
        %v9630 = vsel %vm2941, %v8169, %v7753
        %v9631 = vsel %vm2941, %v8175, %v7759
        %v9632 = vsel %vm2941, %v8182, %v7766
        %v9633 = vsel %vm2941, %v8188, %v7772
        %v9634 = vsel %vm2941, %v8195, %v7779
        %v9635 = vsel %vm2941, %v8201, %v7785
        %v9636 = vsel %vm2941, %v8208, %v7792
        %v9637 = vsel %vm2941, %v8214, %v7798
        %v9638 = vsel %vm2941, %v8221, %v7805
        %v9639 = vsel %vm2941, %v8227, %v7811
        %v9640 = vsel %vm2941, %v8234, %v7818
        %v9641 = vsel %vm2941, %v8240, %v7824
        %v9642 = vsel %vm2941, %v8247, %v7831
        %v9643 = vsel %vm2941, %v8253, %v7837
        %v9644 = vsel %vm2941, %v8260, %v7844
        %v9645 = vsel %vm2941, %v8266, %v7850
        %v9646 = vsel %vm2941, %v8273, %v7857
        %v9647 = vsel %vm2941, %v8279, %v7863
        %v9648 = vsel %vm2941, %v8286, %v7870
        %v9649 = vsel %vm2941, %v8292, %v7876
        %v9650 = vsel %vm2941, %v8299, %v7883
        %v9651 = vsel %vm2941, %v8305, %v7889
        %v9652 = vsel %vm2941, %v8312, %v7896
        %v9653 = vsel %vm2941, %v8318, %v7902
        %v9654 = vsel %vm2941, %v8325, %v7909
        %v9655 = vsel %vm2941, %v8331, %v7915
        %v9656 = vrot.slane %v9596, 4
        %v9657 = vsel %vm860, %v9656, %v9592
        %v9658 = vrot.slane %v9592, 4
        %v9659 = vsel %vm860, %v9596, %v9658
        %v9661 = vunpack.c.l.s4 1983009808
        %v9662 = vunpack.c.0.s8 %v9661
        %v9663 = vperm.slane %v9657, %v9662
        %v9665 = vunpack.c.l.s4 1983009808
        %v9666 = vunpack.c.0.s8 %v9665
        %v9667 = vperm.slane %v9659, %v9666
        %v9668 = vrot.slane %v9598, 4
        %v9669 = vsel %vm860, %v9668, %v9594
        %v9670 = vrot.slane %v9594, 4
        %v9671 = vsel %vm860, %v9598, %v9670
        %v9673 = vunpack.c.l.s4 1983009808
        %v9674 = vunpack.c.0.s8 %v9673
        %v9675 = vperm.slane %v9669, %v9674
        %v9677 = vunpack.c.l.s4 1983009808
        %v9678 = vunpack.c.0.s8 %v9677
        %v9679 = vperm.slane %v9671, %v9678
        %v9680 = vrot.slane %v9604, 4
        %v9681 = vsel %vm860, %v9680, %v9600
        %v9682 = vrot.slane %v9600, 4
        %v9683 = vsel %vm860, %v9604, %v9682
        %v9685 = vunpack.c.l.s4 1983009808
        %v9686 = vunpack.c.0.s8 %v9685
        %v9687 = vperm.slane %v9681, %v9686
        %v9689 = vunpack.c.l.s4 1983009808
        %v9690 = vunpack.c.0.s8 %v9689
        %v9691 = vperm.slane %v9683, %v9690
        %v9692 = vrot.slane %v9606, 4
        %v9693 = vsel %vm860, %v9692, %v9602
        %v9694 = vrot.slane %v9602, 4
        %v9695 = vsel %vm860, %v9606, %v9694
        %v9697 = vunpack.c.l.s4 1983009808
        %v9698 = vunpack.c.0.s8 %v9697
        %v9699 = vperm.slane %v9693, %v9698
        %v9701 = vunpack.c.l.s4 1983009808
        %v9702 = vunpack.c.0.s8 %v9701
        %v9703 = vperm.slane %v9695, %v9702
        %v9704 = vrot.slane %v9675, 4
        %v9705 = vsel %vm860, %v9704, %v9663
        %v9706 = vrot.slane %v9663, 4
        %v9707 = vsel %vm860, %v9675, %v9706
        %v9709 = vunpack.c.l.s4 1934713408
        %v9710 = vunpack.c.0.s8 %v9709
        %v9711 = vperm.slane %v9705, %v9710
        %v9713 = vunpack.c.l.s4 1934713408
        %v9714 = vunpack.c.0.s8 %v9713
        %v9715 = vperm.slane %v9707, %v9714
        %v9716 = vrot.slane %v9679, 4
        %v9717 = vsel %vm860, %v9716, %v9667
        %v9718 = vrot.slane %v9667, 4
        %v9719 = vsel %vm860, %v9679, %v9718
        %v9721 = vunpack.c.l.s4 1934713408
        %v9722 = vunpack.c.0.s8 %v9721
        %v9723 = vperm.slane %v9717, %v9722
        %v9725 = vunpack.c.l.s4 1934713408
        %v9726 = vunpack.c.0.s8 %v9725
        %v9727 = vperm.slane %v9719, %v9726
        %v9728 = vrot.slane %v9699, 4
        %v9729 = vsel %vm860, %v9728, %v9687
        %v9730 = vrot.slane %v9687, 4
        %v9731 = vsel %vm860, %v9699, %v9730
        %v9733 = vunpack.c.l.s4 1934713408
        %v9734 = vunpack.c.0.s8 %v9733
        %v9735 = vperm.slane %v9729, %v9734
        %v9737 = vunpack.c.l.s4 1934713408
        %v9738 = vunpack.c.0.s8 %v9737
        %v9739 = vperm.slane %v9731, %v9738
        %v9740 = vrot.slane %v9703, 4
        %v9741 = vsel %vm860, %v9740, %v9691
        %v9742 = vrot.slane %v9691, 4
        %v9743 = vsel %vm860, %v9703, %v9742
        %v9745 = vunpack.c.l.s4 1934713408
        %v9746 = vunpack.c.0.s8 %v9745
        %v9747 = vperm.slane %v9741, %v9746
        %v9749 = vunpack.c.l.s4 1934713408
        %v9750 = vunpack.c.0.s8 %v9749
        %v9751 = vperm.slane %v9743, %v9750
        %v9752 = vrot.slane %v9735, 4
        %v9753 = vsel %vm860, %v9752, %v9711
        %v9754 = vrot.slane %v9711, 4
        %v9755 = vsel %vm860, %v9735, %v9754
        %v9756 = vrot.slane %v9739, 4
        %v9757 = vsel %vm860, %v9756, %v9715
        %v9758 = vrot.slane %v9715, 4
        %v9759 = vsel %vm860, %v9739, %v9758
        %v9760 = vrot.slane %v9747, 4
        %v9761 = vsel %vm860, %v9760, %v9723
        %v9762 = vrot.slane %v9723, 4
        %v9763 = vsel %vm860, %v9747, %v9762
        %v9764 = vrot.slane %v9751, 4
        %v9765 = vsel %vm860, %v9764, %v9727
        %v9766 = vrot.slane %v9727, 4
        %v9767 = vsel %vm860, %v9751, %v9766
        %v9768 = vrot.slane %v9612, 4
        %v9769 = vsel %vm860, %v9768, %v9608
        %v9770 = vrot.slane %v9608, 4
        %v9771 = vsel %vm860, %v9612, %v9770
        %v9773 = vunpack.c.l.s4 1983009808
        %v9774 = vunpack.c.0.s8 %v9773
        %v9775 = vperm.slane %v9769, %v9774
        %v9777 = vunpack.c.l.s4 1983009808
        %v9778 = vunpack.c.0.s8 %v9777
        %v9779 = vperm.slane %v9771, %v9778
        %v9780 = vrot.slane %v9614, 4
        %v9781 = vsel %vm860, %v9780, %v9610
        %v9782 = vrot.slane %v9610, 4
        %v9783 = vsel %vm860, %v9614, %v9782
        %v9785 = vunpack.c.l.s4 1983009808
        %v9786 = vunpack.c.0.s8 %v9785
        %v9787 = vperm.slane %v9781, %v9786
        %v9789 = vunpack.c.l.s4 1983009808
        %v9790 = vunpack.c.0.s8 %v9789
        %v9791 = vperm.slane %v9783, %v9790
        %v9792 = vrot.slane %v9620, 4
        %v9793 = vsel %vm860, %v9792, %v9616
        %v9794 = vrot.slane %v9616, 4
        %v9795 = vsel %vm860, %v9620, %v9794
        %v9797 = vunpack.c.l.s4 1983009808
        %v9798 = vunpack.c.0.s8 %v9797
        %v9799 = vperm.slane %v9793, %v9798
        %v9801 = vunpack.c.l.s4 1983009808
        %v9802 = vunpack.c.0.s8 %v9801
        %v9803 = vperm.slane %v9795, %v9802
        %v9804 = vrot.slane %v9622, 4
        %v9805 = vsel %vm860, %v9804, %v9618
        %v9806 = vrot.slane %v9618, 4
        %v9807 = vsel %vm860, %v9622, %v9806
        %v9809 = vunpack.c.l.s4 1983009808
        %v9810 = vunpack.c.0.s8 %v9809
        %v9811 = vperm.slane %v9805, %v9810
        %v9813 = vunpack.c.l.s4 1983009808
        %v9814 = vunpack.c.0.s8 %v9813
        %v9815 = vperm.slane %v9807, %v9814
        %v9816 = vrot.slane %v9787, 4
        %v9817 = vsel %vm860, %v9816, %v9775
        %v9818 = vrot.slane %v9775, 4
        %v9819 = vsel %vm860, %v9787, %v9818
        %v9821 = vunpack.c.l.s4 1934713408
        %v9822 = vunpack.c.0.s8 %v9821
        %v9823 = vperm.slane %v9817, %v9822
        %v9825 = vunpack.c.l.s4 1934713408
        %v9826 = vunpack.c.0.s8 %v9825
        %v9827 = vperm.slane %v9819, %v9826
        %v9828 = vrot.slane %v9791, 4
        %v9829 = vsel %vm860, %v9828, %v9779
        %v9830 = vrot.slane %v9779, 4
        %v9831 = vsel %vm860, %v9791, %v9830
        %v9833 = vunpack.c.l.s4 1934713408
        %v9834 = vunpack.c.0.s8 %v9833
        %v9835 = vperm.slane %v9829, %v9834
        %v9837 = vunpack.c.l.s4 1934713408
        %v9838 = vunpack.c.0.s8 %v9837
        %v9839 = vperm.slane %v9831, %v9838
        %v9840 = vrot.slane %v9811, 4
        %v9841 = vsel %vm860, %v9840, %v9799
        %v9842 = vrot.slane %v9799, 4
        %v9843 = vsel %vm860, %v9811, %v9842
        %v9845 = vunpack.c.l.s4 1934713408
        %v9846 = vunpack.c.0.s8 %v9845
        %v9847 = vperm.slane %v9841, %v9846
        %v9849 = vunpack.c.l.s4 1934713408
        %v9850 = vunpack.c.0.s8 %v9849
        %v9851 = vperm.slane %v9843, %v9850
        %v9852 = vrot.slane %v9815, 4
        %v9853 = vsel %vm860, %v9852, %v9803
        %v9854 = vrot.slane %v9803, 4
        %v9855 = vsel %vm860, %v9815, %v9854
        %v9857 = vunpack.c.l.s4 1934713408
        %v9858 = vunpack.c.0.s8 %v9857
        %v9859 = vperm.slane %v9853, %v9858
        %v9861 = vunpack.c.l.s4 1934713408
        %v9862 = vunpack.c.0.s8 %v9861
        %v9863 = vperm.slane %v9855, %v9862
        %v9864 = vrot.slane %v9847, 4
        %v9865 = vsel %vm860, %v9864, %v9823
        %v9866 = vrot.slane %v9823, 4
        %v9867 = vsel %vm860, %v9847, %v9866
        %v9868 = vrot.slane %v9851, 4
        %v9869 = vsel %vm860, %v9868, %v9827
        %v9870 = vrot.slane %v9827, 4
        %v9871 = vsel %vm860, %v9851, %v9870
        %v9872 = vrot.slane %v9859, 4
        %v9873 = vsel %vm860, %v9872, %v9835
        %v9874 = vrot.slane %v9835, 4
        %v9875 = vsel %vm860, %v9859, %v9874
        %v9876 = vrot.slane %v9863, 4
        %v9877 = vsel %vm860, %v9876, %v9839
        %v9878 = vrot.slane %v9839, 4
        %v9879 = vsel %vm860, %v9863, %v9878
        %v9880 = vrot.slane %v9628, 4
        %v9881 = vsel %vm860, %v9880, %v9624
        %v9882 = vrot.slane %v9624, 4
        %v9883 = vsel %vm860, %v9628, %v9882
        %v9885 = vunpack.c.l.s4 1983009808
        %v9886 = vunpack.c.0.s8 %v9885
        %v9887 = vperm.slane %v9881, %v9886
        %v9889 = vunpack.c.l.s4 1983009808
        %v9890 = vunpack.c.0.s8 %v9889
        %v9891 = vperm.slane %v9883, %v9890
        %v9892 = vrot.slane %v9630, 4
        %v9893 = vsel %vm860, %v9892, %v9626
        %v9894 = vrot.slane %v9626, 4
        %v9895 = vsel %vm860, %v9630, %v9894
        %v9897 = vunpack.c.l.s4 1983009808
        %v9898 = vunpack.c.0.s8 %v9897
        %v9899 = vperm.slane %v9893, %v9898
        %v9901 = vunpack.c.l.s4 1983009808
        %v9902 = vunpack.c.0.s8 %v9901
        %v9903 = vperm.slane %v9895, %v9902
        %v9904 = vrot.slane %v9636, 4
        %v9905 = vsel %vm860, %v9904, %v9632
        %v9906 = vrot.slane %v9632, 4
        %v9907 = vsel %vm860, %v9636, %v9906
        %v9909 = vunpack.c.l.s4 1983009808
        %v9910 = vunpack.c.0.s8 %v9909
        %v9911 = vperm.slane %v9905, %v9910
        %v9913 = vunpack.c.l.s4 1983009808
        %v9914 = vunpack.c.0.s8 %v9913
        %v9915 = vperm.slane %v9907, %v9914
        %v9916 = vrot.slane %v9638, 4
        %v9917 = vsel %vm860, %v9916, %v9634
        %v9918 = vrot.slane %v9634, 4
        %v9919 = vsel %vm860, %v9638, %v9918
        %v9921 = vunpack.c.l.s4 1983009808
        %v9922 = vunpack.c.0.s8 %v9921
        %v9923 = vperm.slane %v9917, %v9922
        %v9925 = vunpack.c.l.s4 1983009808
        %v9926 = vunpack.c.0.s8 %v9925
        %v9927 = vperm.slane %v9919, %v9926
        %v9928 = vrot.slane %v9899, 4
        %v9929 = vsel %vm860, %v9928, %v9887
        %v9930 = vrot.slane %v9887, 4
        %v9931 = vsel %vm860, %v9899, %v9930
        %v9933 = vunpack.c.l.s4 1934713408
        %v9934 = vunpack.c.0.s8 %v9933
        %v9935 = vperm.slane %v9929, %v9934
        %v9937 = vunpack.c.l.s4 1934713408
        %v9938 = vunpack.c.0.s8 %v9937
        %v9939 = vperm.slane %v9931, %v9938
        %v9940 = vrot.slane %v9903, 4
        %v9941 = vsel %vm860, %v9940, %v9891
        %v9942 = vrot.slane %v9891, 4
        %v9943 = vsel %vm860, %v9903, %v9942
        %v9945 = vunpack.c.l.s4 1934713408
        %v9946 = vunpack.c.0.s8 %v9945
        %v9947 = vperm.slane %v9941, %v9946
        %v9949 = vunpack.c.l.s4 1934713408
        %v9950 = vunpack.c.0.s8 %v9949
        %v9951 = vperm.slane %v9943, %v9950
        %v9952 = vrot.slane %v9923, 4
        %v9953 = vsel %vm860, %v9952, %v9911
        %v9954 = vrot.slane %v9911, 4
        %v9955 = vsel %vm860, %v9923, %v9954
        %v9957 = vunpack.c.l.s4 1934713408
        %v9958 = vunpack.c.0.s8 %v9957
        %v9959 = vperm.slane %v9953, %v9958
        %v9961 = vunpack.c.l.s4 1934713408
        %v9962 = vunpack.c.0.s8 %v9961
        %v9963 = vperm.slane %v9955, %v9962
        %v9964 = vrot.slane %v9927, 4
        %v9965 = vsel %vm860, %v9964, %v9915
        %v9966 = vrot.slane %v9915, 4
        %v9967 = vsel %vm860, %v9927, %v9966
        %v9969 = vunpack.c.l.s4 1934713408
        %v9970 = vunpack.c.0.s8 %v9969
        %v9971 = vperm.slane %v9965, %v9970
        %v9973 = vunpack.c.l.s4 1934713408
        %v9974 = vunpack.c.0.s8 %v9973
        %v9975 = vperm.slane %v9967, %v9974
        %v9976 = vrot.slane %v9959, 4
        %v9977 = vsel %vm860, %v9976, %v9935
        %v9978 = vrot.slane %v9935, 4
        %v9979 = vsel %vm860, %v9959, %v9978
        %v9980 = vrot.slane %v9963, 4
        %v9981 = vsel %vm860, %v9980, %v9939
        %v9982 = vrot.slane %v9939, 4
        %v9983 = vsel %vm860, %v9963, %v9982
        %v9984 = vrot.slane %v9971, 4
        %v9985 = vsel %vm860, %v9984, %v9947
        %v9986 = vrot.slane %v9947, 4
        %v9987 = vsel %vm860, %v9971, %v9986
        %v9988 = vrot.slane %v9975, 4
        %v9989 = vsel %vm860, %v9988, %v9951
        %v9990 = vrot.slane %v9951, 4
        %v9991 = vsel %vm860, %v9975, %v9990
        %v9992 = vrot.slane %v9644, 4
        %v9993 = vsel %vm860, %v9992, %v9640
        %v9994 = vrot.slane %v9640, 4
        %v9995 = vsel %vm860, %v9644, %v9994
        %v9997 = vunpack.c.l.s4 1983009808
        %v9998 = vunpack.c.0.s8 %v9997
        %v9999 = vperm.slane %v9993, %v9998
        %v10001 = vunpack.c.l.s4 1983009808
        %v10002 = vunpack.c.0.s8 %v10001
        %v10003 = vperm.slane %v9995, %v10002
        %v10004 = vrot.slane %v9646, 4
        %v10005 = vsel %vm860, %v10004, %v9642
        %v10006 = vrot.slane %v9642, 4
        %v10007 = vsel %vm860, %v9646, %v10006
        %v10009 = vunpack.c.l.s4 1983009808
        %v10010 = vunpack.c.0.s8 %v10009
        %v10011 = vperm.slane %v10005, %v10010
        %v10013 = vunpack.c.l.s4 1983009808
        %v10014 = vunpack.c.0.s8 %v10013
        %v10015 = vperm.slane %v10007, %v10014
        %v10016 = vrot.slane %v9652, 4
        %v10017 = vsel %vm860, %v10016, %v9648
        %v10018 = vrot.slane %v9648, 4
        %v10019 = vsel %vm860, %v9652, %v10018
        %v10021 = vunpack.c.l.s4 1983009808
        %v10022 = vunpack.c.0.s8 %v10021
        %v10023 = vperm.slane %v10017, %v10022
        %v10025 = vunpack.c.l.s4 1983009808
        %v10026 = vunpack.c.0.s8 %v10025
        %v10027 = vperm.slane %v10019, %v10026
        %v10028 = vrot.slane %v9654, 4
        %v10029 = vsel %vm860, %v10028, %v9650
        %v10030 = vrot.slane %v9650, 4
        %v10031 = vsel %vm860, %v9654, %v10030
        %v10033 = vunpack.c.l.s4 1983009808
        %v10034 = vunpack.c.0.s8 %v10033
        %v10035 = vperm.slane %v10029, %v10034
        %v10037 = vunpack.c.l.s4 1983009808
        %v10038 = vunpack.c.0.s8 %v10037
        %v10039 = vperm.slane %v10031, %v10038
        %v10040 = vrot.slane %v10011, 4
        %v10041 = vsel %vm860, %v10040, %v9999
        %v10042 = vrot.slane %v9999, 4
        %v10043 = vsel %vm860, %v10011, %v10042
        %v10045 = vunpack.c.l.s4 1934713408
        %v10046 = vunpack.c.0.s8 %v10045
        %v10047 = vperm.slane %v10041, %v10046
        %v10049 = vunpack.c.l.s4 1934713408
        %v10050 = vunpack.c.0.s8 %v10049
        %v10051 = vperm.slane %v10043, %v10050
        %v10052 = vrot.slane %v10015, 4
        %v10053 = vsel %vm860, %v10052, %v10003
        %v10054 = vrot.slane %v10003, 4
        %v10055 = vsel %vm860, %v10015, %v10054
        %v10057 = vunpack.c.l.s4 1934713408
        %v10058 = vunpack.c.0.s8 %v10057
        %v10059 = vperm.slane %v10053, %v10058
        %v10061 = vunpack.c.l.s4 1934713408
        %v10062 = vunpack.c.0.s8 %v10061
        %v10063 = vperm.slane %v10055, %v10062
        %v10064 = vrot.slane %v10035, 4
        %v10065 = vsel %vm860, %v10064, %v10023
        %v10066 = vrot.slane %v10023, 4
        %v10067 = vsel %vm860, %v10035, %v10066
        %v10069 = vunpack.c.l.s4 1934713408
        %v10070 = vunpack.c.0.s8 %v10069
        %v10071 = vperm.slane %v10065, %v10070
        %v10073 = vunpack.c.l.s4 1934713408
        %v10074 = vunpack.c.0.s8 %v10073
        %v10075 = vperm.slane %v10067, %v10074
        %v10076 = vrot.slane %v10039, 4
        %v10077 = vsel %vm860, %v10076, %v10027
        %v10078 = vrot.slane %v10027, 4
        %v10079 = vsel %vm860, %v10039, %v10078
        %v10081 = vunpack.c.l.s4 1934713408
        %v10082 = vunpack.c.0.s8 %v10081
        %v10083 = vperm.slane %v10077, %v10082
        %v10085 = vunpack.c.l.s4 1934713408
        %v10086 = vunpack.c.0.s8 %v10085
        %v10087 = vperm.slane %v10079, %v10086
        %v10088 = vrot.slane %v10071, 4
        %v10089 = vsel %vm860, %v10088, %v10047
        %v10090 = vrot.slane %v10047, 4
        %v10091 = vsel %vm860, %v10071, %v10090
        %v10092 = vrot.slane %v10075, 4
        %v10093 = vsel %vm860, %v10092, %v10051
        %v10094 = vrot.slane %v10051, 4
        %v10095 = vsel %vm860, %v10075, %v10094
        %v10096 = vrot.slane %v10083, 4
        %v10097 = vsel %vm860, %v10096, %v10059
        %v10098 = vrot.slane %v10059, 4
        %v10099 = vsel %vm860, %v10083, %v10098
        %v10100 = vrot.slane %v10087, 4
        %v10101 = vsel %vm860, %v10100, %v10063
        %v10102 = vrot.slane %v10063, 4
        %v10103 = vsel %vm860, %v10087, %v10102
        %v10104 = vrot.slane %v9597, 4
        %v10105 = vsel %vm860, %v10104, %v9593
        %v10106 = vrot.slane %v9593, 4
        %v10107 = vsel %vm860, %v9597, %v10106
        %v10109 = vunpack.c.l.s4 1983009808
        %v10110 = vunpack.c.0.s8 %v10109
        %v10111 = vperm.slane %v10105, %v10110
        %v10113 = vunpack.c.l.s4 1983009808
        %v10114 = vunpack.c.0.s8 %v10113
        %v10115 = vperm.slane %v10107, %v10114
        %v10116 = vrot.slane %v9599, 4
        %v10117 = vsel %vm860, %v10116, %v9595
        %v10118 = vrot.slane %v9595, 4
        %v10119 = vsel %vm860, %v9599, %v10118
        %v10121 = vunpack.c.l.s4 1983009808
        %v10122 = vunpack.c.0.s8 %v10121
        %v10123 = vperm.slane %v10117, %v10122
        %v10125 = vunpack.c.l.s4 1983009808
        %v10126 = vunpack.c.0.s8 %v10125
        %v10127 = vperm.slane %v10119, %v10126
        %v10128 = vrot.slane %v9605, 4
        %v10129 = vsel %vm860, %v10128, %v9601
        %v10130 = vrot.slane %v9601, 4
        %v10131 = vsel %vm860, %v9605, %v10130
        %v10133 = vunpack.c.l.s4 1983009808
        %v10134 = vunpack.c.0.s8 %v10133
        %v10135 = vperm.slane %v10129, %v10134
        %v10137 = vunpack.c.l.s4 1983009808
        %v10138 = vunpack.c.0.s8 %v10137
        %v10139 = vperm.slane %v10131, %v10138
        %v10140 = vrot.slane %v9607, 4
        %v10141 = vsel %vm860, %v10140, %v9603
        %v10142 = vrot.slane %v9603, 4
        %v10143 = vsel %vm860, %v9607, %v10142
        %v10145 = vunpack.c.l.s4 1983009808
        %v10146 = vunpack.c.0.s8 %v10145
        %v10147 = vperm.slane %v10141, %v10146
        %v10149 = vunpack.c.l.s4 1983009808
        %v10150 = vunpack.c.0.s8 %v10149
        %v10151 = vperm.slane %v10143, %v10150
        %v10152 = vrot.slane %v10123, 4
        %v10153 = vsel %vm860, %v10152, %v10111
        %v10154 = vrot.slane %v10111, 4
        %v10155 = vsel %vm860, %v10123, %v10154
        %v10157 = vunpack.c.l.s4 1934713408
        %v10158 = vunpack.c.0.s8 %v10157
        %v10159 = vperm.slane %v10153, %v10158
        %v10161 = vunpack.c.l.s4 1934713408
        %v10162 = vunpack.c.0.s8 %v10161
        %v10163 = vperm.slane %v10155, %v10162
        %v10164 = vrot.slane %v10127, 4
        %v10165 = vsel %vm860, %v10164, %v10115
        %v10166 = vrot.slane %v10115, 4
        %v10167 = vsel %vm860, %v10127, %v10166
        %v10169 = vunpack.c.l.s4 1934713408
        %v10170 = vunpack.c.0.s8 %v10169
        %v10171 = vperm.slane %v10165, %v10170
        %v10173 = vunpack.c.l.s4 1934713408
        %v10174 = vunpack.c.0.s8 %v10173
        %v10175 = vperm.slane %v10167, %v10174
        %v10176 = vrot.slane %v10147, 4
        %v10177 = vsel %vm860, %v10176, %v10135
        %v10178 = vrot.slane %v10135, 4
        %v10179 = vsel %vm860, %v10147, %v10178
        %v10181 = vunpack.c.l.s4 1934713408
        %v10182 = vunpack.c.0.s8 %v10181
        %v10183 = vperm.slane %v10177, %v10182
        %v10185 = vunpack.c.l.s4 1934713408
        %v10186 = vunpack.c.0.s8 %v10185
        %v10187 = vperm.slane %v10179, %v10186
        %v10188 = vrot.slane %v10151, 4
        %v10189 = vsel %vm860, %v10188, %v10139
        %v10190 = vrot.slane %v10139, 4
        %v10191 = vsel %vm860, %v10151, %v10190
        %v10193 = vunpack.c.l.s4 1934713408
        %v10194 = vunpack.c.0.s8 %v10193
        %v10195 = vperm.slane %v10189, %v10194
        %v10197 = vunpack.c.l.s4 1934713408
        %v10198 = vunpack.c.0.s8 %v10197
        %v10199 = vperm.slane %v10191, %v10198
        %v10200 = vrot.slane %v10183, 4
        %v10201 = vsel %vm860, %v10200, %v10159
        %v10202 = vrot.slane %v10159, 4
        %v10203 = vsel %vm860, %v10183, %v10202
        %v10204 = vrot.slane %v10187, 4
        %v10205 = vsel %vm860, %v10204, %v10163
        %v10206 = vrot.slane %v10163, 4
        %v10207 = vsel %vm860, %v10187, %v10206
        %v10208 = vrot.slane %v10195, 4
        %v10209 = vsel %vm860, %v10208, %v10171
        %v10210 = vrot.slane %v10171, 4
        %v10211 = vsel %vm860, %v10195, %v10210
        %v10212 = vrot.slane %v10199, 4
        %v10213 = vsel %vm860, %v10212, %v10175
        %v10214 = vrot.slane %v10175, 4
        %v10215 = vsel %vm860, %v10199, %v10214
        %v10216 = vrot.slane %v9613, 4
        %v10217 = vsel %vm860, %v10216, %v9609
        %v10218 = vrot.slane %v9609, 4
        %v10219 = vsel %vm860, %v9613, %v10218
        %v10221 = vunpack.c.l.s4 1983009808
        %v10222 = vunpack.c.0.s8 %v10221
        %v10223 = vperm.slane %v10217, %v10222
        %v10225 = vunpack.c.l.s4 1983009808
        %v10226 = vunpack.c.0.s8 %v10225
        %v10227 = vperm.slane %v10219, %v10226
        %v10228 = vrot.slane %v9615, 4
        %v10229 = vsel %vm860, %v10228, %v9611
        %v10230 = vrot.slane %v9611, 4
        %v10231 = vsel %vm860, %v9615, %v10230
        %v10233 = vunpack.c.l.s4 1983009808
        %v10234 = vunpack.c.0.s8 %v10233
        %v10235 = vperm.slane %v10229, %v10234
        %v10237 = vunpack.c.l.s4 1983009808
        %v10238 = vunpack.c.0.s8 %v10237
        %v10239 = vperm.slane %v10231, %v10238
        %v10240 = vrot.slane %v9621, 4
        %v10241 = vsel %vm860, %v10240, %v9617
        %v10242 = vrot.slane %v9617, 4
        %v10243 = vsel %vm860, %v9621, %v10242
        %v10245 = vunpack.c.l.s4 1983009808
        %v10246 = vunpack.c.0.s8 %v10245
        %v10247 = vperm.slane %v10241, %v10246
        %v10249 = vunpack.c.l.s4 1983009808
        %v10250 = vunpack.c.0.s8 %v10249
        %v10251 = vperm.slane %v10243, %v10250
        %v10252 = vrot.slane %v9623, 4
        %v10253 = vsel %vm860, %v10252, %v9619
        %v10254 = vrot.slane %v9619, 4
        %v10255 = vsel %vm860, %v9623, %v10254
        %v10257 = vunpack.c.l.s4 1983009808
        %v10258 = vunpack.c.0.s8 %v10257
        %v10259 = vperm.slane %v10253, %v10258
        %v10261 = vunpack.c.l.s4 1983009808
        %v10262 = vunpack.c.0.s8 %v10261
        %v10263 = vperm.slane %v10255, %v10262
        %v10264 = vrot.slane %v10235, 4
        %v10265 = vsel %vm860, %v10264, %v10223
        %v10266 = vrot.slane %v10223, 4
        %v10267 = vsel %vm860, %v10235, %v10266
        %v10269 = vunpack.c.l.s4 1934713408
        %v10270 = vunpack.c.0.s8 %v10269
        %v10271 = vperm.slane %v10265, %v10270
        %v10273 = vunpack.c.l.s4 1934713408
        %v10274 = vunpack.c.0.s8 %v10273
        %v10275 = vperm.slane %v10267, %v10274
        %v10276 = vrot.slane %v10239, 4
        %v10277 = vsel %vm860, %v10276, %v10227
        %v10278 = vrot.slane %v10227, 4
        %v10279 = vsel %vm860, %v10239, %v10278
        %v10281 = vunpack.c.l.s4 1934713408
        %v10282 = vunpack.c.0.s8 %v10281
        %v10283 = vperm.slane %v10277, %v10282
        %v10285 = vunpack.c.l.s4 1934713408
        %v10286 = vunpack.c.0.s8 %v10285
        %v10287 = vperm.slane %v10279, %v10286
        %v10288 = vrot.slane %v10259, 4
        %v10289 = vsel %vm860, %v10288, %v10247
        %v10290 = vrot.slane %v10247, 4
        %v10291 = vsel %vm860, %v10259, %v10290
        %v10293 = vunpack.c.l.s4 1934713408
        %v10294 = vunpack.c.0.s8 %v10293
        %v10295 = vperm.slane %v10289, %v10294
        %v10297 = vunpack.c.l.s4 1934713408
        %v10298 = vunpack.c.0.s8 %v10297
        %v10299 = vperm.slane %v10291, %v10298
        %v10300 = vrot.slane %v10263, 4
        %v10301 = vsel %vm860, %v10300, %v10251
        %v10302 = vrot.slane %v10251, 4
        %v10303 = vsel %vm860, %v10263, %v10302
        %v10305 = vunpack.c.l.s4 1934713408
        %v10306 = vunpack.c.0.s8 %v10305
        %v10307 = vperm.slane %v10301, %v10306
        %v10309 = vunpack.c.l.s4 1934713408
        %v10310 = vunpack.c.0.s8 %v10309
        %v10311 = vperm.slane %v10303, %v10310
        %v10312 = vrot.slane %v10295, 4
        %v10313 = vsel %vm860, %v10312, %v10271
        %v10314 = vrot.slane %v10271, 4
        %v10315 = vsel %vm860, %v10295, %v10314
        %v10316 = vrot.slane %v10299, 4
        %v10317 = vsel %vm860, %v10316, %v10275
        %v10318 = vrot.slane %v10275, 4
        %v10319 = vsel %vm860, %v10299, %v10318
        %v10320 = vrot.slane %v10307, 4
        %v10321 = vsel %vm860, %v10320, %v10283
        %v10322 = vrot.slane %v10283, 4
        %v10323 = vsel %vm860, %v10307, %v10322
        %v10324 = vrot.slane %v10311, 4
        %v10325 = vsel %vm860, %v10324, %v10287
        %v10326 = vrot.slane %v10287, 4
        %v10327 = vsel %vm860, %v10311, %v10326
        %v10328 = vrot.slane %v9629, 4
        %v10329 = vsel %vm860, %v10328, %v9625
        %v10330 = vrot.slane %v9625, 4
        %v10331 = vsel %vm860, %v9629, %v10330
        %v10333 = vunpack.c.l.s4 1983009808
        %v10334 = vunpack.c.0.s8 %v10333
        %v10335 = vperm.slane %v10329, %v10334
        %v10337 = vunpack.c.l.s4 1983009808
        %v10338 = vunpack.c.0.s8 %v10337
        %v10339 = vperm.slane %v10331, %v10338
        %v10340 = vrot.slane %v9631, 4
        %v10341 = vsel %vm860, %v10340, %v9627
        %v10342 = vrot.slane %v9627, 4
        %v10343 = vsel %vm860, %v9631, %v10342
        %v10345 = vunpack.c.l.s4 1983009808
        %v10346 = vunpack.c.0.s8 %v10345
        %v10347 = vperm.slane %v10341, %v10346
        %v10349 = vunpack.c.l.s4 1983009808
        %v10350 = vunpack.c.0.s8 %v10349
        %v10351 = vperm.slane %v10343, %v10350
        %v10352 = vrot.slane %v9637, 4
        %v10353 = vsel %vm860, %v10352, %v9633
        %v10354 = vrot.slane %v9633, 4
        %v10355 = vsel %vm860, %v9637, %v10354
        %v10357 = vunpack.c.l.s4 1983009808
        %v10358 = vunpack.c.0.s8 %v10357
        %v10359 = vperm.slane %v10353, %v10358
        %v10361 = vunpack.c.l.s4 1983009808
        %v10362 = vunpack.c.0.s8 %v10361
        %v10363 = vperm.slane %v10355, %v10362
        %v10364 = vrot.slane %v9639, 4
        %v10365 = vsel %vm860, %v10364, %v9635
        %v10366 = vrot.slane %v9635, 4
        %v10367 = vsel %vm860, %v9639, %v10366
        %v10369 = vunpack.c.l.s4 1983009808
        %v10370 = vunpack.c.0.s8 %v10369
        %v10371 = vperm.slane %v10365, %v10370
        %v10373 = vunpack.c.l.s4 1983009808
        %v10374 = vunpack.c.0.s8 %v10373
        %v10375 = vperm.slane %v10367, %v10374
        %v10376 = vrot.slane %v10347, 4
        %v10377 = vsel %vm860, %v10376, %v10335
        %v10378 = vrot.slane %v10335, 4
        %v10379 = vsel %vm860, %v10347, %v10378
        %v10381 = vunpack.c.l.s4 1934713408
        %v10382 = vunpack.c.0.s8 %v10381
        %v10383 = vperm.slane %v10377, %v10382
        %v10385 = vunpack.c.l.s4 1934713408
        %v10386 = vunpack.c.0.s8 %v10385
        %v10387 = vperm.slane %v10379, %v10386
        %v10388 = vrot.slane %v10351, 4
        %v10389 = vsel %vm860, %v10388, %v10339
        %v10390 = vrot.slane %v10339, 4
        %v10391 = vsel %vm860, %v10351, %v10390
        %v10393 = vunpack.c.l.s4 1934713408
        %v10394 = vunpack.c.0.s8 %v10393
        %v10395 = vperm.slane %v10389, %v10394
        %v10397 = vunpack.c.l.s4 1934713408
        %v10398 = vunpack.c.0.s8 %v10397
        %v10399 = vperm.slane %v10391, %v10398
        %v10400 = vrot.slane %v10371, 4
        %v10401 = vsel %vm860, %v10400, %v10359
        %v10402 = vrot.slane %v10359, 4
        %v10403 = vsel %vm860, %v10371, %v10402
        %v10405 = vunpack.c.l.s4 1934713408
        %v10406 = vunpack.c.0.s8 %v10405
        %v10407 = vperm.slane %v10401, %v10406
        %v10409 = vunpack.c.l.s4 1934713408
        %v10410 = vunpack.c.0.s8 %v10409
        %v10411 = vperm.slane %v10403, %v10410
        %v10412 = vrot.slane %v10375, 4
        %v10413 = vsel %vm860, %v10412, %v10363
        %v10414 = vrot.slane %v10363, 4
        %v10415 = vsel %vm860, %v10375, %v10414
        %v10417 = vunpack.c.l.s4 1934713408
        %v10418 = vunpack.c.0.s8 %v10417
        %v10419 = vperm.slane %v10413, %v10418
        %v10421 = vunpack.c.l.s4 1934713408
        %v10422 = vunpack.c.0.s8 %v10421
        %v10423 = vperm.slane %v10415, %v10422
        %v10424 = vrot.slane %v10407, 4
        %v10425 = vsel %vm860, %v10424, %v10383
        %v10426 = vrot.slane %v10383, 4
        %v10427 = vsel %vm860, %v10407, %v10426
        %v10428 = vrot.slane %v10411, 4
        %v10429 = vsel %vm860, %v10428, %v10387
        %v10430 = vrot.slane %v10387, 4
        %v10431 = vsel %vm860, %v10411, %v10430
        %v10432 = vrot.slane %v10419, 4
        %v10433 = vsel %vm860, %v10432, %v10395
        %v10434 = vrot.slane %v10395, 4
        %v10435 = vsel %vm860, %v10419, %v10434
        %v10436 = vrot.slane %v10423, 4
        %v10437 = vsel %vm860, %v10436, %v10399
        %v10438 = vrot.slane %v10399, 4
        %v10439 = vsel %vm860, %v10423, %v10438
        %v10440 = vrot.slane %v9645, 4
        %v10441 = vsel %vm860, %v10440, %v9641
        %v10442 = vrot.slane %v9641, 4
        %v10443 = vsel %vm860, %v9645, %v10442
        %v10445 = vunpack.c.l.s4 1983009808
        %v10446 = vunpack.c.0.s8 %v10445
        %v10447 = vperm.slane %v10441, %v10446
        %v10449 = vunpack.c.l.s4 1983009808
        %v10450 = vunpack.c.0.s8 %v10449
        %v10451 = vperm.slane %v10443, %v10450
        %v10452 = vrot.slane %v9647, 4
        %v10453 = vsel %vm860, %v10452, %v9643
        %v10454 = vrot.slane %v9643, 4
        %v10455 = vsel %vm860, %v9647, %v10454
        %v10457 = vunpack.c.l.s4 1983009808
        %v10458 = vunpack.c.0.s8 %v10457
        %v10459 = vperm.slane %v10453, %v10458
        %v10461 = vunpack.c.l.s4 1983009808
        %v10462 = vunpack.c.0.s8 %v10461
        %v10463 = vperm.slane %v10455, %v10462
        %v10464 = vrot.slane %v9653, 4
        %v10465 = vsel %vm860, %v10464, %v9649
        %v10466 = vrot.slane %v9649, 4
        %v10467 = vsel %vm860, %v9653, %v10466
        %v10469 = vunpack.c.l.s4 1983009808
        %v10470 = vunpack.c.0.s8 %v10469
        %v10471 = vperm.slane %v10465, %v10470
        %v10473 = vunpack.c.l.s4 1983009808
        %v10474 = vunpack.c.0.s8 %v10473
        %v10475 = vperm.slane %v10467, %v10474
        %v10476 = vrot.slane %v9655, 4
        %v10477 = vsel %vm860, %v10476, %v9651
        %v10478 = vrot.slane %v9651, 4
        %v10479 = vsel %vm860, %v9655, %v10478
        %v10481 = vunpack.c.l.s4 1983009808
        %v10482 = vunpack.c.0.s8 %v10481
        %v10483 = vperm.slane %v10477, %v10482
        %v10485 = vunpack.c.l.s4 1983009808
        %v10486 = vunpack.c.0.s8 %v10485
        %v10487 = vperm.slane %v10479, %v10486
        %v10488 = vrot.slane %v10459, 4
        %v10489 = vsel %vm860, %v10488, %v10447
        %v10490 = vrot.slane %v10447, 4
        %v10491 = vsel %vm860, %v10459, %v10490
        %v10493 = vunpack.c.l.s4 1934713408
        %v10494 = vunpack.c.0.s8 %v10493
        %v10495 = vperm.slane %v10489, %v10494
        %v10497 = vunpack.c.l.s4 1934713408
        %v10498 = vunpack.c.0.s8 %v10497
        %v10499 = vperm.slane %v10491, %v10498
        %v10500 = vrot.slane %v10463, 4
        %v10501 = vsel %vm860, %v10500, %v10451
        %v10502 = vrot.slane %v10451, 4
        %v10503 = vsel %vm860, %v10463, %v10502
        %v10505 = vunpack.c.l.s4 1934713408
        %v10506 = vunpack.c.0.s8 %v10505
        %v10507 = vperm.slane %v10501, %v10506
        %v10509 = vunpack.c.l.s4 1934713408
        %v10510 = vunpack.c.0.s8 %v10509
        %v10511 = vperm.slane %v10503, %v10510
        %v10512 = vrot.slane %v10483, 4
        %v10513 = vsel %vm860, %v10512, %v10471
        %v10514 = vrot.slane %v10471, 4
        %v10515 = vsel %vm860, %v10483, %v10514
        %v10517 = vunpack.c.l.s4 1934713408
        %v10518 = vunpack.c.0.s8 %v10517
        %v10519 = vperm.slane %v10513, %v10518
        %v10521 = vunpack.c.l.s4 1934713408
        %v10522 = vunpack.c.0.s8 %v10521
        %v10523 = vperm.slane %v10515, %v10522
        %v10524 = vrot.slane %v10487, 4
        %v10525 = vsel %vm860, %v10524, %v10475
        %v10526 = vrot.slane %v10475, 4
        %v10527 = vsel %vm860, %v10487, %v10526
        %v10529 = vunpack.c.l.s4 1934713408
        %v10530 = vunpack.c.0.s8 %v10529
        %v10531 = vperm.slane %v10525, %v10530
        %v10533 = vunpack.c.l.s4 1934713408
        %v10534 = vunpack.c.0.s8 %v10533
        %v10535 = vperm.slane %v10527, %v10534
        %v10536 = vrot.slane %v10519, 4
        %v10537 = vsel %vm860, %v10536, %v10495
        %v10538 = vrot.slane %v10495, 4
        %v10539 = vsel %vm860, %v10519, %v10538
        %v10540 = vrot.slane %v10523, 4
        %v10541 = vsel %vm860, %v10540, %v10499
        %v10542 = vrot.slane %v10499, 4
        %v10543 = vsel %vm860, %v10523, %v10542
        %v10544 = vrot.slane %v10531, 4
        %v10545 = vsel %vm860, %v10544, %v10507
        %v10546 = vrot.slane %v10507, 4
        %v10547 = vsel %vm860, %v10531, %v10546
        %v10548 = vrot.slane %v10535, 4
        %v10549 = vsel %vm860, %v10548, %v10511
        %v10550 = vrot.slane %v10511, 4
        %v10551 = vsel %vm860, %v10535, %v10550
        %10556 = vrot.lane.b32.xlu0 %v9755, 2
        %v10557 = vpop.permute.xlu0 %10556
        %10558 = vrot.lane.b32.xlu0 %v9867, 2
        %v10559 = vpop.permute.xlu0 %10558
        %10560 = vrot.lane.b32.xlu0 %v9979, 2
        %v10561 = vpop.permute.xlu0 %10560
        %10562 = vrot.lane.b32.xlu0 %v10091, 2
        %v10563 = vpop.permute.xlu0 %10562
        %10572 = vrot.lane.b32.xlu0 %v9757, 4
        %v10573 = vpop.permute.xlu0 %10572
        %10574 = vrot.lane.b32.xlu0 %v9869, 4
        %v10575 = vpop.permute.xlu0 %10574
        %10576 = vrot.lane.b32.xlu0 %v9981, 4
        %v10577 = vpop.permute.xlu0 %10576
        %10578 = vrot.lane.b32.xlu0 %v10093, 4
        %v10579 = vpop.permute.xlu0 %10578
        %10588 = vrot.lane.b32.xlu0 %v9759, 6
        %v10589 = vpop.permute.xlu0 %10588
        %10590 = vrot.lane.b32.xlu0 %v9871, 6
        %v10591 = vpop.permute.xlu0 %10590
        %10592 = vrot.lane.b32.xlu0 %v9983, 6
        %v10593 = vpop.permute.xlu0 %10592
        %10594 = vrot.lane.b32.xlu0 %v10095, 6
        %v10595 = vpop.permute.xlu0 %10594
        %10604 = vrot.lane.b32.xlu0 %v9761, 8
        %v10605 = vpop.permute.xlu0 %10604
        %10606 = vrot.lane.b32.xlu0 %v9873, 8
        %v10607 = vpop.permute.xlu0 %10606
        %10608 = vrot.lane.b32.xlu0 %v9985, 8
        %v10609 = vpop.permute.xlu0 %10608
        %10610 = vrot.lane.b32.xlu0 %v10097, 8
        %v10611 = vpop.permute.xlu0 %10610
        %10620 = vrot.lane.b32.xlu0 %v9763, 10
        %v10621 = vpop.permute.xlu0 %10620
        %10622 = vrot.lane.b32.xlu0 %v9875, 10
        %v10623 = vpop.permute.xlu0 %10622
        %10624 = vrot.lane.b32.xlu0 %v9987, 10
        %v10625 = vpop.permute.xlu0 %10624
        %10626 = vrot.lane.b32.xlu0 %v10099, 10
        %v10627 = vpop.permute.xlu0 %10626
        %10636 = vrot.lane.b32.xlu0 %v9765, 12
        %v10637 = vpop.permute.xlu0 %10636
        %10638 = vrot.lane.b32.xlu0 %v9877, 12
        %v10639 = vpop.permute.xlu0 %10638
        %10640 = vrot.lane.b32.xlu0 %v9989, 12
        %v10641 = vpop.permute.xlu0 %10640
        %10642 = vrot.lane.b32.xlu0 %v10101, 12
        %v10643 = vpop.permute.xlu0 %10642
        %10652 = vrot.lane.b32.xlu0 %v9767, 14
        %v10653 = vpop.permute.xlu0 %10652
        %10654 = vrot.lane.b32.xlu0 %v9879, 14
        %v10655 = vpop.permute.xlu0 %10654
        %10656 = vrot.lane.b32.xlu0 %v9991, 14
        %v10657 = vpop.permute.xlu0 %10656
        %10658 = vrot.lane.b32.xlu0 %v10103, 14
        %v10659 = vpop.permute.xlu0 %10658
        %10668 = vrot.lane.b32.xlu0 %v10201, 16
        %v10669 = vpop.permute.xlu0 %10668
        %10670 = vrot.lane.b32.xlu0 %v10313, 16
        %v10671 = vpop.permute.xlu0 %10670
        %10672 = vrot.lane.b32.xlu0 %v10425, 16
        %v10673 = vpop.permute.xlu0 %10672
        %10674 = vrot.lane.b32.xlu0 %v10537, 16
        %v10675 = vpop.permute.xlu0 %10674
        %10684 = vrot.lane.b32.xlu0 %v10203, 18
        %v10685 = vpop.permute.xlu0 %10684
        %10686 = vrot.lane.b32.xlu0 %v10315, 18
        %v10687 = vpop.permute.xlu0 %10686
        %10688 = vrot.lane.b32.xlu0 %v10427, 18
        %v10689 = vpop.permute.xlu0 %10688
        %10690 = vrot.lane.b32.xlu0 %v10539, 18
        %v10691 = vpop.permute.xlu0 %10690
        %10700 = vrot.lane.b32.xlu0 %v10205, 20
        %v10701 = vpop.permute.xlu0 %10700
        %10702 = vrot.lane.b32.xlu0 %v10317, 20
        %v10703 = vpop.permute.xlu0 %10702
        %10704 = vrot.lane.b32.xlu0 %v10429, 20
        %v10705 = vpop.permute.xlu0 %10704
        %10706 = vrot.lane.b32.xlu0 %v10541, 20
        %v10707 = vpop.permute.xlu0 %10706
        %10716 = vrot.lane.b32.xlu0 %v10207, 22
        %v10717 = vpop.permute.xlu0 %10716
        %10718 = vrot.lane.b32.xlu0 %v10319, 22
        %v10719 = vpop.permute.xlu0 %10718
        %10720 = vrot.lane.b32.xlu0 %v10431, 22
        %v10721 = vpop.permute.xlu0 %10720
        %10722 = vrot.lane.b32.xlu0 %v10543, 22
        %v10723 = vpop.permute.xlu0 %10722
        %10732 = vrot.lane.b32.xlu0 %v10209, 24
        %v10733 = vpop.permute.xlu0 %10732
        %10734 = vrot.lane.b32.xlu0 %v10321, 24
        %v10735 = vpop.permute.xlu0 %10734
        %10736 = vrot.lane.b32.xlu0 %v10433, 24
        %v10737 = vpop.permute.xlu0 %10736
        %10738 = vrot.lane.b32.xlu0 %v10545, 24
        %v10739 = vpop.permute.xlu0 %10738
        %10748 = vrot.lane.b32.xlu0 %v10211, 26
        %v10749 = vpop.permute.xlu0 %10748
        %10750 = vrot.lane.b32.xlu0 %v10323, 26
        %v10751 = vpop.permute.xlu0 %10750
        %10752 = vrot.lane.b32.xlu0 %v10435, 26
        %v10753 = vpop.permute.xlu0 %10752
        %10754 = vrot.lane.b32.xlu0 %v10547, 26
        %v10755 = vpop.permute.xlu0 %10754
        %10764 = vrot.lane.b32.xlu0 %v10213, 28
        %v10765 = vpop.permute.xlu0 %10764
        %10766 = vrot.lane.b32.xlu0 %v10325, 28
        %v10767 = vpop.permute.xlu0 %10766
        %10768 = vrot.lane.b32.xlu0 %v10437, 28
        %v10769 = vpop.permute.xlu0 %10768
        %10770 = vrot.lane.b32.xlu0 %v10549, 28
        %v10771 = vpop.permute.xlu0 %10770
        %10780 = vrot.lane.b32.xlu0 %v10215, 30
        %v10781 = vpop.permute.xlu0 %10780
        %10782 = vrot.lane.b32.xlu0 %v10327, 30
        %v10783 = vpop.permute.xlu0 %10782
        %10784 = vrot.lane.b32.xlu0 %v10439, 30
        %v10785 = vpop.permute.xlu0 %10784
        %10786 = vrot.lane.b32.xlu0 %v10551, 30
        %v10787 = vpop.permute.xlu0 %10786
        %v10792 = vsel %vm1996, %v9753, %v10557
        %v10793 = vsel %vm1996, %v9865, %v10559
        %v10794 = vsel %vm1996, %v9977, %v10561
        %v10795 = vsel %vm1996, %v10089, %v10563
        %v10796 = vsel %vm2001, %v10792, %v10573
        %v10797 = vsel %vm2001, %v10793, %v10575
        %v10798 = vsel %vm2001, %v10794, %v10577
        %v10799 = vsel %vm2001, %v10795, %v10579
        %v10800 = vsel %vm2006, %v10796, %v10589
        %v10801 = vsel %vm2006, %v10797, %v10591
        %v10802 = vsel %vm2006, %v10798, %v10593
        %v10803 = vsel %vm2006, %v10799, %v10595
        %v10804 = vsel %vm2011, %v10800, %v10605
        %v10805 = vsel %vm2011, %v10801, %v10607
        %v10806 = vsel %vm2011, %v10802, %v10609
        %v10807 = vsel %vm2011, %v10803, %v10611
        %v10808 = vsel %vm2016, %v10804, %v10621
        %v10809 = vsel %vm2016, %v10805, %v10623
        %v10810 = vsel %vm2016, %v10806, %v10625
        %v10811 = vsel %vm2016, %v10807, %v10627
        %v10812 = vsel %vm2021, %v10808, %v10637
        %v10813 = vsel %vm2021, %v10809, %v10639
        %v10814 = vsel %vm2021, %v10810, %v10641
        %v10815 = vsel %vm2021, %v10811, %v10643
        %v10816 = vsel %vm2026, %v10812, %v10653
        %v10817 = vsel %vm2026, %v10813, %v10655
        %v10818 = vsel %vm2026, %v10814, %v10657
        %v10819 = vsel %vm2026, %v10815, %v10659
        %v10820 = vsel %vm2031, %v10816, %v10669
        %v10821 = vsel %vm2031, %v10817, %v10671
        %v10822 = vsel %vm2031, %v10818, %v10673
        %v10823 = vsel %vm2031, %v10819, %v10675
        %v10824 = vsel %vm2036, %v10820, %v10685
        %v10825 = vsel %vm2036, %v10821, %v10687
        %v10826 = vsel %vm2036, %v10822, %v10689
        %v10827 = vsel %vm2036, %v10823, %v10691
        %v10828 = vsel %vm2041, %v10824, %v10701
        %v10829 = vsel %vm2041, %v10825, %v10703
        %v10830 = vsel %vm2041, %v10826, %v10705
        %v10831 = vsel %vm2041, %v10827, %v10707
        %v10832 = vsel %vm2046, %v10828, %v10717
        %v10833 = vsel %vm2046, %v10829, %v10719
        %v10834 = vsel %vm2046, %v10830, %v10721
        %v10835 = vsel %vm2046, %v10831, %v10723
        %v10836 = vsel %vm2051, %v10832, %v10733
        %v10837 = vsel %vm2051, %v10833, %v10735
        %v10838 = vsel %vm2051, %v10834, %v10737
        %v10839 = vsel %vm2051, %v10835, %v10739
        %v10840 = vsel %vm2056, %v10836, %v10749
        %v10841 = vsel %vm2056, %v10837, %v10751
        %v10842 = vsel %vm2056, %v10838, %v10753
        %v10843 = vsel %vm2056, %v10839, %v10755
        %v10844 = vsel %vm2061, %v10840, %v10765
        %v10845 = vsel %vm2061, %v10841, %v10767
        %v10846 = vsel %vm2061, %v10842, %v10769
        %v10847 = vsel %vm2061, %v10843, %v10771
        %v10848 = vsel %vm2066, %v10844, %v10781
        %v10849 = vsel %vm2066, %v10845, %v10783
        %v10850 = vsel %vm2066, %v10846, %v10785
        %v10851 = vsel %vm2066, %v10847, %v10787
        %10856 = vrot.lane.b32.xlu0 %v10848, 32
        %v10857 = vpop.permute.xlu0 %10856
        %10858 = vrot.lane.b32.xlu0 %v10849, 32
        %v10859 = vpop.permute.xlu0 %10858
        %10860 = vrot.lane.b32.xlu0 %v10850, 32
        %v10861 = vpop.permute.xlu0 %10860
        %10862 = vrot.lane.b32.xlu0 %v10851, 32
        %v10863 = vpop.permute.xlu0 %10862
        %v10868 = vsel %vm2087, %v9588, %v10857
        %v10869 = vsel %vm2087, %v9589, %v10859
        %v10870 = vsel %vm2087, %v9590, %v10861
        %v10871 = vsel %vm2087, %v9591, %v10863
        %s10872 = scalar_lea.vmem %s419, 96 [#allocation9]
        %10873 = vst.msk [vmem:[%s10872] sm:$0xff] %vm2092, %v10868
        %10874 = vst.msk [vmem:[%s10872 + $0x8] sm:$0xff] %vm2092, %v10869
        %10875 = vst.msk [vmem:[%s10872 + $0x10] sm:$0xff] %vm2092, %v10870
        %10876 = vst.msk [vmem:[%s10872 + $0x18] sm:$0xff] %vm2092, %v10871
        %v10877 = vld [vmem:[%s432] sm:$0xff]
        %v10878 = vld [vmem:[%s432 + $0x8] sm:$0xff]
        %v10879 = vld [vmem:[%s432 + $0x10] sm:$0xff]
        %v10880 = vld [vmem:[%s432 + $0x18] sm:$0xff]
        %s10881 = scalar_lea.vmem %s419, 128 [#allocation9]
        %10882 = vst.msk [vmem:[%s10881] sm:$0xff] %vm2092, %v10877
        %10883 = vst.msk [vmem:[%s10881 + $0x8] sm:$0xff] %vm2092, %v10878
        %10884 = vst.msk [vmem:[%s10881 + $0x10] sm:$0xff] %vm2092, %v10879
        %10885 = vst.msk [vmem:[%s10881 + $0x18] sm:$0xff] %vm2092, %v10880
        %s10886 = sand.u32 %s187, 1
        %s10887 = sand.u32 %s187, 1
        %s10888 = smul.addr %s10887, 160
        %s10889 = scalar_lea.vmem [#allocation9], %s10888
        // Predicated region
        $region57: #{wave_unpool.1} parent=39 // pred_check
          %p10890 = pneg %p197
        $region58: #{wave_unpool.1} parent=39 // pred_check_branch
          %10892 = sbr.rel (%p10890) target = $region60
        $region59: #{wave_unpool.1} parent=39 // pred_region
          %s10893 = smul.u32 4, %s30
          %s10894 = smul.addr %s29, 80
          %s10895 = sadd.s32 %s10893, %s10894
          %s10896 = smul.addr %s10895, 8
          %s10897 = scalar_lea.vmem %s5, %s10896
          // Predicated region
          $region61: #{wave_unpool.1} parent=59 // pred_check
            _
          $region62: #{wave_unpool.1} parent=59 // pred_check_branch
            %10899 = sbr.rel (0) target = $region64
          $region63: #{wave_unpool.1} parent=59 // pred_region
            // Predicated region
            $region65: #{wave_unpool.1} parent=63 // pred_check
              _
            $region66: #{wave_unpool.1} parent=63 // pred_check_branch
              %10901 = sbr.rel (0) target = $region68
            $region67: #{wave_unpool.1} parent=63 // pred_region
              // Predicated region
              $region80: #{wave_unpool.1} parent=67 // pred_check
                _
              $region81: #{wave_unpool.1} parent=67 // pred_check_branch
                %10955 = sbr.rel (0) target = $region83
              $region82: #{wave_unpool.1} parent=67 // pred_region
                loop: start=0, step=1, limit=1
                $region84: #{wave_unpool.1} parent=82 // loop_pre_header
                  _
                $region85: #{wave_unpool.1} parent=82 // loop_header
                  %s10957 = sphi 0, %s10961
                  %p10958 = scmp.ge.s32.totalorder %s10957, 1
                  %s10962 = sphi %s10889, %s10889
                  %s10963 = sphi %s10897, %s10897
                $region86: #{wave_unpool.1} parent=82 // loop_header_branch
                  %10960 = sbr.rel (%p10958) target = $region90
                $region87: #{wave_unpool.1} parent=82 // loop_body
                  %v10964 = vld [vmem:[%s10962] sm:$0xff]
                  %10965 = vst [vmem:[%s10963] sm:$0xff] %v10964
                  %v10966 = vld [vmem:[%s10962 + $0x8] sm:$0xff]
                  %10967 = vst [vmem:[%s10963 + $0x8] sm:$0xff] %v10966
                  %v10968 = vld [vmem:[%s10962 + $0x10] sm:$0xff]
                  %10969 = vst [vmem:[%s10963 + $0x10] sm:$0xff] %v10968
                  %v10970 = vld [vmem:[%s10962 + $0x18] sm:$0xff]
                  %10971 = vst [vmem:[%s10963 + $0x18] sm:$0xff] %v10970
                  %v10972 = vld [vmem:[%s10962 + $0x20] sm:$0xff]
                  %10973 = vst [vmem:[%s10963 + $0x80] sm:$0xff] %v10972
                  %v10974 = vld [vmem:[%s10962 + $0x28] sm:$0xff]
                  %10975 = vst [vmem:[%s10963 + $0x88] sm:$0xff] %v10974
                  %v10976 = vld [vmem:[%s10962 + $0x30] sm:$0xff]
                  %10977 = vst [vmem:[%s10963 + $0x90] sm:$0xff] %v10976
                  %v10978 = vld [vmem:[%s10962 + $0x38] sm:$0xff]
                  %10979 = vst [vmem:[%s10963 + $0x98] sm:$0xff] %v10978
                  %v10980 = vld [vmem:[%s10962 + $0x40] sm:$0xff]
                  %10981 = vst [vmem:[%s10963 + $0x100] sm:$0xff] %v10980
                  %v10982 = vld [vmem:[%s10962 + $0x48] sm:$0xff]
                  %10983 = vst [vmem:[%s10963 + $0x108] sm:$0xff] %v10982
                  %v10984 = vld [vmem:[%s10962 + $0x50] sm:$0xff]
                  %10985 = vst [vmem:[%s10963 + $0x110] sm:$0xff] %v10984
                  %v10986 = vld [vmem:[%s10962 + $0x58] sm:$0xff]
                  %10987 = vst [vmem:[%s10963 + $0x118] sm:$0xff] %v10986
                  %v10988 = vld [vmem:[%s10962 + $0x60] sm:$0xff]
                  %10989 = vst [vmem:[%s10963 + $0x180] sm:$0xff] %v10988
                  %v10990 = vld [vmem:[%s10962 + $0x68] sm:$0xff]
                  %10991 = vst [vmem:[%s10963 + $0x188] sm:$0xff] %v10990
                  %v10992 = vld [vmem:[%s10962 + $0x70] sm:$0xff]
                  %10993 = vst [vmem:[%s10963 + $0x190] sm:$0xff] %v10992
                  %v10994 = vld [vmem:[%s10962 + $0x78] sm:$0xff]
                  %10995 = vst [vmem:[%s10963 + $0x198] sm:$0xff] %v10994
                  %v10996 = vld [vmem:[%s10962 + $0x80] sm:$0xff]
                  %10997 = vst [vmem:[%s10963 + $0x200] sm:$0xff] %v10996
                  %v10998 = vld [vmem:[%s10962 + $0x88] sm:$0xff]
                  %10999 = vst [vmem:[%s10963 + $0x208] sm:$0xff] %v10998
                  %v11000 = vld [vmem:[%s10962 + $0x90] sm:$0xff]
                  %11001 = vst [vmem:[%s10963 + $0x210] sm:$0xff] %v11000
                  %v11002 = vld [vmem:[%s10962 + $0x98] sm:$0xff]
                  %11003 = vst [vmem:[%s10963 + $0x218] sm:$0xff] %v11002
                $region88: #{wave_unpool.1} parent=82 // loop_footer
                  %s10961 = sadd.s32 1, %s10957
                $region89: #{wave_unpool.1} parent=82 // loop_footer_branch
                  %10956 = sbr.rel target = $region85
                $region90: #{wave_unpool.1} parent=82 // loop_exit
                  _
              $region83: #{wave_unpool.1} parent=67 // pred_fallthru
                _
              // Predicated region
              $region91: #{wave_unpool.1} parent=67 // pred_check
                _
              $region92: #{wave_unpool.1} parent=67 // pred_check_branch
                %11005 = sbr.rel target = $region94
              $region93: #{wave_unpool.1} parent=67 // pred_region
                _
              $region94: #{wave_unpool.1} parent=67 // pred_fallthru
                _
            $region68: #{wave_unpool.1} parent=63 // pred_fallthru
              _
            // Predicated region
            $region69: #{wave_unpool.1} parent=63 // pred_check
              _
            $region70: #{wave_unpool.1} parent=63 // pred_check_branch
              %10903 = sbr.rel target = $region72
            $region71: #{wave_unpool.1} parent=63 // pred_region
              %s10905 = ssub.s32 256, 1
              loop: start=0, step=1, limit=1
              $region73: #{wave_unpool.1} parent=71 // loop_pre_header
                _
              $region74: #{wave_unpool.1} parent=71 // loop_header
                %s10907 = sphi 0, %s10911
                %p10908 = scmp.ge.s32.totalorder %s10907, 1
                %s10912 = sphi %s10889, %s10889
                %s10913 = sphi %s10897, %s10897
              $region75: #{wave_unpool.1} parent=71 // loop_header_branch
                %10910 = sbr.rel (%p10908) target = $region79
              $region76: #{wave_unpool.1} parent=71 // loop_body
                %v10914 = vld [vmem:[%s10912] sm:%s10905]
                %10915 = vst [vmem:[%s10913] sm:%s10905] %v10914
                %v10916 = vld [vmem:[%s10912 + $0x8] sm:%s10905]
                %10917 = vst [vmem:[%s10913 + $0x8] sm:%s10905] %v10916
                %v10918 = vld [vmem:[%s10912 + $0x10] sm:%s10905]
                %10919 = vst [vmem:[%s10913 + $0x10] sm:%s10905] %v10918
                %v10920 = vld [vmem:[%s10912 + $0x18] sm:%s10905]
                %10921 = vst [vmem:[%s10913 + $0x18] sm:%s10905] %v10920
                %v10922 = vld [vmem:[%s10912 + $0x20] sm:%s10905]
                %10923 = vst [vmem:[%s10913 + $0x80] sm:%s10905] %v10922
                %v10924 = vld [vmem:[%s10912 + $0x28] sm:%s10905]
                %10925 = vst [vmem:[%s10913 + $0x88] sm:%s10905] %v10924
                %v10926 = vld [vmem:[%s10912 + $0x30] sm:%s10905]
                %10927 = vst [vmem:[%s10913 + $0x90] sm:%s10905] %v10926
                %v10928 = vld [vmem:[%s10912 + $0x38] sm:%s10905]
                %10929 = vst [vmem:[%s10913 + $0x98] sm:%s10905] %v10928
                %v10930 = vld [vmem:[%s10912 + $0x40] sm:%s10905]
                %10931 = vst [vmem:[%s10913 + $0x100] sm:%s10905] %v10930
                %v10932 = vld [vmem:[%s10912 + $0x48] sm:%s10905]
                %10933 = vst [vmem:[%s10913 + $0x108] sm:%s10905] %v10932
                %v10934 = vld [vmem:[%s10912 + $0x50] sm:%s10905]
                %10935 = vst [vmem:[%s10913 + $0x110] sm:%s10905] %v10934
                %v10936 = vld [vmem:[%s10912 + $0x58] sm:%s10905]
                %10937 = vst [vmem:[%s10913 + $0x118] sm:%s10905] %v10936
                %v10938 = vld [vmem:[%s10912 + $0x60] sm:%s10905]
                %10939 = vst [vmem:[%s10913 + $0x180] sm:%s10905] %v10938
                %v10940 = vld [vmem:[%s10912 + $0x68] sm:%s10905]
                %10941 = vst [vmem:[%s10913 + $0x188] sm:%s10905] %v10940
                %v10942 = vld [vmem:[%s10912 + $0x70] sm:%s10905]
                %10943 = vst [vmem:[%s10913 + $0x190] sm:%s10905] %v10942
                %v10944 = vld [vmem:[%s10912 + $0x78] sm:%s10905]
                %10945 = vst [vmem:[%s10913 + $0x198] sm:%s10905] %v10944
                %v10946 = vld [vmem:[%s10912 + $0x80] sm:%s10905]
                %10947 = vst [vmem:[%s10913 + $0x200] sm:%s10905] %v10946
                %v10948 = vld [vmem:[%s10912 + $0x88] sm:%s10905]
                %10949 = vst [vmem:[%s10913 + $0x208] sm:%s10905] %v10948
                %v10950 = vld [vmem:[%s10912 + $0x90] sm:%s10905]
                %10951 = vst [vmem:[%s10913 + $0x210] sm:%s10905] %v10950
                %v10952 = vld [vmem:[%s10912 + $0x98] sm:%s10905]
                %10953 = vst [vmem:[%s10913 + $0x218] sm:%s10905] %v10952
              $region77: #{wave_unpool.1} parent=71 // loop_footer
                %s10911 = sadd.s32 1, %s10907
              $region78: #{wave_unpool.1} parent=71 // loop_footer_branch
                %10906 = sbr.rel target = $region74
              $region79: #{wave_unpool.1} parent=71 // loop_exit
                _
            $region72: #{wave_unpool.1} parent=63 // pred_fallthru
              _
          $region64: #{wave_unpool.1} parent=59 // pred_fallthru
            _
          %11006 = vnop
        $region60: #{wave_unpool.1} parent=39 // pred_fallthru
          _
      $region40: #{wave_unpool.1} parent=5 // pred_fallthru
        _
      %p11007 = scmp.le.s32.totalorder 2, %s20
      // Predicated region
      $region95: #{wave_unpool.1} parent=5 // pred_check
        %p11008 = pneg %p11007
      $region96: #{wave_unpool.1} parent=5 // pred_check_branch
        %11010 = sbr.rel (%p11008) target = $region98
      $region97: #{wave_unpool.1} parent=5 // pred_region
        %s11011 = ssub.s32 %s20, 2
        // Predicated region
        $region99: #{wave_unpool.1} parent=97 // pred_check
          %p11012 = pneg %p203
        $region100: #{wave_unpool.1} parent=97 // pred_check_branch
          %11014 = sbr.rel (%p11012) target = $region102
        $region101: #{wave_unpool.1} parent=97 // pred_region
          %s11015 = sand.u32 %s188, 1
          %s11016 = sand.u32 %s188, 1
          %s11017 = smul.addr %s11016, 160
          %s11018 = scalar_lea.vmem [#allocation9], %s11017
        $region102: #{wave_unpool.1} parent=97 // pred_fallthru
          _
      $region98: #{wave_unpool.1} parent=5 // pred_fallthru
        _
    $region6: #{wave_unpool.1} parent=1 // loop_footer
      %s24 = sadd.s32 1, %s20
    $region7: #{wave_unpool.1} parent=1 // loop_footer_branch
      %19 = sbr.rel target = $region3
    $region8: #{wave_unpool.1} parent=1 // loop_exit
      _
    %11019 = vsyncpa [#allocation3], 1
    %s11020 = scalar_lea.sflag [#allocation3], 1
    %11021 = vsyncpa %s11020, 1
    %11022 = vsyncpa [#allocation5], 1
    %s11023 = scalar_lea.sflag [#allocation5], 1
    %11024 = vsyncpa %s11023, 1
    %11025 = vsyncpa [#allocation8], 1
    %s11026 = scalar_lea.sflag [#allocation8], 1
    %11027 = vsyncpa %s11026, 1

</llo_original>
